<compile_context>
chip_gen: v7x
topology: tpu7x:2x2x1
jax: 0.10.0
libtpu: 0.0.40
codegen_flags: <defaults>
</compile_context>

<pallas_src>
import functools
import math

import numpy as np
import jax
import jax.numpy as jnp
from jax.experimental import pallas as pl
from jax.experimental.pallas import tpu as pltpu


_TAP_OFFSETS = tuple((ky - 1, kx - 1) for ky in range(3) for kx in range(3))


def _build_shift_mats(H, W):
    """9 one-hot (H*W, H*W) operators: (x @ S_t)[c, h*W+w] = x[c, (h+dy)*W+(w+dx)], 0 outside."""
    M = H * W
    mats = np.zeros((9, M, M), np.float32)
    for t, (dy, dx) in enumerate(_TAP_OFFSETS):
        for h in range(H):
            for w in range(W):
                hs, ws = h + dy, w + dx
                if 0 <= hs < H and 0 <= ws < W:
                    mats[t, hs * W + ws, h * W + w] = 1.0
    return jnp.asarray(mats)


# ----------------------------------------------------------------------------
# Fused NLRG kernel (one batch element per grid step)
# ----------------------------------------------------------------------------
def _nlrg_kernel(x_ref, shift_ref, rw_ref, rb_ref, sw1_ref, sb1_ref,
                 sw2_ref, sb2_ref, lw_ref, lb_ref, o_ref,
                 *, C, M, n_resblocks, iterN):
    f32 = jnp.float32
    x0 = x_ref[0].astype(f32)                                    # (C, M) channel-major

    def conv3x3(x_cm, w_flat, b_col):
        # im2col via MXU shift operators, then a single K = 9*C matmul.
        taps = [jnp.dot(x_cm, shift_ref[t], preferred_element_type=f32)
                for t in range(9)]                               # 9 x (C, M)
        patches = jnp.concatenate(taps, axis=0)                  # (9*C, M), sublane-aligned
        out = jnp.dot(w_flat, patches, preferred_element_type=f32)   # (C, M)
        return out + b_col

    # --- RCAB chain: x = conv2(relu(conv1(x))) + x ---
    x = x0
    for i in range(n_resblocks):
        y = jnp.maximum(conv3x3(x, rw_ref[2 * i], rb_ref[2 * i]), 0.0)
        x = conv3x3(y, rw_ref[2 * i + 1], rb_ref[2 * i + 1]) + x

    # --- SOCA: MPNCOV covariance pooling + Newton-Schulz sqrtm (iterN steps) ---
    # cov = X I_hat X^T computed in centered form (numerically equivalent).
    mean_col = jnp.sum(x, axis=1, keepdims=True) * (1.0 / M)     # (C, 1)
    xc = x - mean_col
    cov = jax.lax.dot_general(xc, xc, (((1,), (1,)), ((), ())),
                              preferred_element_type=f32) * (1.0 / M)   # (C, C)

    ri = jax.lax.broadcasted_iota(jnp.int32, (C, C), 0)
    ci = jax.lax.broadcasted_iota(jnp.int32, (C, C), 1)
    eye = (ri == ci).astype(f32)
    i3 = 3.0 * eye

    normA = jnp.sum(cov * eye)                                   # trace(cov)
    A = cov / normA
    ZY = 0.5 * (i3 - A)
    Y = jnp.dot(A, ZY, preferred_element_type=f32)
    Z = ZY
    for _ in range(1, iterN - 1):
        ZY = 0.5 * (i3 - jnp.dot(Z, Y, preferred_element_type=f32))
        Y, Z = (jnp.dot(Y, ZY, preferred_element_type=f32),
                jnp.dot(ZY, Z, preferred_element_type=f32))
    YZY = 0.5 * jnp.dot(Y, i3 - jnp.dot(Z, Y, preferred_element_type=f32),
                        preferred_element_type=f32)
    cov_sqrt = YZY * jnp.sqrt(normA)

    # torch.mean(cov_sqrt, dim=1): reduce the row index -> column vector indexed by j.
    ones_col = jnp.ones((C, 1), f32)
    cov_mean = jax.lax.dot_general(cov_sqrt, ones_col, (((0,), (0,)), ((), ())),
                                   preferred_element_type=f32) * (1.0 / C)   # (C, 1)

    # conv_du: 1x1 conv -> ReLU -> 1x1 conv -> Sigmoid (channel-major column math)
    hmid = jnp.maximum(jnp.dot(sw1_ref[...], cov_mean, preferred_element_type=f32)
                       + sb1_ref[...], 0.0)                      # (Cr, 1)
    scale = jax.nn.sigmoid(jnp.dot(sw2_ref[...], hmid, preferred_element_type=f32)
                           + sb2_ref[...])                       # (C, 1)
    x = x * scale                                                # per-channel gate

    # --- conv_last + outer residual ---
    out = conv3x3(x, lw_ref[...], lb_ref[...]) + x0
    o_ref[0] = out.astype(o_ref.dtype)


def _resident(arr):
    """BlockSpec for a small array kept fully resident in VMEM across the grid."""
    zeros = (0,) * arr.ndim
    return pl.BlockSpec(arr.shape, lambda b: zeros)


def nlrg_forward(x_nchw, kparams):
    """x_nchw: (B, C, H, W) float32; kparams from pack_kernel_params()."""
    B, C, H, W = x_nchw.shape
    M = H * W
    # TODO(synk): SOCA's 200x200 center-crop branch (h or w >= 200) is not implemented;
    # for H, W < 200 (as here) the PyTorch module also uses the full feature map.
    x_cm = x_nchw.reshape(B, C, M)                 # free relabel in HBM (channel-major)
    n_resblocks = kparams["rcab_w"].shape[0] // 2

    kernel = functools.partial(_nlrg_kernel, C=C, M=M,
                               n_resblocks=n_resblocks, iterN=5)
    out = pl.pallas_call(
        kernel,
        out_shape=jax.ShapeDtypeStruct((B, C, M), x_nchw.dtype),
        grid=(B,),
        in_specs=[
            pl.BlockSpec((1, C, M), lambda b: (b, 0, 0)),
            _resident(kparams["shift"]),
            _resident(kparams["rcab_w"]), _resident(kparams["rcab_b"]),
            _resident(kparams["s_w1"]), _resident(kparams["s_b1"]),
            _resident(kparams["s_w2"]), _resident(kparams["s_b2"]),
            _resident(kparams["last_w"]), _resident(kparams["last_b"]),
        ],
        out_specs=pl.BlockSpec((1, C, M), lambda b: (b, 0, 0)),
        compiler_params=pltpu.CompilerParams(
            dimension_semantics=("parallel",),       # batch is independent -> 2 TCs on v7x
            vmem_limit_bytes=32 * 1024 * 1024,
        ),
    )(x_cm, kparams["shift"], kparams["rcab_w"], kparams["rcab_b"],
      kparams["s_w1"], kparams["s_b1"], kparams["s_w2"], kparams["s_b2"],
      kparams["last_w"], kparams["last_b"])
    return out.reshape(B, C, H, W)


# ----------------------------------------------------------------------------
# Parameters: PyTorch layout + packing to the kernel's channel-major format
# ----------------------------------------------------------------------------
def init_params(key, C, reduction, n_resblocks):
    """PyTorch-layout parameters: conv weights (Cout, Cin, 3, 3), biases (Cout,)."""
    Cr = max(1, C // reduction)
    keys = jax.random.split(key, 4 * n_resblocks + 6)
    std_conv = math.sqrt(2.0 / (C * 9))

    def conv_param(k_w, k_b):
        w = std_conv * jax.random.normal(k_w, (C, C, 3, 3), jnp.float32)
        b = 0.01 * jax.random.normal(k_b, (C,), jnp.float32)
        return w, b

    idx = 0
    rcab = []
    for _ in range(n_resblocks):
        wa, ba = conv_param(keys[idx], keys[idx + 1]); idx += 2
        wb, bb = conv_param(keys[idx], keys[idx + 1]); idx += 2
        rcab.append((wa, ba, wb, bb))

    w1 = math.sqrt(2.0 / C) * jax.random.normal(keys[idx], (Cr, C), jnp.float32); idx += 1
    b1 = 0.01 * jax.random.normal(keys[idx], (Cr,), jnp.float32); idx += 1
    w2 = math.sqrt(2.0 / Cr) * jax.random.normal(keys[idx], (C, Cr), jnp.float32); idx += 1
    b2 = 0.01 * jax.random.normal(keys[idx], (C,), jnp.float32); idx += 1
    soca_p = (w1, b1, w2, b2)

    wl, bl = conv_param(keys[idx], keys[idx + 1]); idx += 2
    return {"rcab": rcab, "soca": soca_p, "last": (wl, bl)}


def pack_kernel_params(params, H, W):
    """PyTorch-layout params -> channel-major kernel format (plus shift operators)."""
    def w_cm(w):                                   # (Cout, Cin, 3, 3) -> (Cout, 9*Cin)
        co = w.shape[0]
        return jnp.transpose(w, (0, 2, 3, 1)).reshape(co, -1)

    rcab_w, rcab_b = [], []
    for (wa, ba, wb, bb) in params["rcab"]:
        rcab_w += [w_cm(wa), w_cm(wb)]
        rcab_b += [ba[:, None], bb[:, None]]
    w1, b1, w2, b2 = params["soca"]
    wl, bl = params["last"]
    return {
        "shift": _build_shift_mats(H, W),          # (9, H*W, H*W)
        "rcab_w": jnp.stack(rcab_w),               # (2*n_resblocks, C, 9*C)
        "rcab_b": jnp.stack(rcab_b),               # (2*n_resblocks, C, 1)
        "s_w1": w1, "s_b1": b1[:, None],           # (Cr, C), (Cr, 1)
        "s_w2": w2, "s_b2": b2[:, None],           # (C, Cr), (C, 1)
        "last_w": w_cm(wl), "last_b": bl[:, None], # (C, 9*C), (C, 1)
    }


# ----------------------------------------------------------------------------
# Pure-JAX reference (NCHW, follows the PyTorch module / MPNCOV semantics)
# ----------------------------------------------------------------------------
def _conv3x3_ref(x, w, b):
    y = jax.lax.conv_general_dilated(
        x, w, window_strides=(1, 1), padding="SAME",
        dimension_numbers=("NCHW", "OIHW", "NCHW"))
    return y + b.reshape(1, -1, 1, 1)


def _soca_ref(x, soca_params, iterN=5):
    w1, b1, w2, b2 = soca_params
    B, C, H, W = x.shape
    M = H * W
    X = x.reshape(B, C, M)
    gram = jnp.einsum("bcm,bdm->bcd", X, X)
    s = jnp.sum(X, axis=2)
    cov = gram / M - jnp.einsum("bc,bd->bcd", s, s) / (M * M)
    eye = jnp.eye(C, dtype=jnp.float32)
    i3 = 3.0 * eye
    normA = jnp.trace(cov, axis1=1, axis2=2)
    A = cov / normA[:, None, None]
    ZY = 0.5 * (i3 - A)
    Y = jnp.einsum("bij,bjk->bik", A, ZY)
    Z = ZY
    for _ in range(1, iterN - 1):
        ZY = 0.5 * (i3 - jnp.einsum("bij,bjk->bik", Z, Y))
        Y, Z = (jnp.einsum("bij,bjk->bik", Y, ZY),
                jnp.einsum("bij,bjk->bik", ZY, Z))
    YZY = 0.5 * jnp.einsum("bij,bjk->bik", Y, i3 - jnp.einsum("bij,bjk->bik", Z, Y))
    cov_sqrt = YZY * jnp.sqrt(normA)[:, None, None]
    cov_mean = jnp.mean(cov_sqrt, axis=1)          # (B, C)
    h = jnp.maximum(cov_mean @ w1.T + b1, 0.0)
    scale = jax.nn.sigmoid(h @ w2.T + b2)
    return x * scale[:, :, None, None]


def nlrg_ref(x, params):
    residual = x
    for (wa, ba, wb, bb) in params["rcab"]:
        y = jnp.maximum(_conv3x3_ref(x, wa, ba), 0.0)
        x = _conv3x3_ref(y, wb, bb) + x
    x = _soca_ref(x, params["soca"])
    wl, bl = params["last"]
    x = _conv3x3_ref(x, wl, bl) + residual
    return x


if __name__ == "__main__":
    B, C, Hs, Ws = 2, 16, 16, 16
    reduction = 4
    n_resblocks = 2

    key = jax.random.PRNGKey(0)
    k_x, k_p = jax.random.split(key)
    x_nchw = jax.random.normal(k_x, (B, C, Hs, Ws), jnp.float32)   # PyTorch NCHW input

    params = init_params(k_p, C, reduction, n_resblocks)
    kparams = pack_kernel_params(params, Hs, Ws)

    out = nlrg_forward(x_nchw, kparams)
    out = jax.block_until_ready(out)

    ref = nlrg_ref(x_nchw, params)
    np.testing.assert_allclose(np.asarray(out), np.asarray(ref), rtol=2e-3, atol=2e-3)

    print("KERNEL_OK")
</pallas_src>

<mosaic_0001>
module attributes {stable_mosaic.version = 11 : i64} {
  func.func @_nlrg_kernel(%arg0: i32, %arg1: memref<1x16x256xf32, #tpu.memory_space<vmem>>, %arg2: memref<9x256x256xf32, #tpu.memory_space<vmem>>, %arg3: memref<4x16x144xf32, #tpu.memory_space<vmem>>, %arg4: memref<4x16x1xf32, #tpu.memory_space<vmem>>, %arg5: memref<4x16xf32, #tpu.memory_space<vmem>>, %arg6: memref<4x1xf32, #tpu.memory_space<vmem>>, %arg7: memref<16x4xf32, #tpu.memory_space<vmem>>, %arg8: memref<16x1xf32, #tpu.memory_space<vmem>>, %arg9: memref<16x144xf32, #tpu.memory_space<vmem>>, %arg10: memref<16x1xf32, #tpu.memory_space<vmem>>, %arg11: memref<1x16x256xf32, #tpu.memory_space<vmem>>) attributes {dimension_semantics = [#tpu.dimension_semantics<parallel>], iteration_bounds = array<i64: 2>, scalar_prefetch = 0 : i64, scratch_operands = 0 : i64, tpu.core_type = #tpu.core_type<tc>, window_params = [{transform_indices = @transform_0, window_bounds = array<i64: 1, 16, 256>}, {pipeline_mode = #tpu.pipeline_mode<synchronous>, transform_indices = @transform_1, window_bounds = array<i64: 9, 256, 256>}, {pipeline_mode = #tpu.pipeline_mode<synchronous>, transform_indices = @transform_2, window_bounds = array<i64: 4, 16, 144>}, {pipeline_mode = #tpu.pipeline_mode<synchronous>, transform_indices = @transform_3, window_bounds = array<i64: 4, 16, 1>}, {pipeline_mode = #tpu.pipeline_mode<synchronous>, transform_indices = @transform_4, window_bounds = array<i64: 4, 16>}, {pipeline_mode = #tpu.pipeline_mode<synchronous>, transform_indices = @transform_5, window_bounds = array<i64: 4, 1>}, {pipeline_mode = #tpu.pipeline_mode<synchronous>, transform_indices = @transform_6, window_bounds = array<i64: 16, 4>}, {pipeline_mode = #tpu.pipeline_mode<synchronous>, transform_indices = @transform_7, window_bounds = array<i64: 16, 1>}, {pipeline_mode = #tpu.pipeline_mode<synchronous>, transform_indices = @transform_8, window_bounds = array<i64: 16, 144>}, {pipeline_mode = #tpu.pipeline_mode<synchronous>, transform_indices = @transform_9, window_bounds = array<i64: 16, 1>}, {transform_indices = @transform_10, window_bounds = array<i64: 1, 16, 256>}]} {
    %c0 = arith.constant 0 : index
    %c0_0 = arith.constant 0 : index
    %c0_1 = arith.constant 0 : index
    %0 = vector.load %arg1[%c0, %c0_0, %c0_1] : memref<1x16x256xf32, #tpu.memory_space<vmem>>, vector<1x16x256xf32>
    %1 = vector.shape_cast %0 : vector<1x16x256xf32> to vector<16x256xf32>
    %c0_2 = arith.constant 0 : index
    %c0_3 = arith.constant 0 : index
    %c0_4 = arith.constant 0 : index
    %2 = vector.load %arg3[%c0_2, %c0_3, %c0_4] : memref<4x16x144xf32, #tpu.memory_space<vmem>>, vector<1x16x144xf32>
    %3 = vector.shape_cast %2 : vector<1x16x144xf32> to vector<16x144xf32>
    %c0_5 = arith.constant 0 : index
    %c0_6 = arith.constant 0 : index
    %c0_7 = arith.constant 0 : index
    %4 = vector.load %arg4[%c0_5, %c0_6, %c0_7] : memref<4x16x1xf32, #tpu.memory_space<vmem>>, vector<1x16x1xf32>
    %5 = vector.shape_cast %4 : vector<1x16x1xf32> to vector<16x1xf32>
    %c0_8 = arith.constant 0 : index
    %c0_9 = arith.constant 0 : index
    %c0_10 = arith.constant 0 : index
    %6 = vector.load %arg2[%c0_8, %c0_9, %c0_10] : memref<9x256x256xf32, #tpu.memory_space<vmem>>, vector<1x256x256xf32>
    %7 = vector.shape_cast %6 : vector<1x256x256xf32> to vector<256x256xf32>
    %cst = arith.constant dense<0.000000e+00> : vector<16x256xf32>
    %8 = tpu.matmul %1, %7, %cst {dimension_numbers = #tpu.dot_dimension_numbers<[1], [0], [0], [1], [0, 0, 1, 1], [], []>} : vector<16x256xf32>, vector<256x256xf32>, vector<16x256xf32> -> vector<16x256xf32>
    %c1 = arith.constant 1 : index
    %c0_11 = arith.constant 0 : index
    %c0_12 = arith.constant 0 : index
    %9 = vector.load %arg2[%c1, %c0_11, %c0_12] : memref<9x256x256xf32, #tpu.memory_space<vmem>>, vector<1x256x256xf32>
    %10 = vector.shape_cast %9 : vector<1x256x256xf32> to vector<256x256xf32>
    %cst_13 = arith.constant dense<0.000000e+00> : vector<16x256xf32>
    %11 = tpu.matmul %1, %10, %cst_13 {dimension_numbers = #tpu.dot_dimension_numbers<[1], [0], [0], [1], [0, 0, 1, 1], [], []>} : vector<16x256xf32>, vector<256x256xf32>, vector<16x256xf32> -> vector<16x256xf32>
    %c2 = arith.constant 2 : index
    %c0_14 = arith.constant 0 : index
    %c0_15 = arith.constant 0 : index
    %12 = vector.load %arg2[%c2, %c0_14, %c0_15] : memref<9x256x256xf32, #tpu.memory_space<vmem>>, vector<1x256x256xf32>
    %13 = vector.shape_cast %12 : vector<1x256x256xf32> to vector<256x256xf32>
    %cst_16 = arith.constant dense<0.000000e+00> : vector<16x256xf32>
    %14 = tpu.matmul %1, %13, %cst_16 {dimension_numbers = #tpu.dot_dimension_numbers<[1], [0], [0], [1], [0, 0, 1, 1], [], []>} : vector<16x256xf32>, vector<256x256xf32>, vector<16x256xf32> -> vector<16x256xf32>
    %c3 = arith.constant 3 : index
    %c0_17 = arith.constant 0 : index
    %c0_18 = arith.constant 0 : index
    %15 = vector.load %arg2[%c3, %c0_17, %c0_18] : memref<9x256x256xf32, #tpu.memory_space<vmem>>, vector<1x256x256xf32>
    %16 = vector.shape_cast %15 : vector<1x256x256xf32> to vector<256x256xf32>
    %cst_19 = arith.constant dense<0.000000e+00> : vector<16x256xf32>
    %17 = tpu.matmul %1, %16, %cst_19 {dimension_numbers = #tpu.dot_dimension_numbers<[1], [0], [0], [1], [0, 0, 1, 1], [], []>} : vector<16x256xf32>, vector<256x256xf32>, vector<16x256xf32> -> vector<16x256xf32>
    %c4 = arith.constant 4 : index
    %c0_20 = arith.constant 0 : index
    %c0_21 = arith.constant 0 : index
    %18 = vector.load %arg2[%c4, %c0_20, %c0_21] : memref<9x256x256xf32, #tpu.memory_space<vmem>>, vector<1x256x256xf32>
    %19 = vector.shape_cast %18 : vector<1x256x256xf32> to vector<256x256xf32>
    %cst_22 = arith.constant dense<0.000000e+00> : vector<16x256xf32>
    %20 = tpu.matmul %1, %19, %cst_22 {dimension_numbers = #tpu.dot_dimension_numbers<[1], [0], [0], [1], [0, 0, 1, 1], [], []>} : vector<16x256xf32>, vector<256x256xf32>, vector<16x256xf32> -> vector<16x256xf32>
    %c5 = arith.constant 5 : index
    %c0_23 = arith.constant 0 : index
    %c0_24 = arith.constant 0 : index
    %21 = vector.load %arg2[%c5, %c0_23, %c0_24] : memref<9x256x256xf32, #tpu.memory_space<vmem>>, vector<1x256x256xf32>
    %22 = vector.shape_cast %21 : vector<1x256x256xf32> to vector<256x256xf32>
    %cst_25 = arith.constant dense<0.000000e+00> : vector<16x256xf32>
    %23 = tpu.matmul %1, %22, %cst_25 {dimension_numbers = #tpu.dot_dimension_numbers<[1], [0], [0], [1], [0, 0, 1, 1], [], []>} : vector<16x256xf32>, vector<256x256xf32>, vector<16x256xf32> -> vector<16x256xf32>
    %c6 = arith.constant 6 : index
    %c0_26 = arith.constant 0 : index
    %c0_27 = arith.constant 0 : index
    %24 = vector.load %arg2[%c6, %c0_26, %c0_27] : memref<9x256x256xf32, #tpu.memory_space<vmem>>, vector<1x256x256xf32>
    %25 = vector.shape_cast %24 : vector<1x256x256xf32> to vector<256x256xf32>
    %cst_28 = arith.constant dense<0.000000e+00> : vector<16x256xf32>
    %26 = tpu.matmul %1, %25, %cst_28 {dimension_numbers = #tpu.dot_dimension_numbers<[1], [0], [0], [1], [0, 0, 1, 1], [], []>} : vector<16x256xf32>, vector<256x256xf32>, vector<16x256xf32> -> vector<16x256xf32>
    %c7 = arith.constant 7 : index
    %c0_29 = arith.constant 0 : index
    %c0_30 = arith.constant 0 : index
    %27 = vector.load %arg2[%c7, %c0_29, %c0_30] : memref<9x256x256xf32, #tpu.memory_space<vmem>>, vector<1x256x256xf32>
    %28 = vector.shape_cast %27 : vector<1x256x256xf32> to vector<256x256xf32>
    %cst_31 = arith.constant dense<0.000000e+00> : vector<16x256xf32>
    %29 = tpu.matmul %1, %28, %cst_31 {dimension_numbers = #tpu.dot_dimension_numbers<[1], [0], [0], [1], [0, 0, 1, 1], [], []>} : vector<16x256xf32>, vector<256x256xf32>, vector<16x256xf32> -> vector<16x256xf32>
    %c8 = arith.constant 8 : index
    %c0_32 = arith.constant 0 : index
    %c0_33 = arith.constant 0 : index
    %30 = vector.load %arg2[%c8, %c0_32, %c0_33] : memref<9x256x256xf32, #tpu.memory_space<vmem>>, vector<1x256x256xf32>
    %31 = vector.shape_cast %30 : vector<1x256x256xf32> to vector<256x256xf32>
    %cst_34 = arith.constant dense<0.000000e+00> : vector<16x256xf32>
    %32 = tpu.matmul %1, %31, %cst_34 {dimension_numbers = #tpu.dot_dimension_numbers<[1], [0], [0], [1], [0, 0, 1, 1], [], []>} : vector<16x256xf32>, vector<256x256xf32>, vector<16x256xf32> -> vector<16x256xf32>
    %33 = tpu.concatenate %8, %11, %14, %17, %20, %23, %26, %29, %32 in 0 : vector<16x256xf32>, vector<16x256xf32>, vector<16x256xf32>, vector<16x256xf32>, vector<16x256xf32>, vector<16x256xf32>, vector<16x256xf32>, vector<16x256xf32>, vector<16x256xf32> -> vector<144x256xf32>
    %cst_35 = arith.constant dense<0.000000e+00> : vector<16x256xf32>
    %34 = tpu.matmul %3, %33, %cst_35 {dimension_numbers = #tpu.dot_dimension_numbers<[1], [0], [0], [1], [0, 0, 1, 1], [], []>} : vector<16x144xf32>, vector<144x256xf32>, vector<16x256xf32> -> vector<16x256xf32>
    %35 = vector.broadcast %5 : vector<16x1xf32> to vector<16x256xf32>
    %36 = arith.addf %34, %35 : vector<16x256xf32>
    %cst_36 = arith.constant 0.000000e+00 : f32
    %37 = vector.broadcast %cst_36 : f32 to vector<16x256xf32>
    %38 = arith.maximumf %36, %37 : vector<16x256xf32>
    %c1_37 = arith.constant 1 : index
    %c0_38 = arith.constant 0 : index
    %c0_39 = arith.constant 0 : index
    %39 = vector.load %arg3[%c1_37, %c0_38, %c0_39] : memref<4x16x144xf32, #tpu.memory_space<vmem>>, vector<1x16x144xf32>
    %40 = vector.shape_cast %39 : vector<1x16x144xf32> to vector<16x144xf32>
    %c1_40 = arith.constant 1 : index
    %c0_41 = arith.constant 0 : index
    %c0_42 = arith.constant 0 : index
    %41 = vector.load %arg4[%c1_40, %c0_41, %c0_42] : memref<4x16x1xf32, #tpu.memory_space<vmem>>, vector<1x16x1xf32>
    %42 = vector.shape_cast %41 : vector<1x16x1xf32> to vector<16x1xf32>
    %c0_43 = arith.constant 0 : index
    %c0_44 = arith.constant 0 : index
    %c0_45 = arith.constant 0 : index
    %43 = vector.load %arg2[%c0_43, %c0_44, %c0_45] : memref<9x256x256xf32, #tpu.memory_space<vmem>>, vector<1x256x256xf32>
    %44 = vector.shape_cast %43 : vector<1x256x256xf32> to vector<256x256xf32>
    %cst_46 = arith.constant dense<0.000000e+00> : vector<16x256xf32>
    %45 = tpu.matmul %38, %44, %cst_46 {dimension_numbers = #tpu.dot_dimension_numbers<[1], [0], [0], [1], [0, 0, 1, 1], [], []>} : vector<16x256xf32>, vector<256x256xf32>, vector<16x256xf32> -> vector<16x256xf32>
    %c1_47 = arith.constant 1 : index
    %c0_48 = arith.constant 0 : index
    %c0_49 = arith.constant 0 : index
    %46 = vector.load %arg2[%c1_47, %c0_48, %c0_49] : memref<9x256x256xf32, #tpu.memory_space<vmem>>, vector<1x256x256xf32>
    %47 = vector.shape_cast %46 : vector<1x256x256xf32> to vector<256x256xf32>
    %cst_50 = arith.constant dense<0.000000e+00> : vector<16x256xf32>
    %48 = tpu.matmul %38, %47, %cst_50 {dimension_numbers = #tpu.dot_dimension_numbers<[1], [0], [0], [1], [0, 0, 1, 1], [], []>} : vector<16x256xf32>, vector<256x256xf32>, vector<16x256xf32> -> vector<16x256xf32>
    %c2_51 = arith.constant 2 : index
    %c0_52 = arith.constant 0 : index
    %c0_53 = arith.constant 0 : index
    %49 = vector.load %arg2[%c2_51, %c0_52, %c0_53] : memref<9x256x256xf32, #tpu.memory_space<vmem>>, vector<1x256x256xf32>
    %50 = vector.shape_cast %49 : vector<1x256x256xf32> to vector<256x256xf32>
    %cst_54 = arith.constant dense<0.000000e+00> : vector<16x256xf32>
    %51 = tpu.matmul %38, %50, %cst_54 {dimension_numbers = #tpu.dot_dimension_numbers<[1], [0], [0], [1], [0, 0, 1, 1], [], []>} : vector<16x256xf32>, vector<256x256xf32>, vector<16x256xf32> -> vector<16x256xf32>
    %c3_55 = arith.constant 3 : index
    %c0_56 = arith.constant 0 : index
    %c0_57 = arith.constant 0 : index
    %52 = vector.load %arg2[%c3_55, %c0_56, %c0_57] : memref<9x256x256xf32, #tpu.memory_space<vmem>>, vector<1x256x256xf32>
    %53 = vector.shape_cast %52 : vector<1x256x256xf32> to vector<256x256xf32>
    %cst_58 = arith.constant dense<0.000000e+00> : vector<16x256xf32>
    %54 = tpu.matmul %38, %53, %cst_58 {dimension_numbers = #tpu.dot_dimension_numbers<[1], [0], [0], [1], [0, 0, 1, 1], [], []>} : vector<16x256xf32>, vector<256x256xf32>, vector<16x256xf32> -> vector<16x256xf32>
    %c4_59 = arith.constant 4 : index
    %c0_60 = arith.constant 0 : index
    %c0_61 = arith.constant 0 : index
    %55 = vector.load %arg2[%c4_59, %c0_60, %c0_61] : memref<9x256x256xf32, #tpu.memory_space<vmem>>, vector<1x256x256xf32>
    %56 = vector.shape_cast %55 : vector<1x256x256xf32> to vector<256x256xf32>
    %cst_62 = arith.constant dense<0.000000e+00> : vector<16x256xf32>
    %57 = tpu.matmul %38, %56, %cst_62 {dimension_numbers = #tpu.dot_dimension_numbers<[1], [0], [0], [1], [0, 0, 1, 1], [], []>} : vector<16x256xf32>, vector<256x256xf32>, vector<16x256xf32> -> vector<16x256xf32>
    %c5_63 = arith.constant 5 : index
    %c0_64 = arith.constant 0 : index
    %c0_65 = arith.constant 0 : index
    %58 = vector.load %arg2[%c5_63, %c0_64, %c0_65] : memref<9x256x256xf32, #tpu.memory_space<vmem>>, vector<1x256x256xf32>
    %59 = vector.shape_cast %58 : vector<1x256x256xf32> to vector<256x256xf32>
    %cst_66 = arith.constant dense<0.000000e+00> : vector<16x256xf32>
    %60 = tpu.matmul %38, %59, %cst_66 {dimension_numbers = #tpu.dot_dimension_numbers<[1], [0], [0], [1], [0, 0, 1, 1], [], []>} : vector<16x256xf32>, vector<256x256xf32>, vector<16x256xf32> -> vector<16x256xf32>
    %c6_67 = arith.constant 6 : index
    %c0_68 = arith.constant 0 : index
    %c0_69 = arith.constant 0 : index
    %61 = vector.load %arg2[%c6_67, %c0_68, %c0_69] : memref<9x256x256xf32, #tpu.memory_space<vmem>>, vector<1x256x256xf32>
    %62 = vector.shape_cast %61 : vector<1x256x256xf32> to vector<256x256xf32>
    %cst_70 = arith.constant dense<0.000000e+00> : vector<16x256xf32>
    %63 = tpu.matmul %38, %62, %cst_70 {dimension_numbers = #tpu.dot_dimension_numbers<[1], [0], [0], [1], [0, 0, 1, 1], [], []>} : vector<16x256xf32>, vector<256x256xf32>, vector<16x256xf32> -> vector<16x256xf32>
    %c7_71 = arith.constant 7 : index
    %c0_72 = arith.constant 0 : index
    %c0_73 = arith.constant 0 : index
    %64 = vector.load %arg2[%c7_71, %c0_72, %c0_73] : memref<9x256x256xf32, #tpu.memory_space<vmem>>, vector<1x256x256xf32>
    %65 = vector.shape_cast %64 : vector<1x256x256xf32> to vector<256x256xf32>
    %cst_74 = arith.constant dense<0.000000e+00> : vector<16x256xf32>
    %66 = tpu.matmul %38, %65, %cst_74 {dimension_numbers = #tpu.dot_dimension_numbers<[1], [0], [0], [1], [0, 0, 1, 1], [], []>} : vector<16x256xf32>, vector<256x256xf32>, vector<16x256xf32> -> vector<16x256xf32>
    %c8_75 = arith.constant 8 : index
    %c0_76 = arith.constant 0 : index
    %c0_77 = arith.constant 0 : index
    %67 = vector.load %arg2[%c8_75, %c0_76, %c0_77] : memref<9x256x256xf32, #tpu.memory_space<vmem>>, vector<1x256x256xf32>
    %68 = vector.shape_cast %67 : vector<1x256x256xf32> to vector<256x256xf32>
    %cst_78 = arith.constant dense<0.000000e+00> : vector<16x256xf32>
    %69 = tpu.matmul %38, %68, %cst_78 {dimension_numbers = #tpu.dot_dimension_numbers<[1], [0], [0], [1], [0, 0, 1, 1], [], []>} : vector<16x256xf32>, vector<256x256xf32>, vector<16x256xf32> -> vector<16x256xf32>
    %70 = tpu.concatenate %45, %48, %51, %54, %57, %60, %63, %66, %69 in 0 : vector<16x256xf32>, vector<16x256xf32>, vector<16x256xf32>, vector<16x256xf32>, vector<16x256xf32>, vector<16x256xf32>, vector<16x256xf32>, vector<16x256xf32>, vector<16x256xf32> -> vector<144x256xf32>
    %cst_79 = arith.constant dense<0.000000e+00> : vector<16x256xf32>
    %71 = tpu.matmul %40, %70, %cst_79 {dimension_numbers = #tpu.dot_dimension_numbers<[1], [0], [0], [1], [0, 0, 1, 1], [], []>} : vector<16x144xf32>, vector<144x256xf32>, vector<16x256xf32> -> vector<16x256xf32>
    %72 = vector.broadcast %42 : vector<16x1xf32> to vector<16x256xf32>
    %73 = arith.addf %71, %72 : vector<16x256xf32>
    %74 = arith.addf %73, %1 : vector<16x256xf32>
    %c2_80 = arith.constant 2 : index
    %c0_81 = arith.constant 0 : index
    %c0_82 = arith.constant 0 : index
    %75 = vector.load %arg3[%c2_80, %c0_81, %c0_82] : memref<4x16x144xf32, #tpu.memory_space<vmem>>, vector<1x16x144xf32>
    %76 = vector.shape_cast %75 : vector<1x16x144xf32> to vector<16x144xf32>
    %c2_83 = arith.constant 2 : index
    %c0_84 = arith.constant 0 : index
    %c0_85 = arith.constant 0 : index
    %77 = vector.load %arg4[%c2_83, %c0_84, %c0_85] : memref<4x16x1xf32, #tpu.memory_space<vmem>>, vector<1x16x1xf32>
    %78 = vector.shape_cast %77 : vector<1x16x1xf32> to vector<16x1xf32>
    %c0_86 = arith.constant 0 : index
    %c0_87 = arith.constant 0 : index
    %c0_88 = arith.constant 0 : index
    %79 = vector.load %arg2[%c0_86, %c0_87, %c0_88] : memref<9x256x256xf32, #tpu.memory_space<vmem>>, vector<1x256x256xf32>
    %80 = vector.shape_cast %79 : vector<1x256x256xf32> to vector<256x256xf32>
    %cst_89 = arith.constant dense<0.000000e+00> : vector<16x256xf32>
    %81 = tpu.matmul %74, %80, %cst_89 {dimension_numbers = #tpu.dot_dimension_numbers<[1], [0], [0], [1], [0, 0, 1, 1], [], []>} : vector<16x256xf32>, vector<256x256xf32>, vector<16x256xf32> -> vector<16x256xf32>
    %c1_90 = arith.constant 1 : index
    %c0_91 = arith.constant 0 : index
    %c0_92 = arith.constant 0 : index
    %82 = vector.load %arg2[%c1_90, %c0_91, %c0_92] : memref<9x256x256xf32, #tpu.memory_space<vmem>>, vector<1x256x256xf32>
    %83 = vector.shape_cast %82 : vector<1x256x256xf32> to vector<256x256xf32>
    %cst_93 = arith.constant dense<0.000000e+00> : vector<16x256xf32>
    %84 = tpu.matmul %74, %83, %cst_93 {dimension_numbers = #tpu.dot_dimension_numbers<[1], [0], [0], [1], [0, 0, 1, 1], [], []>} : vector<16x256xf32>, vector<256x256xf32>, vector<16x256xf32> -> vector<16x256xf32>
    %c2_94 = arith.constant 2 : index
    %c0_95 = arith.constant 0 : index
    %c0_96 = arith.constant 0 : index
    %85 = vector.load %arg2[%c2_94, %c0_95, %c0_96] : memref<9x256x256xf32, #tpu.memory_space<vmem>>, vector<1x256x256xf32>
    %86 = vector.shape_cast %85 : vector<1x256x256xf32> to vector<256x256xf32>
    %cst_97 = arith.constant dense<0.000000e+00> : vector<16x256xf32>
    %87 = tpu.matmul %74, %86, %cst_97 {dimension_numbers = #tpu.dot_dimension_numbers<[1], [0], [0], [1], [0, 0, 1, 1], [], []>} : vector<16x256xf32>, vector<256x256xf32>, vector<16x256xf32> -> vector<16x256xf32>
    %c3_98 = arith.constant 3 : index
    %c0_99 = arith.constant 0 : index
    %c0_100 = arith.constant 0 : index
    %88 = vector.load %arg2[%c3_98, %c0_99, %c0_100] : memref<9x256x256xf32, #tpu.memory_space<vmem>>, vector<1x256x256xf32>
    %89 = vector.shape_cast %88 : vector<1x256x256xf32> to vector<256x256xf32>
    %cst_101 = arith.constant dense<0.000000e+00> : vector<16x256xf32>
    %90 = tpu.matmul %74, %89, %cst_101 {dimension_numbers = #tpu.dot_dimension_numbers<[1], [0], [0], [1], [0, 0, 1, 1], [], []>} : vector<16x256xf32>, vector<256x256xf32>, vector<16x256xf32> -> vector<16x256xf32>
    %c4_102 = arith.constant 4 : index
    %c0_103 = arith.constant 0 : index
    %c0_104 = arith.constant 0 : index
    %91 = vector.load %arg2[%c4_102, %c0_103, %c0_104] : memref<9x256x256xf32, #tpu.memory_space<vmem>>, vector<1x256x256xf32>
    %92 = vector.shape_cast %91 : vector<1x256x256xf32> to vector<256x256xf32>
    %cst_105 = arith.constant dense<0.000000e+00> : vector<16x256xf32>
    %93 = tpu.matmul %74, %92, %cst_105 {dimension_numbers = #tpu.dot_dimension_numbers<[1], [0], [0], [1], [0, 0, 1, 1], [], []>} : vector<16x256xf32>, vector<256x256xf32>, vector<16x256xf32> -> vector<16x256xf32>
    %c5_106 = arith.constant 5 : index
    %c0_107 = arith.constant 0 : index
    %c0_108 = arith.constant 0 : index
    %94 = vector.load %arg2[%c5_106, %c0_107, %c0_108] : memref<9x256x256xf32, #tpu.memory_space<vmem>>, vector<1x256x256xf32>
    %95 = vector.shape_cast %94 : vector<1x256x256xf32> to vector<256x256xf32>
    %cst_109 = arith.constant dense<0.000000e+00> : vector<16x256xf32>
    %96 = tpu.matmul %74, %95, %cst_109 {dimension_numbers = #tpu.dot_dimension_numbers<[1], [0], [0], [1], [0, 0, 1, 1], [], []>} : vector<16x256xf32>, vector<256x256xf32>, vector<16x256xf32> -> vector<16x256xf32>
    %c6_110 = arith.constant 6 : index
    %c0_111 = arith.constant 0 : index
    %c0_112 = arith.constant 0 : index
    %97 = vector.load %arg2[%c6_110, %c0_111, %c0_112] : memref<9x256x256xf32, #tpu.memory_space<vmem>>, vector<1x256x256xf32>
    %98 = vector.shape_cast %97 : vector<1x256x256xf32> to vector<256x256xf32>
    %cst_113 = arith.constant dense<0.000000e+00> : vector<16x256xf32>
    %99 = tpu.matmul %74, %98, %cst_113 {dimension_numbers = #tpu.dot_dimension_numbers<[1], [0], [0], [1], [0, 0, 1, 1], [], []>} : vector<16x256xf32>, vector<256x256xf32>, vector<16x256xf32> -> vector<16x256xf32>
    %c7_114 = arith.constant 7 : index
    %c0_115 = arith.constant 0 : index
    %c0_116 = arith.constant 0 : index
    %100 = vector.load %arg2[%c7_114, %c0_115, %c0_116] : memref<9x256x256xf32, #tpu.memory_space<vmem>>, vector<1x256x256xf32>
    %101 = vector.shape_cast %100 : vector<1x256x256xf32> to vector<256x256xf32>
    %cst_117 = arith.constant dense<0.000000e+00> : vector<16x256xf32>
    %102 = tpu.matmul %74, %101, %cst_117 {dimension_numbers = #tpu.dot_dimension_numbers<[1], [0], [0], [1], [0, 0, 1, 1], [], []>} : vector<16x256xf32>, vector<256x256xf32>, vector<16x256xf32> -> vector<16x256xf32>
    %c8_118 = arith.constant 8 : index
    %c0_119 = arith.constant 0 : index
    %c0_120 = arith.constant 0 : index
    %103 = vector.load %arg2[%c8_118, %c0_119, %c0_120] : memref<9x256x256xf32, #tpu.memory_space<vmem>>, vector<1x256x256xf32>
    %104 = vector.shape_cast %103 : vector<1x256x256xf32> to vector<256x256xf32>
    %cst_121 = arith.constant dense<0.000000e+00> : vector<16x256xf32>
    %105 = tpu.matmul %74, %104, %cst_121 {dimension_numbers = #tpu.dot_dimension_numbers<[1], [0], [0], [1], [0, 0, 1, 1], [], []>} : vector<16x256xf32>, vector<256x256xf32>, vector<16x256xf32> -> vector<16x256xf32>
    %106 = tpu.concatenate %81, %84, %87, %90, %93, %96, %99, %102, %105 in 0 : vector<16x256xf32>, vector<16x256xf32>, vector<16x256xf32>, vector<16x256xf32>, vector<16x256xf32>, vector<16x256xf32>, vector<16x256xf32>, vector<16x256xf32>, vector<16x256xf32> -> vector<144x256xf32>
    %cst_122 = arith.constant dense<0.000000e+00> : vector<16x256xf32>
    %107 = tpu.matmul %76, %106, %cst_122 {dimension_numbers = #tpu.dot_dimension_numbers<[1], [0], [0], [1], [0, 0, 1, 1], [], []>} : vector<16x144xf32>, vector<144x256xf32>, vector<16x256xf32> -> vector<16x256xf32>
    %108 = vector.broadcast %78 : vector<16x1xf32> to vector<16x256xf32>
    %109 = arith.addf %107, %108 : vector<16x256xf32>
    %cst_123 = arith.constant 0.000000e+00 : f32
    %110 = vector.broadcast %cst_123 : f32 to vector<16x256xf32>
    %111 = arith.maximumf %109, %110 : vector<16x256xf32>
    %c3_124 = arith.constant 3 : index
    %c0_125 = arith.constant 0 : index
    %c0_126 = arith.constant 0 : index
    %112 = vector.load %arg3[%c3_124, %c0_125, %c0_126] : memref<4x16x144xf32, #tpu.memory_space<vmem>>, vector<1x16x144xf32>
    %113 = vector.shape_cast %112 : vector<1x16x144xf32> to vector<16x144xf32>
    %c3_127 = arith.constant 3 : index
    %c0_128 = arith.constant 0 : index
    %c0_129 = arith.constant 0 : index
    %114 = vector.load %arg4[%c3_127, %c0_128, %c0_129] : memref<4x16x1xf32, #tpu.memory_space<vmem>>, vector<1x16x1xf32>
    %115 = vector.shape_cast %114 : vector<1x16x1xf32> to vector<16x1xf32>
    %c0_130 = arith.constant 0 : index
    %c0_131 = arith.constant 0 : index
    %c0_132 = arith.constant 0 : index
    %116 = vector.load %arg2[%c0_130, %c0_131, %c0_132] : memref<9x256x256xf32, #tpu.memory_space<vmem>>, vector<1x256x256xf32>
    %117 = vector.shape_cast %116 : vector<1x256x256xf32> to vector<256x256xf32>
    %cst_133 = arith.constant dense<0.000000e+00> : vector<16x256xf32>
    %118 = tpu.matmul %111, %117, %cst_133 {dimension_numbers = #tpu.dot_dimension_numbers<[1], [0], [0], [1], [0, 0, 1, 1], [], []>} : vector<16x256xf32>, vector<256x256xf32>, vector<16x256xf32> -> vector<16x256xf32>
    %c1_134 = arith.constant 1 : index
    %c0_135 = arith.constant 0 : index
    %c0_136 = arith.constant 0 : index
    %119 = vector.load %arg2[%c1_134, %c0_135, %c0_136] : memref<9x256x256xf32, #tpu.memory_space<vmem>>, vector<1x256x256xf32>
    %120 = vector.shape_cast %119 : vector<1x256x256xf32> to vector<256x256xf32>
    %cst_137 = arith.constant dense<0.000000e+00> : vector<16x256xf32>
    %121 = tpu.matmul %111, %120, %cst_137 {dimension_numbers = #tpu.dot_dimension_numbers<[1], [0], [0], [1], [0, 0, 1, 1], [], []>} : vector<16x256xf32>, vector<256x256xf32>, vector<16x256xf32> -> vector<16x256xf32>
    %c2_138 = arith.constant 2 : index
    %c0_139 = arith.constant 0 : index
    %c0_140 = arith.constant 0 : index
    %122 = vector.load %arg2[%c2_138, %c0_139, %c0_140] : memref<9x256x256xf32, #tpu.memory_space<vmem>>, vector<1x256x256xf32>
    %123 = vector.shape_cast %122 : vector<1x256x256xf32> to vector<256x256xf32>
    %cst_141 = arith.constant dense<0.000000e+00> : vector<16x256xf32>
    %124 = tpu.matmul %111, %123, %cst_141 {dimension_numbers = #tpu.dot_dimension_numbers<[1], [0], [0], [1], [0, 0, 1, 1], [], []>} : vector<16x256xf32>, vector<256x256xf32>, vector<16x256xf32> -> vector<16x256xf32>
    %c3_142 = arith.constant 3 : index
    %c0_143 = arith.constant 0 : index
    %c0_144 = arith.constant 0 : index
    %125 = vector.load %arg2[%c3_142, %c0_143, %c0_144] : memref<9x256x256xf32, #tpu.memory_space<vmem>>, vector<1x256x256xf32>
    %126 = vector.shape_cast %125 : vector<1x256x256xf32> to vector<256x256xf32>
    %cst_145 = arith.constant dense<0.000000e+00> : vector<16x256xf32>
    %127 = tpu.matmul %111, %126, %cst_145 {dimension_numbers = #tpu.dot_dimension_numbers<[1], [0], [0], [1], [0, 0, 1, 1], [], []>} : vector<16x256xf32>, vector<256x256xf32>, vector<16x256xf32> -> vector<16x256xf32>
    %c4_146 = arith.constant 4 : index
    %c0_147 = arith.constant 0 : index
    %c0_148 = arith.constant 0 : index
    %128 = vector.load %arg2[%c4_146, %c0_147, %c0_148] : memref<9x256x256xf32, #tpu.memory_space<vmem>>, vector<1x256x256xf32>
    %129 = vector.shape_cast %128 : vector<1x256x256xf32> to vector<256x256xf32>
    %cst_149 = arith.constant dense<0.000000e+00> : vector<16x256xf32>
    %130 = tpu.matmul %111, %129, %cst_149 {dimension_numbers = #tpu.dot_dimension_numbers<[1], [0], [0], [1], [0, 0, 1, 1], [], []>} : vector<16x256xf32>, vector<256x256xf32>, vector<16x256xf32> -> vector<16x256xf32>
    %c5_150 = arith.constant 5 : index
    %c0_151 = arith.constant 0 : index
    %c0_152 = arith.constant 0 : index
    %131 = vector.load %arg2[%c5_150, %c0_151, %c0_152] : memref<9x256x256xf32, #tpu.memory_space<vmem>>, vector<1x256x256xf32>
    %132 = vector.shape_cast %131 : vector<1x256x256xf32> to vector<256x256xf32>
    %cst_153 = arith.constant dense<0.000000e+00> : vector<16x256xf32>
    %133 = tpu.matmul %111, %132, %cst_153 {dimension_numbers = #tpu.dot_dimension_numbers<[1], [0], [0], [1], [0, 0, 1, 1], [], []>} : vector<16x256xf32>, vector<256x256xf32>, vector<16x256xf32> -> vector<16x256xf32>
    %c6_154 = arith.constant 6 : index
    %c0_155 = arith.constant 0 : index
    %c0_156 = arith.constant 0 : index
    %134 = vector.load %arg2[%c6_154, %c0_155, %c0_156] : memref<9x256x256xf32, #tpu.memory_space<vmem>>, vector<1x256x256xf32>
    %135 = vector.shape_cast %134 : vector<1x256x256xf32> to vector<256x256xf32>
    %cst_157 = arith.constant dense<0.000000e+00> : vector<16x256xf32>
    %136 = tpu.matmul %111, %135, %cst_157 {dimension_numbers = #tpu.dot_dimension_numbers<[1], [0], [0], [1], [0, 0, 1, 1], [], []>} : vector<16x256xf32>, vector<256x256xf32>, vector<16x256xf32> -> vector<16x256xf32>
    %c7_158 = arith.constant 7 : index
    %c0_159 = arith.constant 0 : index
    %c0_160 = arith.constant 0 : index
    %137 = vector.load %arg2[%c7_158, %c0_159, %c0_160] : memref<9x256x256xf32, #tpu.memory_space<vmem>>, vector<1x256x256xf32>
    %138 = vector.shape_cast %137 : vector<1x256x256xf32> to vector<256x256xf32>
    %cst_161 = arith.constant dense<0.000000e+00> : vector<16x256xf32>
    %139 = tpu.matmul %111, %138, %cst_161 {dimension_numbers = #tpu.dot_dimension_numbers<[1], [0], [0], [1], [0, 0, 1, 1], [], []>} : vector<16x256xf32>, vector<256x256xf32>, vector<16x256xf32> -> vector<16x256xf32>
    %c8_162 = arith.constant 8 : index
    %c0_163 = arith.constant 0 : index
    %c0_164 = arith.constant 0 : index
    %140 = vector.load %arg2[%c8_162, %c0_163, %c0_164] : memref<9x256x256xf32, #tpu.memory_space<vmem>>, vector<1x256x256xf32>
    %141 = vector.shape_cast %140 : vector<1x256x256xf32> to vector<256x256xf32>
    %cst_165 = arith.constant dense<0.000000e+00> : vector<16x256xf32>
    %142 = tpu.matmul %111, %141, %cst_165 {dimension_numbers = #tpu.dot_dimension_numbers<[1], [0], [0], [1], [0, 0, 1, 1], [], []>} : vector<16x256xf32>, vector<256x256xf32>, vector<16x256xf32> -> vector<16x256xf32>
    %143 = tpu.concatenate %118, %121, %124, %127, %130, %133, %136, %139, %142 in 0 : vector<16x256xf32>, vector<16x256xf32>, vector<16x256xf32>, vector<16x256xf32>, vector<16x256xf32>, vector<16x256xf32>, vector<16x256xf32>, vector<16x256xf32>, vector<16x256xf32> -> vector<144x256xf32>
    %cst_166 = arith.constant dense<0.000000e+00> : vector<16x256xf32>
    %144 = tpu.matmul %113, %143, %cst_166 {dimension_numbers = #tpu.dot_dimension_numbers<[1], [0], [0], [1], [0, 0, 1, 1], [], []>} : vector<16x144xf32>, vector<144x256xf32>, vector<16x256xf32> -> vector<16x256xf32>
    %145 = vector.broadcast %115 : vector<16x1xf32> to vector<16x256xf32>
    %146 = arith.addf %144, %145 : vector<16x256xf32>
    %147 = arith.addf %146, %74 : vector<16x256xf32>
    %cst_167 = arith.constant dense<0.000000e+00> : vector<16xf32>
    %148 = vector.multi_reduction <add>, %147, %cst_167 [1] : vector<16x256xf32> to vector<16xf32>
    %149 = vector.shape_cast %148 : vector<16xf32> to vector<16x1xf32>
    %cst_168 = arith.constant 3.906250e-03 : f32
    %150 = vector.broadcast %cst_168 : f32 to vector<16x1xf32>
    %151 = arith.mulf %149, %150 : vector<16x1xf32>
    %152 = vector.broadcast %151 : vector<16x1xf32> to vector<16x256xf32>
    %153 = arith.subf %147, %152 : vector<16x256xf32>
    %cst_169 = arith.constant dense<0.000000e+00> : vector<16x16xf32>
    %154 = tpu.matmul %153, %153, %cst_169 {dimension_numbers = #tpu.dot_dimension_numbers<[1], [1], [0], [0], [0, 0, 1, 0], [], []>} : vector<16x256xf32>, vector<16x256xf32>, vector<16x16xf32> -> vector<16x16xf32>
    %cst_170 = arith.constant 3.906250e-03 : f32
    %155 = vector.broadcast %cst_170 : f32 to vector<16x16xf32>
    %156 = arith.mulf %154, %155 : vector<16x16xf32>
    %157 = tpu.iota {dimensions = array<i32: 0>} : vector<16x16xi32>
    %158 = tpu.iota {dimensions = array<i32: 1>} : vector<16x16xi32>
    %159 = arith.cmpi eq, %157, %158 : vector<16x16xi32>
    %160 = arith.extui %159 : vector<16x16xi1> to vector<16x16xi32>
    %161 = arith.sitofp %160 : vector<16x16xi32> to vector<16x16xf32>
    %cst_171 = arith.constant 3.000000e+00 : f32
    %162 = vector.broadcast %cst_171 : f32 to vector<16x16xf32>
    %163 = arith.mulf %162, %161 : vector<16x16xf32>
    %164 = arith.mulf %156, %161 : vector<16x16xf32>
    %165 = vector.shape_cast %164 : vector<16x16xf32> to vector<1x16x16xf32>
    %cst_172 = arith.constant dense<0.000000e+00> : vector<1xf32>
    %166 = vector.multi_reduction <add>, %165, %cst_172 [1, 2] : vector<1x16x16xf32> to vector<1xf32>
    %167 = vector.shape_cast %166 : vector<1xf32> to vector<1x1x1xf32>
    %168 = vector.extract %167[0, 0, 0] : f32 from vector<1x1x1xf32>
    %169 = vector.broadcast %168 : f32 to vector<16x16xf32>
    %170 = arith.divf %156, %169 : vector<16x16xf32>
    %171 = arith.subf %163, %170 : vector<16x16xf32>
    %cst_173 = arith.constant 5.000000e-01 : f32
    %172 = vector.broadcast %cst_173 : f32 to vector<16x16xf32>
    %173 = arith.mulf %172, %171 : vector<16x16xf32>
    %cst_174 = arith.constant dense<0.000000e+00> : vector<16x16xf32>
    %174 = tpu.matmul %170, %173, %cst_174 {dimension_numbers = #tpu.dot_dimension_numbers<[1], [0], [0], [1], [0, 0, 1, 1], [], []>} : vector<16x16xf32>, vector<16x16xf32>, vector<16x16xf32> -> vector<16x16xf32>
    %cst_175 = arith.constant dense<0.000000e+00> : vector<16x16xf32>
    %175 = tpu.matmul %173, %174, %cst_175 {dimension_numbers = #tpu.dot_dimension_numbers<[1], [0], [0], [1], [0, 0, 1, 1], [], []>} : vector<16x16xf32>, vector<16x16xf32>, vector<16x16xf32> -> vector<16x16xf32>
    %176 = arith.subf %163, %175 : vector<16x16xf32>
    %cst_176 = arith.constant 5.000000e-01 : f32
    %177 = vector.broadcast %cst_176 : f32 to vector<16x16xf32>
    %178 = arith.mulf %177, %176 : vector<16x16xf32>
    %cst_177 = arith.constant dense<0.000000e+00> : vector<16x16xf32>
    %179 = tpu.matmul %174, %178, %cst_177 {dimension_numbers = #tpu.dot_dimension_numbers<[1], [0], [0], [1], [0, 0, 1, 1], [], []>} : vector<16x16xf32>, vector<16x16xf32>, vector<16x16xf32> -> vector<16x16xf32>
    %cst_178 = arith.constant dense<0.000000e+00> : vector<16x16xf32>
    %180 = tpu.matmul %178, %173, %cst_178 {dimension_numbers = #tpu.dot_dimension_numbers<[1], [0], [0], [1], [0, 0, 1, 1], [], []>} : vector<16x16xf32>, vector<16x16xf32>, vector<16x16xf32> -> vector<16x16xf32>
    %cst_179 = arith.constant dense<0.000000e+00> : vector<16x16xf32>
    %181 = tpu.matmul %180, %179, %cst_179 {dimension_numbers = #tpu.dot_dimension_numbers<[1], [0], [0], [1], [0, 0, 1, 1], [], []>} : vector<16x16xf32>, vector<16x16xf32>, vector<16x16xf32> -> vector<16x16xf32>
    %182 = arith.subf %163, %181 : vector<16x16xf32>
    %cst_180 = arith.constant 5.000000e-01 : f32
    %183 = vector.broadcast %cst_180 : f32 to vector<16x16xf32>
    %184 = arith.mulf %183, %182 : vector<16x16xf32>
    %cst_181 = arith.constant dense<0.000000e+00> : vector<16x16xf32>
    %185 = tpu.matmul %179, %184, %cst_181 {dimension_numbers = #tpu.dot_dimension_numbers<[1], [0], [0], [1], [0, 0, 1, 1], [], []>} : vector<16x16xf32>, vector<16x16xf32>, vector<16x16xf32> -> vector<16x16xf32>
    %cst_182 = arith.constant dense<0.000000e+00> : vector<16x16xf32>
    %186 = tpu.matmul %184, %180, %cst_182 {dimension_numbers = #tpu.dot_dimension_numbers<[1], [0], [0], [1], [0, 0, 1, 1], [], []>} : vector<16x16xf32>, vector<16x16xf32>, vector<16x16xf32> -> vector<16x16xf32>
    %cst_183 = arith.constant dense<0.000000e+00> : vector<16x16xf32>
    %187 = tpu.matmul %186, %185, %cst_183 {dimension_numbers = #tpu.dot_dimension_numbers<[1], [0], [0], [1], [0, 0, 1, 1], [], []>} : vector<16x16xf32>, vector<16x16xf32>, vector<16x16xf32> -> vector<16x16xf32>
    %188 = arith.subf %163, %187 : vector<16x16xf32>
    %cst_184 = arith.constant 5.000000e-01 : f32
    %189 = vector.broadcast %cst_184 : f32 to vector<16x16xf32>
    %190 = arith.mulf %189, %188 : vector<16x16xf32>
    %cst_185 = arith.constant dense<0.000000e+00> : vector<16x16xf32>
    %191 = tpu.matmul %185, %190, %cst_185 {dimension_numbers = #tpu.dot_dimension_numbers<[1], [0], [0], [1], [0, 0, 1, 1], [], []>} : vector<16x16xf32>, vector<16x16xf32>, vector<16x16xf32> -> vector<16x16xf32>
    %cst_186 = arith.constant dense<0.000000e+00> : vector<16x16xf32>
    %192 = tpu.matmul %190, %186, %cst_186 {dimension_numbers = #tpu.dot_dimension_numbers<[1], [0], [0], [1], [0, 0, 1, 1], [], []>} : vector<16x16xf32>, vector<16x16xf32>, vector<16x16xf32> -> vector<16x16xf32>
    %cst_187 = arith.constant dense<0.000000e+00> : vector<16x16xf32>
    %193 = tpu.matmul %192, %191, %cst_187 {dimension_numbers = #tpu.dot_dimension_numbers<[1], [0], [0], [1], [0, 0, 1, 1], [], []>} : vector<16x16xf32>, vector<16x16xf32>, vector<16x16xf32> -> vector<16x16xf32>
    %194 = arith.subf %163, %193 : vector<16x16xf32>
    %cst_188 = arith.constant dense<0.000000e+00> : vector<16x16xf32>
    %195 = tpu.matmul %191, %194, %cst_188 {dimension_numbers = #tpu.dot_dimension_numbers<[1], [0], [0], [1], [0, 0, 1, 1], [], []>} : vector<16x16xf32>, vector<16x16xf32>, vector<16x16xf32> -> vector<16x16xf32>
    %cst_189 = arith.constant 5.000000e-01 : f32
    %196 = vector.broadcast %cst_189 : f32 to vector<16x16xf32>
    %197 = arith.mulf %196, %195 : vector<16x16xf32>
    %198 = math.sqrt %168 : f32
    %199 = vector.broadcast %198 : f32 to vector<16x16xf32>
    %200 = arith.mulf %197, %199 : vector<16x16xf32>
    %cst_190 = arith.constant 1.000000e+00 : f32
    %201 = vector.broadcast %cst_190 : f32 to vector<16x1xf32>
    %cst_191 = arith.constant dense<0.000000e+00> : vector<16x1xf32>
    %202 = tpu.matmul %200, %201, %cst_191 {dimension_numbers = #tpu.dot_dimension_numbers<[0], [0], [1], [1], [0, 1, 1, 1], [], []>} : vector<16x16xf32>, vector<16x1xf32>, vector<16x1xf32> -> vector<16x1xf32>
    %cst_192 = arith.constant 6.250000e-02 : f32
    %203 = vector.broadcast %cst_192 : f32 to vector<16x1xf32>
    %204 = arith.mulf %202, %203 : vector<16x1xf32>
    %c0_193 = arith.constant 0 : index
    %c0_194 = arith.constant 0 : index
    %205 = vector.load %arg5[%c0_193, %c0_194] : memref<4x16xf32, #tpu.memory_space<vmem>>, vector<4x16xf32>
    %cst_195 = arith.constant dense<0.000000e+00> : vector<4x1xf32>
    %206 = tpu.matmul %205, %204, %cst_195 {dimension_numbers = #tpu.dot_dimension_numbers<[1], [0], [0], [1], [0, 0, 1, 1], [], []>} : vector<4x16xf32>, vector<16x1xf32>, vector<4x1xf32> -> vector<4x1xf32>
    %c0_196 = arith.constant 0 : index
    %c0_197 = arith.constant 0 : index
    %207 = vector.load %arg6[%c0_196, %c0_197] : memref<4x1xf32, #tpu.memory_space<vmem>>, vector<4x1xf32>
    %208 = arith.addf %206, %207 : vector<4x1xf32>
    %cst_198 = arith.constant 0.000000e+00 : f32
    %209 = vector.broadcast %cst_198 : f32 to vector<4x1xf32>
    %210 = arith.maximumf %208, %209 : vector<4x1xf32>
    %c0_199 = arith.constant 0 : index
    %c0_200 = arith.constant 0 : index
    %211 = vector.load %arg7[%c0_199, %c0_200] : memref<16x4xf32, #tpu.memory_space<vmem>>, vector<16x4xf32>
    %cst_201 = arith.constant dense<0.000000e+00> : vector<16x1xf32>
    %212 = tpu.matmul %211, %210, %cst_201 {dimension_numbers = #tpu.dot_dimension_numbers<[1], [0], [0], [1], [0, 0, 1, 1], [], []>} : vector<16x4xf32>, vector<4x1xf32>, vector<16x1xf32> -> vector<16x1xf32>
    %c0_202 = arith.constant 0 : index
    %c0_203 = arith.constant 0 : index
    %213 = vector.load %arg8[%c0_202, %c0_203] : memref<16x1xf32, #tpu.memory_space<vmem>>, vector<16x1xf32>
    %214 = arith.addf %212, %213 : vector<16x1xf32>
    %215 = arith.negf %214 : vector<16x1xf32>
    %216 = math.exp %215 : vector<16x1xf32>
    %cst_204 = arith.constant 1.000000e+00 : f32
    %217 = vector.broadcast %cst_204 : f32 to vector<16x1xf32>
    %218 = arith.addf %217, %216 : vector<16x1xf32>
    %219 = arith.divf %217, %218 : vector<16x1xf32>
    %220 = vector.broadcast %219 : vector<16x1xf32> to vector<16x256xf32>
    %221 = arith.mulf %147, %220 : vector<16x256xf32>
    %c0_205 = arith.constant 0 : index
    %c0_206 = arith.constant 0 : index
    %222 = vector.load %arg9[%c0_205, %c0_206] : memref<16x144xf32, #tpu.memory_space<vmem>>, vector<16x144xf32>
    %c0_207 = arith.constant 0 : index
    %c0_208 = arith.constant 0 : index
    %223 = vector.load %arg10[%c0_207, %c0_208] : memref<16x1xf32, #tpu.memory_space<vmem>>, vector<16x1xf32>
    %c0_209 = arith.constant 0 : index
    %c0_210 = arith.constant 0 : index
    %c0_211 = arith.constant 0 : index
    %224 = vector.load %arg2[%c0_209, %c0_210, %c0_211] : memref<9x256x256xf32, #tpu.memory_space<vmem>>, vector<1x256x256xf32>
    %225 = vector.shape_cast %224 : vector<1x256x256xf32> to vector<256x256xf32>
    %cst_212 = arith.constant dense<0.000000e+00> : vector<16x256xf32>
    %226 = tpu.matmul %221, %225, %cst_212 {dimension_numbers = #tpu.dot_dimension_numbers<[1], [0], [0], [1], [0, 0, 1, 1], [], []>} : vector<16x256xf32>, vector<256x256xf32>, vector<16x256xf32> -> vector<16x256xf32>
    %c1_213 = arith.constant 1 : index
    %c0_214 = arith.constant 0 : index
    %c0_215 = arith.constant 0 : index
    %227 = vector.load %arg2[%c1_213, %c0_214, %c0_215] : memref<9x256x256xf32, #tpu.memory_space<vmem>>, vector<1x256x256xf32>
    %228 = vector.shape_cast %227 : vector<1x256x256xf32> to vector<256x256xf32>
    %cst_216 = arith.constant dense<0.000000e+00> : vector<16x256xf32>
    %229 = tpu.matmul %221, %228, %cst_216 {dimension_numbers = #tpu.dot_dimension_numbers<[1], [0], [0], [1], [0, 0, 1, 1], [], []>} : vector<16x256xf32>, vector<256x256xf32>, vector<16x256xf32> -> vector<16x256xf32>
    %c2_217 = arith.constant 2 : index
    %c0_218 = arith.constant 0 : index
    %c0_219 = arith.constant 0 : index
    %230 = vector.load %arg2[%c2_217, %c0_218, %c0_219] : memref<9x256x256xf32, #tpu.memory_space<vmem>>, vector<1x256x256xf32>
    %231 = vector.shape_cast %230 : vector<1x256x256xf32> to vector<256x256xf32>
    %cst_220 = arith.constant dense<0.000000e+00> : vector<16x256xf32>
    %232 = tpu.matmul %221, %231, %cst_220 {dimension_numbers = #tpu.dot_dimension_numbers<[1], [0], [0], [1], [0, 0, 1, 1], [], []>} : vector<16x256xf32>, vector<256x256xf32>, vector<16x256xf32> -> vector<16x256xf32>
    %c3_221 = arith.constant 3 : index
    %c0_222 = arith.constant 0 : index
    %c0_223 = arith.constant 0 : index
    %233 = vector.load %arg2[%c3_221, %c0_222, %c0_223] : memref<9x256x256xf32, #tpu.memory_space<vmem>>, vector<1x256x256xf32>
    %234 = vector.shape_cast %233 : vector<1x256x256xf32> to vector<256x256xf32>
    %cst_224 = arith.constant dense<0.000000e+00> : vector<16x256xf32>
    %235 = tpu.matmul %221, %234, %cst_224 {dimension_numbers = #tpu.dot_dimension_numbers<[1], [0], [0], [1], [0, 0, 1, 1], [], []>} : vector<16x256xf32>, vector<256x256xf32>, vector<16x256xf32> -> vector<16x256xf32>
    %c4_225 = arith.constant 4 : index
    %c0_226 = arith.constant 0 : index
    %c0_227 = arith.constant 0 : index
    %236 = vector.load %arg2[%c4_225, %c0_226, %c0_227] : memref<9x256x256xf32, #tpu.memory_space<vmem>>, vector<1x256x256xf32>
    %237 = vector.shape_cast %236 : vector<1x256x256xf32> to vector<256x256xf32>
    %cst_228 = arith.constant dense<0.000000e+00> : vector<16x256xf32>
    %238 = tpu.matmul %221, %237, %cst_228 {dimension_numbers = #tpu.dot_dimension_numbers<[1], [0], [0], [1], [0, 0, 1, 1], [], []>} : vector<16x256xf32>, vector<256x256xf32>, vector<16x256xf32> -> vector<16x256xf32>
    %c5_229 = arith.constant 5 : index
    %c0_230 = arith.constant 0 : index
    %c0_231 = arith.constant 0 : index
    %239 = vector.load %arg2[%c5_229, %c0_230, %c0_231] : memref<9x256x256xf32, #tpu.memory_space<vmem>>, vector<1x256x256xf32>
    %240 = vector.shape_cast %239 : vector<1x256x256xf32> to vector<256x256xf32>
    %cst_232 = arith.constant dense<0.000000e+00> : vector<16x256xf32>
    %241 = tpu.matmul %221, %240, %cst_232 {dimension_numbers = #tpu.dot_dimension_numbers<[1], [0], [0], [1], [0, 0, 1, 1], [], []>} : vector<16x256xf32>, vector<256x256xf32>, vector<16x256xf32> -> vector<16x256xf32>
    %c6_233 = arith.constant 6 : index
    %c0_234 = arith.constant 0 : index
    %c0_235 = arith.constant 0 : index
    %242 = vector.load %arg2[%c6_233, %c0_234, %c0_235] : memref<9x256x256xf32, #tpu.memory_space<vmem>>, vector<1x256x256xf32>
    %243 = vector.shape_cast %242 : vector<1x256x256xf32> to vector<256x256xf32>
    %cst_236 = arith.constant dense<0.000000e+00> : vector<16x256xf32>
    %244 = tpu.matmul %221, %243, %cst_236 {dimension_numbers = #tpu.dot_dimension_numbers<[1], [0], [0], [1], [0, 0, 1, 1], [], []>} : vector<16x256xf32>, vector<256x256xf32>, vector<16x256xf32> -> vector<16x256xf32>
    %c7_237 = arith.constant 7 : index
    %c0_238 = arith.constant 0 : index
    %c0_239 = arith.constant 0 : index
    %245 = vector.load %arg2[%c7_237, %c0_238, %c0_239] : memref<9x256x256xf32, #tpu.memory_space<vmem>>, vector<1x256x256xf32>
    %246 = vector.shape_cast %245 : vector<1x256x256xf32> to vector<256x256xf32>
    %cst_240 = arith.constant dense<0.000000e+00> : vector<16x256xf32>
    %247 = tpu.matmul %221, %246, %cst_240 {dimension_numbers = #tpu.dot_dimension_numbers<[1], [0], [0], [1], [0, 0, 1, 1], [], []>} : vector<16x256xf32>, vector<256x256xf32>, vector<16x256xf32> -> vector<16x256xf32>
    %c8_241 = arith.constant 8 : index
    %c0_242 = arith.constant 0 : index
    %c0_243 = arith.constant 0 : index
    %248 = vector.load %arg2[%c8_241, %c0_242, %c0_243] : memref<9x256x256xf32, #tpu.memory_space<vmem>>, vector<1x256x256xf32>
    %249 = vector.shape_cast %248 : vector<1x256x256xf32> to vector<256x256xf32>
    %cst_244 = arith.constant dense<0.000000e+00> : vector<16x256xf32>
    %250 = tpu.matmul %221, %249, %cst_244 {dimension_numbers = #tpu.dot_dimension_numbers<[1], [0], [0], [1], [0, 0, 1, 1], [], []>} : vector<16x256xf32>, vector<256x256xf32>, vector<16x256xf32> -> vector<16x256xf32>
    %251 = tpu.concatenate %226, %229, %232, %235, %238, %241, %244, %247, %250 in 0 : vector<16x256xf32>, vector<16x256xf32>, vector<16x256xf32>, vector<16x256xf32>, vector<16x256xf32>, vector<16x256xf32>, vector<16x256xf32>, vector<16x256xf32>, vector<16x256xf32> -> vector<144x256xf32>
    %cst_245 = arith.constant dense<0.000000e+00> : vector<16x256xf32>
    %252 = tpu.matmul %222, %251, %cst_245 {dimension_numbers = #tpu.dot_dimension_numbers<[1], [0], [0], [1], [0, 0, 1, 1], [], []>} : vector<16x144xf32>, vector<144x256xf32>, vector<16x256xf32> -> vector<16x256xf32>
    %253 = vector.broadcast %223 : vector<16x1xf32> to vector<16x256xf32>
    %254 = arith.addf %252, %253 : vector<16x256xf32>
    %255 = arith.addf %254, %1 : vector<16x256xf32>
    %c0_246 = arith.constant 0 : index
    %c0_247 = arith.constant 0 : index
    %c0_248 = arith.constant 0 : index
    %256 = vector.load %arg11[%c0_246, %c0_247, %c0_248] : memref<1x16x256xf32, #tpu.memory_space<vmem>>, vector<1x16x256xf32>
    %257 = vector.shape_cast %256 : vector<1x16x256xf32> to vector<16x256xf32>
    %258 = vector.shape_cast %255 : vector<16x256xf32> to vector<1x16x256xf32>
    tpu.vector_store %arg11[%c0_246, %c0_247, %c0_248], %258 {strides = array<i32>} : memref<1x16x256xf32, #tpu.memory_space<vmem>>, vector<1x16x256xf32>,
    return
  }
  func.func @transform_0(%arg0: i32) -> (i32, i32, i32) {
    %c0_i32 = arith.constant 0 : i32
    %c0_i32_0 = arith.constant 0 : i32
    %c0_i32_1 = arith.constant 0 : i32
    return %arg0, %c0_i32, %c0_i32_0 : i32, i32, i32
  }
  func.func @transform_1(%arg0: i32) -> (i32, i32, i32) {
    %c0_i32 = arith.constant 0 : i32
    %c0_i32_0 = arith.constant 0 : i32
    %c0_i32_1 = arith.constant 0 : i32
    %c0_i32_2 = arith.constant 0 : i32
    return %c0_i32, %c0_i32_0, %c0_i32_1 : i32, i32, i32
  }
  func.func @transform_2(%arg0: i32) -> (i32, i32, i32) {
    %c0_i32 = arith.constant 0 : i32
    %c0_i32_0 = arith.constant 0 : i32
    %c0_i32_1 = arith.constant 0 : i32
    %c0_i32_2 = arith.constant 0 : i32
    return %c0_i32, %c0_i32_0, %c0_i32_1 : i32, i32, i32
  }
  func.func @transform_3(%arg0: i32) -> (i32, i32, i32) {
    %c0_i32 = arith.constant 0 : i32
    %c0_i32_0 = arith.constant 0 : i32
    %c0_i32_1 = arith.constant 0 : i32
    %c0_i32_2 = arith.constant 0 : i32
    return %c0_i32, %c0_i32_0, %c0_i32_1 : i32, i32, i32
  }
  func.func @transform_4(%arg0: i32) -> (i32, i32) {
    %c0_i32 = arith.constant 0 : i32
    %c0_i32_0 = arith.constant 0 : i32
    %c0_i32_1 = arith.constant 0 : i32
    return %c0_i32, %c0_i32_0 : i32, i32
  }
  func.func @transform_5(%arg0: i32) -> (i32, i32) {
    %c0_i32 = arith.constant 0 : i32
    %c0_i32_0 = arith.constant 0 : i32
    %c0_i32_1 = arith.constant 0 : i32
    return %c0_i32, %c0_i32_0 : i32, i32
  }
  func.func @transform_6(%arg0: i32) -> (i32, i32) {
    %c0_i32 = arith.constant 0 : i32
    %c0_i32_0 = arith.constant 0 : i32
    %c0_i32_1 = arith.constant 0 : i32
    return %c0_i32, %c0_i32_0 : i32, i32
  }
  func.func @transform_7(%arg0: i32) -> (i32, i32) {
    %c0_i32 = arith.constant 0 : i32
    %c0_i32_0 = arith.constant 0 : i32
    %c0_i32_1 = arith.constant 0 : i32
    return %c0_i32, %c0_i32_0 : i32, i32
  }
  func.func @transform_8(%arg0: i32) -> (i32, i32) {
    %c0_i32 = arith.constant 0 : i32
    %c0_i32_0 = arith.constant 0 : i32
    %c0_i32_1 = arith.constant 0 : i32
    return %c0_i32, %c0_i32_0 : i32, i32
  }
  func.func @transform_9(%arg0: i32) -> (i32, i32) {
    %c0_i32 = arith.constant 0 : i32
    %c0_i32_0 = arith.constant 0 : i32
    %c0_i32_1 = arith.constant 0 : i32
    return %c0_i32, %c0_i32_0 : i32, i32
  }
  func.func @transform_10(%arg0: i32) -> (i32, i32, i32) {
    %c0_i32 = arith.constant 0 : i32
    %c0_i32_0 = arith.constant 0 : i32
    %c0_i32_1 = arith.constant 0 : i32
    return %arg0, %c0_i32, %c0_i32_0 : i32, i32, i32
  }
}

</mosaic_0001>

<llo_original>
// kernel: tpu_custom_call.1
$region0: #{tpu_custom_call.1}
  #allocation0 [shape = 'u32[]', space=smem, size = 0x4, offset = 0x4, fixed_abs, tag = 'smem constant byte address 0x4 - core index']
  #allocation1 [shape = 'u32[144,128]{1,0:T(1,128)}', space=vmem, size = 0x12000, scoped, tag = 'internal scratch']
  %s0 = inlined_call_operand.hbm [shape: f32[2,16,256], index: 0, kind: input, shape index: {}]
  %s1 = inlined_call_operand.hbm [shape: f32[9,256,256], index: 1, kind: input, shape index: {}]
  %s2 = inlined_call_operand.hbm [shape: f32[4,16,144], index: 2, kind: input, shape index: {}]
  %s3 = inlined_call_operand.vmem [shape: f32[4,16,1], index: 3, kind: input, shape index: {}]
  %s4 = inlined_call_operand.hbm [shape: f32[4,16], index: 4, kind: input, shape index: {}]
  %s5 = inlined_call_operand.vmem [shape: f32[4,1], index: 5, kind: input, shape index: {}]
  %s6 = inlined_call_operand.vmem [shape: f32[16,4], index: 6, kind: input, shape index: {}]
  %s7 = inlined_call_operand.vmem [shape: f32[16,1], index: 7, kind: input, shape index: {}]
  %s8 = inlined_call_operand.hbm [shape: f32[16,144], index: 8, kind: input, shape index: {}]
  %s9 = inlined_call_operand.vmem [shape: f32[16,1], index: 9, kind: input, shape index: {}]
  %s10 = inlined_call_operand.hbm [shape: f32[2,16,256], index: 10, kind: output, shape index: {}]
  %s11 = sld [smem:[#allocation0]]
  $region93: #{tpu_custom_call.1} parent=0
    _
  %s13 = ssub.s32 1, %s11
  %s14 = scalar_select 0, %s13, %s11
  $region1: #{tpu_custom_call.1} parent=0
    #allocation2 [shape = 'u8[32768]{0}', space=vmem, size = 0x8000, scoped, tag = 'input window, operand 0']
    #allocation3 [shape = 's32[2]{0}', space=sflag, size = 0x8, scoped, tag = 'scoped memory for tpu_custom_call.1']
    #allocation4 [shape = 's32[2]{0}', space=sflag, size = 0x8, scoped, tag = 'scoped memory for tpu_custom_call.1']
    #allocation5 [shape = 'u8[2359296]{0}', space=vmem, size = 0x240000, scoped, tag = 'input window, operand 1, single buffered']
    #allocation6 [shape = 's32[1]{0}', space=sflag, size = 0x4, scoped, tag = 'scoped memory for tpu_custom_call.1']
    #allocation7 [shape = 'u8[65536]{0}', space=vmem, size = 0x10000, scoped, tag = 'input window, operand 2, single buffered']
    #allocation8 [shape = 'u8[2048]{0}', space=vmem, size = 0x800, scoped, tag = 'input window, operand 4, single buffered']
    #allocation9 [shape = 's32[1]{0}', space=sflag, size = 0x4, scoped, tag = 'scoped memory for tpu_custom_call.1']
    #allocation10 [shape = 'u8[16384]{0}', space=vmem, size = 0x4000, scoped, tag = 'input window, operand 8, single buffered']
    #allocation11 [shape = 'u8[32768]{0}', space=vmem, size = 0x8000, scoped, tag = 'output window, operand 0']
    %15 = vsyncpa [#allocation3], 0
    %s16 = scalar_lea.sflag [#allocation3], 1
    %17 = vsyncpa %s16, 0
    %18 = vsyncpa [#allocation6], 0
    %19 = vsyncpa [#allocation9], 0
    %20 = vsyncpa [#allocation4], 0
    %s21 = scalar_lea.sflag [#allocation4], 1
    %22 = vsyncpa %s21, 0
    loop: start=0, step=1, limit=4
    $region2: #{tpu_custom_call.1} parent=1 // loop_pre_header
      _
    $region3: #{tpu_custom_call.1} parent=1 // loop_header
      %s24 = sphi 0, %s28
      %p25 = scmp.ge.s32.totalorder %s24, 4
      %s34 = sphi 0, %s36
      %s37 = sphi 0, %s34
      %s38 = sphi 0, %s37
      %s54 = sphi 0, %s38
      %s58 = sphi 0, %s58
      %s60 = sphi 0, %s58
      %s61 = sphi 0, %s60
      %s75 = sphi 0, %s61
      %s79 = sphi 0, %s79
      %s81 = sphi 0, %s79
      %s82 = sphi 0, %s81
      %s96 = sphi 0, %s82
      %s100 = sphi 0, %s100
      %s102 = sphi 0, %s100
      %s103 = sphi 0, %s102
      %s117 = sphi 0, %s103
      %s121 = sphi 0, %s121
      %s123 = sphi 0, %s121
      %s124 = sphi 0, %s123
      %s138 = sphi 0, %s124
      %s142 = sphi 0, %s142
      %s144 = sphi 0, %s142
      %s145 = sphi 0, %s144
      %s159 = sphi 0, %s145
      %s163 = sphi 0, %s163
      %s165 = sphi 0, %s163
      %s166 = sphi 0, %s165
      %s180 = sphi 0, %s166
      %s184 = sphi 0, %s184
      %s186 = sphi 0, %s184
      %s187 = sphi 0, %s186
      %s201 = sphi 0, %s187
      %s205 = sphi 0, %s205
      %s207 = sphi 0, %s205
      %s208 = sphi 0, %s207
      %s222 = sphi 0, %s208
      %s226 = sphi 0, %s226
      %s228 = sphi 0, %s226
      %s229 = sphi 0, %s228
      %s243 = sphi 0, %s229
      %s249 = sphi 0, %s251
      %s252 = sphi 0, %s249
      %s253 = sphi 0, %s252
      %s269 = sphi 0, %s253
    $region4: #{tpu_custom_call.1} parent=1 // loop_header_branch
      %27 = sbr.rel (%p25) target = $region8
    $region5: #{tpu_custom_call.1} parent=1 // loop_body
      %s29 = ssub.s32 %s24, 1
      %s30 = ssub.s32 %s24, 2
      %s31 = sadd.s32 %s24, 1
      %s32 = ssub.s32 %s24, %s31
      %p33 = scmp.eq.s32.totalorder %s32, 0
      %s35 = sadd.s32 %s34, 1
      %s36 = scalar_select %p33, %s34, %s35
      %p39 = pneg %p33
      %p40 = scmp.eq.s32.totalorder %s24, 1
      %p41 = por %p39, %p40
      %p42 = scmp.ne.s32.totalorder %s34, %s37
      %p43 = scmp.eq.s32.totalorder %s24, 0
      %p44 = por %p42, %p43
      %p45 = scmp.ne.s32.totalorder %s34, %s37
      %p46 = scmp.eq.s32.totalorder %s29, 1
      %p47 = por %p45, %p46
      %p48 = scmp.ne.s32.totalorder %s37, %s38
      %p49 = scmp.eq.s32.totalorder %s29, 0
      %p50 = por %p48, %p49
      %p51 = scmp.ne.s32.totalorder %s37, %s38
      %p52 = scmp.eq.s32.totalorder %s30, 1
      %p53 = por %p51, %p52
      %p55 = scmp.ne.s32.totalorder %s38, %s54
      %p56 = scmp.eq.s32.totalorder %s30, 0
      %p57 = por %p55, %p56
      %s59 = sadd.s32 %s58, 1
      %p62 = scmp.eq.s32.totalorder %s24, 1
      %p63 = scmp.ne.s32.totalorder %s58, %s60
      %p64 = scmp.eq.s32.totalorder %s24, 0
      %p65 = por %p63, %p64
      %p66 = scmp.ne.s32.totalorder %s58, %s60
      %p67 = scmp.eq.s32.totalorder %s29, 1
      %p68 = por %p66, %p67
      %p69 = scmp.ne.s32.totalorder %s60, %s61
      %p70 = scmp.eq.s32.totalorder %s29, 0
      %p71 = por %p69, %p70
      %p72 = scmp.ne.s32.totalorder %s60, %s61
      %p73 = scmp.eq.s32.totalorder %s30, 1
      %p74 = por %p72, %p73
      %p76 = scmp.ne.s32.totalorder %s61, %s75
      %p77 = scmp.eq.s32.totalorder %s30, 0
      %p78 = por %p76, %p77
      %s80 = sadd.s32 %s79, 1
      %p83 = scmp.eq.s32.totalorder %s24, 1
      %p84 = scmp.ne.s32.totalorder %s79, %s81
      %p85 = scmp.eq.s32.totalorder %s24, 0
      %p86 = por %p84, %p85
      %p87 = scmp.ne.s32.totalorder %s79, %s81
      %p88 = scmp.eq.s32.totalorder %s29, 1
      %p89 = por %p87, %p88
      %p90 = scmp.ne.s32.totalorder %s81, %s82
      %p91 = scmp.eq.s32.totalorder %s29, 0
      %p92 = por %p90, %p91
      %p93 = scmp.ne.s32.totalorder %s81, %s82
      %p94 = scmp.eq.s32.totalorder %s30, 1
      %p95 = por %p93, %p94
      %p97 = scmp.ne.s32.totalorder %s82, %s96
      %p98 = scmp.eq.s32.totalorder %s30, 0
      %p99 = por %p97, %p98
      %s101 = sadd.s32 %s100, 1
      %p104 = scmp.eq.s32.totalorder %s24, 1
      %p105 = scmp.ne.s32.totalorder %s100, %s102
      %p106 = scmp.eq.s32.totalorder %s24, 0
      %p107 = por %p105, %p106
      %p108 = scmp.ne.s32.totalorder %s100, %s102
      %p109 = scmp.eq.s32.totalorder %s29, 1
      %p110 = por %p108, %p109
      %p111 = scmp.ne.s32.totalorder %s102, %s103
      %p112 = scmp.eq.s32.totalorder %s29, 0
      %p113 = por %p111, %p112
      %p114 = scmp.ne.s32.totalorder %s102, %s103
      %p115 = scmp.eq.s32.totalorder %s30, 1
      %p116 = por %p114, %p115
      %p118 = scmp.ne.s32.totalorder %s103, %s117
      %p119 = scmp.eq.s32.totalorder %s30, 0
      %p120 = por %p118, %p119
      %s122 = sadd.s32 %s121, 1
      %p125 = scmp.eq.s32.totalorder %s24, 1
      %p126 = scmp.ne.s32.totalorder %s121, %s123
      %p127 = scmp.eq.s32.totalorder %s24, 0
      %p128 = por %p126, %p127
      %p129 = scmp.ne.s32.totalorder %s121, %s123
      %p130 = scmp.eq.s32.totalorder %s29, 1
      %p131 = por %p129, %p130
      %p132 = scmp.ne.s32.totalorder %s123, %s124
      %p133 = scmp.eq.s32.totalorder %s29, 0
      %p134 = por %p132, %p133
      %p135 = scmp.ne.s32.totalorder %s123, %s124
      %p136 = scmp.eq.s32.totalorder %s30, 1
      %p137 = por %p135, %p136
      %p139 = scmp.ne.s32.totalorder %s124, %s138
      %p140 = scmp.eq.s32.totalorder %s30, 0
      %p141 = por %p139, %p140
      %s143 = sadd.s32 %s142, 1
      %p146 = scmp.eq.s32.totalorder %s24, 1
      %p147 = scmp.ne.s32.totalorder %s142, %s144
      %p148 = scmp.eq.s32.totalorder %s24, 0
      %p149 = por %p147, %p148
      %p150 = scmp.ne.s32.totalorder %s142, %s144
      %p151 = scmp.eq.s32.totalorder %s29, 1
      %p152 = por %p150, %p151
      %p153 = scmp.ne.s32.totalorder %s144, %s145
      %p154 = scmp.eq.s32.totalorder %s29, 0
      %p155 = por %p153, %p154
      %p156 = scmp.ne.s32.totalorder %s144, %s145
      %p157 = scmp.eq.s32.totalorder %s30, 1
      %p158 = por %p156, %p157
      %p160 = scmp.ne.s32.totalorder %s145, %s159
      %p161 = scmp.eq.s32.totalorder %s30, 0
      %p162 = por %p160, %p161
      %s164 = sadd.s32 %s163, 1
      %p167 = scmp.eq.s32.totalorder %s24, 1
      %p168 = scmp.ne.s32.totalorder %s163, %s165
      %p169 = scmp.eq.s32.totalorder %s24, 0
      %p170 = por %p168, %p169
      %p171 = scmp.ne.s32.totalorder %s163, %s165
      %p172 = scmp.eq.s32.totalorder %s29, 1
      %p173 = por %p171, %p172
      %p174 = scmp.ne.s32.totalorder %s165, %s166
      %p175 = scmp.eq.s32.totalorder %s29, 0
      %p176 = por %p174, %p175
      %p177 = scmp.ne.s32.totalorder %s165, %s166
      %p178 = scmp.eq.s32.totalorder %s30, 1
      %p179 = por %p177, %p178
      %p181 = scmp.ne.s32.totalorder %s166, %s180
      %p182 = scmp.eq.s32.totalorder %s30, 0
      %p183 = por %p181, %p182
      %s185 = sadd.s32 %s184, 1
      %p188 = scmp.eq.s32.totalorder %s24, 1
      %p189 = scmp.ne.s32.totalorder %s184, %s186
      %p190 = scmp.eq.s32.totalorder %s24, 0
      %p191 = por %p189, %p190
      %p192 = scmp.ne.s32.totalorder %s184, %s186
      %p193 = scmp.eq.s32.totalorder %s29, 1
      %p194 = por %p192, %p193
      %p195 = scmp.ne.s32.totalorder %s186, %s187
      %p196 = scmp.eq.s32.totalorder %s29, 0
      %p197 = por %p195, %p196
      %p198 = scmp.ne.s32.totalorder %s186, %s187
      %p199 = scmp.eq.s32.totalorder %s30, 1
      %p200 = por %p198, %p199
      %p202 = scmp.ne.s32.totalorder %s187, %s201
      %p203 = scmp.eq.s32.totalorder %s30, 0
      %p204 = por %p202, %p203
      %s206 = sadd.s32 %s205, 1
      %p209 = scmp.eq.s32.totalorder %s24, 1
      %p210 = scmp.ne.s32.totalorder %s205, %s207
      %p211 = scmp.eq.s32.totalorder %s24, 0
      %p212 = por %p210, %p211
      %p213 = scmp.ne.s32.totalorder %s205, %s207
      %p214 = scmp.eq.s32.totalorder %s29, 1
      %p215 = por %p213, %p214
      %p216 = scmp.ne.s32.totalorder %s207, %s208
      %p217 = scmp.eq.s32.totalorder %s29, 0
      %p218 = por %p216, %p217
      %p219 = scmp.ne.s32.totalorder %s207, %s208
      %p220 = scmp.eq.s32.totalorder %s30, 1
      %p221 = por %p219, %p220
      %p223 = scmp.ne.s32.totalorder %s208, %s222
      %p224 = scmp.eq.s32.totalorder %s30, 0
      %p225 = por %p223, %p224
      %s227 = sadd.s32 %s226, 1
      %p230 = scmp.eq.s32.totalorder %s24, 1
      %p231 = scmp.ne.s32.totalorder %s226, %s228
      %p232 = scmp.eq.s32.totalorder %s24, 0
      %p233 = por %p231, %p232
      %p234 = scmp.ne.s32.totalorder %s226, %s228
      %p235 = scmp.eq.s32.totalorder %s29, 1
      %p236 = por %p234, %p235
      %p237 = scmp.ne.s32.totalorder %s228, %s229
      %p238 = scmp.eq.s32.totalorder %s29, 0
      %p239 = por %p237, %p238
      %p240 = scmp.ne.s32.totalorder %s228, %s229
      %p241 = scmp.eq.s32.totalorder %s30, 1
      %p242 = por %p240, %p241
      %p244 = scmp.ne.s32.totalorder %s229, %s243
      %p245 = scmp.eq.s32.totalorder %s30, 0
      %p246 = por %p244, %p245
      %s247 = ssub.s32 %s24, %s31
      %p248 = scmp.eq.s32.totalorder %s247, 0
      %s250 = sadd.s32 %s249, 1
      %s251 = scalar_select %p248, %s249, %s250
      %p254 = pneg %p248
      %p255 = scmp.eq.s32.totalorder %s24, 1
      %p256 = por %p254, %p255
      %p257 = scmp.ne.s32.totalorder %s249, %s252
      %p258 = scmp.eq.s32.totalorder %s24, 0
      %p259 = por %p257, %p258
      %p260 = scmp.ne.s32.totalorder %s249, %s252
      %p261 = scmp.eq.s32.totalorder %s29, 1
      %p262 = por %p260, %p261
      %p263 = scmp.ne.s32.totalorder %s252, %s253
      %p264 = scmp.eq.s32.totalorder %s29, 0
      %p265 = por %p263, %p264
      %p266 = scmp.ne.s32.totalorder %s252, %s253
      %p267 = scmp.eq.s32.totalorder %s30, 1
      %p268 = por %p266, %p267
      %p270 = scmp.ne.s32.totalorder %s253, %s269
      %p271 = scmp.eq.s32.totalorder %s30, 0
      %p272 = por %p270, %p271
      %p273 = scmp.le.s32.totalorder 1, %s24
      %p274 = scmp.lt.s32.totalorder %s24, 3
      %p275 = pnand %p273, %p274
      %p276 = pneg %p275
      // Predicated region
      $region9: #{tpu_custom_call.1} parent=5 // pred_check
        _
      $region10: #{tpu_custom_call.1} parent=5 // pred_check_branch
        %278 = sbr.rel (%p275) target = $region12
      $region11: #{tpu_custom_call.1} parent=5 // pred_region
        %s279 = ssub.s32 %s24, 1
        // Predicated region
        $region13: #{tpu_custom_call.1} parent=11 // pred_check
          %p280 = pneg %p71
        $region14: #{tpu_custom_call.1} parent=11 // pred_check_branch
          %282 = sbr.rel (%p280) target = $region16
        $region15: #{tpu_custom_call.1} parent=11 // pred_region
          %s284 = ssub.s32 73728, 73728
          %285 = vsyncadd [#allocation6], %s284
          %s286 = sshll.u32 [#allocation5], 4
          %s287 = int_to_ptr.vmem [resolvable:$true] %s286
          %292 = dma.hbm_to_vmem [thread:$0]  %s1, 73728, %s287, [#allocation6], 256, 256, 16
        $region16: #{tpu_custom_call.1} parent=11 // pred_fallthru
          _
        // Predicated region
        $region17: #{tpu_custom_call.1} parent=11 // pred_check
          %p293 = pneg %p92
        $region18: #{tpu_custom_call.1} parent=11 // pred_check_branch
          %295 = sbr.rel (%p293) target = $region20
        $region19: #{tpu_custom_call.1} parent=11 // pred_region
          %s297 = ssub.s32 2048, 2048
          %298 = vsyncadd [#allocation6], %s297
          %s299 = sshll.u32 [#allocation7], 4
          %s300 = int_to_ptr.vmem [resolvable:$true] %s299
          %305 = dma.hbm_to_vmem [thread:$0]  %s2, 2048, %s300, [#allocation6], 256, 256, 16
        $region20: #{tpu_custom_call.1} parent=11 // pred_fallthru
          _
        // Predicated region
        $region21: #{tpu_custom_call.1} parent=11 // pred_check
          %p306 = pneg %p113
        $region22: #{tpu_custom_call.1} parent=11 // pred_check_branch
          %308 = sbr.rel (%p306) target = $region24
        $region23: #{tpu_custom_call.1} parent=11 // pred_region
          _
        $region24: #{tpu_custom_call.1} parent=11 // pred_fallthru
          _
        // Predicated region
        $region25: #{tpu_custom_call.1} parent=11 // pred_check
          %p309 = pneg %p134
        $region26: #{tpu_custom_call.1} parent=11 // pred_check_branch
          %311 = sbr.rel (%p309) target = $region28
        $region27: #{tpu_custom_call.1} parent=11 // pred_region
          %s313 = ssub.s32 64, 64
          %314 = vsyncadd [#allocation9], %s313
          %s316 = sshll.u32 [#allocation8], 4
          %s317 = int_to_ptr.vmem [resolvable:$true] %s316
          %319 = dma.hbm_to_vmem [thread:$0]  %s4, 64, %s317, [#allocation9]
        $region28: #{tpu_custom_call.1} parent=11 // pred_fallthru
          _
        // Predicated region
        $region29: #{tpu_custom_call.1} parent=11 // pred_check
          %p320 = pneg %p155
        $region30: #{tpu_custom_call.1} parent=11 // pred_check_branch
          %322 = sbr.rel (%p320) target = $region32
        $region31: #{tpu_custom_call.1} parent=11 // pred_region
          _
        $region32: #{tpu_custom_call.1} parent=11 // pred_fallthru
          _
        // Predicated region
        $region33: #{tpu_custom_call.1} parent=11 // pred_check
          %p323 = pneg %p176
        $region34: #{tpu_custom_call.1} parent=11 // pred_check_branch
          %325 = sbr.rel (%p323) target = $region36
        $region35: #{tpu_custom_call.1} parent=11 // pred_region
          _
        $region36: #{tpu_custom_call.1} parent=11 // pred_fallthru
          _
        // Predicated region
        $region37: #{tpu_custom_call.1} parent=11 // pred_check
          %p326 = pneg %p197
        $region38: #{tpu_custom_call.1} parent=11 // pred_check_branch
          %328 = sbr.rel (%p326) target = $region40
        $region39: #{tpu_custom_call.1} parent=11 // pred_region
          _
        $region40: #{tpu_custom_call.1} parent=11 // pred_fallthru
          _
        // Predicated region
        $region41: #{tpu_custom_call.1} parent=11 // pred_check
          %p329 = pneg %p218
        $region42: #{tpu_custom_call.1} parent=11 // pred_check_branch
          %331 = sbr.rel (%p329) target = $region44
        $region43: #{tpu_custom_call.1} parent=11 // pred_region
          %s333 = ssub.s32 512, 512
          %334 = vsyncadd [#allocation9], %s333
          %s335 = sshll.u32 [#allocation10], 4
          %s336 = int_to_ptr.vmem [resolvable:$true] %s335
          %341 = dma.hbm_to_vmem [thread:$0]  %s8, 512, %s336, [#allocation9], 256, 256, 16
        $region44: #{tpu_custom_call.1} parent=11 // pred_fallthru
          _
        // Predicated region
        $region45: #{tpu_custom_call.1} parent=11 // pred_check
          %p342 = pneg %p239
        $region46: #{tpu_custom_call.1} parent=11 // pred_check_branch
          %344 = sbr.rel (%p342) target = $region48
        $region47: #{tpu_custom_call.1} parent=11 // pred_region
          _
        $region48: #{tpu_custom_call.1} parent=11 // pred_fallthru
          _
      $region12: #{tpu_custom_call.1} parent=5 // pred_fallthru
        _
      %p345 = scmp.lt.s32.totalorder %s24, 2
      // Predicated region
      $region49: #{tpu_custom_call.1} parent=5 // pred_check
        %p346 = pneg %p345
      $region50: #{tpu_custom_call.1} parent=5 // pred_check_branch
        %348 = sbr.rel (%p346) target = $region52
      $region51: #{tpu_custom_call.1} parent=5 // pred_region
        // Predicated region
        $region53: #{tpu_custom_call.1} parent=51 // pred_check
          %p349 = pneg %p44
        $region54: #{tpu_custom_call.1} parent=51 // pred_check_branch
          %351 = sbr.rel (%p349) target = $region56
        $region55: #{tpu_custom_call.1} parent=51 // pred_region
          %s352 = sand.u32 %s34, 1
          %s353 = scalar_lea.sflag [#allocation3], %s352
          %s354 = sand.u32 %s34, 1
          %s355 = smul.addr %s354, 32
          %s356 = scalar_lea.vmem [#allocation2], %s355
          %s358 = ssub.s32 512, 512
          %359 = vsyncadd %s353, %s358
          %s360 = smul.addr %s24, 4
          %s361 = smul.addr %s360, 128
          %s362 = scalar_lea.hbm %s0, %s361
          %s363 = sshll.u32 %s356, 4
          %s364 = int_to_ptr.vmem [resolvable:$true] %s363
          %369 = dma.hbm_to_vmem [thread:$0]  %s362, 512, %s364, %s353, 256, 256, 16
        $region56: #{tpu_custom_call.1} parent=51 // pred_fallthru
          _
      $region52: #{tpu_custom_call.1} parent=5 // pred_fallthru
        _
      %p370 = scmp.le.s32.totalorder 1, %s24
      %p371 = scmp.lt.s32.totalorder %s24, 3
      %p372 = pnand %p370, %p371
      %p373 = pneg %p372
      // Predicated region
      $region57: #{tpu_custom_call.1} parent=5 // pred_check
        _
      $region58: #{tpu_custom_call.1} parent=5 // pred_check_branch
        %375 = sbr.rel (%p372) target = $region60
      $region59: #{tpu_custom_call.1} parent=5 // pred_region
        %s376 = ssub.s32 %s24, 1
        %s377 = sand.u32 %s37, 1
        %s378 = scalar_lea.sflag [#allocation3], %s377
        %s379 = sand.u32 %s37, 1
        %s380 = smul.addr %s379, 32
        %s381 = scalar_lea.vmem [#allocation2], %s380
        // Predicated region
        $region61: #{tpu_custom_call.1} parent=59 // pred_check
          %p382 = pneg %p50
        $region62: #{tpu_custom_call.1} parent=59 // pred_check_branch
          %384 = sbr.rel (%p382) target = $region64
        $region63: #{tpu_custom_call.1} parent=59 // pred_region
          %385 = dma.done %s378, 512
        $region64: #{tpu_custom_call.1} parent=59 // pred_fallthru
          _
        // Predicated region
        $region65: #{tpu_custom_call.1} parent=59 // pred_check
          %p386 = pneg %p71
        $region66: #{tpu_custom_call.1} parent=59 // pred_check_branch
          %388 = sbr.rel (%p386) target = $region68
        $region67: #{tpu_custom_call.1} parent=59 // pred_region
          %389 = dma.done [#allocation6], 73728
        $region68: #{tpu_custom_call.1} parent=59 // pred_fallthru
          _
        // Predicated region
        $region69: #{tpu_custom_call.1} parent=59 // pred_check
          %p390 = pneg %p92
        $region70: #{tpu_custom_call.1} parent=59 // pred_check_branch
          %392 = sbr.rel (%p390) target = $region72
        $region71: #{tpu_custom_call.1} parent=59 // pred_region
          %393 = dma.done [#allocation6], 2048
        $region72: #{tpu_custom_call.1} parent=59 // pred_fallthru
          _
        // Predicated region
        $region73: #{tpu_custom_call.1} parent=59 // pred_check
          %p394 = pneg %p134
        $region74: #{tpu_custom_call.1} parent=59 // pred_check_branch
          %396 = sbr.rel (%p394) target = $region76
        $region75: #{tpu_custom_call.1} parent=59 // pred_region
          %397 = dma.done [#allocation9], 64
        $region76: #{tpu_custom_call.1} parent=59 // pred_fallthru
          _
        // Predicated region
        $region77: #{tpu_custom_call.1} parent=59 // pred_check
          %p398 = pneg %p218
        $region78: #{tpu_custom_call.1} parent=59 // pred_check_branch
          %400 = sbr.rel (%p398) target = $region80
        $region79: #{tpu_custom_call.1} parent=59 // pred_region
          %401 = dma.done [#allocation9], 512
        $region80: #{tpu_custom_call.1} parent=59 // pred_fallthru
          _
        %s402 = sand.u32 %s37, 1
        %s403 = scalar_lea.sflag [#allocation3], %s402
        %s404 = sand.u32 %s37, 1
        %s405 = smul.addr %s404, 32
        %s406 = scalar_lea.vmem [#allocation2], %s405
        %p407 = pneg %p50
        %p408 = pneg %p47
        %p409 = pneg %p71
        %p410 = pneg %p68
        %p411 = pneg %p92
        %p412 = pneg %p89
        %p413 = pneg %p113
        %p414 = pneg %p110
        %p415 = pneg %p134
        %p416 = pneg %p131
        %p417 = pneg %p155
        %p418 = pneg %p152
        %p419 = pneg %p176
        %p420 = pneg %p173
        %p421 = pneg %p197
        %p422 = pneg %p194
        %p423 = pneg %p218
        %p424 = pneg %p215
        %p425 = pneg %p239
        %p426 = pneg %p236
        %p427 = pneg %p265
        %p428 = pneg %p262
        %s429 = sand.u32 %s252, 1
        %s430 = scalar_lea.sflag [#allocation4], %s429
        %s431 = sand.u32 %s252, 1
        %s432 = smul.addr %s431, 32
        %s433 = scalar_lea.vmem [#allocation11], %s432
        %v434 = vld [vmem:[%s381] sm:$0xff]
        %v435 = vld [vmem:[%s381 + $0x8] sm:$0xff]
        %v436 = vld [vmem:[%s381 + $0x10] sm:$0xff]
        %v437 = vld [vmem:[%s381 + $0x18] sm:$0xff]
        %v438 = vld [vmem:[#allocation7] sm:$0xff]
        %v439 = vld [vmem:[#allocation7 + $0x8] sm:$0xff]
        %v440 = vld [vmem:[#allocation7 + $0x10] sm:$0xff]
        %v441 = vld [vmem:[#allocation7 + $0x18] sm:$0xff]
        %v442 = vld [vmem:[%s3] sm:$0xff]
        %v443 = vld [vmem:[%s3 + $0x8] sm:$0xff]
        %v444 = vld [vmem:[#allocation5] sm:$0xff]
        %v445 = vld [vmem:[#allocation5 + $0x8] sm:$0xff]
        %v446 = vld [vmem:[#allocation5 + $0x10] sm:$0xff]
        %v447 = vld [vmem:[#allocation5 + $0x18] sm:$0xff]
        %v448 = vld [vmem:[#allocation5 + $0x20] sm:$0xff]
        %v449 = vld [vmem:[#allocation5 + $0x28] sm:$0xff]
        %v450 = vld [vmem:[#allocation5 + $0x30] sm:$0xff]
        %v451 = vld [vmem:[#allocation5 + $0x38] sm:$0xff]
        %v452 = vld [vmem:[#allocation5 + $0x40] sm:$0xff]
        %v453 = vld [vmem:[#allocation5 + $0x48] sm:$0xff]
        %v454 = vld [vmem:[#allocation5 + $0x50] sm:$0xff]
        %v455 = vld [vmem:[#allocation5 + $0x58] sm:$0xff]
        %v456 = vld [vmem:[#allocation5 + $0x60] sm:$0xff]
        %v457 = vld [vmem:[#allocation5 + $0x68] sm:$0xff]
        %v458 = vld [vmem:[#allocation5 + $0x70] sm:$0xff]
        %v459 = vld [vmem:[#allocation5 + $0x78] sm:$0xff]
        %v460 = vld [vmem:[#allocation5 + $0x80] sm:$0xff]
        %v461 = vld [vmem:[#allocation5 + $0x88] sm:$0xff]
        %v462 = vld [vmem:[#allocation5 + $0x90] sm:$0xff]
        %v463 = vld [vmem:[#allocation5 + $0x98] sm:$0xff]
        %v464 = vld [vmem:[#allocation5 + $0xa0] sm:$0xff]
        %v465 = vld [vmem:[#allocation5 + $0xa8] sm:$0xff]
        %v466 = vld [vmem:[#allocation5 + $0xb0] sm:$0xff]
        %v467 = vld [vmem:[#allocation5 + $0xb8] sm:$0xff]
        %v468 = vld [vmem:[#allocation5 + $0xc0] sm:$0xff]
        %v469 = vld [vmem:[#allocation5 + $0xc8] sm:$0xff]
        %v470 = vld [vmem:[#allocation5 + $0xd0] sm:$0xff]
        %v471 = vld [vmem:[#allocation5 + $0xd8] sm:$0xff]
        %v472 = vld [vmem:[#allocation5 + $0xe0] sm:$0xff]
        %v473 = vld [vmem:[#allocation5 + $0xe8] sm:$0xff]
        %v474 = vld [vmem:[#allocation5 + $0xf0] sm:$0xff]
        %v475 = vld [vmem:[#allocation5 + $0xf8] sm:$0xff]
        %v476 = vld [vmem:[#allocation5 + $0x100] sm:$0xff]
        %v477 = vld [vmem:[#allocation5 + $0x108] sm:$0xff]
        %v478 = vld [vmem:[#allocation5 + $0x110] sm:$0xff]
        %v479 = vld [vmem:[#allocation5 + $0x118] sm:$0xff]
        %v480 = vld [vmem:[#allocation5 + $0x120] sm:$0xff]
        %v481 = vld [vmem:[#allocation5 + $0x128] sm:$0xff]
        %v482 = vld [vmem:[#allocation5 + $0x130] sm:$0xff]
        %v483 = vld [vmem:[#allocation5 + $0x138] sm:$0xff]
        %v484 = vld [vmem:[#allocation5 + $0x140] sm:$0xff]
        %v485 = vld [vmem:[#allocation5 + $0x148] sm:$0xff]
        %v486 = vld [vmem:[#allocation5 + $0x150] sm:$0xff]
        %v487 = vld [vmem:[#allocation5 + $0x158] sm:$0xff]
        %v488 = vld [vmem:[#allocation5 + $0x160] sm:$0xff]
        %v489 = vld [vmem:[#allocation5 + $0x168] sm:$0xff]
        %v490 = vld [vmem:[#allocation5 + $0x170] sm:$0xff]
        %v491 = vld [vmem:[#allocation5 + $0x178] sm:$0xff]
        %v492 = vld [vmem:[#allocation5 + $0x180] sm:$0xff]
        %v493 = vld [vmem:[#allocation5 + $0x188] sm:$0xff]
        %v494 = vld [vmem:[#allocation5 + $0x190] sm:$0xff]
        %v495 = vld [vmem:[#allocation5 + $0x198] sm:$0xff]
        %v496 = vld [vmem:[#allocation5 + $0x1a0] sm:$0xff]
        %v497 = vld [vmem:[#allocation5 + $0x1a8] sm:$0xff]
        %v498 = vld [vmem:[#allocation5 + $0x1b0] sm:$0xff]
        %v499 = vld [vmem:[#allocation5 + $0x1b8] sm:$0xff]
        %v500 = vld [vmem:[#allocation5 + $0x1c0] sm:$0xff]
        %v501 = vld [vmem:[#allocation5 + $0x1c8] sm:$0xff]
        %v502 = vld [vmem:[#allocation5 + $0x1d0] sm:$0xff]
        %v503 = vld [vmem:[#allocation5 + $0x1d8] sm:$0xff]
        %v504 = vld [vmem:[#allocation5 + $0x1e0] sm:$0xff]
        %v505 = vld [vmem:[#allocation5 + $0x1e8] sm:$0xff]
        %v506 = vld [vmem:[#allocation5 + $0x1f0] sm:$0xff]
        %v507 = vld [vmem:[#allocation5 + $0x1f8] sm:$0xff]
        %508 = vmatprep.subr.mxu0 %v445
        %509 = vmatpush1.msra.mxu0 %v444
        %510 = vmatprep.subr.mxu0 %v447
        %511 = vmatpush1.msra.mxu0 %v446
        %512 = vmatprep.subr.mxu0 %v449
        %513 = vmatpush1.msra.mxu0 %v448
        %514 = vmatprep.subr.mxu0 %v451
        %515 = vmatpush1.msra.mxu0 %v450
        %516 = vmatprep.subr.mxu0 %v453
        %517 = vmatpush1.msra.mxu0 %v452
        %518 = vmatprep.subr.mxu0 %v455
        %519 = vmatpush1.msra.mxu0 %v454
        %520 = vmatprep.subr.mxu0 %v457
        %521 = vmatpush1.msra.mxu0 %v456
        %522 = vmatprep.subr.mxu0 %v459
        %523 = vmatpush1.msra.mxu0 %v458
        %524 = vmatprep.subr.mxu0 %v461
        %525 = vmatpush1.msra.mxu0 %v460
        %526 = vmatprep.subr.mxu0 %v463
        %527 = vmatpush1.msra.mxu0 %v462
        %528 = vmatprep.subr.mxu0 %v465
        %529 = vmatpush1.msra.mxu0 %v464
        %530 = vmatprep.subr.mxu0 %v467
        %531 = vmatpush1.msra.mxu0 %v466
        %532 = vmatprep.subr.mxu0 %v469
        %533 = vmatpush1.msra.mxu0 %v468
        %534 = vmatprep.subr.mxu0 %v471
        %535 = vmatpush1.msra.mxu0 %v470
        %536 = vmatprep.subr.mxu0 %v473
        %537 = vmatpush1.msra.mxu0 %v472
        %538 = vmatprep.subr.mxu0 %v475
        %539 = vmatpush1.msra.mxu0 %v474
        %540 = vmatprep.subr.mxu0 %v477
        %541 = vmatpush1.msra.mxu0 %v476
        %542 = vmatprep.subr.mxu0 %v479
        %543 = vmatpush1.msra.mxu0 %v478
        %544 = vmatprep.subr.mxu0 %v481
        %545 = vmatpush1.msra.mxu0 %v480
        %546 = vmatprep.subr.mxu0 %v483
        %547 = vmatpush1.msra.mxu0 %v482
        %548 = vmatprep.subr.mxu0 %v485
        %549 = vmatpush1.msra.mxu0 %v484
        %550 = vmatprep.subr.mxu0 %v487
        %551 = vmatpush1.msra.mxu0 %v486
        %552 = vmatprep.subr.mxu0 %v489
        %553 = vmatpush1.msra.mxu0 %v488
        %554 = vmatprep.subr.mxu0 %v491
        %555 = vmatpush1.msra.mxu0 %v490
        %556 = vmatprep.subr.mxu0 %v493
        %557 = vmatpush1.msra.mxu0 %v492
        %558 = vmatprep.subr.mxu0 %v495
        %559 = vmatpush1.msra.mxu0 %v494
        %560 = vmatprep.subr.mxu0 %v497
        %561 = vmatpush1.msra.mxu0 %v496
        %562 = vmatprep.subr.mxu0 %v499
        %563 = vmatpush1.msra.mxu0 %v498
        %564 = vmatprep.subr.mxu0 %v501
        %565 = vmatpush1.msra.mxu0 %v500
        %566 = vmatprep.subr.mxu0 %v503
        %567 = vmatpush1.msra.mxu0 %v502
        %568 = vmatprep.subr.mxu0 %v505
        %569 = vmatpush1.msra.mxu0 %v504
        %570 = vmatprep.subr.mxu0 %v507
        %571 = vmatpush1.msra.mxu0 %v506
        %572 = vmatprep.mubr.f32.mxu0 %v435
        %573 = vmatmul.mubr.f32.gmra.mrb[0].mxu0 %v434
        %v574 = vpop.f32.mrb[0].mxu0
        %v575 = vadd.f32 0.0, %v574
        %v576 = vpop.f32.mrb[0].mxu0
        %v577 = vadd.f32 0.0, %v576
        %578 = vmatprep.mubr.f32.mxu0 %v437
        %579 = vmatmul.mubr.f32.gmra.mrb[0].mxu0 %v436
        %v580 = vpop.f32.mrb[0].mxu0
        %v581 = vadd.f32 0.0, %v580
        %v582 = vpop.f32.mrb[0].mxu0
        %v583 = vadd.f32 0.0, %v582
        %584 = vdwg.mxu0
        %s585 = scalar_lea.vmem [#allocation5], 512
        %v586 = vld [vmem:[%s585] sm:$0xff]
        %v587 = vld [vmem:[%s585 + $0x8] sm:$0xff]
        %v588 = vld [vmem:[%s585 + $0x10] sm:$0xff]
        %v589 = vld [vmem:[%s585 + $0x18] sm:$0xff]
        %v590 = vld [vmem:[%s585 + $0x20] sm:$0xff]
        %v591 = vld [vmem:[%s585 + $0x28] sm:$0xff]
        %v592 = vld [vmem:[%s585 + $0x30] sm:$0xff]
        %v593 = vld [vmem:[%s585 + $0x38] sm:$0xff]
        %v594 = vld [vmem:[%s585 + $0x40] sm:$0xff]
        %v595 = vld [vmem:[%s585 + $0x48] sm:$0xff]
        %v596 = vld [vmem:[%s585 + $0x50] sm:$0xff]
        %v597 = vld [vmem:[%s585 + $0x58] sm:$0xff]
        %v598 = vld [vmem:[%s585 + $0x60] sm:$0xff]
        %v599 = vld [vmem:[%s585 + $0x68] sm:$0xff]
        %v600 = vld [vmem:[%s585 + $0x70] sm:$0xff]
        %v601 = vld [vmem:[%s585 + $0x78] sm:$0xff]
        %v602 = vld [vmem:[%s585 + $0x80] sm:$0xff]
        %v603 = vld [vmem:[%s585 + $0x88] sm:$0xff]
        %v604 = vld [vmem:[%s585 + $0x90] sm:$0xff]
        %v605 = vld [vmem:[%s585 + $0x98] sm:$0xff]
        %v606 = vld [vmem:[%s585 + $0xa0] sm:$0xff]
        %v607 = vld [vmem:[%s585 + $0xa8] sm:$0xff]
        %v608 = vld [vmem:[%s585 + $0xb0] sm:$0xff]
        %v609 = vld [vmem:[%s585 + $0xb8] sm:$0xff]
        %v610 = vld [vmem:[%s585 + $0xc0] sm:$0xff]
        %v611 = vld [vmem:[%s585 + $0xc8] sm:$0xff]
        %v612 = vld [vmem:[%s585 + $0xd0] sm:$0xff]
        %v613 = vld [vmem:[%s585 + $0xd8] sm:$0xff]
        %v614 = vld [vmem:[%s585 + $0xe0] sm:$0xff]
        %v615 = vld [vmem:[%s585 + $0xe8] sm:$0xff]
        %v616 = vld [vmem:[%s585 + $0xf0] sm:$0xff]
        %v617 = vld [vmem:[%s585 + $0xf8] sm:$0xff]
        %v618 = vld [vmem:[%s585 + $0x100] sm:$0xff]
        %v619 = vld [vmem:[%s585 + $0x108] sm:$0xff]
        %v620 = vld [vmem:[%s585 + $0x110] sm:$0xff]
        %v621 = vld [vmem:[%s585 + $0x118] sm:$0xff]
        %v622 = vld [vmem:[%s585 + $0x120] sm:$0xff]
        %v623 = vld [vmem:[%s585 + $0x128] sm:$0xff]
        %v624 = vld [vmem:[%s585 + $0x130] sm:$0xff]
        %v625 = vld [vmem:[%s585 + $0x138] sm:$0xff]
        %v626 = vld [vmem:[%s585 + $0x140] sm:$0xff]
        %v627 = vld [vmem:[%s585 + $0x148] sm:$0xff]
        %v628 = vld [vmem:[%s585 + $0x150] sm:$0xff]
        %v629 = vld [vmem:[%s585 + $0x158] sm:$0xff]
        %v630 = vld [vmem:[%s585 + $0x160] sm:$0xff]
        %v631 = vld [vmem:[%s585 + $0x168] sm:$0xff]
        %v632 = vld [vmem:[%s585 + $0x170] sm:$0xff]
        %v633 = vld [vmem:[%s585 + $0x178] sm:$0xff]
        %v634 = vld [vmem:[%s585 + $0x180] sm:$0xff]
        %v635 = vld [vmem:[%s585 + $0x188] sm:$0xff]
        %v636 = vld [vmem:[%s585 + $0x190] sm:$0xff]
        %v637 = vld [vmem:[%s585 + $0x198] sm:$0xff]
        %v638 = vld [vmem:[%s585 + $0x1a0] sm:$0xff]
        %v639 = vld [vmem:[%s585 + $0x1a8] sm:$0xff]
        %v640 = vld [vmem:[%s585 + $0x1b0] sm:$0xff]
        %v641 = vld [vmem:[%s585 + $0x1b8] sm:$0xff]
        %v642 = vld [vmem:[%s585 + $0x1c0] sm:$0xff]
        %v643 = vld [vmem:[%s585 + $0x1c8] sm:$0xff]
        %v644 = vld [vmem:[%s585 + $0x1d0] sm:$0xff]
        %v645 = vld [vmem:[%s585 + $0x1d8] sm:$0xff]
        %v646 = vld [vmem:[%s585 + $0x1e0] sm:$0xff]
        %v647 = vld [vmem:[%s585 + $0x1e8] sm:$0xff]
        %v648 = vld [vmem:[%s585 + $0x1f0] sm:$0xff]
        %v649 = vld [vmem:[%s585 + $0x1f8] sm:$0xff]
        %650 = vmatprep.subr.mxu0 %v587
        %651 = vmatpush1.msra.mxu0 %v586
        %652 = vmatprep.subr.mxu0 %v589
        %653 = vmatpush1.msra.mxu0 %v588
        %654 = vmatprep.subr.mxu0 %v591
        %655 = vmatpush1.msra.mxu0 %v590
        %656 = vmatprep.subr.mxu0 %v593
        %657 = vmatpush1.msra.mxu0 %v592
        %658 = vmatprep.subr.mxu0 %v595
        %659 = vmatpush1.msra.mxu0 %v594
        %660 = vmatprep.subr.mxu0 %v597
        %661 = vmatpush1.msra.mxu0 %v596
        %662 = vmatprep.subr.mxu0 %v599
        %663 = vmatpush1.msra.mxu0 %v598
        %664 = vmatprep.subr.mxu0 %v601
        %665 = vmatpush1.msra.mxu0 %v600
        %666 = vmatprep.subr.mxu0 %v603
        %667 = vmatpush1.msra.mxu0 %v602
        %668 = vmatprep.subr.mxu0 %v605
        %669 = vmatpush1.msra.mxu0 %v604
        %670 = vmatprep.subr.mxu0 %v607
        %671 = vmatpush1.msra.mxu0 %v606
        %672 = vmatprep.subr.mxu0 %v609
        %673 = vmatpush1.msra.mxu0 %v608
        %674 = vmatprep.subr.mxu0 %v611
        %675 = vmatpush1.msra.mxu0 %v610
        %676 = vmatprep.subr.mxu0 %v613
        %677 = vmatpush1.msra.mxu0 %v612
        %678 = vmatprep.subr.mxu0 %v615
        %679 = vmatpush1.msra.mxu0 %v614
        %680 = vmatprep.subr.mxu0 %v617
        %681 = vmatpush1.msra.mxu0 %v616
        %682 = vmatprep.subr.mxu0 %v619
        %683 = vmatpush1.msra.mxu0 %v618
        %684 = vmatprep.subr.mxu0 %v621
        %685 = vmatpush1.msra.mxu0 %v620
        %686 = vmatprep.subr.mxu0 %v623
        %687 = vmatpush1.msra.mxu0 %v622
        %688 = vmatprep.subr.mxu0 %v625
        %689 = vmatpush1.msra.mxu0 %v624
        %690 = vmatprep.subr.mxu0 %v627
        %691 = vmatpush1.msra.mxu0 %v626
        %692 = vmatprep.subr.mxu0 %v629
        %693 = vmatpush1.msra.mxu0 %v628
        %694 = vmatprep.subr.mxu0 %v631
        %695 = vmatpush1.msra.mxu0 %v630
        %696 = vmatprep.subr.mxu0 %v633
        %697 = vmatpush1.msra.mxu0 %v632
        %698 = vmatprep.subr.mxu0 %v635
        %699 = vmatpush1.msra.mxu0 %v634
        %700 = vmatprep.subr.mxu0 %v637
        %701 = vmatpush1.msra.mxu0 %v636
        %702 = vmatprep.subr.mxu0 %v639
        %703 = vmatpush1.msra.mxu0 %v638
        %704 = vmatprep.subr.mxu0 %v641
        %705 = vmatpush1.msra.mxu0 %v640
        %706 = vmatprep.subr.mxu0 %v643
        %707 = vmatpush1.msra.mxu0 %v642
        %708 = vmatprep.subr.mxu0 %v645
        %709 = vmatpush1.msra.mxu0 %v644
        %710 = vmatprep.subr.mxu0 %v647
        %711 = vmatpush1.msra.mxu0 %v646
        %712 = vmatprep.subr.mxu0 %v649
        %713 = vmatpush1.msra.mxu0 %v648
        %714 = vmatprep.mubr.f32.mxu0 %v435
        %715 = vmatmul.mubr.f32.gmra.mrb[0].mxu0 %v434
        %v716 = vpop.f32.mrb[0].mxu0
        %v717 = vadd.f32 0.0, %v716
        %v718 = vpop.f32.mrb[0].mxu0
        %v719 = vadd.f32 0.0, %v718
        %720 = vmatprep.mubr.f32.mxu0 %v437
        %721 = vmatmul.mubr.f32.gmra.mrb[0].mxu0 %v436
        %v722 = vpop.f32.mrb[0].mxu0
        %v723 = vadd.f32 0.0, %v722
        %v724 = vpop.f32.mrb[0].mxu0
        %v725 = vadd.f32 0.0, %v724
        %726 = vdwg.mxu0
        %s727 = scalar_lea.vmem [#allocation5], 1024
        %v728 = vld [vmem:[%s727] sm:$0xff]
        %v729 = vld [vmem:[%s727 + $0x8] sm:$0xff]
        %v730 = vld [vmem:[%s727 + $0x10] sm:$0xff]
        %v731 = vld [vmem:[%s727 + $0x18] sm:$0xff]
        %v732 = vld [vmem:[%s727 + $0x20] sm:$0xff]
        %v733 = vld [vmem:[%s727 + $0x28] sm:$0xff]
        %v734 = vld [vmem:[%s727 + $0x30] sm:$0xff]
        %v735 = vld [vmem:[%s727 + $0x38] sm:$0xff]
        %v736 = vld [vmem:[%s727 + $0x40] sm:$0xff]
        %v737 = vld [vmem:[%s727 + $0x48] sm:$0xff]
        %v738 = vld [vmem:[%s727 + $0x50] sm:$0xff]
        %v739 = vld [vmem:[%s727 + $0x58] sm:$0xff]
        %v740 = vld [vmem:[%s727 + $0x60] sm:$0xff]
        %v741 = vld [vmem:[%s727 + $0x68] sm:$0xff]
        %v742 = vld [vmem:[%s727 + $0x70] sm:$0xff]
        %v743 = vld [vmem:[%s727 + $0x78] sm:$0xff]
        %v744 = vld [vmem:[%s727 + $0x80] sm:$0xff]
        %v745 = vld [vmem:[%s727 + $0x88] sm:$0xff]
        %v746 = vld [vmem:[%s727 + $0x90] sm:$0xff]
        %v747 = vld [vmem:[%s727 + $0x98] sm:$0xff]
        %v748 = vld [vmem:[%s727 + $0xa0] sm:$0xff]
        %v749 = vld [vmem:[%s727 + $0xa8] sm:$0xff]
        %v750 = vld [vmem:[%s727 + $0xb0] sm:$0xff]
        %v751 = vld [vmem:[%s727 + $0xb8] sm:$0xff]
        %v752 = vld [vmem:[%s727 + $0xc0] sm:$0xff]
        %v753 = vld [vmem:[%s727 + $0xc8] sm:$0xff]
        %v754 = vld [vmem:[%s727 + $0xd0] sm:$0xff]
        %v755 = vld [vmem:[%s727 + $0xd8] sm:$0xff]
        %v756 = vld [vmem:[%s727 + $0xe0] sm:$0xff]
        %v757 = vld [vmem:[%s727 + $0xe8] sm:$0xff]
        %v758 = vld [vmem:[%s727 + $0xf0] sm:$0xff]
        %v759 = vld [vmem:[%s727 + $0xf8] sm:$0xff]
        %v760 = vld [vmem:[%s727 + $0x100] sm:$0xff]
        %v761 = vld [vmem:[%s727 + $0x108] sm:$0xff]
        %v762 = vld [vmem:[%s727 + $0x110] sm:$0xff]
        %v763 = vld [vmem:[%s727 + $0x118] sm:$0xff]
        %v764 = vld [vmem:[%s727 + $0x120] sm:$0xff]
        %v765 = vld [vmem:[%s727 + $0x128] sm:$0xff]
        %v766 = vld [vmem:[%s727 + $0x130] sm:$0xff]
        %v767 = vld [vmem:[%s727 + $0x138] sm:$0xff]
        %v768 = vld [vmem:[%s727 + $0x140] sm:$0xff]
        %v769 = vld [vmem:[%s727 + $0x148] sm:$0xff]
        %v770 = vld [vmem:[%s727 + $0x150] sm:$0xff]
        %v771 = vld [vmem:[%s727 + $0x158] sm:$0xff]
        %v772 = vld [vmem:[%s727 + $0x160] sm:$0xff]
        %v773 = vld [vmem:[%s727 + $0x168] sm:$0xff]
        %v774 = vld [vmem:[%s727 + $0x170] sm:$0xff]
        %v775 = vld [vmem:[%s727 + $0x178] sm:$0xff]
        %v776 = vld [vmem:[%s727 + $0x180] sm:$0xff]
        %v777 = vld [vmem:[%s727 + $0x188] sm:$0xff]
        %v778 = vld [vmem:[%s727 + $0x190] sm:$0xff]
        %v779 = vld [vmem:[%s727 + $0x198] sm:$0xff]
        %v780 = vld [vmem:[%s727 + $0x1a0] sm:$0xff]
        %v781 = vld [vmem:[%s727 + $0x1a8] sm:$0xff]
        %v782 = vld [vmem:[%s727 + $0x1b0] sm:$0xff]
        %v783 = vld [vmem:[%s727 + $0x1b8] sm:$0xff]
        %v784 = vld [vmem:[%s727 + $0x1c0] sm:$0xff]
        %v785 = vld [vmem:[%s727 + $0x1c8] sm:$0xff]
        %v786 = vld [vmem:[%s727 + $0x1d0] sm:$0xff]
        %v787 = vld [vmem:[%s727 + $0x1d8] sm:$0xff]
        %v788 = vld [vmem:[%s727 + $0x1e0] sm:$0xff]
        %v789 = vld [vmem:[%s727 + $0x1e8] sm:$0xff]
        %v790 = vld [vmem:[%s727 + $0x1f0] sm:$0xff]
        %v791 = vld [vmem:[%s727 + $0x1f8] sm:$0xff]
        %792 = vmatprep.subr.mxu0 %v729
        %793 = vmatpush1.msra.mxu0 %v728
        %794 = vmatprep.subr.mxu0 %v731
        %795 = vmatpush1.msra.mxu0 %v730
        %796 = vmatprep.subr.mxu0 %v733
        %797 = vmatpush1.msra.mxu0 %v732
        %798 = vmatprep.subr.mxu0 %v735
        %799 = vmatpush1.msra.mxu0 %v734
        %800 = vmatprep.subr.mxu0 %v737
        %801 = vmatpush1.msra.mxu0 %v736
        %802 = vmatprep.subr.mxu0 %v739
        %803 = vmatpush1.msra.mxu0 %v738
        %804 = vmatprep.subr.mxu0 %v741
        %805 = vmatpush1.msra.mxu0 %v740
        %806 = vmatprep.subr.mxu0 %v743
        %807 = vmatpush1.msra.mxu0 %v742
        %808 = vmatprep.subr.mxu0 %v745
        %809 = vmatpush1.msra.mxu0 %v744
        %810 = vmatprep.subr.mxu0 %v747
        %811 = vmatpush1.msra.mxu0 %v746
        %812 = vmatprep.subr.mxu0 %v749
        %813 = vmatpush1.msra.mxu0 %v748
        %814 = vmatprep.subr.mxu0 %v751
        %815 = vmatpush1.msra.mxu0 %v750
        %816 = vmatprep.subr.mxu0 %v753
        %817 = vmatpush1.msra.mxu0 %v752
        %818 = vmatprep.subr.mxu0 %v755
        %819 = vmatpush1.msra.mxu0 %v754
        %820 = vmatprep.subr.mxu0 %v757
        %821 = vmatpush1.msra.mxu0 %v756
        %822 = vmatprep.subr.mxu0 %v759
        %823 = vmatpush1.msra.mxu0 %v758
        %824 = vmatprep.subr.mxu0 %v761
        %825 = vmatpush1.msra.mxu0 %v760
        %826 = vmatprep.subr.mxu0 %v763
        %827 = vmatpush1.msra.mxu0 %v762
        %828 = vmatprep.subr.mxu0 %v765
        %829 = vmatpush1.msra.mxu0 %v764
        %830 = vmatprep.subr.mxu0 %v767
        %831 = vmatpush1.msra.mxu0 %v766
        %832 = vmatprep.subr.mxu0 %v769
        %833 = vmatpush1.msra.mxu0 %v768
        %834 = vmatprep.subr.mxu0 %v771
        %835 = vmatpush1.msra.mxu0 %v770
        %836 = vmatprep.subr.mxu0 %v773
        %837 = vmatpush1.msra.mxu0 %v772
        %838 = vmatprep.subr.mxu0 %v775
        %839 = vmatpush1.msra.mxu0 %v774
        %840 = vmatprep.subr.mxu0 %v777
        %841 = vmatpush1.msra.mxu0 %v776
        %842 = vmatprep.subr.mxu0 %v779
        %843 = vmatpush1.msra.mxu0 %v778
        %844 = vmatprep.subr.mxu0 %v781
        %845 = vmatpush1.msra.mxu0 %v780
        %846 = vmatprep.subr.mxu0 %v783
        %847 = vmatpush1.msra.mxu0 %v782
        %848 = vmatprep.subr.mxu0 %v785
        %849 = vmatpush1.msra.mxu0 %v784
        %850 = vmatprep.subr.mxu0 %v787
        %851 = vmatpush1.msra.mxu0 %v786
        %852 = vmatprep.subr.mxu0 %v789
        %853 = vmatpush1.msra.mxu0 %v788
        %854 = vmatprep.subr.mxu0 %v791
        %855 = vmatpush1.msra.mxu0 %v790
        %856 = vmatprep.mubr.f32.mxu0 %v435
        %857 = vmatmul.mubr.f32.gmra.mrb[0].mxu0 %v434
        %v858 = vpop.f32.mrb[0].mxu0
        %v859 = vadd.f32 0.0, %v858
        %v860 = vpop.f32.mrb[0].mxu0
        %v861 = vadd.f32 0.0, %v860
        %862 = vmatprep.mubr.f32.mxu0 %v437
        %863 = vmatmul.mubr.f32.gmra.mrb[0].mxu0 %v436
        %v864 = vpop.f32.mrb[0].mxu0
        %v865 = vadd.f32 0.0, %v864
        %v866 = vpop.f32.mrb[0].mxu0
        %v867 = vadd.f32 0.0, %v866
        %868 = vdwg.mxu0
        %s869 = scalar_lea.vmem [#allocation5], 1536
        %v870 = vld [vmem:[%s869] sm:$0xff]
        %v871 = vld [vmem:[%s869 + $0x8] sm:$0xff]
        %v872 = vld [vmem:[%s869 + $0x10] sm:$0xff]
        %v873 = vld [vmem:[%s869 + $0x18] sm:$0xff]
        %v874 = vld [vmem:[%s869 + $0x20] sm:$0xff]
        %v875 = vld [vmem:[%s869 + $0x28] sm:$0xff]
        %v876 = vld [vmem:[%s869 + $0x30] sm:$0xff]
        %v877 = vld [vmem:[%s869 + $0x38] sm:$0xff]
        %v878 = vld [vmem:[%s869 + $0x40] sm:$0xff]
        %v879 = vld [vmem:[%s869 + $0x48] sm:$0xff]
        %v880 = vld [vmem:[%s869 + $0x50] sm:$0xff]
        %v881 = vld [vmem:[%s869 + $0x58] sm:$0xff]
        %v882 = vld [vmem:[%s869 + $0x60] sm:$0xff]
        %v883 = vld [vmem:[%s869 + $0x68] sm:$0xff]
        %v884 = vld [vmem:[%s869 + $0x70] sm:$0xff]
        %v885 = vld [vmem:[%s869 + $0x78] sm:$0xff]
        %v886 = vld [vmem:[%s869 + $0x80] sm:$0xff]
        %v887 = vld [vmem:[%s869 + $0x88] sm:$0xff]
        %v888 = vld [vmem:[%s869 + $0x90] sm:$0xff]
        %v889 = vld [vmem:[%s869 + $0x98] sm:$0xff]
        %v890 = vld [vmem:[%s869 + $0xa0] sm:$0xff]
        %v891 = vld [vmem:[%s869 + $0xa8] sm:$0xff]
        %v892 = vld [vmem:[%s869 + $0xb0] sm:$0xff]
        %v893 = vld [vmem:[%s869 + $0xb8] sm:$0xff]
        %v894 = vld [vmem:[%s869 + $0xc0] sm:$0xff]
        %v895 = vld [vmem:[%s869 + $0xc8] sm:$0xff]
        %v896 = vld [vmem:[%s869 + $0xd0] sm:$0xff]
        %v897 = vld [vmem:[%s869 + $0xd8] sm:$0xff]
        %v898 = vld [vmem:[%s869 + $0xe0] sm:$0xff]
        %v899 = vld [vmem:[%s869 + $0xe8] sm:$0xff]
        %v900 = vld [vmem:[%s869 + $0xf0] sm:$0xff]
        %v901 = vld [vmem:[%s869 + $0xf8] sm:$0xff]
        %v902 = vld [vmem:[%s869 + $0x100] sm:$0xff]
        %v903 = vld [vmem:[%s869 + $0x108] sm:$0xff]
        %v904 = vld [vmem:[%s869 + $0x110] sm:$0xff]
        %v905 = vld [vmem:[%s869 + $0x118] sm:$0xff]
        %v906 = vld [vmem:[%s869 + $0x120] sm:$0xff]
        %v907 = vld [vmem:[%s869 + $0x128] sm:$0xff]
        %v908 = vld [vmem:[%s869 + $0x130] sm:$0xff]
        %v909 = vld [vmem:[%s869 + $0x138] sm:$0xff]
        %v910 = vld [vmem:[%s869 + $0x140] sm:$0xff]
        %v911 = vld [vmem:[%s869 + $0x148] sm:$0xff]
        %v912 = vld [vmem:[%s869 + $0x150] sm:$0xff]
        %v913 = vld [vmem:[%s869 + $0x158] sm:$0xff]
        %v914 = vld [vmem:[%s869 + $0x160] sm:$0xff]
        %v915 = vld [vmem:[%s869 + $0x168] sm:$0xff]
        %v916 = vld [vmem:[%s869 + $0x170] sm:$0xff]
        %v917 = vld [vmem:[%s869 + $0x178] sm:$0xff]
        %v918 = vld [vmem:[%s869 + $0x180] sm:$0xff]
        %v919 = vld [vmem:[%s869 + $0x188] sm:$0xff]
        %v920 = vld [vmem:[%s869 + $0x190] sm:$0xff]
        %v921 = vld [vmem:[%s869 + $0x198] sm:$0xff]
        %v922 = vld [vmem:[%s869 + $0x1a0] sm:$0xff]
        %v923 = vld [vmem:[%s869 + $0x1a8] sm:$0xff]
        %v924 = vld [vmem:[%s869 + $0x1b0] sm:$0xff]
        %v925 = vld [vmem:[%s869 + $0x1b8] sm:$0xff]
        %v926 = vld [vmem:[%s869 + $0x1c0] sm:$0xff]
        %v927 = vld [vmem:[%s869 + $0x1c8] sm:$0xff]
        %v928 = vld [vmem:[%s869 + $0x1d0] sm:$0xff]
        %v929 = vld [vmem:[%s869 + $0x1d8] sm:$0xff]
        %v930 = vld [vmem:[%s869 + $0x1e0] sm:$0xff]
        %v931 = vld [vmem:[%s869 + $0x1e8] sm:$0xff]
        %v932 = vld [vmem:[%s869 + $0x1f0] sm:$0xff]
        %v933 = vld [vmem:[%s869 + $0x1f8] sm:$0xff]
        %934 = vmatprep.subr.mxu0 %v871
        %935 = vmatpush1.msra.mxu0 %v870
        %936 = vmatprep.subr.mxu0 %v873
        %937 = vmatpush1.msra.mxu0 %v872
        %938 = vmatprep.subr.mxu0 %v875
        %939 = vmatpush1.msra.mxu0 %v874
        %940 = vmatprep.subr.mxu0 %v877
        %941 = vmatpush1.msra.mxu0 %v876
        %942 = vmatprep.subr.mxu0 %v879
        %943 = vmatpush1.msra.mxu0 %v878
        %944 = vmatprep.subr.mxu0 %v881
        %945 = vmatpush1.msra.mxu0 %v880
        %946 = vmatprep.subr.mxu0 %v883
        %947 = vmatpush1.msra.mxu0 %v882
        %948 = vmatprep.subr.mxu0 %v885
        %949 = vmatpush1.msra.mxu0 %v884
        %950 = vmatprep.subr.mxu0 %v887
        %951 = vmatpush1.msra.mxu0 %v886
        %952 = vmatprep.subr.mxu0 %v889
        %953 = vmatpush1.msra.mxu0 %v888
        %954 = vmatprep.subr.mxu0 %v891
        %955 = vmatpush1.msra.mxu0 %v890
        %956 = vmatprep.subr.mxu0 %v893
        %957 = vmatpush1.msra.mxu0 %v892
        %958 = vmatprep.subr.mxu0 %v895
        %959 = vmatpush1.msra.mxu0 %v894
        %960 = vmatprep.subr.mxu0 %v897
        %961 = vmatpush1.msra.mxu0 %v896
        %962 = vmatprep.subr.mxu0 %v899
        %963 = vmatpush1.msra.mxu0 %v898
        %964 = vmatprep.subr.mxu0 %v901
        %965 = vmatpush1.msra.mxu0 %v900
        %966 = vmatprep.subr.mxu0 %v903
        %967 = vmatpush1.msra.mxu0 %v902
        %968 = vmatprep.subr.mxu0 %v905
        %969 = vmatpush1.msra.mxu0 %v904
        %970 = vmatprep.subr.mxu0 %v907
        %971 = vmatpush1.msra.mxu0 %v906
        %972 = vmatprep.subr.mxu0 %v909
        %973 = vmatpush1.msra.mxu0 %v908
        %974 = vmatprep.subr.mxu0 %v911
        %975 = vmatpush1.msra.mxu0 %v910
        %976 = vmatprep.subr.mxu0 %v913
        %977 = vmatpush1.msra.mxu0 %v912
        %978 = vmatprep.subr.mxu0 %v915
        %979 = vmatpush1.msra.mxu0 %v914
        %980 = vmatprep.subr.mxu0 %v917
        %981 = vmatpush1.msra.mxu0 %v916
        %982 = vmatprep.subr.mxu0 %v919
        %983 = vmatpush1.msra.mxu0 %v918
        %984 = vmatprep.subr.mxu0 %v921
        %985 = vmatpush1.msra.mxu0 %v920
        %986 = vmatprep.subr.mxu0 %v923
        %987 = vmatpush1.msra.mxu0 %v922
        %988 = vmatprep.subr.mxu0 %v925
        %989 = vmatpush1.msra.mxu0 %v924
        %990 = vmatprep.subr.mxu0 %v927
        %991 = vmatpush1.msra.mxu0 %v926
        %992 = vmatprep.subr.mxu0 %v929
        %993 = vmatpush1.msra.mxu0 %v928
        %994 = vmatprep.subr.mxu0 %v931
        %995 = vmatpush1.msra.mxu0 %v930
        %996 = vmatprep.subr.mxu0 %v933
        %997 = vmatpush1.msra.mxu0 %v932
        %998 = vmatprep.mubr.f32.mxu0 %v435
        %999 = vmatmul.mubr.f32.gmra.mrb[0].mxu0 %v434
        %v1000 = vpop.f32.mrb[0].mxu0
        %v1001 = vadd.f32 0.0, %v1000
        %v1002 = vpop.f32.mrb[0].mxu0
        %v1003 = vadd.f32 0.0, %v1002
        %1004 = vmatprep.mubr.f32.mxu0 %v437
        %1005 = vmatmul.mubr.f32.gmra.mrb[0].mxu0 %v436
        %v1006 = vpop.f32.mrb[0].mxu0
        %v1007 = vadd.f32 0.0, %v1006
        %v1008 = vpop.f32.mrb[0].mxu0
        %v1009 = vadd.f32 0.0, %v1008
        %1010 = vdwg.mxu0
        %s1011 = scalar_lea.vmem [#allocation5], 2048
        %v1012 = vld [vmem:[%s1011] sm:$0xff]
        %v1013 = vld [vmem:[%s1011 + $0x8] sm:$0xff]
        %v1014 = vld [vmem:[%s1011 + $0x10] sm:$0xff]
        %v1015 = vld [vmem:[%s1011 + $0x18] sm:$0xff]
        %v1016 = vld [vmem:[%s1011 + $0x20] sm:$0xff]
        %v1017 = vld [vmem:[%s1011 + $0x28] sm:$0xff]
        %v1018 = vld [vmem:[%s1011 + $0x30] sm:$0xff]
        %v1019 = vld [vmem:[%s1011 + $0x38] sm:$0xff]
        %v1020 = vld [vmem:[%s1011 + $0x40] sm:$0xff]
        %v1021 = vld [vmem:[%s1011 + $0x48] sm:$0xff]
        %v1022 = vld [vmem:[%s1011 + $0x50] sm:$0xff]
        %v1023 = vld [vmem:[%s1011 + $0x58] sm:$0xff]
        %v1024 = vld [vmem:[%s1011 + $0x60] sm:$0xff]
        %v1025 = vld [vmem:[%s1011 + $0x68] sm:$0xff]
        %v1026 = vld [vmem:[%s1011 + $0x70] sm:$0xff]
        %v1027 = vld [vmem:[%s1011 + $0x78] sm:$0xff]
        %v1028 = vld [vmem:[%s1011 + $0x80] sm:$0xff]
        %v1029 = vld [vmem:[%s1011 + $0x88] sm:$0xff]
        %v1030 = vld [vmem:[%s1011 + $0x90] sm:$0xff]
        %v1031 = vld [vmem:[%s1011 + $0x98] sm:$0xff]
        %v1032 = vld [vmem:[%s1011 + $0xa0] sm:$0xff]
        %v1033 = vld [vmem:[%s1011 + $0xa8] sm:$0xff]
        %v1034 = vld [vmem:[%s1011 + $0xb0] sm:$0xff]
        %v1035 = vld [vmem:[%s1011 + $0xb8] sm:$0xff]
        %v1036 = vld [vmem:[%s1011 + $0xc0] sm:$0xff]
        %v1037 = vld [vmem:[%s1011 + $0xc8] sm:$0xff]
        %v1038 = vld [vmem:[%s1011 + $0xd0] sm:$0xff]
        %v1039 = vld [vmem:[%s1011 + $0xd8] sm:$0xff]
        %v1040 = vld [vmem:[%s1011 + $0xe0] sm:$0xff]
        %v1041 = vld [vmem:[%s1011 + $0xe8] sm:$0xff]
        %v1042 = vld [vmem:[%s1011 + $0xf0] sm:$0xff]
        %v1043 = vld [vmem:[%s1011 + $0xf8] sm:$0xff]
        %v1044 = vld [vmem:[%s1011 + $0x100] sm:$0xff]
        %v1045 = vld [vmem:[%s1011 + $0x108] sm:$0xff]
        %v1046 = vld [vmem:[%s1011 + $0x110] sm:$0xff]
        %v1047 = vld [vmem:[%s1011 + $0x118] sm:$0xff]
        %v1048 = vld [vmem:[%s1011 + $0x120] sm:$0xff]
        %v1049 = vld [vmem:[%s1011 + $0x128] sm:$0xff]
        %v1050 = vld [vmem:[%s1011 + $0x130] sm:$0xff]
        %v1051 = vld [vmem:[%s1011 + $0x138] sm:$0xff]
        %v1052 = vld [vmem:[%s1011 + $0x140] sm:$0xff]
        %v1053 = vld [vmem:[%s1011 + $0x148] sm:$0xff]
        %v1054 = vld [vmem:[%s1011 + $0x150] sm:$0xff]
        %v1055 = vld [vmem:[%s1011 + $0x158] sm:$0xff]
        %v1056 = vld [vmem:[%s1011 + $0x160] sm:$0xff]
        %v1057 = vld [vmem:[%s1011 + $0x168] sm:$0xff]
        %v1058 = vld [vmem:[%s1011 + $0x170] sm:$0xff]
        %v1059 = vld [vmem:[%s1011 + $0x178] sm:$0xff]
        %v1060 = vld [vmem:[%s1011 + $0x180] sm:$0xff]
        %v1061 = vld [vmem:[%s1011 + $0x188] sm:$0xff]
        %v1062 = vld [vmem:[%s1011 + $0x190] sm:$0xff]
        %v1063 = vld [vmem:[%s1011 + $0x198] sm:$0xff]
        %v1064 = vld [vmem:[%s1011 + $0x1a0] sm:$0xff]
        %v1065 = vld [vmem:[%s1011 + $0x1a8] sm:$0xff]
        %v1066 = vld [vmem:[%s1011 + $0x1b0] sm:$0xff]
        %v1067 = vld [vmem:[%s1011 + $0x1b8] sm:$0xff]
        %v1068 = vld [vmem:[%s1011 + $0x1c0] sm:$0xff]
        %v1069 = vld [vmem:[%s1011 + $0x1c8] sm:$0xff]
        %v1070 = vld [vmem:[%s1011 + $0x1d0] sm:$0xff]
        %v1071 = vld [vmem:[%s1011 + $0x1d8] sm:$0xff]
        %v1072 = vld [vmem:[%s1011 + $0x1e0] sm:$0xff]
        %v1073 = vld [vmem:[%s1011 + $0x1e8] sm:$0xff]
        %v1074 = vld [vmem:[%s1011 + $0x1f0] sm:$0xff]
        %v1075 = vld [vmem:[%s1011 + $0x1f8] sm:$0xff]
        %1076 = vmatprep.subr.mxu0 %v1013
        %1077 = vmatpush1.msra.mxu0 %v1012
        %1078 = vmatprep.subr.mxu0 %v1015
        %1079 = vmatpush1.msra.mxu0 %v1014
        %1080 = vmatprep.subr.mxu0 %v1017
        %1081 = vmatpush1.msra.mxu0 %v1016
        %1082 = vmatprep.subr.mxu0 %v1019
        %1083 = vmatpush1.msra.mxu0 %v1018
        %1084 = vmatprep.subr.mxu0 %v1021
        %1085 = vmatpush1.msra.mxu0 %v1020
        %1086 = vmatprep.subr.mxu0 %v1023
        %1087 = vmatpush1.msra.mxu0 %v1022
        %1088 = vmatprep.subr.mxu0 %v1025
        %1089 = vmatpush1.msra.mxu0 %v1024
        %1090 = vmatprep.subr.mxu0 %v1027
        %1091 = vmatpush1.msra.mxu0 %v1026
        %1092 = vmatprep.subr.mxu0 %v1029
        %1093 = vmatpush1.msra.mxu0 %v1028
        %1094 = vmatprep.subr.mxu0 %v1031
        %1095 = vmatpush1.msra.mxu0 %v1030
        %1096 = vmatprep.subr.mxu0 %v1033
        %1097 = vmatpush1.msra.mxu0 %v1032
        %1098 = vmatprep.subr.mxu0 %v1035
        %1099 = vmatpush1.msra.mxu0 %v1034
        %1100 = vmatprep.subr.mxu0 %v1037
        %1101 = vmatpush1.msra.mxu0 %v1036
        %1102 = vmatprep.subr.mxu0 %v1039
        %1103 = vmatpush1.msra.mxu0 %v1038
        %1104 = vmatprep.subr.mxu0 %v1041
        %1105 = vmatpush1.msra.mxu0 %v1040
        %1106 = vmatprep.subr.mxu0 %v1043
        %1107 = vmatpush1.msra.mxu0 %v1042
        %1108 = vmatprep.subr.mxu0 %v1045
        %1109 = vmatpush1.msra.mxu0 %v1044
        %1110 = vmatprep.subr.mxu0 %v1047
        %1111 = vmatpush1.msra.mxu0 %v1046
        %1112 = vmatprep.subr.mxu0 %v1049
        %1113 = vmatpush1.msra.mxu0 %v1048
        %1114 = vmatprep.subr.mxu0 %v1051
        %1115 = vmatpush1.msra.mxu0 %v1050
        %1116 = vmatprep.subr.mxu0 %v1053
        %1117 = vmatpush1.msra.mxu0 %v1052
        %1118 = vmatprep.subr.mxu0 %v1055
        %1119 = vmatpush1.msra.mxu0 %v1054
        %1120 = vmatprep.subr.mxu0 %v1057
        %1121 = vmatpush1.msra.mxu0 %v1056
        %1122 = vmatprep.subr.mxu0 %v1059
        %1123 = vmatpush1.msra.mxu0 %v1058
        %1124 = vmatprep.subr.mxu0 %v1061
        %1125 = vmatpush1.msra.mxu0 %v1060
        %1126 = vmatprep.subr.mxu0 %v1063
        %1127 = vmatpush1.msra.mxu0 %v1062
        %1128 = vmatprep.subr.mxu0 %v1065
        %1129 = vmatpush1.msra.mxu0 %v1064
        %1130 = vmatprep.subr.mxu0 %v1067
        %1131 = vmatpush1.msra.mxu0 %v1066
        %1132 = vmatprep.subr.mxu0 %v1069
        %1133 = vmatpush1.msra.mxu0 %v1068
        %1134 = vmatprep.subr.mxu0 %v1071
        %1135 = vmatpush1.msra.mxu0 %v1070
        %1136 = vmatprep.subr.mxu0 %v1073
        %1137 = vmatpush1.msra.mxu0 %v1072
        %1138 = vmatprep.subr.mxu0 %v1075
        %1139 = vmatpush1.msra.mxu0 %v1074
        %1140 = vmatprep.mubr.f32.mxu0 %v435
        %1141 = vmatmul.mubr.f32.gmra.mrb[0].mxu0 %v434
        %v1142 = vpop.f32.mrb[0].mxu0
        %v1143 = vadd.f32 0.0, %v1142
        %v1144 = vpop.f32.mrb[0].mxu0
        %v1145 = vadd.f32 0.0, %v1144
        %1146 = vmatprep.mubr.f32.mxu0 %v437
        %1147 = vmatmul.mubr.f32.gmra.mrb[0].mxu0 %v436
        %v1148 = vpop.f32.mrb[0].mxu0
        %v1149 = vadd.f32 0.0, %v1148
        %v1150 = vpop.f32.mrb[0].mxu0
        %v1151 = vadd.f32 0.0, %v1150
        %1152 = vdwg.mxu0
        %s1153 = scalar_lea.vmem [#allocation5], 2560
        %v1154 = vld [vmem:[%s1153] sm:$0xff]
        %v1155 = vld [vmem:[%s1153 + $0x8] sm:$0xff]
        %v1156 = vld [vmem:[%s1153 + $0x10] sm:$0xff]
        %v1157 = vld [vmem:[%s1153 + $0x18] sm:$0xff]
        %v1158 = vld [vmem:[%s1153 + $0x20] sm:$0xff]
        %v1159 = vld [vmem:[%s1153 + $0x28] sm:$0xff]
        %v1160 = vld [vmem:[%s1153 + $0x30] sm:$0xff]
        %v1161 = vld [vmem:[%s1153 + $0x38] sm:$0xff]
        %v1162 = vld [vmem:[%s1153 + $0x40] sm:$0xff]
        %v1163 = vld [vmem:[%s1153 + $0x48] sm:$0xff]
        %v1164 = vld [vmem:[%s1153 + $0x50] sm:$0xff]
        %v1165 = vld [vmem:[%s1153 + $0x58] sm:$0xff]
        %v1166 = vld [vmem:[%s1153 + $0x60] sm:$0xff]
        %v1167 = vld [vmem:[%s1153 + $0x68] sm:$0xff]
        %v1168 = vld [vmem:[%s1153 + $0x70] sm:$0xff]
        %v1169 = vld [vmem:[%s1153 + $0x78] sm:$0xff]
        %v1170 = vld [vmem:[%s1153 + $0x80] sm:$0xff]
        %v1171 = vld [vmem:[%s1153 + $0x88] sm:$0xff]
        %v1172 = vld [vmem:[%s1153 + $0x90] sm:$0xff]
        %v1173 = vld [vmem:[%s1153 + $0x98] sm:$0xff]
        %v1174 = vld [vmem:[%s1153 + $0xa0] sm:$0xff]
        %v1175 = vld [vmem:[%s1153 + $0xa8] sm:$0xff]
        %v1176 = vld [vmem:[%s1153 + $0xb0] sm:$0xff]
        %v1177 = vld [vmem:[%s1153 + $0xb8] sm:$0xff]
        %v1178 = vld [vmem:[%s1153 + $0xc0] sm:$0xff]
        %v1179 = vld [vmem:[%s1153 + $0xc8] sm:$0xff]
        %v1180 = vld [vmem:[%s1153 + $0xd0] sm:$0xff]
        %v1181 = vld [vmem:[%s1153 + $0xd8] sm:$0xff]
        %v1182 = vld [vmem:[%s1153 + $0xe0] sm:$0xff]
        %v1183 = vld [vmem:[%s1153 + $0xe8] sm:$0xff]
        %v1184 = vld [vmem:[%s1153 + $0xf0] sm:$0xff]
        %v1185 = vld [vmem:[%s1153 + $0xf8] sm:$0xff]
        %v1186 = vld [vmem:[%s1153 + $0x100] sm:$0xff]
        %v1187 = vld [vmem:[%s1153 + $0x108] sm:$0xff]
        %v1188 = vld [vmem:[%s1153 + $0x110] sm:$0xff]
        %v1189 = vld [vmem:[%s1153 + $0x118] sm:$0xff]
        %v1190 = vld [vmem:[%s1153 + $0x120] sm:$0xff]
        %v1191 = vld [vmem:[%s1153 + $0x128] sm:$0xff]
        %v1192 = vld [vmem:[%s1153 + $0x130] sm:$0xff]
        %v1193 = vld [vmem:[%s1153 + $0x138] sm:$0xff]
        %v1194 = vld [vmem:[%s1153 + $0x140] sm:$0xff]
        %v1195 = vld [vmem:[%s1153 + $0x148] sm:$0xff]
        %v1196 = vld [vmem:[%s1153 + $0x150] sm:$0xff]
        %v1197 = vld [vmem:[%s1153 + $0x158] sm:$0xff]
        %v1198 = vld [vmem:[%s1153 + $0x160] sm:$0xff]
        %v1199 = vld [vmem:[%s1153 + $0x168] sm:$0xff]
        %v1200 = vld [vmem:[%s1153 + $0x170] sm:$0xff]
        %v1201 = vld [vmem:[%s1153 + $0x178] sm:$0xff]
        %v1202 = vld [vmem:[%s1153 + $0x180] sm:$0xff]
        %v1203 = vld [vmem:[%s1153 + $0x188] sm:$0xff]
        %v1204 = vld [vmem:[%s1153 + $0x190] sm:$0xff]
        %v1205 = vld [vmem:[%s1153 + $0x198] sm:$0xff]
        %v1206 = vld [vmem:[%s1153 + $0x1a0] sm:$0xff]
        %v1207 = vld [vmem:[%s1153 + $0x1a8] sm:$0xff]
        %v1208 = vld [vmem:[%s1153 + $0x1b0] sm:$0xff]
        %v1209 = vld [vmem:[%s1153 + $0x1b8] sm:$0xff]
        %v1210 = vld [vmem:[%s1153 + $0x1c0] sm:$0xff]
        %v1211 = vld [vmem:[%s1153 + $0x1c8] sm:$0xff]
        %v1212 = vld [vmem:[%s1153 + $0x1d0] sm:$0xff]
        %v1213 = vld [vmem:[%s1153 + $0x1d8] sm:$0xff]
        %v1214 = vld [vmem:[%s1153 + $0x1e0] sm:$0xff]
        %v1215 = vld [vmem:[%s1153 + $0x1e8] sm:$0xff]
        %v1216 = vld [vmem:[%s1153 + $0x1f0] sm:$0xff]
        %v1217 = vld [vmem:[%s1153 + $0x1f8] sm:$0xff]
        %1218 = vmatprep.subr.mxu0 %v1155
        %1219 = vmatpush1.msra.mxu0 %v1154
        %1220 = vmatprep.subr.mxu0 %v1157
        %1221 = vmatpush1.msra.mxu0 %v1156
        %1222 = vmatprep.subr.mxu0 %v1159
        %1223 = vmatpush1.msra.mxu0 %v1158
        %1224 = vmatprep.subr.mxu0 %v1161
        %1225 = vmatpush1.msra.mxu0 %v1160
        %1226 = vmatprep.subr.mxu0 %v1163
        %1227 = vmatpush1.msra.mxu0 %v1162
        %1228 = vmatprep.subr.mxu0 %v1165
        %1229 = vmatpush1.msra.mxu0 %v1164
        %1230 = vmatprep.subr.mxu0 %v1167
        %1231 = vmatpush1.msra.mxu0 %v1166
        %1232 = vmatprep.subr.mxu0 %v1169
        %1233 = vmatpush1.msra.mxu0 %v1168
        %1234 = vmatprep.subr.mxu0 %v1171
        %1235 = vmatpush1.msra.mxu0 %v1170
        %1236 = vmatprep.subr.mxu0 %v1173
        %1237 = vmatpush1.msra.mxu0 %v1172
        %1238 = vmatprep.subr.mxu0 %v1175
        %1239 = vmatpush1.msra.mxu0 %v1174
        %1240 = vmatprep.subr.mxu0 %v1177
        %1241 = vmatpush1.msra.mxu0 %v1176
        %1242 = vmatprep.subr.mxu0 %v1179
        %1243 = vmatpush1.msra.mxu0 %v1178
        %1244 = vmatprep.subr.mxu0 %v1181
        %1245 = vmatpush1.msra.mxu0 %v1180
        %1246 = vmatprep.subr.mxu0 %v1183
        %1247 = vmatpush1.msra.mxu0 %v1182
        %1248 = vmatprep.subr.mxu0 %v1185
        %1249 = vmatpush1.msra.mxu0 %v1184
        %1250 = vmatprep.subr.mxu0 %v1187
        %1251 = vmatpush1.msra.mxu0 %v1186
        %1252 = vmatprep.subr.mxu0 %v1189
        %1253 = vmatpush1.msra.mxu0 %v1188
        %1254 = vmatprep.subr.mxu0 %v1191
        %1255 = vmatpush1.msra.mxu0 %v1190
        %1256 = vmatprep.subr.mxu0 %v1193
        %1257 = vmatpush1.msra.mxu0 %v1192
        %1258 = vmatprep.subr.mxu0 %v1195
        %1259 = vmatpush1.msra.mxu0 %v1194
        %1260 = vmatprep.subr.mxu0 %v1197
        %1261 = vmatpush1.msra.mxu0 %v1196
        %1262 = vmatprep.subr.mxu0 %v1199
        %1263 = vmatpush1.msra.mxu0 %v1198
        %1264 = vmatprep.subr.mxu0 %v1201
        %1265 = vmatpush1.msra.mxu0 %v1200
        %1266 = vmatprep.subr.mxu0 %v1203
        %1267 = vmatpush1.msra.mxu0 %v1202
        %1268 = vmatprep.subr.mxu0 %v1205
        %1269 = vmatpush1.msra.mxu0 %v1204
        %1270 = vmatprep.subr.mxu0 %v1207
        %1271 = vmatpush1.msra.mxu0 %v1206
        %1272 = vmatprep.subr.mxu0 %v1209
        %1273 = vmatpush1.msra.mxu0 %v1208
        %1274 = vmatprep.subr.mxu0 %v1211
        %1275 = vmatpush1.msra.mxu0 %v1210
        %1276 = vmatprep.subr.mxu0 %v1213
        %1277 = vmatpush1.msra.mxu0 %v1212
        %1278 = vmatprep.subr.mxu0 %v1215
        %1279 = vmatpush1.msra.mxu0 %v1214
        %1280 = vmatprep.subr.mxu0 %v1217
        %1281 = vmatpush1.msra.mxu0 %v1216
        %1282 = vmatprep.mubr.f32.mxu0 %v435
        %1283 = vmatmul.mubr.f32.gmra.mrb[0].mxu0 %v434
        %v1284 = vpop.f32.mrb[0].mxu0
        %v1285 = vadd.f32 0.0, %v1284
        %v1286 = vpop.f32.mrb[0].mxu0
        %v1287 = vadd.f32 0.0, %v1286
        %1288 = vmatprep.mubr.f32.mxu0 %v437
        %1289 = vmatmul.mubr.f32.gmra.mrb[0].mxu0 %v436
        %v1290 = vpop.f32.mrb[0].mxu0
        %v1291 = vadd.f32 0.0, %v1290
        %v1292 = vpop.f32.mrb[0].mxu0
        %v1293 = vadd.f32 0.0, %v1292
        %1294 = vdwg.mxu0
        %s1295 = scalar_lea.vmem [#allocation5], 3072
        %v1296 = vld [vmem:[%s1295] sm:$0xff]
        %v1297 = vld [vmem:[%s1295 + $0x8] sm:$0xff]
        %v1298 = vld [vmem:[%s1295 + $0x10] sm:$0xff]
        %v1299 = vld [vmem:[%s1295 + $0x18] sm:$0xff]
        %v1300 = vld [vmem:[%s1295 + $0x20] sm:$0xff]
        %v1301 = vld [vmem:[%s1295 + $0x28] sm:$0xff]
        %v1302 = vld [vmem:[%s1295 + $0x30] sm:$0xff]
        %v1303 = vld [vmem:[%s1295 + $0x38] sm:$0xff]
        %v1304 = vld [vmem:[%s1295 + $0x40] sm:$0xff]
        %v1305 = vld [vmem:[%s1295 + $0x48] sm:$0xff]
        %v1306 = vld [vmem:[%s1295 + $0x50] sm:$0xff]
        %v1307 = vld [vmem:[%s1295 + $0x58] sm:$0xff]
        %v1308 = vld [vmem:[%s1295 + $0x60] sm:$0xff]
        %v1309 = vld [vmem:[%s1295 + $0x68] sm:$0xff]
        %v1310 = vld [vmem:[%s1295 + $0x70] sm:$0xff]
        %v1311 = vld [vmem:[%s1295 + $0x78] sm:$0xff]
        %v1312 = vld [vmem:[%s1295 + $0x80] sm:$0xff]
        %v1313 = vld [vmem:[%s1295 + $0x88] sm:$0xff]
        %v1314 = vld [vmem:[%s1295 + $0x90] sm:$0xff]
        %v1315 = vld [vmem:[%s1295 + $0x98] sm:$0xff]
        %v1316 = vld [vmem:[%s1295 + $0xa0] sm:$0xff]
        %v1317 = vld [vmem:[%s1295 + $0xa8] sm:$0xff]
        %v1318 = vld [vmem:[%s1295 + $0xb0] sm:$0xff]
        %v1319 = vld [vmem:[%s1295 + $0xb8] sm:$0xff]
        %v1320 = vld [vmem:[%s1295 + $0xc0] sm:$0xff]
        %v1321 = vld [vmem:[%s1295 + $0xc8] sm:$0xff]
        %v1322 = vld [vmem:[%s1295 + $0xd0] sm:$0xff]
        %v1323 = vld [vmem:[%s1295 + $0xd8] sm:$0xff]
        %v1324 = vld [vmem:[%s1295 + $0xe0] sm:$0xff]
        %v1325 = vld [vmem:[%s1295 + $0xe8] sm:$0xff]
        %v1326 = vld [vmem:[%s1295 + $0xf0] sm:$0xff]
        %v1327 = vld [vmem:[%s1295 + $0xf8] sm:$0xff]
        %v1328 = vld [vmem:[%s1295 + $0x100] sm:$0xff]
        %v1329 = vld [vmem:[%s1295 + $0x108] sm:$0xff]
        %v1330 = vld [vmem:[%s1295 + $0x110] sm:$0xff]
        %v1331 = vld [vmem:[%s1295 + $0x118] sm:$0xff]
        %v1332 = vld [vmem:[%s1295 + $0x120] sm:$0xff]
        %v1333 = vld [vmem:[%s1295 + $0x128] sm:$0xff]
        %v1334 = vld [vmem:[%s1295 + $0x130] sm:$0xff]
        %v1335 = vld [vmem:[%s1295 + $0x138] sm:$0xff]
        %v1336 = vld [vmem:[%s1295 + $0x140] sm:$0xff]
        %v1337 = vld [vmem:[%s1295 + $0x148] sm:$0xff]
        %v1338 = vld [vmem:[%s1295 + $0x150] sm:$0xff]
        %v1339 = vld [vmem:[%s1295 + $0x158] sm:$0xff]
        %v1340 = vld [vmem:[%s1295 + $0x160] sm:$0xff]
        %v1341 = vld [vmem:[%s1295 + $0x168] sm:$0xff]
        %v1342 = vld [vmem:[%s1295 + $0x170] sm:$0xff]
        %v1343 = vld [vmem:[%s1295 + $0x178] sm:$0xff]
        %v1344 = vld [vmem:[%s1295 + $0x180] sm:$0xff]
        %v1345 = vld [vmem:[%s1295 + $0x188] sm:$0xff]
        %v1346 = vld [vmem:[%s1295 + $0x190] sm:$0xff]
        %v1347 = vld [vmem:[%s1295 + $0x198] sm:$0xff]
        %v1348 = vld [vmem:[%s1295 + $0x1a0] sm:$0xff]
        %v1349 = vld [vmem:[%s1295 + $0x1a8] sm:$0xff]
        %v1350 = vld [vmem:[%s1295 + $0x1b0] sm:$0xff]
        %v1351 = vld [vmem:[%s1295 + $0x1b8] sm:$0xff]
        %v1352 = vld [vmem:[%s1295 + $0x1c0] sm:$0xff]
        %v1353 = vld [vmem:[%s1295 + $0x1c8] sm:$0xff]
        %v1354 = vld [vmem:[%s1295 + $0x1d0] sm:$0xff]
        %v1355 = vld [vmem:[%s1295 + $0x1d8] sm:$0xff]
        %v1356 = vld [vmem:[%s1295 + $0x1e0] sm:$0xff]
        %v1357 = vld [vmem:[%s1295 + $0x1e8] sm:$0xff]
        %v1358 = vld [vmem:[%s1295 + $0x1f0] sm:$0xff]
        %v1359 = vld [vmem:[%s1295 + $0x1f8] sm:$0xff]
        %1360 = vmatprep.subr.mxu0 %v1297
        %1361 = vmatpush1.msra.mxu0 %v1296
        %1362 = vmatprep.subr.mxu0 %v1299
        %1363 = vmatpush1.msra.mxu0 %v1298
        %1364 = vmatprep.subr.mxu0 %v1301
        %1365 = vmatpush1.msra.mxu0 %v1300
        %1366 = vmatprep.subr.mxu0 %v1303
        %1367 = vmatpush1.msra.mxu0 %v1302
        %1368 = vmatprep.subr.mxu0 %v1305
        %1369 = vmatpush1.msra.mxu0 %v1304
        %1370 = vmatprep.subr.mxu0 %v1307
        %1371 = vmatpush1.msra.mxu0 %v1306
        %1372 = vmatprep.subr.mxu0 %v1309
        %1373 = vmatpush1.msra.mxu0 %v1308
        %1374 = vmatprep.subr.mxu0 %v1311
        %1375 = vmatpush1.msra.mxu0 %v1310
        %1376 = vmatprep.subr.mxu0 %v1313
        %1377 = vmatpush1.msra.mxu0 %v1312
        %1378 = vmatprep.subr.mxu0 %v1315
        %1379 = vmatpush1.msra.mxu0 %v1314
        %1380 = vmatprep.subr.mxu0 %v1317
        %1381 = vmatpush1.msra.mxu0 %v1316
        %1382 = vmatprep.subr.mxu0 %v1319
        %1383 = vmatpush1.msra.mxu0 %v1318
        %1384 = vmatprep.subr.mxu0 %v1321
        %1385 = vmatpush1.msra.mxu0 %v1320
        %1386 = vmatprep.subr.mxu0 %v1323
        %1387 = vmatpush1.msra.mxu0 %v1322
        %1388 = vmatprep.subr.mxu0 %v1325
        %1389 = vmatpush1.msra.mxu0 %v1324
        %1390 = vmatprep.subr.mxu0 %v1327
        %1391 = vmatpush1.msra.mxu0 %v1326
        %1392 = vmatprep.subr.mxu0 %v1329
        %1393 = vmatpush1.msra.mxu0 %v1328
        %1394 = vmatprep.subr.mxu0 %v1331
        %1395 = vmatpush1.msra.mxu0 %v1330
        %1396 = vmatprep.subr.mxu0 %v1333
        %1397 = vmatpush1.msra.mxu0 %v1332
        %1398 = vmatprep.subr.mxu0 %v1335
        %1399 = vmatpush1.msra.mxu0 %v1334
        %1400 = vmatprep.subr.mxu0 %v1337
        %1401 = vmatpush1.msra.mxu0 %v1336
        %1402 = vmatprep.subr.mxu0 %v1339
        %1403 = vmatpush1.msra.mxu0 %v1338
        %1404 = vmatprep.subr.mxu0 %v1341
        %1405 = vmatpush1.msra.mxu0 %v1340
        %1406 = vmatprep.subr.mxu0 %v1343
        %1407 = vmatpush1.msra.mxu0 %v1342
        %1408 = vmatprep.subr.mxu0 %v1345
        %1409 = vmatpush1.msra.mxu0 %v1344
        %1410 = vmatprep.subr.mxu0 %v1347
        %1411 = vmatpush1.msra.mxu0 %v1346
        %1412 = vmatprep.subr.mxu0 %v1349
        %1413 = vmatpush1.msra.mxu0 %v1348
        %1414 = vmatprep.subr.mxu0 %v1351
        %1415 = vmatpush1.msra.mxu0 %v1350
        %1416 = vmatprep.subr.mxu0 %v1353
        %1417 = vmatpush1.msra.mxu0 %v1352
        %1418 = vmatprep.subr.mxu0 %v1355
        %1419 = vmatpush1.msra.mxu0 %v1354
        %1420 = vmatprep.subr.mxu0 %v1357
        %1421 = vmatpush1.msra.mxu0 %v1356
        %1422 = vmatprep.subr.mxu0 %v1359
        %1423 = vmatpush1.msra.mxu0 %v1358
        %1424 = vmatprep.mubr.f32.mxu0 %v435
        %1425 = vmatmul.mubr.f32.gmra.mrb[0].mxu0 %v434
        %v1426 = vpop.f32.mrb[0].mxu0
        %v1427 = vadd.f32 0.0, %v1426
        %v1428 = vpop.f32.mrb[0].mxu0
        %v1429 = vadd.f32 0.0, %v1428
        %1430 = vmatprep.mubr.f32.mxu0 %v437
        %1431 = vmatmul.mubr.f32.gmra.mrb[0].mxu0 %v436
        %v1432 = vpop.f32.mrb[0].mxu0
        %v1433 = vadd.f32 0.0, %v1432
        %v1434 = vpop.f32.mrb[0].mxu0
        %v1435 = vadd.f32 0.0, %v1434
        %1436 = vdwg.mxu0
        %s1437 = scalar_lea.vmem [#allocation5], 3584
        %v1438 = vld [vmem:[%s1437] sm:$0xff]
        %v1439 = vld [vmem:[%s1437 + $0x8] sm:$0xff]
        %v1440 = vld [vmem:[%s1437 + $0x10] sm:$0xff]
        %v1441 = vld [vmem:[%s1437 + $0x18] sm:$0xff]
        %v1442 = vld [vmem:[%s1437 + $0x20] sm:$0xff]
        %v1443 = vld [vmem:[%s1437 + $0x28] sm:$0xff]
        %v1444 = vld [vmem:[%s1437 + $0x30] sm:$0xff]
        %v1445 = vld [vmem:[%s1437 + $0x38] sm:$0xff]
        %v1446 = vld [vmem:[%s1437 + $0x40] sm:$0xff]
        %v1447 = vld [vmem:[%s1437 + $0x48] sm:$0xff]
        %v1448 = vld [vmem:[%s1437 + $0x50] sm:$0xff]
        %v1449 = vld [vmem:[%s1437 + $0x58] sm:$0xff]
        %v1450 = vld [vmem:[%s1437 + $0x60] sm:$0xff]
        %v1451 = vld [vmem:[%s1437 + $0x68] sm:$0xff]
        %v1452 = vld [vmem:[%s1437 + $0x70] sm:$0xff]
        %v1453 = vld [vmem:[%s1437 + $0x78] sm:$0xff]
        %v1454 = vld [vmem:[%s1437 + $0x80] sm:$0xff]
        %v1455 = vld [vmem:[%s1437 + $0x88] sm:$0xff]
        %v1456 = vld [vmem:[%s1437 + $0x90] sm:$0xff]
        %v1457 = vld [vmem:[%s1437 + $0x98] sm:$0xff]
        %v1458 = vld [vmem:[%s1437 + $0xa0] sm:$0xff]
        %v1459 = vld [vmem:[%s1437 + $0xa8] sm:$0xff]
        %v1460 = vld [vmem:[%s1437 + $0xb0] sm:$0xff]
        %v1461 = vld [vmem:[%s1437 + $0xb8] sm:$0xff]
        %v1462 = vld [vmem:[%s1437 + $0xc0] sm:$0xff]
        %v1463 = vld [vmem:[%s1437 + $0xc8] sm:$0xff]
        %v1464 = vld [vmem:[%s1437 + $0xd0] sm:$0xff]
        %v1465 = vld [vmem:[%s1437 + $0xd8] sm:$0xff]
        %v1466 = vld [vmem:[%s1437 + $0xe0] sm:$0xff]
        %v1467 = vld [vmem:[%s1437 + $0xe8] sm:$0xff]
        %v1468 = vld [vmem:[%s1437 + $0xf0] sm:$0xff]
        %v1469 = vld [vmem:[%s1437 + $0xf8] sm:$0xff]
        %v1470 = vld [vmem:[%s1437 + $0x100] sm:$0xff]
        %v1471 = vld [vmem:[%s1437 + $0x108] sm:$0xff]
        %v1472 = vld [vmem:[%s1437 + $0x110] sm:$0xff]
        %v1473 = vld [vmem:[%s1437 + $0x118] sm:$0xff]
        %v1474 = vld [vmem:[%s1437 + $0x120] sm:$0xff]
        %v1475 = vld [vmem:[%s1437 + $0x128] sm:$0xff]
        %v1476 = vld [vmem:[%s1437 + $0x130] sm:$0xff]
        %v1477 = vld [vmem:[%s1437 + $0x138] sm:$0xff]
        %v1478 = vld [vmem:[%s1437 + $0x140] sm:$0xff]
        %v1479 = vld [vmem:[%s1437 + $0x148] sm:$0xff]
        %v1480 = vld [vmem:[%s1437 + $0x150] sm:$0xff]
        %v1481 = vld [vmem:[%s1437 + $0x158] sm:$0xff]
        %v1482 = vld [vmem:[%s1437 + $0x160] sm:$0xff]
        %v1483 = vld [vmem:[%s1437 + $0x168] sm:$0xff]
        %v1484 = vld [vmem:[%s1437 + $0x170] sm:$0xff]
        %v1485 = vld [vmem:[%s1437 + $0x178] sm:$0xff]
        %v1486 = vld [vmem:[%s1437 + $0x180] sm:$0xff]
        %v1487 = vld [vmem:[%s1437 + $0x188] sm:$0xff]
        %v1488 = vld [vmem:[%s1437 + $0x190] sm:$0xff]
        %v1489 = vld [vmem:[%s1437 + $0x198] sm:$0xff]
        %v1490 = vld [vmem:[%s1437 + $0x1a0] sm:$0xff]
        %v1491 = vld [vmem:[%s1437 + $0x1a8] sm:$0xff]
        %v1492 = vld [vmem:[%s1437 + $0x1b0] sm:$0xff]
        %v1493 = vld [vmem:[%s1437 + $0x1b8] sm:$0xff]
        %v1494 = vld [vmem:[%s1437 + $0x1c0] sm:$0xff]
        %v1495 = vld [vmem:[%s1437 + $0x1c8] sm:$0xff]
        %v1496 = vld [vmem:[%s1437 + $0x1d0] sm:$0xff]
        %v1497 = vld [vmem:[%s1437 + $0x1d8] sm:$0xff]
        %v1498 = vld [vmem:[%s1437 + $0x1e0] sm:$0xff]
        %v1499 = vld [vmem:[%s1437 + $0x1e8] sm:$0xff]
        %v1500 = vld [vmem:[%s1437 + $0x1f0] sm:$0xff]
        %v1501 = vld [vmem:[%s1437 + $0x1f8] sm:$0xff]
        %1502 = vmatprep.subr.mxu0 %v1439
        %1503 = vmatpush1.msra.mxu0 %v1438
        %1504 = vmatprep.subr.mxu0 %v1441
        %1505 = vmatpush1.msra.mxu0 %v1440
        %1506 = vmatprep.subr.mxu0 %v1443
        %1507 = vmatpush1.msra.mxu0 %v1442
        %1508 = vmatprep.subr.mxu0 %v1445
        %1509 = vmatpush1.msra.mxu0 %v1444
        %1510 = vmatprep.subr.mxu0 %v1447
        %1511 = vmatpush1.msra.mxu0 %v1446
        %1512 = vmatprep.subr.mxu0 %v1449
        %1513 = vmatpush1.msra.mxu0 %v1448
        %1514 = vmatprep.subr.mxu0 %v1451
        %1515 = vmatpush1.msra.mxu0 %v1450
        %1516 = vmatprep.subr.mxu0 %v1453
        %1517 = vmatpush1.msra.mxu0 %v1452
        %1518 = vmatprep.subr.mxu0 %v1455
        %1519 = vmatpush1.msra.mxu0 %v1454
        %1520 = vmatprep.subr.mxu0 %v1457
        %1521 = vmatpush1.msra.mxu0 %v1456
        %1522 = vmatprep.subr.mxu0 %v1459
        %1523 = vmatpush1.msra.mxu0 %v1458
        %1524 = vmatprep.subr.mxu0 %v1461
        %1525 = vmatpush1.msra.mxu0 %v1460
        %1526 = vmatprep.subr.mxu0 %v1463
        %1527 = vmatpush1.msra.mxu0 %v1462
        %1528 = vmatprep.subr.mxu0 %v1465
        %1529 = vmatpush1.msra.mxu0 %v1464
        %1530 = vmatprep.subr.mxu0 %v1467
        %1531 = vmatpush1.msra.mxu0 %v1466
        %1532 = vmatprep.subr.mxu0 %v1469
        %1533 = vmatpush1.msra.mxu0 %v1468
        %1534 = vmatprep.subr.mxu0 %v1471
        %1535 = vmatpush1.msra.mxu0 %v1470
        %1536 = vmatprep.subr.mxu0 %v1473
        %1537 = vmatpush1.msra.mxu0 %v1472
        %1538 = vmatprep.subr.mxu0 %v1475
        %1539 = vmatpush1.msra.mxu0 %v1474
        %1540 = vmatprep.subr.mxu0 %v1477
        %1541 = vmatpush1.msra.mxu0 %v1476
        %1542 = vmatprep.subr.mxu0 %v1479
        %1543 = vmatpush1.msra.mxu0 %v1478
        %1544 = vmatprep.subr.mxu0 %v1481
        %1545 = vmatpush1.msra.mxu0 %v1480
        %1546 = vmatprep.subr.mxu0 %v1483
        %1547 = vmatpush1.msra.mxu0 %v1482
        %1548 = vmatprep.subr.mxu0 %v1485
        %1549 = vmatpush1.msra.mxu0 %v1484
        %1550 = vmatprep.subr.mxu0 %v1487
        %1551 = vmatpush1.msra.mxu0 %v1486
        %1552 = vmatprep.subr.mxu0 %v1489
        %1553 = vmatpush1.msra.mxu0 %v1488
        %1554 = vmatprep.subr.mxu0 %v1491
        %1555 = vmatpush1.msra.mxu0 %v1490
        %1556 = vmatprep.subr.mxu0 %v1493
        %1557 = vmatpush1.msra.mxu0 %v1492
        %1558 = vmatprep.subr.mxu0 %v1495
        %1559 = vmatpush1.msra.mxu0 %v1494
        %1560 = vmatprep.subr.mxu0 %v1497
        %1561 = vmatpush1.msra.mxu0 %v1496
        %1562 = vmatprep.subr.mxu0 %v1499
        %1563 = vmatpush1.msra.mxu0 %v1498
        %1564 = vmatprep.subr.mxu0 %v1501
        %1565 = vmatpush1.msra.mxu0 %v1500
        %1566 = vmatprep.mubr.f32.mxu0 %v435
        %1567 = vmatmul.mubr.f32.gmra.mrb[0].mxu0 %v434
        %v1568 = vpop.f32.mrb[0].mxu0
        %v1569 = vadd.f32 0.0, %v1568
        %v1570 = vpop.f32.mrb[0].mxu0
        %v1571 = vadd.f32 0.0, %v1570
        %1572 = vmatprep.mubr.f32.mxu0 %v437
        %1573 = vmatmul.mubr.f32.gmra.mrb[0].mxu0 %v436
        %v1574 = vpop.f32.mrb[0].mxu0
        %v1575 = vadd.f32 0.0, %v1574
        %v1576 = vpop.f32.mrb[0].mxu0
        %v1577 = vadd.f32 0.0, %v1576
        %1578 = vdwg.mxu0
        %s1579 = scalar_lea.vmem [#allocation5], 4096
        %v1580 = vld [vmem:[%s1579] sm:$0xff]
        %v1581 = vld [vmem:[%s1579 + $0x8] sm:$0xff]
        %v1582 = vld [vmem:[%s1579 + $0x10] sm:$0xff]
        %v1583 = vld [vmem:[%s1579 + $0x18] sm:$0xff]
        %v1584 = vld [vmem:[%s1579 + $0x20] sm:$0xff]
        %v1585 = vld [vmem:[%s1579 + $0x28] sm:$0xff]
        %v1586 = vld [vmem:[%s1579 + $0x30] sm:$0xff]
        %v1587 = vld [vmem:[%s1579 + $0x38] sm:$0xff]
        %v1588 = vld [vmem:[%s1579 + $0x40] sm:$0xff]
        %v1589 = vld [vmem:[%s1579 + $0x48] sm:$0xff]
        %v1590 = vld [vmem:[%s1579 + $0x50] sm:$0xff]
        %v1591 = vld [vmem:[%s1579 + $0x58] sm:$0xff]
        %v1592 = vld [vmem:[%s1579 + $0x60] sm:$0xff]
        %v1593 = vld [vmem:[%s1579 + $0x68] sm:$0xff]
        %v1594 = vld [vmem:[%s1579 + $0x70] sm:$0xff]
        %v1595 = vld [vmem:[%s1579 + $0x78] sm:$0xff]
        %v1596 = vld [vmem:[%s1579 + $0x80] sm:$0xff]
        %v1597 = vld [vmem:[%s1579 + $0x88] sm:$0xff]
        %v1598 = vld [vmem:[%s1579 + $0x90] sm:$0xff]
        %v1599 = vld [vmem:[%s1579 + $0x98] sm:$0xff]
        %v1600 = vld [vmem:[%s1579 + $0xa0] sm:$0xff]
        %v1601 = vld [vmem:[%s1579 + $0xa8] sm:$0xff]
        %v1602 = vld [vmem:[%s1579 + $0xb0] sm:$0xff]
        %v1603 = vld [vmem:[%s1579 + $0xb8] sm:$0xff]
        %v1604 = vld [vmem:[%s1579 + $0xc0] sm:$0xff]
        %v1605 = vld [vmem:[%s1579 + $0xc8] sm:$0xff]
        %v1606 = vld [vmem:[%s1579 + $0xd0] sm:$0xff]
        %v1607 = vld [vmem:[%s1579 + $0xd8] sm:$0xff]
        %v1608 = vld [vmem:[%s1579 + $0xe0] sm:$0xff]
        %v1609 = vld [vmem:[%s1579 + $0xe8] sm:$0xff]
        %v1610 = vld [vmem:[%s1579 + $0xf0] sm:$0xff]
        %v1611 = vld [vmem:[%s1579 + $0xf8] sm:$0xff]
        %v1612 = vld [vmem:[%s1579 + $0x100] sm:$0xff]
        %v1613 = vld [vmem:[%s1579 + $0x108] sm:$0xff]
        %v1614 = vld [vmem:[%s1579 + $0x110] sm:$0xff]
        %v1615 = vld [vmem:[%s1579 + $0x118] sm:$0xff]
        %v1616 = vld [vmem:[%s1579 + $0x120] sm:$0xff]
        %v1617 = vld [vmem:[%s1579 + $0x128] sm:$0xff]
        %v1618 = vld [vmem:[%s1579 + $0x130] sm:$0xff]
        %v1619 = vld [vmem:[%s1579 + $0x138] sm:$0xff]
        %v1620 = vld [vmem:[%s1579 + $0x140] sm:$0xff]
        %v1621 = vld [vmem:[%s1579 + $0x148] sm:$0xff]
        %v1622 = vld [vmem:[%s1579 + $0x150] sm:$0xff]
        %v1623 = vld [vmem:[%s1579 + $0x158] sm:$0xff]
        %v1624 = vld [vmem:[%s1579 + $0x160] sm:$0xff]
        %v1625 = vld [vmem:[%s1579 + $0x168] sm:$0xff]
        %v1626 = vld [vmem:[%s1579 + $0x170] sm:$0xff]
        %v1627 = vld [vmem:[%s1579 + $0x178] sm:$0xff]
        %v1628 = vld [vmem:[%s1579 + $0x180] sm:$0xff]
        %v1629 = vld [vmem:[%s1579 + $0x188] sm:$0xff]
        %v1630 = vld [vmem:[%s1579 + $0x190] sm:$0xff]
        %v1631 = vld [vmem:[%s1579 + $0x198] sm:$0xff]
        %v1632 = vld [vmem:[%s1579 + $0x1a0] sm:$0xff]
        %v1633 = vld [vmem:[%s1579 + $0x1a8] sm:$0xff]
        %v1634 = vld [vmem:[%s1579 + $0x1b0] sm:$0xff]
        %v1635 = vld [vmem:[%s1579 + $0x1b8] sm:$0xff]
        %v1636 = vld [vmem:[%s1579 + $0x1c0] sm:$0xff]
        %v1637 = vld [vmem:[%s1579 + $0x1c8] sm:$0xff]
        %v1638 = vld [vmem:[%s1579 + $0x1d0] sm:$0xff]
        %v1639 = vld [vmem:[%s1579 + $0x1d8] sm:$0xff]
        %v1640 = vld [vmem:[%s1579 + $0x1e0] sm:$0xff]
        %v1641 = vld [vmem:[%s1579 + $0x1e8] sm:$0xff]
        %v1642 = vld [vmem:[%s1579 + $0x1f0] sm:$0xff]
        %v1643 = vld [vmem:[%s1579 + $0x1f8] sm:$0xff]
        %1644 = vmatprep.subr.mxu0 %v1581
        %1645 = vmatpush1.msra.mxu0 %v1580
        %1646 = vmatprep.subr.mxu0 %v1583
        %1647 = vmatpush1.msra.mxu0 %v1582
        %1648 = vmatprep.subr.mxu0 %v1585
        %1649 = vmatpush1.msra.mxu0 %v1584
        %1650 = vmatprep.subr.mxu0 %v1587
        %1651 = vmatpush1.msra.mxu0 %v1586
        %1652 = vmatprep.subr.mxu0 %v1589
        %1653 = vmatpush1.msra.mxu0 %v1588
        %1654 = vmatprep.subr.mxu0 %v1591
        %1655 = vmatpush1.msra.mxu0 %v1590
        %1656 = vmatprep.subr.mxu0 %v1593
        %1657 = vmatpush1.msra.mxu0 %v1592
        %1658 = vmatprep.subr.mxu0 %v1595
        %1659 = vmatpush1.msra.mxu0 %v1594
        %1660 = vmatprep.subr.mxu0 %v1597
        %1661 = vmatpush1.msra.mxu0 %v1596
        %1662 = vmatprep.subr.mxu0 %v1599
        %1663 = vmatpush1.msra.mxu0 %v1598
        %1664 = vmatprep.subr.mxu0 %v1601
        %1665 = vmatpush1.msra.mxu0 %v1600
        %1666 = vmatprep.subr.mxu0 %v1603
        %1667 = vmatpush1.msra.mxu0 %v1602
        %1668 = vmatprep.subr.mxu0 %v1605
        %1669 = vmatpush1.msra.mxu0 %v1604
        %1670 = vmatprep.subr.mxu0 %v1607
        %1671 = vmatpush1.msra.mxu0 %v1606
        %1672 = vmatprep.subr.mxu0 %v1609
        %1673 = vmatpush1.msra.mxu0 %v1608
        %1674 = vmatprep.subr.mxu0 %v1611
        %1675 = vmatpush1.msra.mxu0 %v1610
        %1676 = vmatprep.subr.mxu0 %v1613
        %1677 = vmatpush1.msra.mxu0 %v1612
        %1678 = vmatprep.subr.mxu0 %v1615
        %1679 = vmatpush1.msra.mxu0 %v1614
        %1680 = vmatprep.subr.mxu0 %v1617
        %1681 = vmatpush1.msra.mxu0 %v1616
        %1682 = vmatprep.subr.mxu0 %v1619
        %1683 = vmatpush1.msra.mxu0 %v1618
        %1684 = vmatprep.subr.mxu0 %v1621
        %1685 = vmatpush1.msra.mxu0 %v1620
        %1686 = vmatprep.subr.mxu0 %v1623
        %1687 = vmatpush1.msra.mxu0 %v1622
        %1688 = vmatprep.subr.mxu0 %v1625
        %1689 = vmatpush1.msra.mxu0 %v1624
        %1690 = vmatprep.subr.mxu0 %v1627
        %1691 = vmatpush1.msra.mxu0 %v1626
        %1692 = vmatprep.subr.mxu0 %v1629
        %1693 = vmatpush1.msra.mxu0 %v1628
        %1694 = vmatprep.subr.mxu0 %v1631
        %1695 = vmatpush1.msra.mxu0 %v1630
        %1696 = vmatprep.subr.mxu0 %v1633
        %1697 = vmatpush1.msra.mxu0 %v1632
        %1698 = vmatprep.subr.mxu0 %v1635
        %1699 = vmatpush1.msra.mxu0 %v1634
        %1700 = vmatprep.subr.mxu0 %v1637
        %1701 = vmatpush1.msra.mxu0 %v1636
        %1702 = vmatprep.subr.mxu0 %v1639
        %1703 = vmatpush1.msra.mxu0 %v1638
        %1704 = vmatprep.subr.mxu0 %v1641
        %1705 = vmatpush1.msra.mxu0 %v1640
        %1706 = vmatprep.subr.mxu0 %v1643
        %1707 = vmatpush1.msra.mxu0 %v1642
        %1708 = vmatprep.mubr.f32.mxu0 %v435
        %1709 = vmatmul.mubr.f32.gmra.mrb[0].mxu0 %v434
        %v1710 = vpop.f32.mrb[0].mxu0
        %v1711 = vadd.f32 0.0, %v1710
        %v1712 = vpop.f32.mrb[0].mxu0
        %v1713 = vadd.f32 0.0, %v1712
        %1714 = vmatprep.mubr.f32.mxu0 %v437
        %1715 = vmatmul.mubr.f32.gmra.mrb[0].mxu0 %v436
        %v1716 = vpop.f32.mrb[0].mxu0
        %v1717 = vadd.f32 0.0, %v1716
        %v1718 = vpop.f32.mrb[0].mxu0
        %v1719 = vadd.f32 0.0, %v1718
        %1720 = vdwg.mxu0
        %1722 = vset.pattern.permute.xlu0 0
        %1723 = vperm.xlu0 %1722, %v442
        %v1724 = vpop.permute.xlu0 %1723
        %1727 = vset.pattern.permute.xlu0 0
        %1728 = vperm.xlu0 %1727, %v443
        %v1729 = vpop.permute.xlu0 %1728
        %vm1731 = vcmask 130048
        %v1733 = vsel %vm1731, %v439, 0
        %v1736 = vsel %vm1731, %v441, 0
        %1738 = vmatprep.subr.mxu0 %v577
        %1739 = vmatpush1.msra.mxu0 %v575
        %1740 = vmatprep.subr.mxu0 %v583
        %1741 = vmatpush1.msra.mxu0 %v581
        %1742 = vmatprep.subr.mxu0 %v719
        %1743 = vmatpush1.msra.mxu0 %v717
        %1744 = vmatprep.subr.mxu0 %v725
        %1745 = vmatpush1.msra.mxu0 %v723
        %1746 = vmatprep.subr.mxu0 %v861
        %1747 = vmatpush1.msra.mxu0 %v859
        %1748 = vmatprep.subr.mxu0 %v867
        %1749 = vmatpush1.msra.mxu0 %v865
        %1750 = vmatprep.subr.mxu0 %v1003
        %1751 = vmatpush1.msra.mxu0 %v1001
        %1752 = vmatprep.subr.mxu0 %v1009
        %1753 = vmatpush1.msra.mxu0 %v1007
        %1754 = vmatprep.subr.mxu0 %v1145
        %1755 = vmatpush1.msra.mxu0 %v1143
        %1756 = vmatprep.subr.mxu0 %v1151
        %1757 = vmatpush1.msra.mxu0 %v1149
        %1758 = vmatprep.subr.mxu0 %v1287
        %1759 = vmatpush1.msra.mxu0 %v1285
        %1760 = vmatprep.subr.mxu0 %v1293
        %1761 = vmatpush1.msra.mxu0 %v1291
        %1762 = vmatprep.subr.mxu0 %v1429
        %1763 = vmatpush1.msra.mxu0 %v1427
        %1764 = vmatprep.subr.mxu0 %v1435
        %1765 = vmatpush1.msra.mxu0 %v1433
        %1766 = vmatprep.subr.mxu0 %v1571
        %1767 = vmatpush1.msra.mxu0 %v1569
        %1768 = vmatprep.subr.mxu0 %v1577
        %1769 = vmatpush1.msra.mxu0 %v1575
        %1770 = vmatprep.subr.mxu0 %v1713
        %1771 = vmatpush1.msra.mxu0 %v1711
        %1772 = vmatprep.subr.mxu0 %v1719
        %1773 = vmatpush1.msra.mxu0 %v1717
        %1774 = vmatprep.subr.mxu0 0.0
        %1775 = vmatpush1.msra.mxu0 0.0
        %1776 = vmatprep.subr.mxu0 0.0
        %1777 = vmatpush1.msra.mxu0 0.0
        %1778 = vmatprep.subr.mxu0 0.0
        %1779 = vmatpush1.msra.mxu0 0.0
        %1780 = vmatprep.subr.mxu0 0.0
        %1781 = vmatpush1.msra.mxu0 0.0
        %1782 = vmatprep.subr.mxu0 0.0
        %1783 = vmatpush1.msra.mxu0 0.0
        %1784 = vmatprep.subr.mxu0 0.0
        %1785 = vmatpush1.msra.mxu0 0.0
        %1786 = vmatprep.subr.mxu0 0.0
        %1787 = vmatpush1.msra.mxu0 0.0
        %1788 = vmatprep.subr.mxu0 0.0
        %1789 = vmatpush1.msra.mxu0 0.0
        %1790 = vmatprep.subr.mxu0 0.0
        %1791 = vmatpush1.msra.mxu0 0.0
        %1792 = vmatprep.subr.mxu0 0.0
        %1793 = vmatpush1.msra.mxu0 0.0
        %1794 = vmatprep.subr.mxu0 0.0
        %1795 = vmatpush1.msra.mxu0 0.0
        %1796 = vmatprep.subr.mxu0 0.0
        %1797 = vmatpush1.msra.mxu0 0.0
        %1798 = vmatprep.subr.mxu0 0.0
        %1799 = vmatpush1.msra.mxu0 0.0
        %1800 = vmatprep.subr.mxu0 0.0
        %1801 = vmatpush1.msra.mxu0 0.0
        %1802 = vmatprep.mubr.f32.mxu0 %v1733
        %1803 = vmatmul.mubr.f32.gmra.mrb[0].mxu0 %v438
        %v1804 = vpop.f32.mrb[0].mxu0
        %v1805 = vadd.f32 %v1724, %v1804
        %v1806 = vpop.f32.mrb[0].mxu0
        %v1807 = vadd.f32 %v1724, %v1806
        %1808 = vmatprep.mubr.f32.mxu0 %v1736
        %1809 = vmatmul.mubr.f32.gmra.mrb[0].mxu0 %v440
        %v1810 = vpop.f32.mrb[0].mxu0
        %v1811 = vadd.f32 %v1729, %v1810
        %v1812 = vpop.f32.mrb[0].mxu0
        %v1813 = vadd.f32 %v1729, %v1812
        %1814 = vdwg.mxu0
        %v1815 = vmax.f32 %v1805, 0.0
        %v1816 = vmax.f32 %v1807, 0.0
        %v1817 = vmax.f32 %v1811, 0.0
        %v1818 = vmax.f32 %v1813, 0.0
        %s1819 = scalar_lea.vmem [#allocation7], 32
        %v1820 = vld [vmem:[%s1819] sm:$0xff]
        %v1821 = vld [vmem:[%s1819 + $0x8] sm:$0xff]
        %v1822 = vld [vmem:[%s1819 + $0x10] sm:$0xff]
        %v1823 = vld [vmem:[%s1819 + $0x18] sm:$0xff]
        %s1824 = scalar_lea.vmem %s3, 16
        %v1825 = vld [vmem:[%s1824] sm:$0xff]
        %v1826 = vld [vmem:[%s1824 + $0x8] sm:$0xff]
        %1827 = vmatprep.subr.mxu0 %v445
        %1828 = vmatpush1.msra.mxu0 %v444
        %1829 = vmatprep.subr.mxu0 %v447
        %1830 = vmatpush1.msra.mxu0 %v446
        %1831 = vmatprep.subr.mxu0 %v449
        %1832 = vmatpush1.msra.mxu0 %v448
        %1833 = vmatprep.subr.mxu0 %v451
        %1834 = vmatpush1.msra.mxu0 %v450
        %1835 = vmatprep.subr.mxu0 %v453
        %1836 = vmatpush1.msra.mxu0 %v452
        %1837 = vmatprep.subr.mxu0 %v455
        %1838 = vmatpush1.msra.mxu0 %v454
        %1839 = vmatprep.subr.mxu0 %v457
        %1840 = vmatpush1.msra.mxu0 %v456
        %1841 = vmatprep.subr.mxu0 %v459
        %1842 = vmatpush1.msra.mxu0 %v458
        %1843 = vmatprep.subr.mxu0 %v461
        %1844 = vmatpush1.msra.mxu0 %v460
        %1845 = vmatprep.subr.mxu0 %v463
        %1846 = vmatpush1.msra.mxu0 %v462
        %1847 = vmatprep.subr.mxu0 %v465
        %1848 = vmatpush1.msra.mxu0 %v464
        %1849 = vmatprep.subr.mxu0 %v467
        %1850 = vmatpush1.msra.mxu0 %v466
        %1851 = vmatprep.subr.mxu0 %v469
        %1852 = vmatpush1.msra.mxu0 %v468
        %1853 = vmatprep.subr.mxu0 %v471
        %1854 = vmatpush1.msra.mxu0 %v470
        %1855 = vmatprep.subr.mxu0 %v473
        %1856 = vmatpush1.msra.mxu0 %v472
        %1857 = vmatprep.subr.mxu0 %v475
        %1858 = vmatpush1.msra.mxu0 %v474
        %1859 = vmatprep.subr.mxu0 %v477
        %1860 = vmatpush1.msra.mxu0 %v476
        %1861 = vmatprep.subr.mxu0 %v479
        %1862 = vmatpush1.msra.mxu0 %v478
        %1863 = vmatprep.subr.mxu0 %v481
        %1864 = vmatpush1.msra.mxu0 %v480
        %1865 = vmatprep.subr.mxu0 %v483
        %1866 = vmatpush1.msra.mxu0 %v482
        %1867 = vmatprep.subr.mxu0 %v485
        %1868 = vmatpush1.msra.mxu0 %v484
        %1869 = vmatprep.subr.mxu0 %v487
        %1870 = vmatpush1.msra.mxu0 %v486
        %1871 = vmatprep.subr.mxu0 %v489
        %1872 = vmatpush1.msra.mxu0 %v488
        %1873 = vmatprep.subr.mxu0 %v491
        %1874 = vmatpush1.msra.mxu0 %v490
        %1875 = vmatprep.subr.mxu0 %v493
        %1876 = vmatpush1.msra.mxu0 %v492
        %1877 = vmatprep.subr.mxu0 %v495
        %1878 = vmatpush1.msra.mxu0 %v494
        %1879 = vmatprep.subr.mxu0 %v497
        %1880 = vmatpush1.msra.mxu0 %v496
        %1881 = vmatprep.subr.mxu0 %v499
        %1882 = vmatpush1.msra.mxu0 %v498
        %1883 = vmatprep.subr.mxu0 %v501
        %1884 = vmatpush1.msra.mxu0 %v500
        %1885 = vmatprep.subr.mxu0 %v503
        %1886 = vmatpush1.msra.mxu0 %v502
        %1887 = vmatprep.subr.mxu0 %v505
        %1888 = vmatpush1.msra.mxu0 %v504
        %1889 = vmatprep.subr.mxu0 %v507
        %1890 = vmatpush1.msra.mxu0 %v506
        %1891 = vmatprep.mubr.f32.mxu0 %v1816
        %1892 = vmatmul.mubr.f32.gmra.mrb[0].mxu0 %v1815
        %v1893 = vpop.f32.mrb[0].mxu0
        %v1894 = vadd.f32 0.0, %v1893
        %v1895 = vpop.f32.mrb[0].mxu0
        %v1896 = vadd.f32 0.0, %v1895
        %1897 = vmatprep.mubr.f32.mxu0 %v1818
        %1898 = vmatmul.mubr.f32.gmra.mrb[0].mxu0 %v1817
        %v1899 = vpop.f32.mrb[0].mxu0
        %v1900 = vadd.f32 0.0, %v1899
        %v1901 = vpop.f32.mrb[0].mxu0
        %v1902 = vadd.f32 0.0, %v1901
        %1903 = vdwg.mxu0
        %1904 = vmatprep.subr.mxu0 %v587
        %1905 = vmatpush1.msra.mxu0 %v586
        %1906 = vmatprep.subr.mxu0 %v589
        %1907 = vmatpush1.msra.mxu0 %v588
        %1908 = vmatprep.subr.mxu0 %v591
        %1909 = vmatpush1.msra.mxu0 %v590
        %1910 = vmatprep.subr.mxu0 %v593
        %1911 = vmatpush1.msra.mxu0 %v592
        %1912 = vmatprep.subr.mxu0 %v595
        %1913 = vmatpush1.msra.mxu0 %v594
        %1914 = vmatprep.subr.mxu0 %v597
        %1915 = vmatpush1.msra.mxu0 %v596
        %1916 = vmatprep.subr.mxu0 %v599
        %1917 = vmatpush1.msra.mxu0 %v598
        %1918 = vmatprep.subr.mxu0 %v601
        %1919 = vmatpush1.msra.mxu0 %v600
        %1920 = vmatprep.subr.mxu0 %v603
        %1921 = vmatpush1.msra.mxu0 %v602
        %1922 = vmatprep.subr.mxu0 %v605
        %1923 = vmatpush1.msra.mxu0 %v604
        %1924 = vmatprep.subr.mxu0 %v607
        %1925 = vmatpush1.msra.mxu0 %v606
        %1926 = vmatprep.subr.mxu0 %v609
        %1927 = vmatpush1.msra.mxu0 %v608
        %1928 = vmatprep.subr.mxu0 %v611
        %1929 = vmatpush1.msra.mxu0 %v610
        %1930 = vmatprep.subr.mxu0 %v613
        %1931 = vmatpush1.msra.mxu0 %v612
        %1932 = vmatprep.subr.mxu0 %v615
        %1933 = vmatpush1.msra.mxu0 %v614
        %1934 = vmatprep.subr.mxu0 %v617
        %1935 = vmatpush1.msra.mxu0 %v616
        %1936 = vmatprep.subr.mxu0 %v619
        %1937 = vmatpush1.msra.mxu0 %v618
        %1938 = vmatprep.subr.mxu0 %v621
        %1939 = vmatpush1.msra.mxu0 %v620
        %1940 = vmatprep.subr.mxu0 %v623
        %1941 = vmatpush1.msra.mxu0 %v622
        %1942 = vmatprep.subr.mxu0 %v625
        %1943 = vmatpush1.msra.mxu0 %v624
        %1944 = vmatprep.subr.mxu0 %v627
        %1945 = vmatpush1.msra.mxu0 %v626
        %1946 = vmatprep.subr.mxu0 %v629
        %1947 = vmatpush1.msra.mxu0 %v628
        %1948 = vmatprep.subr.mxu0 %v631
        %1949 = vmatpush1.msra.mxu0 %v630
        %1950 = vmatprep.subr.mxu0 %v633
        %1951 = vmatpush1.msra.mxu0 %v632
        %1952 = vmatprep.subr.mxu0 %v635
        %1953 = vmatpush1.msra.mxu0 %v634
        %1954 = vmatprep.subr.mxu0 %v637
        %1955 = vmatpush1.msra.mxu0 %v636
        %1956 = vmatprep.subr.mxu0 %v639
        %1957 = vmatpush1.msra.mxu0 %v638
        %1958 = vmatprep.subr.mxu0 %v641
        %1959 = vmatpush1.msra.mxu0 %v640
        %1960 = vmatprep.subr.mxu0 %v643
        %1961 = vmatpush1.msra.mxu0 %v642
        %1962 = vmatprep.subr.mxu0 %v645
        %1963 = vmatpush1.msra.mxu0 %v644
        %1964 = vmatprep.subr.mxu0 %v647
        %1965 = vmatpush1.msra.mxu0 %v646
        %1966 = vmatprep.subr.mxu0 %v649
        %1967 = vmatpush1.msra.mxu0 %v648
        %1968 = vmatprep.mubr.f32.mxu0 %v1816
        %1969 = vmatmul.mubr.f32.gmra.mrb[0].mxu0 %v1815
        %v1970 = vpop.f32.mrb[0].mxu0
        %v1971 = vadd.f32 0.0, %v1970
        %v1972 = vpop.f32.mrb[0].mxu0
        %v1973 = vadd.f32 0.0, %v1972
        %1974 = vmatprep.mubr.f32.mxu0 %v1818
        %1975 = vmatmul.mubr.f32.gmra.mrb[0].mxu0 %v1817
        %v1976 = vpop.f32.mrb[0].mxu0
        %v1977 = vadd.f32 0.0, %v1976
        %v1978 = vpop.f32.mrb[0].mxu0
        %v1979 = vadd.f32 0.0, %v1978
        %1980 = vdwg.mxu0
        %1981 = vmatprep.subr.mxu0 %v729
        %1982 = vmatpush1.msra.mxu0 %v728
        %1983 = vmatprep.subr.mxu0 %v731
        %1984 = vmatpush1.msra.mxu0 %v730
        %1985 = vmatprep.subr.mxu0 %v733
        %1986 = vmatpush1.msra.mxu0 %v732
        %1987 = vmatprep.subr.mxu0 %v735
        %1988 = vmatpush1.msra.mxu0 %v734
        %1989 = vmatprep.subr.mxu0 %v737
        %1990 = vmatpush1.msra.mxu0 %v736
        %1991 = vmatprep.subr.mxu0 %v739
        %1992 = vmatpush1.msra.mxu0 %v738
        %1993 = vmatprep.subr.mxu0 %v741
        %1994 = vmatpush1.msra.mxu0 %v740
        %1995 = vmatprep.subr.mxu0 %v743
        %1996 = vmatpush1.msra.mxu0 %v742
        %1997 = vmatprep.subr.mxu0 %v745
        %1998 = vmatpush1.msra.mxu0 %v744
        %1999 = vmatprep.subr.mxu0 %v747
        %2000 = vmatpush1.msra.mxu0 %v746
        %2001 = vmatprep.subr.mxu0 %v749
        %2002 = vmatpush1.msra.mxu0 %v748
        %2003 = vmatprep.subr.mxu0 %v751
        %2004 = vmatpush1.msra.mxu0 %v750
        %2005 = vmatprep.subr.mxu0 %v753
        %2006 = vmatpush1.msra.mxu0 %v752
        %2007 = vmatprep.subr.mxu0 %v755
        %2008 = vmatpush1.msra.mxu0 %v754
        %2009 = vmatprep.subr.mxu0 %v757
        %2010 = vmatpush1.msra.mxu0 %v756
        %2011 = vmatprep.subr.mxu0 %v759
        %2012 = vmatpush1.msra.mxu0 %v758
        %2013 = vmatprep.subr.mxu0 %v761
        %2014 = vmatpush1.msra.mxu0 %v760
        %2015 = vmatprep.subr.mxu0 %v763
        %2016 = vmatpush1.msra.mxu0 %v762
        %2017 = vmatprep.subr.mxu0 %v765
        %2018 = vmatpush1.msra.mxu0 %v764
        %2019 = vmatprep.subr.mxu0 %v767
        %2020 = vmatpush1.msra.mxu0 %v766
        %2021 = vmatprep.subr.mxu0 %v769
        %2022 = vmatpush1.msra.mxu0 %v768
        %2023 = vmatprep.subr.mxu0 %v771
        %2024 = vmatpush1.msra.mxu0 %v770
        %2025 = vmatprep.subr.mxu0 %v773
        %2026 = vmatpush1.msra.mxu0 %v772
        %2027 = vmatprep.subr.mxu0 %v775
        %2028 = vmatpush1.msra.mxu0 %v774
        %2029 = vmatprep.subr.mxu0 %v777
        %2030 = vmatpush1.msra.mxu0 %v776
        %2031 = vmatprep.subr.mxu0 %v779
        %2032 = vmatpush1.msra.mxu0 %v778
        %2033 = vmatprep.subr.mxu0 %v781
        %2034 = vmatpush1.msra.mxu0 %v780
        %2035 = vmatprep.subr.mxu0 %v783
        %2036 = vmatpush1.msra.mxu0 %v782
        %2037 = vmatprep.subr.mxu0 %v785
        %2038 = vmatpush1.msra.mxu0 %v784
        %2039 = vmatprep.subr.mxu0 %v787
        %2040 = vmatpush1.msra.mxu0 %v786
        %2041 = vmatprep.subr.mxu0 %v789
        %2042 = vmatpush1.msra.mxu0 %v788
        %2043 = vmatprep.subr.mxu0 %v791
        %2044 = vmatpush1.msra.mxu0 %v790
        %2045 = vmatprep.mubr.f32.mxu0 %v1816
        %2046 = vmatmul.mubr.f32.gmra.mrb[0].mxu0 %v1815
        %v2047 = vpop.f32.mrb[0].mxu0
        %v2048 = vadd.f32 0.0, %v2047
        %v2049 = vpop.f32.mrb[0].mxu0
        %v2050 = vadd.f32 0.0, %v2049
        %2051 = vmatprep.mubr.f32.mxu0 %v1818
        %2052 = vmatmul.mubr.f32.gmra.mrb[0].mxu0 %v1817
        %v2053 = vpop.f32.mrb[0].mxu0
        %v2054 = vadd.f32 0.0, %v2053
        %v2055 = vpop.f32.mrb[0].mxu0
        %v2056 = vadd.f32 0.0, %v2055
        %2057 = vdwg.mxu0
        %2058 = vmatprep.subr.mxu0 %v871
        %2059 = vmatpush1.msra.mxu0 %v870
        %2060 = vmatprep.subr.mxu0 %v873
        %2061 = vmatpush1.msra.mxu0 %v872
        %2062 = vmatprep.subr.mxu0 %v875
        %2063 = vmatpush1.msra.mxu0 %v874
        %2064 = vmatprep.subr.mxu0 %v877
        %2065 = vmatpush1.msra.mxu0 %v876
        %2066 = vmatprep.subr.mxu0 %v879
        %2067 = vmatpush1.msra.mxu0 %v878
        %2068 = vmatprep.subr.mxu0 %v881
        %2069 = vmatpush1.msra.mxu0 %v880
        %2070 = vmatprep.subr.mxu0 %v883
        %2071 = vmatpush1.msra.mxu0 %v882
        %2072 = vmatprep.subr.mxu0 %v885
        %2073 = vmatpush1.msra.mxu0 %v884
        %2074 = vmatprep.subr.mxu0 %v887
        %2075 = vmatpush1.msra.mxu0 %v886
        %2076 = vmatprep.subr.mxu0 %v889
        %2077 = vmatpush1.msra.mxu0 %v888
        %2078 = vmatprep.subr.mxu0 %v891
        %2079 = vmatpush1.msra.mxu0 %v890
        %2080 = vmatprep.subr.mxu0 %v893
        %2081 = vmatpush1.msra.mxu0 %v892
        %2082 = vmatprep.subr.mxu0 %v895
        %2083 = vmatpush1.msra.mxu0 %v894
        %2084 = vmatprep.subr.mxu0 %v897
        %2085 = vmatpush1.msra.mxu0 %v896
        %2086 = vmatprep.subr.mxu0 %v899
        %2087 = vmatpush1.msra.mxu0 %v898
        %2088 = vmatprep.subr.mxu0 %v901
        %2089 = vmatpush1.msra.mxu0 %v900
        %2090 = vmatprep.subr.mxu0 %v903
        %2091 = vmatpush1.msra.mxu0 %v902
        %2092 = vmatprep.subr.mxu0 %v905
        %2093 = vmatpush1.msra.mxu0 %v904
        %2094 = vmatprep.subr.mxu0 %v907
        %2095 = vmatpush1.msra.mxu0 %v906
        %2096 = vmatprep.subr.mxu0 %v909
        %2097 = vmatpush1.msra.mxu0 %v908
        %2098 = vmatprep.subr.mxu0 %v911
        %2099 = vmatpush1.msra.mxu0 %v910
        %2100 = vmatprep.subr.mxu0 %v913
        %2101 = vmatpush1.msra.mxu0 %v912
        %2102 = vmatprep.subr.mxu0 %v915
        %2103 = vmatpush1.msra.mxu0 %v914
        %2104 = vmatprep.subr.mxu0 %v917
        %2105 = vmatpush1.msra.mxu0 %v916
        %2106 = vmatprep.subr.mxu0 %v919
        %2107 = vmatpush1.msra.mxu0 %v918
        %2108 = vmatprep.subr.mxu0 %v921
        %2109 = vmatpush1.msra.mxu0 %v920
        %2110 = vmatprep.subr.mxu0 %v923
        %2111 = vmatpush1.msra.mxu0 %v922
        %2112 = vmatprep.subr.mxu0 %v925
        %2113 = vmatpush1.msra.mxu0 %v924
        %2114 = vmatprep.subr.mxu0 %v927
        %2115 = vmatpush1.msra.mxu0 %v926
        %2116 = vmatprep.subr.mxu0 %v929
        %2117 = vmatpush1.msra.mxu0 %v928
        %2118 = vmatprep.subr.mxu0 %v931
        %2119 = vmatpush1.msra.mxu0 %v930
        %2120 = vmatprep.subr.mxu0 %v933
        %2121 = vmatpush1.msra.mxu0 %v932
        %2122 = vmatprep.mubr.f32.mxu0 %v1816
        %2123 = vmatmul.mubr.f32.gmra.mrb[0].mxu0 %v1815
        %v2124 = vpop.f32.mrb[0].mxu0
        %v2125 = vadd.f32 0.0, %v2124
        %v2126 = vpop.f32.mrb[0].mxu0
        %v2127 = vadd.f32 0.0, %v2126
        %2128 = vmatprep.mubr.f32.mxu0 %v1818
        %2129 = vmatmul.mubr.f32.gmra.mrb[0].mxu0 %v1817
        %v2130 = vpop.f32.mrb[0].mxu0
        %v2131 = vadd.f32 0.0, %v2130
        %v2132 = vpop.f32.mrb[0].mxu0
        %v2133 = vadd.f32 0.0, %v2132
        %2134 = vdwg.mxu0
        %2135 = vmatprep.subr.mxu0 %v1013
        %2136 = vmatpush1.msra.mxu0 %v1012
        %2137 = vmatprep.subr.mxu0 %v1015
        %2138 = vmatpush1.msra.mxu0 %v1014
        %2139 = vmatprep.subr.mxu0 %v1017
        %2140 = vmatpush1.msra.mxu0 %v1016
        %2141 = vmatprep.subr.mxu0 %v1019
        %2142 = vmatpush1.msra.mxu0 %v1018
        %2143 = vmatprep.subr.mxu0 %v1021
        %2144 = vmatpush1.msra.mxu0 %v1020
        %2145 = vmatprep.subr.mxu0 %v1023
        %2146 = vmatpush1.msra.mxu0 %v1022
        %2147 = vmatprep.subr.mxu0 %v1025
        %2148 = vmatpush1.msra.mxu0 %v1024
        %2149 = vmatprep.subr.mxu0 %v1027
        %2150 = vmatpush1.msra.mxu0 %v1026
        %2151 = vmatprep.subr.mxu0 %v1029
        %2152 = vmatpush1.msra.mxu0 %v1028
        %2153 = vmatprep.subr.mxu0 %v1031
        %2154 = vmatpush1.msra.mxu0 %v1030
        %2155 = vmatprep.subr.mxu0 %v1033
        %2156 = vmatpush1.msra.mxu0 %v1032
        %2157 = vmatprep.subr.mxu0 %v1035
        %2158 = vmatpush1.msra.mxu0 %v1034
        %2159 = vmatprep.subr.mxu0 %v1037
        %2160 = vmatpush1.msra.mxu0 %v1036
        %2161 = vmatprep.subr.mxu0 %v1039
        %2162 = vmatpush1.msra.mxu0 %v1038
        %2163 = vmatprep.subr.mxu0 %v1041
        %2164 = vmatpush1.msra.mxu0 %v1040
        %2165 = vmatprep.subr.mxu0 %v1043
        %2166 = vmatpush1.msra.mxu0 %v1042
        %2167 = vmatprep.subr.mxu0 %v1045
        %2168 = vmatpush1.msra.mxu0 %v1044
        %2169 = vmatprep.subr.mxu0 %v1047
        %2170 = vmatpush1.msra.mxu0 %v1046
        %2171 = vmatprep.subr.mxu0 %v1049
        %2172 = vmatpush1.msra.mxu0 %v1048
        %2173 = vmatprep.subr.mxu0 %v1051
        %2174 = vmatpush1.msra.mxu0 %v1050
        %2175 = vmatprep.subr.mxu0 %v1053
        %2176 = vmatpush1.msra.mxu0 %v1052
        %2177 = vmatprep.subr.mxu0 %v1055
        %2178 = vmatpush1.msra.mxu0 %v1054
        %2179 = vmatprep.subr.mxu0 %v1057
        %2180 = vmatpush1.msra.mxu0 %v1056
        %2181 = vmatprep.subr.mxu0 %v1059
        %2182 = vmatpush1.msra.mxu0 %v1058
        %2183 = vmatprep.subr.mxu0 %v1061
        %2184 = vmatpush1.msra.mxu0 %v1060
        %2185 = vmatprep.subr.mxu0 %v1063
        %2186 = vmatpush1.msra.mxu0 %v1062
        %2187 = vmatprep.subr.mxu0 %v1065
        %2188 = vmatpush1.msra.mxu0 %v1064
        %2189 = vmatprep.subr.mxu0 %v1067
        %2190 = vmatpush1.msra.mxu0 %v1066
        %2191 = vmatprep.subr.mxu0 %v1069
        %2192 = vmatpush1.msra.mxu0 %v1068
        %2193 = vmatprep.subr.mxu0 %v1071
        %2194 = vmatpush1.msra.mxu0 %v1070
        %2195 = vmatprep.subr.mxu0 %v1073
        %2196 = vmatpush1.msra.mxu0 %v1072
        %2197 = vmatprep.subr.mxu0 %v1075
        %2198 = vmatpush1.msra.mxu0 %v1074
        %2199 = vmatprep.mubr.f32.mxu0 %v1816
        %2200 = vmatmul.mubr.f32.gmra.mrb[0].mxu0 %v1815
        %v2201 = vpop.f32.mrb[0].mxu0
        %v2202 = vadd.f32 0.0, %v2201
        %v2203 = vpop.f32.mrb[0].mxu0
        %v2204 = vadd.f32 0.0, %v2203
        %2205 = vmatprep.mubr.f32.mxu0 %v1818
        %2206 = vmatmul.mubr.f32.gmra.mrb[0].mxu0 %v1817
        %v2207 = vpop.f32.mrb[0].mxu0
        %v2208 = vadd.f32 0.0, %v2207
        %v2209 = vpop.f32.mrb[0].mxu0
        %v2210 = vadd.f32 0.0, %v2209
        %2211 = vdwg.mxu0
        %2212 = vmatprep.subr.mxu0 %v1155
        %2213 = vmatpush1.msra.mxu0 %v1154
        %2214 = vmatprep.subr.mxu0 %v1157
        %2215 = vmatpush1.msra.mxu0 %v1156
        %2216 = vmatprep.subr.mxu0 %v1159
        %2217 = vmatpush1.msra.mxu0 %v1158
        %2218 = vmatprep.subr.mxu0 %v1161
        %2219 = vmatpush1.msra.mxu0 %v1160
        %2220 = vmatprep.subr.mxu0 %v1163
        %2221 = vmatpush1.msra.mxu0 %v1162
        %2222 = vmatprep.subr.mxu0 %v1165
        %2223 = vmatpush1.msra.mxu0 %v1164
        %2224 = vmatprep.subr.mxu0 %v1167
        %2225 = vmatpush1.msra.mxu0 %v1166
        %2226 = vmatprep.subr.mxu0 %v1169
        %2227 = vmatpush1.msra.mxu0 %v1168
        %2228 = vmatprep.subr.mxu0 %v1171
        %2229 = vmatpush1.msra.mxu0 %v1170
        %2230 = vmatprep.subr.mxu0 %v1173
        %2231 = vmatpush1.msra.mxu0 %v1172
        %2232 = vmatprep.subr.mxu0 %v1175
        %2233 = vmatpush1.msra.mxu0 %v1174
        %2234 = vmatprep.subr.mxu0 %v1177
        %2235 = vmatpush1.msra.mxu0 %v1176
        %2236 = vmatprep.subr.mxu0 %v1179
        %2237 = vmatpush1.msra.mxu0 %v1178
        %2238 = vmatprep.subr.mxu0 %v1181
        %2239 = vmatpush1.msra.mxu0 %v1180
        %2240 = vmatprep.subr.mxu0 %v1183
        %2241 = vmatpush1.msra.mxu0 %v1182
        %2242 = vmatprep.subr.mxu0 %v1185
        %2243 = vmatpush1.msra.mxu0 %v1184
        %2244 = vmatprep.subr.mxu0 %v1187
        %2245 = vmatpush1.msra.mxu0 %v1186
        %2246 = vmatprep.subr.mxu0 %v1189
        %2247 = vmatpush1.msra.mxu0 %v1188
        %2248 = vmatprep.subr.mxu0 %v1191
        %2249 = vmatpush1.msra.mxu0 %v1190
        %2250 = vmatprep.subr.mxu0 %v1193
        %2251 = vmatpush1.msra.mxu0 %v1192
        %2252 = vmatprep.subr.mxu0 %v1195
        %2253 = vmatpush1.msra.mxu0 %v1194
        %2254 = vmatprep.subr.mxu0 %v1197
        %2255 = vmatpush1.msra.mxu0 %v1196
        %2256 = vmatprep.subr.mxu0 %v1199
        %2257 = vmatpush1.msra.mxu0 %v1198
        %2258 = vmatprep.subr.mxu0 %v1201
        %2259 = vmatpush1.msra.mxu0 %v1200
        %2260 = vmatprep.subr.mxu0 %v1203
        %2261 = vmatpush1.msra.mxu0 %v1202
        %2262 = vmatprep.subr.mxu0 %v1205
        %2263 = vmatpush1.msra.mxu0 %v1204
        %2264 = vmatprep.subr.mxu0 %v1207
        %2265 = vmatpush1.msra.mxu0 %v1206
        %2266 = vmatprep.subr.mxu0 %v1209
        %2267 = vmatpush1.msra.mxu0 %v1208
        %2268 = vmatprep.subr.mxu0 %v1211
        %2269 = vmatpush1.msra.mxu0 %v1210
        %2270 = vmatprep.subr.mxu0 %v1213
        %2271 = vmatpush1.msra.mxu0 %v1212
        %2272 = vmatprep.subr.mxu0 %v1215
        %2273 = vmatpush1.msra.mxu0 %v1214
        %2274 = vmatprep.subr.mxu0 %v1217
        %2275 = vmatpush1.msra.mxu0 %v1216
        %2276 = vmatprep.mubr.f32.mxu0 %v1816
        %2277 = vmatmul.mubr.f32.gmra.mrb[0].mxu0 %v1815
        %v2278 = vpop.f32.mrb[0].mxu0
        %v2279 = vadd.f32 0.0, %v2278
        %v2280 = vpop.f32.mrb[0].mxu0
        %v2281 = vadd.f32 0.0, %v2280
        %2282 = vmatprep.mubr.f32.mxu0 %v1818
        %2283 = vmatmul.mubr.f32.gmra.mrb[0].mxu0 %v1817
        %v2284 = vpop.f32.mrb[0].mxu0
        %v2285 = vadd.f32 0.0, %v2284
        %v2286 = vpop.f32.mrb[0].mxu0
        %v2287 = vadd.f32 0.0, %v2286
        %2288 = vdwg.mxu0
        %2289 = vmatprep.subr.mxu0 %v1297
        %2290 = vmatpush1.msra.mxu0 %v1296
        %2291 = vmatprep.subr.mxu0 %v1299
        %2292 = vmatpush1.msra.mxu0 %v1298
        %2293 = vmatprep.subr.mxu0 %v1301
        %2294 = vmatpush1.msra.mxu0 %v1300
        %2295 = vmatprep.subr.mxu0 %v1303
        %2296 = vmatpush1.msra.mxu0 %v1302
        %2297 = vmatprep.subr.mxu0 %v1305
        %2298 = vmatpush1.msra.mxu0 %v1304
        %2299 = vmatprep.subr.mxu0 %v1307
        %2300 = vmatpush1.msra.mxu0 %v1306
        %2301 = vmatprep.subr.mxu0 %v1309
        %2302 = vmatpush1.msra.mxu0 %v1308
        %2303 = vmatprep.subr.mxu0 %v1311
        %2304 = vmatpush1.msra.mxu0 %v1310
        %2305 = vmatprep.subr.mxu0 %v1313
        %2306 = vmatpush1.msra.mxu0 %v1312
        %2307 = vmatprep.subr.mxu0 %v1315
        %2308 = vmatpush1.msra.mxu0 %v1314
        %2309 = vmatprep.subr.mxu0 %v1317
        %2310 = vmatpush1.msra.mxu0 %v1316
        %2311 = vmatprep.subr.mxu0 %v1319
        %2312 = vmatpush1.msra.mxu0 %v1318
        %2313 = vmatprep.subr.mxu0 %v1321
        %2314 = vmatpush1.msra.mxu0 %v1320
        %2315 = vmatprep.subr.mxu0 %v1323
        %2316 = vmatpush1.msra.mxu0 %v1322
        %2317 = vmatprep.subr.mxu0 %v1325
        %2318 = vmatpush1.msra.mxu0 %v1324
        %2319 = vmatprep.subr.mxu0 %v1327
        %2320 = vmatpush1.msra.mxu0 %v1326
        %2321 = vmatprep.subr.mxu0 %v1329
        %2322 = vmatpush1.msra.mxu0 %v1328
        %2323 = vmatprep.subr.mxu0 %v1331
        %2324 = vmatpush1.msra.mxu0 %v1330
        %2325 = vmatprep.subr.mxu0 %v1333
        %2326 = vmatpush1.msra.mxu0 %v1332
        %2327 = vmatprep.subr.mxu0 %v1335
        %2328 = vmatpush1.msra.mxu0 %v1334
        %2329 = vmatprep.subr.mxu0 %v1337
        %2330 = vmatpush1.msra.mxu0 %v1336
        %2331 = vmatprep.subr.mxu0 %v1339
        %2332 = vmatpush1.msra.mxu0 %v1338
        %2333 = vmatprep.subr.mxu0 %v1341
        %2334 = vmatpush1.msra.mxu0 %v1340
        %2335 = vmatprep.subr.mxu0 %v1343
        %2336 = vmatpush1.msra.mxu0 %v1342
        %2337 = vmatprep.subr.mxu0 %v1345
        %2338 = vmatpush1.msra.mxu0 %v1344
        %2339 = vmatprep.subr.mxu0 %v1347
        %2340 = vmatpush1.msra.mxu0 %v1346
        %2341 = vmatprep.subr.mxu0 %v1349
        %2342 = vmatpush1.msra.mxu0 %v1348
        %2343 = vmatprep.subr.mxu0 %v1351
        %2344 = vmatpush1.msra.mxu0 %v1350
        %2345 = vmatprep.subr.mxu0 %v1353
        %2346 = vmatpush1.msra.mxu0 %v1352
        %2347 = vmatprep.subr.mxu0 %v1355
        %2348 = vmatpush1.msra.mxu0 %v1354
        %2349 = vmatprep.subr.mxu0 %v1357
        %2350 = vmatpush1.msra.mxu0 %v1356
        %2351 = vmatprep.subr.mxu0 %v1359
        %2352 = vmatpush1.msra.mxu0 %v1358
        %2353 = vmatprep.mubr.f32.mxu0 %v1816
        %2354 = vmatmul.mubr.f32.gmra.mrb[0].mxu0 %v1815
        %v2355 = vpop.f32.mrb[0].mxu0
        %v2356 = vadd.f32 0.0, %v2355
        %v2357 = vpop.f32.mrb[0].mxu0
        %v2358 = vadd.f32 0.0, %v2357
        %2359 = vmatprep.mubr.f32.mxu0 %v1818
        %2360 = vmatmul.mubr.f32.gmra.mrb[0].mxu0 %v1817
        %v2361 = vpop.f32.mrb[0].mxu0
        %v2362 = vadd.f32 0.0, %v2361
        %v2363 = vpop.f32.mrb[0].mxu0
        %v2364 = vadd.f32 0.0, %v2363
        %2365 = vdwg.mxu0
        %2366 = vmatprep.subr.mxu0 %v1439
        %2367 = vmatpush1.msra.mxu0 %v1438
        %2368 = vmatprep.subr.mxu0 %v1441
        %2369 = vmatpush1.msra.mxu0 %v1440
        %2370 = vmatprep.subr.mxu0 %v1443
        %2371 = vmatpush1.msra.mxu0 %v1442
        %2372 = vmatprep.subr.mxu0 %v1445
        %2373 = vmatpush1.msra.mxu0 %v1444
        %2374 = vmatprep.subr.mxu0 %v1447
        %2375 = vmatpush1.msra.mxu0 %v1446
        %2376 = vmatprep.subr.mxu0 %v1449
        %2377 = vmatpush1.msra.mxu0 %v1448
        %2378 = vmatprep.subr.mxu0 %v1451
        %2379 = vmatpush1.msra.mxu0 %v1450
        %2380 = vmatprep.subr.mxu0 %v1453
        %2381 = vmatpush1.msra.mxu0 %v1452
        %2382 = vmatprep.subr.mxu0 %v1455
        %2383 = vmatpush1.msra.mxu0 %v1454
        %2384 = vmatprep.subr.mxu0 %v1457
        %2385 = vmatpush1.msra.mxu0 %v1456
        %2386 = vmatprep.subr.mxu0 %v1459
        %2387 = vmatpush1.msra.mxu0 %v1458
        %2388 = vmatprep.subr.mxu0 %v1461
        %2389 = vmatpush1.msra.mxu0 %v1460
        %2390 = vmatprep.subr.mxu0 %v1463
        %2391 = vmatpush1.msra.mxu0 %v1462
        %2392 = vmatprep.subr.mxu0 %v1465
        %2393 = vmatpush1.msra.mxu0 %v1464
        %2394 = vmatprep.subr.mxu0 %v1467
        %2395 = vmatpush1.msra.mxu0 %v1466
        %2396 = vmatprep.subr.mxu0 %v1469
        %2397 = vmatpush1.msra.mxu0 %v1468
        %2398 = vmatprep.subr.mxu0 %v1471
        %2399 = vmatpush1.msra.mxu0 %v1470
        %2400 = vmatprep.subr.mxu0 %v1473
        %2401 = vmatpush1.msra.mxu0 %v1472
        %2402 = vmatprep.subr.mxu0 %v1475
        %2403 = vmatpush1.msra.mxu0 %v1474
        %2404 = vmatprep.subr.mxu0 %v1477
        %2405 = vmatpush1.msra.mxu0 %v1476
        %2406 = vmatprep.subr.mxu0 %v1479
        %2407 = vmatpush1.msra.mxu0 %v1478
        %2408 = vmatprep.subr.mxu0 %v1481
        %2409 = vmatpush1.msra.mxu0 %v1480
        %2410 = vmatprep.subr.mxu0 %v1483
        %2411 = vmatpush1.msra.mxu0 %v1482
        %2412 = vmatprep.subr.mxu0 %v1485
        %2413 = vmatpush1.msra.mxu0 %v1484
        %2414 = vmatprep.subr.mxu0 %v1487
        %2415 = vmatpush1.msra.mxu0 %v1486
        %2416 = vmatprep.subr.mxu0 %v1489
        %2417 = vmatpush1.msra.mxu0 %v1488
        %2418 = vmatprep.subr.mxu0 %v1491
        %2419 = vmatpush1.msra.mxu0 %v1490
        %2420 = vmatprep.subr.mxu0 %v1493
        %2421 = vmatpush1.msra.mxu0 %v1492
        %2422 = vmatprep.subr.mxu0 %v1495
        %2423 = vmatpush1.msra.mxu0 %v1494
        %2424 = vmatprep.subr.mxu0 %v1497
        %2425 = vmatpush1.msra.mxu0 %v1496
        %2426 = vmatprep.subr.mxu0 %v1499
        %2427 = vmatpush1.msra.mxu0 %v1498
        %2428 = vmatprep.subr.mxu0 %v1501
        %2429 = vmatpush1.msra.mxu0 %v1500
        %2430 = vmatprep.mubr.f32.mxu0 %v1816
        %2431 = vmatmul.mubr.f32.gmra.mrb[0].mxu0 %v1815
        %v2432 = vpop.f32.mrb[0].mxu0
        %v2433 = vadd.f32 0.0, %v2432
        %v2434 = vpop.f32.mrb[0].mxu0
        %v2435 = vadd.f32 0.0, %v2434
        %2436 = vmatprep.mubr.f32.mxu0 %v1818
        %2437 = vmatmul.mubr.f32.gmra.mrb[0].mxu0 %v1817
        %v2438 = vpop.f32.mrb[0].mxu0
        %v2439 = vadd.f32 0.0, %v2438
        %v2440 = vpop.f32.mrb[0].mxu0
        %v2441 = vadd.f32 0.0, %v2440
        %2442 = vdwg.mxu0
        %2443 = vmatprep.subr.mxu0 %v1581
        %2444 = vmatpush1.msra.mxu0 %v1580
        %2445 = vmatprep.subr.mxu0 %v1583
        %2446 = vmatpush1.msra.mxu0 %v1582
        %2447 = vmatprep.subr.mxu0 %v1585
        %2448 = vmatpush1.msra.mxu0 %v1584
        %2449 = vmatprep.subr.mxu0 %v1587
        %2450 = vmatpush1.msra.mxu0 %v1586
        %2451 = vmatprep.subr.mxu0 %v1589
        %2452 = vmatpush1.msra.mxu0 %v1588
        %2453 = vmatprep.subr.mxu0 %v1591
        %2454 = vmatpush1.msra.mxu0 %v1590
        %2455 = vmatprep.subr.mxu0 %v1593
        %2456 = vmatpush1.msra.mxu0 %v1592
        %2457 = vmatprep.subr.mxu0 %v1595
        %2458 = vmatpush1.msra.mxu0 %v1594
        %2459 = vmatprep.subr.mxu0 %v1597
        %2460 = vmatpush1.msra.mxu0 %v1596
        %2461 = vmatprep.subr.mxu0 %v1599
        %2462 = vmatpush1.msra.mxu0 %v1598
        %2463 = vmatprep.subr.mxu0 %v1601
        %2464 = vmatpush1.msra.mxu0 %v1600
        %2465 = vmatprep.subr.mxu0 %v1603
        %2466 = vmatpush1.msra.mxu0 %v1602
        %2467 = vmatprep.subr.mxu0 %v1605
        %2468 = vmatpush1.msra.mxu0 %v1604
        %2469 = vmatprep.subr.mxu0 %v1607
        %2470 = vmatpush1.msra.mxu0 %v1606
        %2471 = vmatprep.subr.mxu0 %v1609
        %2472 = vmatpush1.msra.mxu0 %v1608
        %2473 = vmatprep.subr.mxu0 %v1611
        %2474 = vmatpush1.msra.mxu0 %v1610
        %2475 = vmatprep.subr.mxu0 %v1613
        %2476 = vmatpush1.msra.mxu0 %v1612
        %2477 = vmatprep.subr.mxu0 %v1615
        %2478 = vmatpush1.msra.mxu0 %v1614
        %2479 = vmatprep.subr.mxu0 %v1617
        %2480 = vmatpush1.msra.mxu0 %v1616
        %2481 = vmatprep.subr.mxu0 %v1619
        %2482 = vmatpush1.msra.mxu0 %v1618
        %2483 = vmatprep.subr.mxu0 %v1621
        %2484 = vmatpush1.msra.mxu0 %v1620
        %2485 = vmatprep.subr.mxu0 %v1623
        %2486 = vmatpush1.msra.mxu0 %v1622
        %2487 = vmatprep.subr.mxu0 %v1625
        %2488 = vmatpush1.msra.mxu0 %v1624
        %2489 = vmatprep.subr.mxu0 %v1627
        %2490 = vmatpush1.msra.mxu0 %v1626
        %2491 = vmatprep.subr.mxu0 %v1629
        %2492 = vmatpush1.msra.mxu0 %v1628
        %2493 = vmatprep.subr.mxu0 %v1631
        %2494 = vmatpush1.msra.mxu0 %v1630
        %2495 = vmatprep.subr.mxu0 %v1633
        %2496 = vmatpush1.msra.mxu0 %v1632
        %2497 = vmatprep.subr.mxu0 %v1635
        %2498 = vmatpush1.msra.mxu0 %v1634
        %2499 = vmatprep.subr.mxu0 %v1637
        %2500 = vmatpush1.msra.mxu0 %v1636
        %2501 = vmatprep.subr.mxu0 %v1639
        %2502 = vmatpush1.msra.mxu0 %v1638
        %2503 = vmatprep.subr.mxu0 %v1641
        %2504 = vmatpush1.msra.mxu0 %v1640
        %2505 = vmatprep.subr.mxu0 %v1643
        %2506 = vmatpush1.msra.mxu0 %v1642
        %2507 = vmatprep.mubr.f32.mxu0 %v1816
        %2508 = vmatmul.mubr.f32.gmra.mrb[0].mxu0 %v1815
        %v2509 = vpop.f32.mrb[0].mxu0
        %v2510 = vadd.f32 0.0, %v2509
        %v2511 = vpop.f32.mrb[0].mxu0
        %v2512 = vadd.f32 0.0, %v2511
        %2513 = vmatprep.mubr.f32.mxu0 %v1818
        %2514 = vmatmul.mubr.f32.gmra.mrb[0].mxu0 %v1817
        %v2515 = vpop.f32.mrb[0].mxu0
        %v2516 = vadd.f32 0.0, %v2515
        %v2517 = vpop.f32.mrb[0].mxu0
        %v2518 = vadd.f32 0.0, %v2517
        %2519 = vdwg.mxu0
        %2521 = vset.pattern.permute.xlu0 0
        %2522 = vperm.xlu0 %2521, %v1825
        %v2523 = vpop.permute.xlu0 %2522
        %2526 = vset.pattern.permute.xlu0 0
        %2527 = vperm.xlu0 %2526, %v1826
        %v2528 = vpop.permute.xlu0 %2527
        %v2531 = vsel %vm1731, %v1821, 0
        %v2534 = vsel %vm1731, %v1823, 0
        %2536 = vmatprep.subr.mxu0 %v1896
        %2537 = vmatpush1.msra.mxu0 %v1894
        %2538 = vmatprep.subr.mxu0 %v1902
        %2539 = vmatpush1.msra.mxu0 %v1900
        %2540 = vmatprep.subr.mxu0 %v1973
        %2541 = vmatpush1.msra.mxu0 %v1971
        %2542 = vmatprep.subr.mxu0 %v1979
        %2543 = vmatpush1.msra.mxu0 %v1977
        %2544 = vmatprep.subr.mxu0 %v2050
        %2545 = vmatpush1.msra.mxu0 %v2048
        %2546 = vmatprep.subr.mxu0 %v2056
        %2547 = vmatpush1.msra.mxu0 %v2054
        %2548 = vmatprep.subr.mxu0 %v2127
        %2549 = vmatpush1.msra.mxu0 %v2125
        %2550 = vmatprep.subr.mxu0 %v2133
        %2551 = vmatpush1.msra.mxu0 %v2131
        %2552 = vmatprep.subr.mxu0 %v2204
        %2553 = vmatpush1.msra.mxu0 %v2202
        %2554 = vmatprep.subr.mxu0 %v2210
        %2555 = vmatpush1.msra.mxu0 %v2208
        %2556 = vmatprep.subr.mxu0 %v2281
        %2557 = vmatpush1.msra.mxu0 %v2279
        %2558 = vmatprep.subr.mxu0 %v2287
        %2559 = vmatpush1.msra.mxu0 %v2285
        %2560 = vmatprep.subr.mxu0 %v2358
        %2561 = vmatpush1.msra.mxu0 %v2356
        %2562 = vmatprep.subr.mxu0 %v2364
        %2563 = vmatpush1.msra.mxu0 %v2362
        %2564 = vmatprep.subr.mxu0 %v2435
        %2565 = vmatpush1.msra.mxu0 %v2433
        %2566 = vmatprep.subr.mxu0 %v2441
        %2567 = vmatpush1.msra.mxu0 %v2439
        %2568 = vmatprep.subr.mxu0 %v2512
        %2569 = vmatpush1.msra.mxu0 %v2510
        %2570 = vmatprep.subr.mxu0 %v2518
        %2571 = vmatpush1.msra.mxu0 %v2516
        %2572 = vmatprep.subr.mxu0 0.0
        %2573 = vmatpush1.msra.mxu0 0.0
        %2574 = vmatprep.subr.mxu0 0.0
        %2575 = vmatpush1.msra.mxu0 0.0
        %2576 = vmatprep.subr.mxu0 0.0
        %2577 = vmatpush1.msra.mxu0 0.0
        %2578 = vmatprep.subr.mxu0 0.0
        %2579 = vmatpush1.msra.mxu0 0.0
        %2580 = vmatprep.subr.mxu0 0.0
        %2581 = vmatpush1.msra.mxu0 0.0
        %2582 = vmatprep.subr.mxu0 0.0
        %2583 = vmatpush1.msra.mxu0 0.0
        %2584 = vmatprep.subr.mxu0 0.0
        %2585 = vmatpush1.msra.mxu0 0.0
        %2586 = vmatprep.subr.mxu0 0.0
        %2587 = vmatpush1.msra.mxu0 0.0
        %2588 = vmatprep.subr.mxu0 0.0
        %2589 = vmatpush1.msra.mxu0 0.0
        %2590 = vmatprep.subr.mxu0 0.0
        %2591 = vmatpush1.msra.mxu0 0.0
        %2592 = vmatprep.subr.mxu0 0.0
        %2593 = vmatpush1.msra.mxu0 0.0
        %2594 = vmatprep.subr.mxu0 0.0
        %2595 = vmatpush1.msra.mxu0 0.0
        %2596 = vmatprep.subr.mxu0 0.0
        %2597 = vmatpush1.msra.mxu0 0.0
        %2598 = vmatprep.subr.mxu0 0.0
        %2599 = vmatpush1.msra.mxu0 0.0
        %2600 = vmatprep.mubr.f32.mxu0 %v2531
        %2601 = vmatmul.mubr.f32.gmra.mrb[0].mxu0 %v1820
        %v2602 = vpop.f32.mrb[0].mxu0
        %v2603 = vadd.f32 %v2523, %v2602
        %v2604 = vpop.f32.mrb[0].mxu0
        %v2605 = vadd.f32 %v2523, %v2604
        %2606 = vmatprep.mubr.f32.mxu0 %v2534
        %2607 = vmatmul.mubr.f32.gmra.mrb[0].mxu0 %v1822
        %v2608 = vpop.f32.mrb[0].mxu0
        %v2609 = vadd.f32 %v2528, %v2608
        %v2610 = vpop.f32.mrb[0].mxu0
        %v2611 = vadd.f32 %v2528, %v2610
        %2612 = vdwg.mxu0
        %v2613 = vadd.f32 %v2603, %v434
        %v2614 = vadd.f32 %v2605, %v435
        %v2615 = vadd.f32 %v2609, %v436
        %v2616 = vadd.f32 %v2611, %v437
        %s2617 = scalar_lea.vmem [#allocation7], 64
        %v2618 = vld [vmem:[%s2617] sm:$0xff]
        %v2619 = vld [vmem:[%s2617 + $0x8] sm:$0xff]
        %v2620 = vld [vmem:[%s2617 + $0x10] sm:$0xff]
        %v2621 = vld [vmem:[%s2617 + $0x18] sm:$0xff]
        %s2622 = scalar_lea.vmem %s3, 32
        %v2623 = vld [vmem:[%s2622] sm:$0xff]
        %v2624 = vld [vmem:[%s2622 + $0x8] sm:$0xff]
        %2625 = vmatprep.subr.mxu0 %v445
        %2626 = vmatpush1.msra.mxu0 %v444
        %2627 = vmatprep.subr.mxu0 %v447
        %2628 = vmatpush1.msra.mxu0 %v446
        %2629 = vmatprep.subr.mxu0 %v449
        %2630 = vmatpush1.msra.mxu0 %v448
        %2631 = vmatprep.subr.mxu0 %v451
        %2632 = vmatpush1.msra.mxu0 %v450
        %2633 = vmatprep.subr.mxu0 %v453
        %2634 = vmatpush1.msra.mxu0 %v452
        %2635 = vmatprep.subr.mxu0 %v455
        %2636 = vmatpush1.msra.mxu0 %v454
        %2637 = vmatprep.subr.mxu0 %v457
        %2638 = vmatpush1.msra.mxu0 %v456
        %2639 = vmatprep.subr.mxu0 %v459
        %2640 = vmatpush1.msra.mxu0 %v458
        %2641 = vmatprep.subr.mxu0 %v461
        %2642 = vmatpush1.msra.mxu0 %v460
        %2643 = vmatprep.subr.mxu0 %v463
        %2644 = vmatpush1.msra.mxu0 %v462
        %2645 = vmatprep.subr.mxu0 %v465
        %2646 = vmatpush1.msra.mxu0 %v464
        %2647 = vmatprep.subr.mxu0 %v467
        %2648 = vmatpush1.msra.mxu0 %v466
        %2649 = vmatprep.subr.mxu0 %v469
        %2650 = vmatpush1.msra.mxu0 %v468
        %2651 = vmatprep.subr.mxu0 %v471
        %2652 = vmatpush1.msra.mxu0 %v470
        %2653 = vmatprep.subr.mxu0 %v473
        %2654 = vmatpush1.msra.mxu0 %v472
        %2655 = vmatprep.subr.mxu0 %v475
        %2656 = vmatpush1.msra.mxu0 %v474
        %2657 = vmatprep.subr.mxu0 %v477
        %2658 = vmatpush1.msra.mxu0 %v476
        %2659 = vmatprep.subr.mxu0 %v479
        %2660 = vmatpush1.msra.mxu0 %v478
        %2661 = vmatprep.subr.mxu0 %v481
        %2662 = vmatpush1.msra.mxu0 %v480
        %2663 = vmatprep.subr.mxu0 %v483
        %2664 = vmatpush1.msra.mxu0 %v482
        %2665 = vmatprep.subr.mxu0 %v485
        %2666 = vmatpush1.msra.mxu0 %v484
        %2667 = vmatprep.subr.mxu0 %v487
        %2668 = vmatpush1.msra.mxu0 %v486
        %2669 = vmatprep.subr.mxu0 %v489
        %2670 = vmatpush1.msra.mxu0 %v488
        %2671 = vmatprep.subr.mxu0 %v491
        %2672 = vmatpush1.msra.mxu0 %v490
        %2673 = vmatprep.subr.mxu0 %v493
        %2674 = vmatpush1.msra.mxu0 %v492
        %2675 = vmatprep.subr.mxu0 %v495
        %2676 = vmatpush1.msra.mxu0 %v494
        %2677 = vmatprep.subr.mxu0 %v497
        %2678 = vmatpush1.msra.mxu0 %v496
        %2679 = vmatprep.subr.mxu0 %v499
        %2680 = vmatpush1.msra.mxu0 %v498
        %2681 = vmatprep.subr.mxu0 %v501
        %2682 = vmatpush1.msra.mxu0 %v500
        %2683 = vmatprep.subr.mxu0 %v503
        %2684 = vmatpush1.msra.mxu0 %v502
        %2685 = vmatprep.subr.mxu0 %v505
        %2686 = vmatpush1.msra.mxu0 %v504
        %2687 = vmatprep.subr.mxu0 %v507
        %2688 = vmatpush1.msra.mxu0 %v506
        %2689 = vmatprep.mubr.f32.mxu0 %v2614
        %2690 = vmatmul.mubr.f32.gmra.mrb[0].mxu0 %v2613
        %v2691 = vpop.f32.mrb[0].mxu0
        %v2692 = vadd.f32 0.0, %v2691
        %v2693 = vpop.f32.mrb[0].mxu0
        %v2694 = vadd.f32 0.0, %v2693
        %2695 = vmatprep.mubr.f32.mxu0 %v2616
        %2696 = vmatmul.mubr.f32.gmra.mrb[0].mxu0 %v2615
        %v2697 = vpop.f32.mrb[0].mxu0
        %v2698 = vadd.f32 0.0, %v2697
        %v2699 = vpop.f32.mrb[0].mxu0
        %v2700 = vadd.f32 0.0, %v2699
        %2701 = vdwg.mxu0
        %2702 = vmatprep.subr.mxu0 %v587
        %2703 = vmatpush1.msra.mxu0 %v586
        %2704 = vmatprep.subr.mxu0 %v589
        %2705 = vmatpush1.msra.mxu0 %v588
        %2706 = vmatprep.subr.mxu0 %v591
        %2707 = vmatpush1.msra.mxu0 %v590
        %2708 = vmatprep.subr.mxu0 %v593
        %2709 = vmatpush1.msra.mxu0 %v592
        %2710 = vmatprep.subr.mxu0 %v595
        %2711 = vmatpush1.msra.mxu0 %v594
        %2712 = vmatprep.subr.mxu0 %v597
        %2713 = vmatpush1.msra.mxu0 %v596
        %2714 = vmatprep.subr.mxu0 %v599
        %2715 = vmatpush1.msra.mxu0 %v598
        %2716 = vmatprep.subr.mxu0 %v601
        %2717 = vmatpush1.msra.mxu0 %v600
        %2718 = vmatprep.subr.mxu0 %v603
        %2719 = vmatpush1.msra.mxu0 %v602
        %2720 = vmatprep.subr.mxu0 %v605
        %2721 = vmatpush1.msra.mxu0 %v604
        %2722 = vmatprep.subr.mxu0 %v607
        %2723 = vmatpush1.msra.mxu0 %v606
        %2724 = vmatprep.subr.mxu0 %v609
        %2725 = vmatpush1.msra.mxu0 %v608
        %2726 = vmatprep.subr.mxu0 %v611
        %2727 = vmatpush1.msra.mxu0 %v610
        %2728 = vmatprep.subr.mxu0 %v613
        %2729 = vmatpush1.msra.mxu0 %v612
        %2730 = vmatprep.subr.mxu0 %v615
        %2731 = vmatpush1.msra.mxu0 %v614
        %2732 = vmatprep.subr.mxu0 %v617
        %2733 = vmatpush1.msra.mxu0 %v616
        %2734 = vmatprep.subr.mxu0 %v619
        %2735 = vmatpush1.msra.mxu0 %v618
        %2736 = vmatprep.subr.mxu0 %v621
        %2737 = vmatpush1.msra.mxu0 %v620
        %2738 = vmatprep.subr.mxu0 %v623
        %2739 = vmatpush1.msra.mxu0 %v622
        %2740 = vmatprep.subr.mxu0 %v625
        %2741 = vmatpush1.msra.mxu0 %v624
        %2742 = vmatprep.subr.mxu0 %v627
        %2743 = vmatpush1.msra.mxu0 %v626
        %2744 = vmatprep.subr.mxu0 %v629
        %2745 = vmatpush1.msra.mxu0 %v628
        %2746 = vmatprep.subr.mxu0 %v631
        %2747 = vmatpush1.msra.mxu0 %v630
        %2748 = vmatprep.subr.mxu0 %v633
        %2749 = vmatpush1.msra.mxu0 %v632
        %2750 = vmatprep.subr.mxu0 %v635
        %2751 = vmatpush1.msra.mxu0 %v634
        %2752 = vmatprep.subr.mxu0 %v637
        %2753 = vmatpush1.msra.mxu0 %v636
        %2754 = vmatprep.subr.mxu0 %v639
        %2755 = vmatpush1.msra.mxu0 %v638
        %2756 = vmatprep.subr.mxu0 %v641
        %2757 = vmatpush1.msra.mxu0 %v640
        %2758 = vmatprep.subr.mxu0 %v643
        %2759 = vmatpush1.msra.mxu0 %v642
        %2760 = vmatprep.subr.mxu0 %v645
        %2761 = vmatpush1.msra.mxu0 %v644
        %2762 = vmatprep.subr.mxu0 %v647
        %2763 = vmatpush1.msra.mxu0 %v646
        %2764 = vmatprep.subr.mxu0 %v649
        %2765 = vmatpush1.msra.mxu0 %v648
        %2766 = vmatprep.mubr.f32.mxu0 %v2614
        %2767 = vmatmul.mubr.f32.gmra.mrb[0].mxu0 %v2613
        %v2768 = vpop.f32.mrb[0].mxu0
        %v2769 = vadd.f32 0.0, %v2768
        %v2770 = vpop.f32.mrb[0].mxu0
        %v2771 = vadd.f32 0.0, %v2770
        %2772 = vmatprep.mubr.f32.mxu0 %v2616
        %2773 = vmatmul.mubr.f32.gmra.mrb[0].mxu0 %v2615
        %v2774 = vpop.f32.mrb[0].mxu0
        %v2775 = vadd.f32 0.0, %v2774
        %v2776 = vpop.f32.mrb[0].mxu0
        %v2777 = vadd.f32 0.0, %v2776
        %2778 = vdwg.mxu0
        %2779 = vmatprep.subr.mxu0 %v729
        %2780 = vmatpush1.msra.mxu0 %v728
        %2781 = vmatprep.subr.mxu0 %v731
        %2782 = vmatpush1.msra.mxu0 %v730
        %2783 = vmatprep.subr.mxu0 %v733
        %2784 = vmatpush1.msra.mxu0 %v732
        %2785 = vmatprep.subr.mxu0 %v735
        %2786 = vmatpush1.msra.mxu0 %v734
        %2787 = vmatprep.subr.mxu0 %v737
        %2788 = vmatpush1.msra.mxu0 %v736
        %2789 = vmatprep.subr.mxu0 %v739
        %2790 = vmatpush1.msra.mxu0 %v738
        %2791 = vmatprep.subr.mxu0 %v741
        %2792 = vmatpush1.msra.mxu0 %v740
        %2793 = vmatprep.subr.mxu0 %v743
        %2794 = vmatpush1.msra.mxu0 %v742
        %2795 = vmatprep.subr.mxu0 %v745
        %2796 = vmatpush1.msra.mxu0 %v744
        %2797 = vmatprep.subr.mxu0 %v747
        %2798 = vmatpush1.msra.mxu0 %v746
        %2799 = vmatprep.subr.mxu0 %v749
        %2800 = vmatpush1.msra.mxu0 %v748
        %2801 = vmatprep.subr.mxu0 %v751
        %2802 = vmatpush1.msra.mxu0 %v750
        %2803 = vmatprep.subr.mxu0 %v753
        %2804 = vmatpush1.msra.mxu0 %v752
        %2805 = vmatprep.subr.mxu0 %v755
        %2806 = vmatpush1.msra.mxu0 %v754
        %2807 = vmatprep.subr.mxu0 %v757
        %2808 = vmatpush1.msra.mxu0 %v756
        %2809 = vmatprep.subr.mxu0 %v759
        %2810 = vmatpush1.msra.mxu0 %v758
        %2811 = vmatprep.subr.mxu0 %v761
        %2812 = vmatpush1.msra.mxu0 %v760
        %2813 = vmatprep.subr.mxu0 %v763
        %2814 = vmatpush1.msra.mxu0 %v762
        %2815 = vmatprep.subr.mxu0 %v765
        %2816 = vmatpush1.msra.mxu0 %v764
        %2817 = vmatprep.subr.mxu0 %v767
        %2818 = vmatpush1.msra.mxu0 %v766
        %2819 = vmatprep.subr.mxu0 %v769
        %2820 = vmatpush1.msra.mxu0 %v768
        %2821 = vmatprep.subr.mxu0 %v771
        %2822 = vmatpush1.msra.mxu0 %v770
        %2823 = vmatprep.subr.mxu0 %v773
        %2824 = vmatpush1.msra.mxu0 %v772
        %2825 = vmatprep.subr.mxu0 %v775
        %2826 = vmatpush1.msra.mxu0 %v774
        %2827 = vmatprep.subr.mxu0 %v777
        %2828 = vmatpush1.msra.mxu0 %v776
        %2829 = vmatprep.subr.mxu0 %v779
        %2830 = vmatpush1.msra.mxu0 %v778
        %2831 = vmatprep.subr.mxu0 %v781
        %2832 = vmatpush1.msra.mxu0 %v780
        %2833 = vmatprep.subr.mxu0 %v783
        %2834 = vmatpush1.msra.mxu0 %v782
        %2835 = vmatprep.subr.mxu0 %v785
        %2836 = vmatpush1.msra.mxu0 %v784
        %2837 = vmatprep.subr.mxu0 %v787
        %2838 = vmatpush1.msra.mxu0 %v786
        %2839 = vmatprep.subr.mxu0 %v789
        %2840 = vmatpush1.msra.mxu0 %v788
        %2841 = vmatprep.subr.mxu0 %v791
        %2842 = vmatpush1.msra.mxu0 %v790
        %2843 = vmatprep.mubr.f32.mxu0 %v2614
        %2844 = vmatmul.mubr.f32.gmra.mrb[0].mxu0 %v2613
        %v2845 = vpop.f32.mrb[0].mxu0
        %v2846 = vadd.f32 0.0, %v2845
        %v2847 = vpop.f32.mrb[0].mxu0
        %v2848 = vadd.f32 0.0, %v2847
        %2849 = vmatprep.mubr.f32.mxu0 %v2616
        %2850 = vmatmul.mubr.f32.gmra.mrb[0].mxu0 %v2615
        %v2851 = vpop.f32.mrb[0].mxu0
        %v2852 = vadd.f32 0.0, %v2851
        %v2853 = vpop.f32.mrb[0].mxu0
        %v2854 = vadd.f32 0.0, %v2853
        %2855 = vdwg.mxu0
        %2856 = vmatprep.subr.mxu0 %v871
        %2857 = vmatpush1.msra.mxu0 %v870
        %2858 = vmatprep.subr.mxu0 %v873
        %2859 = vmatpush1.msra.mxu0 %v872
        %2860 = vmatprep.subr.mxu0 %v875
        %2861 = vmatpush1.msra.mxu0 %v874
        %2862 = vmatprep.subr.mxu0 %v877
        %2863 = vmatpush1.msra.mxu0 %v876
        %2864 = vmatprep.subr.mxu0 %v879
        %2865 = vmatpush1.msra.mxu0 %v878
        %2866 = vmatprep.subr.mxu0 %v881
        %2867 = vmatpush1.msra.mxu0 %v880
        %2868 = vmatprep.subr.mxu0 %v883
        %2869 = vmatpush1.msra.mxu0 %v882
        %2870 = vmatprep.subr.mxu0 %v885
        %2871 = vmatpush1.msra.mxu0 %v884
        %2872 = vmatprep.subr.mxu0 %v887
        %2873 = vmatpush1.msra.mxu0 %v886
        %2874 = vmatprep.subr.mxu0 %v889
        %2875 = vmatpush1.msra.mxu0 %v888
        %2876 = vmatprep.subr.mxu0 %v891
        %2877 = vmatpush1.msra.mxu0 %v890
        %2878 = vmatprep.subr.mxu0 %v893
        %2879 = vmatpush1.msra.mxu0 %v892
        %2880 = vmatprep.subr.mxu0 %v895
        %2881 = vmatpush1.msra.mxu0 %v894
        %2882 = vmatprep.subr.mxu0 %v897
        %2883 = vmatpush1.msra.mxu0 %v896
        %2884 = vmatprep.subr.mxu0 %v899
        %2885 = vmatpush1.msra.mxu0 %v898
        %2886 = vmatprep.subr.mxu0 %v901
        %2887 = vmatpush1.msra.mxu0 %v900
        %2888 = vmatprep.subr.mxu0 %v903
        %2889 = vmatpush1.msra.mxu0 %v902
        %2890 = vmatprep.subr.mxu0 %v905
        %2891 = vmatpush1.msra.mxu0 %v904
        %2892 = vmatprep.subr.mxu0 %v907
        %2893 = vmatpush1.msra.mxu0 %v906
        %2894 = vmatprep.subr.mxu0 %v909
        %2895 = vmatpush1.msra.mxu0 %v908
        %2896 = vmatprep.subr.mxu0 %v911
        %2897 = vmatpush1.msra.mxu0 %v910
        %2898 = vmatprep.subr.mxu0 %v913
        %2899 = vmatpush1.msra.mxu0 %v912
        %2900 = vmatprep.subr.mxu0 %v915
        %2901 = vmatpush1.msra.mxu0 %v914
        %2902 = vmatprep.subr.mxu0 %v917
        %2903 = vmatpush1.msra.mxu0 %v916
        %2904 = vmatprep.subr.mxu0 %v919
        %2905 = vmatpush1.msra.mxu0 %v918
        %2906 = vmatprep.subr.mxu0 %v921
        %2907 = vmatpush1.msra.mxu0 %v920
        %2908 = vmatprep.subr.mxu0 %v923
        %2909 = vmatpush1.msra.mxu0 %v922
        %2910 = vmatprep.subr.mxu0 %v925
        %2911 = vmatpush1.msra.mxu0 %v924
        %2912 = vmatprep.subr.mxu0 %v927
        %2913 = vmatpush1.msra.mxu0 %v926
        %2914 = vmatprep.subr.mxu0 %v929
        %2915 = vmatpush1.msra.mxu0 %v928
        %2916 = vmatprep.subr.mxu0 %v931
        %2917 = vmatpush1.msra.mxu0 %v930
        %2918 = vmatprep.subr.mxu0 %v933
        %2919 = vmatpush1.msra.mxu0 %v932
        %2920 = vmatprep.mubr.f32.mxu0 %v2614
        %2921 = vmatmul.mubr.f32.gmra.mrb[0].mxu0 %v2613
        %v2922 = vpop.f32.mrb[0].mxu0
        %v2923 = vadd.f32 0.0, %v2922
        %v2924 = vpop.f32.mrb[0].mxu0
        %v2925 = vadd.f32 0.0, %v2924
        %2926 = vmatprep.mubr.f32.mxu0 %v2616
        %2927 = vmatmul.mubr.f32.gmra.mrb[0].mxu0 %v2615
        %v2928 = vpop.f32.mrb[0].mxu0
        %v2929 = vadd.f32 0.0, %v2928
        %v2930 = vpop.f32.mrb[0].mxu0
        %v2931 = vadd.f32 0.0, %v2930
        %2932 = vdwg.mxu0
        %2933 = vmatprep.subr.mxu0 %v1013
        %2934 = vmatpush1.msra.mxu0 %v1012
        %2935 = vmatprep.subr.mxu0 %v1015
        %2936 = vmatpush1.msra.mxu0 %v1014
        %2937 = vmatprep.subr.mxu0 %v1017
        %2938 = vmatpush1.msra.mxu0 %v1016
        %2939 = vmatprep.subr.mxu0 %v1019
        %2940 = vmatpush1.msra.mxu0 %v1018
        %2941 = vmatprep.subr.mxu0 %v1021
        %2942 = vmatpush1.msra.mxu0 %v1020
        %2943 = vmatprep.subr.mxu0 %v1023
        %2944 = vmatpush1.msra.mxu0 %v1022
        %2945 = vmatprep.subr.mxu0 %v1025
        %2946 = vmatpush1.msra.mxu0 %v1024
        %2947 = vmatprep.subr.mxu0 %v1027
        %2948 = vmatpush1.msra.mxu0 %v1026
        %2949 = vmatprep.subr.mxu0 %v1029
        %2950 = vmatpush1.msra.mxu0 %v1028
        %2951 = vmatprep.subr.mxu0 %v1031
        %2952 = vmatpush1.msra.mxu0 %v1030
        %2953 = vmatprep.subr.mxu0 %v1033
        %2954 = vmatpush1.msra.mxu0 %v1032
        %2955 = vmatprep.subr.mxu0 %v1035
        %2956 = vmatpush1.msra.mxu0 %v1034
        %2957 = vmatprep.subr.mxu0 %v1037
        %2958 = vmatpush1.msra.mxu0 %v1036
        %2959 = vmatprep.subr.mxu0 %v1039
        %2960 = vmatpush1.msra.mxu0 %v1038
        %2961 = vmatprep.subr.mxu0 %v1041
        %2962 = vmatpush1.msra.mxu0 %v1040
        %2963 = vmatprep.subr.mxu0 %v1043
        %2964 = vmatpush1.msra.mxu0 %v1042
        %2965 = vmatprep.subr.mxu0 %v1045
        %2966 = vmatpush1.msra.mxu0 %v1044
        %2967 = vmatprep.subr.mxu0 %v1047
        %2968 = vmatpush1.msra.mxu0 %v1046
        %2969 = vmatprep.subr.mxu0 %v1049
        %2970 = vmatpush1.msra.mxu0 %v1048
        %2971 = vmatprep.subr.mxu0 %v1051
        %2972 = vmatpush1.msra.mxu0 %v1050
        %2973 = vmatprep.subr.mxu0 %v1053
        %2974 = vmatpush1.msra.mxu0 %v1052
        %2975 = vmatprep.subr.mxu0 %v1055
        %2976 = vmatpush1.msra.mxu0 %v1054
        %2977 = vmatprep.subr.mxu0 %v1057
        %2978 = vmatpush1.msra.mxu0 %v1056
        %2979 = vmatprep.subr.mxu0 %v1059
        %2980 = vmatpush1.msra.mxu0 %v1058
        %2981 = vmatprep.subr.mxu0 %v1061
        %2982 = vmatpush1.msra.mxu0 %v1060
        %2983 = vmatprep.subr.mxu0 %v1063
        %2984 = vmatpush1.msra.mxu0 %v1062
        %2985 = vmatprep.subr.mxu0 %v1065
        %2986 = vmatpush1.msra.mxu0 %v1064
        %2987 = vmatprep.subr.mxu0 %v1067
        %2988 = vmatpush1.msra.mxu0 %v1066
        %2989 = vmatprep.subr.mxu0 %v1069
        %2990 = vmatpush1.msra.mxu0 %v1068
        %2991 = vmatprep.subr.mxu0 %v1071
        %2992 = vmatpush1.msra.mxu0 %v1070
        %2993 = vmatprep.subr.mxu0 %v1073
        %2994 = vmatpush1.msra.mxu0 %v1072
        %2995 = vmatprep.subr.mxu0 %v1075
        %2996 = vmatpush1.msra.mxu0 %v1074
        %2997 = vmatprep.mubr.f32.mxu0 %v2614
        %2998 = vmatmul.mubr.f32.gmra.mrb[0].mxu0 %v2613
        %v2999 = vpop.f32.mrb[0].mxu0
        %v3000 = vadd.f32 0.0, %v2999
        %v3001 = vpop.f32.mrb[0].mxu0
        %v3002 = vadd.f32 0.0, %v3001
        %3003 = vmatprep.mubr.f32.mxu0 %v2616
        %3004 = vmatmul.mubr.f32.gmra.mrb[0].mxu0 %v2615
        %v3005 = vpop.f32.mrb[0].mxu0
        %v3006 = vadd.f32 0.0, %v3005
        %v3007 = vpop.f32.mrb[0].mxu0
        %v3008 = vadd.f32 0.0, %v3007
        %3009 = vdwg.mxu0
        %3010 = vmatprep.subr.mxu0 %v1155
        %3011 = vmatpush1.msra.mxu0 %v1154
        %3012 = vmatprep.subr.mxu0 %v1157
        %3013 = vmatpush1.msra.mxu0 %v1156
        %3014 = vmatprep.subr.mxu0 %v1159
        %3015 = vmatpush1.msra.mxu0 %v1158
        %3016 = vmatprep.subr.mxu0 %v1161
        %3017 = vmatpush1.msra.mxu0 %v1160
        %3018 = vmatprep.subr.mxu0 %v1163
        %3019 = vmatpush1.msra.mxu0 %v1162
        %3020 = vmatprep.subr.mxu0 %v1165
        %3021 = vmatpush1.msra.mxu0 %v1164
        %3022 = vmatprep.subr.mxu0 %v1167
        %3023 = vmatpush1.msra.mxu0 %v1166
        %3024 = vmatprep.subr.mxu0 %v1169
        %3025 = vmatpush1.msra.mxu0 %v1168
        %3026 = vmatprep.subr.mxu0 %v1171
        %3027 = vmatpush1.msra.mxu0 %v1170
        %3028 = vmatprep.subr.mxu0 %v1173
        %3029 = vmatpush1.msra.mxu0 %v1172
        %3030 = vmatprep.subr.mxu0 %v1175
        %3031 = vmatpush1.msra.mxu0 %v1174
        %3032 = vmatprep.subr.mxu0 %v1177
        %3033 = vmatpush1.msra.mxu0 %v1176
        %3034 = vmatprep.subr.mxu0 %v1179
        %3035 = vmatpush1.msra.mxu0 %v1178
        %3036 = vmatprep.subr.mxu0 %v1181
        %3037 = vmatpush1.msra.mxu0 %v1180
        %3038 = vmatprep.subr.mxu0 %v1183
        %3039 = vmatpush1.msra.mxu0 %v1182
        %3040 = vmatprep.subr.mxu0 %v1185
        %3041 = vmatpush1.msra.mxu0 %v1184
        %3042 = vmatprep.subr.mxu0 %v1187
        %3043 = vmatpush1.msra.mxu0 %v1186
        %3044 = vmatprep.subr.mxu0 %v1189
        %3045 = vmatpush1.msra.mxu0 %v1188
        %3046 = vmatprep.subr.mxu0 %v1191
        %3047 = vmatpush1.msra.mxu0 %v1190
        %3048 = vmatprep.subr.mxu0 %v1193
        %3049 = vmatpush1.msra.mxu0 %v1192
        %3050 = vmatprep.subr.mxu0 %v1195
        %3051 = vmatpush1.msra.mxu0 %v1194
        %3052 = vmatprep.subr.mxu0 %v1197
        %3053 = vmatpush1.msra.mxu0 %v1196
        %3054 = vmatprep.subr.mxu0 %v1199
        %3055 = vmatpush1.msra.mxu0 %v1198
        %3056 = vmatprep.subr.mxu0 %v1201
        %3057 = vmatpush1.msra.mxu0 %v1200
        %3058 = vmatprep.subr.mxu0 %v1203
        %3059 = vmatpush1.msra.mxu0 %v1202
        %3060 = vmatprep.subr.mxu0 %v1205
        %3061 = vmatpush1.msra.mxu0 %v1204
        %3062 = vmatprep.subr.mxu0 %v1207
        %3063 = vmatpush1.msra.mxu0 %v1206
        %3064 = vmatprep.subr.mxu0 %v1209
        %3065 = vmatpush1.msra.mxu0 %v1208
        %3066 = vmatprep.subr.mxu0 %v1211
        %3067 = vmatpush1.msra.mxu0 %v1210
        %3068 = vmatprep.subr.mxu0 %v1213
        %3069 = vmatpush1.msra.mxu0 %v1212
        %3070 = vmatprep.subr.mxu0 %v1215
        %3071 = vmatpush1.msra.mxu0 %v1214
        %3072 = vmatprep.subr.mxu0 %v1217
        %3073 = vmatpush1.msra.mxu0 %v1216
        %3074 = vmatprep.mubr.f32.mxu0 %v2614
        %3075 = vmatmul.mubr.f32.gmra.mrb[0].mxu0 %v2613
        %v3076 = vpop.f32.mrb[0].mxu0
        %v3077 = vadd.f32 0.0, %v3076
        %v3078 = vpop.f32.mrb[0].mxu0
        %v3079 = vadd.f32 0.0, %v3078
        %3080 = vmatprep.mubr.f32.mxu0 %v2616
        %3081 = vmatmul.mubr.f32.gmra.mrb[0].mxu0 %v2615
        %v3082 = vpop.f32.mrb[0].mxu0
        %v3083 = vadd.f32 0.0, %v3082
        %v3084 = vpop.f32.mrb[0].mxu0
        %v3085 = vadd.f32 0.0, %v3084
        %3086 = vdwg.mxu0
        %3087 = vmatprep.subr.mxu0 %v1297
        %3088 = vmatpush1.msra.mxu0 %v1296
        %3089 = vmatprep.subr.mxu0 %v1299
        %3090 = vmatpush1.msra.mxu0 %v1298
        %3091 = vmatprep.subr.mxu0 %v1301
        %3092 = vmatpush1.msra.mxu0 %v1300
        %3093 = vmatprep.subr.mxu0 %v1303
        %3094 = vmatpush1.msra.mxu0 %v1302
        %3095 = vmatprep.subr.mxu0 %v1305
        %3096 = vmatpush1.msra.mxu0 %v1304
        %3097 = vmatprep.subr.mxu0 %v1307
        %3098 = vmatpush1.msra.mxu0 %v1306
        %3099 = vmatprep.subr.mxu0 %v1309
        %3100 = vmatpush1.msra.mxu0 %v1308
        %3101 = vmatprep.subr.mxu0 %v1311
        %3102 = vmatpush1.msra.mxu0 %v1310
        %3103 = vmatprep.subr.mxu0 %v1313
        %3104 = vmatpush1.msra.mxu0 %v1312
        %3105 = vmatprep.subr.mxu0 %v1315
        %3106 = vmatpush1.msra.mxu0 %v1314
        %3107 = vmatprep.subr.mxu0 %v1317
        %3108 = vmatpush1.msra.mxu0 %v1316
        %3109 = vmatprep.subr.mxu0 %v1319
        %3110 = vmatpush1.msra.mxu0 %v1318
        %3111 = vmatprep.subr.mxu0 %v1321
        %3112 = vmatpush1.msra.mxu0 %v1320
        %3113 = vmatprep.subr.mxu0 %v1323
        %3114 = vmatpush1.msra.mxu0 %v1322
        %3115 = vmatprep.subr.mxu0 %v1325
        %3116 = vmatpush1.msra.mxu0 %v1324
        %3117 = vmatprep.subr.mxu0 %v1327
        %3118 = vmatpush1.msra.mxu0 %v1326
        %3119 = vmatprep.subr.mxu0 %v1329
        %3120 = vmatpush1.msra.mxu0 %v1328
        %3121 = vmatprep.subr.mxu0 %v1331
        %3122 = vmatpush1.msra.mxu0 %v1330
        %3123 = vmatprep.subr.mxu0 %v1333
        %3124 = vmatpush1.msra.mxu0 %v1332
        %3125 = vmatprep.subr.mxu0 %v1335
        %3126 = vmatpush1.msra.mxu0 %v1334
        %3127 = vmatprep.subr.mxu0 %v1337
        %3128 = vmatpush1.msra.mxu0 %v1336
        %3129 = vmatprep.subr.mxu0 %v1339
        %3130 = vmatpush1.msra.mxu0 %v1338
        %3131 = vmatprep.subr.mxu0 %v1341
        %3132 = vmatpush1.msra.mxu0 %v1340
        %3133 = vmatprep.subr.mxu0 %v1343
        %3134 = vmatpush1.msra.mxu0 %v1342
        %3135 = vmatprep.subr.mxu0 %v1345
        %3136 = vmatpush1.msra.mxu0 %v1344
        %3137 = vmatprep.subr.mxu0 %v1347
        %3138 = vmatpush1.msra.mxu0 %v1346
        %3139 = vmatprep.subr.mxu0 %v1349
        %3140 = vmatpush1.msra.mxu0 %v1348
        %3141 = vmatprep.subr.mxu0 %v1351
        %3142 = vmatpush1.msra.mxu0 %v1350
        %3143 = vmatprep.subr.mxu0 %v1353
        %3144 = vmatpush1.msra.mxu0 %v1352
        %3145 = vmatprep.subr.mxu0 %v1355
        %3146 = vmatpush1.msra.mxu0 %v1354
        %3147 = vmatprep.subr.mxu0 %v1357
        %3148 = vmatpush1.msra.mxu0 %v1356
        %3149 = vmatprep.subr.mxu0 %v1359
        %3150 = vmatpush1.msra.mxu0 %v1358
        %3151 = vmatprep.mubr.f32.mxu0 %v2614
        %3152 = vmatmul.mubr.f32.gmra.mrb[0].mxu0 %v2613
        %v3153 = vpop.f32.mrb[0].mxu0
        %v3154 = vadd.f32 0.0, %v3153
        %v3155 = vpop.f32.mrb[0].mxu0
        %v3156 = vadd.f32 0.0, %v3155
        %3157 = vmatprep.mubr.f32.mxu0 %v2616
        %3158 = vmatmul.mubr.f32.gmra.mrb[0].mxu0 %v2615
        %v3159 = vpop.f32.mrb[0].mxu0
        %v3160 = vadd.f32 0.0, %v3159
        %v3161 = vpop.f32.mrb[0].mxu0
        %v3162 = vadd.f32 0.0, %v3161
        %3163 = vdwg.mxu0
        %3164 = vmatprep.subr.mxu0 %v1439
        %3165 = vmatpush1.msra.mxu0 %v1438
        %3166 = vmatprep.subr.mxu0 %v1441
        %3167 = vmatpush1.msra.mxu0 %v1440
        %3168 = vmatprep.subr.mxu0 %v1443
        %3169 = vmatpush1.msra.mxu0 %v1442
        %3170 = vmatprep.subr.mxu0 %v1445
        %3171 = vmatpush1.msra.mxu0 %v1444
        %3172 = vmatprep.subr.mxu0 %v1447
        %3173 = vmatpush1.msra.mxu0 %v1446
        %3174 = vmatprep.subr.mxu0 %v1449
        %3175 = vmatpush1.msra.mxu0 %v1448
        %3176 = vmatprep.subr.mxu0 %v1451
        %3177 = vmatpush1.msra.mxu0 %v1450
        %3178 = vmatprep.subr.mxu0 %v1453
        %3179 = vmatpush1.msra.mxu0 %v1452
        %3180 = vmatprep.subr.mxu0 %v1455
        %3181 = vmatpush1.msra.mxu0 %v1454
        %3182 = vmatprep.subr.mxu0 %v1457
        %3183 = vmatpush1.msra.mxu0 %v1456
        %3184 = vmatprep.subr.mxu0 %v1459
        %3185 = vmatpush1.msra.mxu0 %v1458
        %3186 = vmatprep.subr.mxu0 %v1461
        %3187 = vmatpush1.msra.mxu0 %v1460
        %3188 = vmatprep.subr.mxu0 %v1463
        %3189 = vmatpush1.msra.mxu0 %v1462
        %3190 = vmatprep.subr.mxu0 %v1465
        %3191 = vmatpush1.msra.mxu0 %v1464
        %3192 = vmatprep.subr.mxu0 %v1467
        %3193 = vmatpush1.msra.mxu0 %v1466
        %3194 = vmatprep.subr.mxu0 %v1469
        %3195 = vmatpush1.msra.mxu0 %v1468
        %3196 = vmatprep.subr.mxu0 %v1471
        %3197 = vmatpush1.msra.mxu0 %v1470
        %3198 = vmatprep.subr.mxu0 %v1473
        %3199 = vmatpush1.msra.mxu0 %v1472
        %3200 = vmatprep.subr.mxu0 %v1475
        %3201 = vmatpush1.msra.mxu0 %v1474
        %3202 = vmatprep.subr.mxu0 %v1477
        %3203 = vmatpush1.msra.mxu0 %v1476
        %3204 = vmatprep.subr.mxu0 %v1479
        %3205 = vmatpush1.msra.mxu0 %v1478
        %3206 = vmatprep.subr.mxu0 %v1481
        %3207 = vmatpush1.msra.mxu0 %v1480
        %3208 = vmatprep.subr.mxu0 %v1483
        %3209 = vmatpush1.msra.mxu0 %v1482
        %3210 = vmatprep.subr.mxu0 %v1485
        %3211 = vmatpush1.msra.mxu0 %v1484
        %3212 = vmatprep.subr.mxu0 %v1487
        %3213 = vmatpush1.msra.mxu0 %v1486
        %3214 = vmatprep.subr.mxu0 %v1489
        %3215 = vmatpush1.msra.mxu0 %v1488
        %3216 = vmatprep.subr.mxu0 %v1491
        %3217 = vmatpush1.msra.mxu0 %v1490
        %3218 = vmatprep.subr.mxu0 %v1493
        %3219 = vmatpush1.msra.mxu0 %v1492
        %3220 = vmatprep.subr.mxu0 %v1495
        %3221 = vmatpush1.msra.mxu0 %v1494
        %3222 = vmatprep.subr.mxu0 %v1497
        %3223 = vmatpush1.msra.mxu0 %v1496
        %3224 = vmatprep.subr.mxu0 %v1499
        %3225 = vmatpush1.msra.mxu0 %v1498
        %3226 = vmatprep.subr.mxu0 %v1501
        %3227 = vmatpush1.msra.mxu0 %v1500
        %3228 = vmatprep.mubr.f32.mxu0 %v2614
        %3229 = vmatmul.mubr.f32.gmra.mrb[0].mxu0 %v2613
        %v3230 = vpop.f32.mrb[0].mxu0
        %v3231 = vadd.f32 0.0, %v3230
        %v3232 = vpop.f32.mrb[0].mxu0
        %v3233 = vadd.f32 0.0, %v3232
        %3234 = vmatprep.mubr.f32.mxu0 %v2616
        %3235 = vmatmul.mubr.f32.gmra.mrb[0].mxu0 %v2615
        %v3236 = vpop.f32.mrb[0].mxu0
        %v3237 = vadd.f32 0.0, %v3236
        %v3238 = vpop.f32.mrb[0].mxu0
        %v3239 = vadd.f32 0.0, %v3238
        %3240 = vdwg.mxu0
        %3241 = vmatprep.subr.mxu0 %v1581
        %3242 = vmatpush1.msra.mxu0 %v1580
        %3243 = vmatprep.subr.mxu0 %v1583
        %3244 = vmatpush1.msra.mxu0 %v1582
        %3245 = vmatprep.subr.mxu0 %v1585
        %3246 = vmatpush1.msra.mxu0 %v1584
        %3247 = vmatprep.subr.mxu0 %v1587
        %3248 = vmatpush1.msra.mxu0 %v1586
        %3249 = vmatprep.subr.mxu0 %v1589
        %3250 = vmatpush1.msra.mxu0 %v1588
        %3251 = vmatprep.subr.mxu0 %v1591
        %3252 = vmatpush1.msra.mxu0 %v1590
        %3253 = vmatprep.subr.mxu0 %v1593
        %3254 = vmatpush1.msra.mxu0 %v1592
        %3255 = vmatprep.subr.mxu0 %v1595
        %3256 = vmatpush1.msra.mxu0 %v1594
        %3257 = vmatprep.subr.mxu0 %v1597
        %3258 = vmatpush1.msra.mxu0 %v1596
        %3259 = vmatprep.subr.mxu0 %v1599
        %3260 = vmatpush1.msra.mxu0 %v1598
        %3261 = vmatprep.subr.mxu0 %v1601
        %3262 = vmatpush1.msra.mxu0 %v1600
        %3263 = vmatprep.subr.mxu0 %v1603
        %3264 = vmatpush1.msra.mxu0 %v1602
        %3265 = vmatprep.subr.mxu0 %v1605
        %3266 = vmatpush1.msra.mxu0 %v1604
        %3267 = vmatprep.subr.mxu0 %v1607
        %3268 = vmatpush1.msra.mxu0 %v1606
        %3269 = vmatprep.subr.mxu0 %v1609
        %3270 = vmatpush1.msra.mxu0 %v1608
        %3271 = vmatprep.subr.mxu0 %v1611
        %3272 = vmatpush1.msra.mxu0 %v1610
        %3273 = vmatprep.subr.mxu0 %v1613
        %3274 = vmatpush1.msra.mxu0 %v1612
        %3275 = vmatprep.subr.mxu0 %v1615
        %3276 = vmatpush1.msra.mxu0 %v1614
        %3277 = vmatprep.subr.mxu0 %v1617
        %3278 = vmatpush1.msra.mxu0 %v1616
        %3279 = vmatprep.subr.mxu0 %v1619
        %3280 = vmatpush1.msra.mxu0 %v1618
        %3281 = vmatprep.subr.mxu0 %v1621
        %3282 = vmatpush1.msra.mxu0 %v1620
        %3283 = vmatprep.subr.mxu0 %v1623
        %3284 = vmatpush1.msra.mxu0 %v1622
        %3285 = vmatprep.subr.mxu0 %v1625
        %3286 = vmatpush1.msra.mxu0 %v1624
        %3287 = vmatprep.subr.mxu0 %v1627
        %3288 = vmatpush1.msra.mxu0 %v1626
        %3289 = vmatprep.subr.mxu0 %v1629
        %3290 = vmatpush1.msra.mxu0 %v1628
        %3291 = vmatprep.subr.mxu0 %v1631
        %3292 = vmatpush1.msra.mxu0 %v1630
        %3293 = vmatprep.subr.mxu0 %v1633
        %3294 = vmatpush1.msra.mxu0 %v1632
        %3295 = vmatprep.subr.mxu0 %v1635
        %3296 = vmatpush1.msra.mxu0 %v1634
        %3297 = vmatprep.subr.mxu0 %v1637
        %3298 = vmatpush1.msra.mxu0 %v1636
        %3299 = vmatprep.subr.mxu0 %v1639
        %3300 = vmatpush1.msra.mxu0 %v1638
        %3301 = vmatprep.subr.mxu0 %v1641
        %3302 = vmatpush1.msra.mxu0 %v1640
        %3303 = vmatprep.subr.mxu0 %v1643
        %3304 = vmatpush1.msra.mxu0 %v1642
        %3305 = vmatprep.mubr.f32.mxu0 %v2614
        %3306 = vmatmul.mubr.f32.gmra.mrb[0].mxu0 %v2613
        %v3307 = vpop.f32.mrb[0].mxu0
        %v3308 = vadd.f32 0.0, %v3307
        %v3309 = vpop.f32.mrb[0].mxu0
        %v3310 = vadd.f32 0.0, %v3309
        %3311 = vmatprep.mubr.f32.mxu0 %v2616
        %3312 = vmatmul.mubr.f32.gmra.mrb[0].mxu0 %v2615
        %v3313 = vpop.f32.mrb[0].mxu0
        %v3314 = vadd.f32 0.0, %v3313
        %v3315 = vpop.f32.mrb[0].mxu0
        %v3316 = vadd.f32 0.0, %v3315
        %3317 = vdwg.mxu0
        %3319 = vset.pattern.permute.xlu0 0
        %3320 = vperm.xlu0 %3319, %v2623
        %v3321 = vpop.permute.xlu0 %3320
        %3324 = vset.pattern.permute.xlu0 0
        %3325 = vperm.xlu0 %3324, %v2624
        %v3326 = vpop.permute.xlu0 %3325
        %v3329 = vsel %vm1731, %v2619, 0
        %v3332 = vsel %vm1731, %v2621, 0
        %3334 = vmatprep.subr.mxu0 %v2694
        %3335 = vmatpush1.msra.mxu0 %v2692
        %3336 = vmatprep.subr.mxu0 %v2700
        %3337 = vmatpush1.msra.mxu0 %v2698
        %3338 = vmatprep.subr.mxu0 %v2771
        %3339 = vmatpush1.msra.mxu0 %v2769
        %3340 = vmatprep.subr.mxu0 %v2777
        %3341 = vmatpush1.msra.mxu0 %v2775
        %3342 = vmatprep.subr.mxu0 %v2848
        %3343 = vmatpush1.msra.mxu0 %v2846
        %3344 = vmatprep.subr.mxu0 %v2854
        %3345 = vmatpush1.msra.mxu0 %v2852
        %3346 = vmatprep.subr.mxu0 %v2925
        %3347 = vmatpush1.msra.mxu0 %v2923
        %3348 = vmatprep.subr.mxu0 %v2931
        %3349 = vmatpush1.msra.mxu0 %v2929
        %3350 = vmatprep.subr.mxu0 %v3002
        %3351 = vmatpush1.msra.mxu0 %v3000
        %3352 = vmatprep.subr.mxu0 %v3008
        %3353 = vmatpush1.msra.mxu0 %v3006
        %3354 = vmatprep.subr.mxu0 %v3079
        %3355 = vmatpush1.msra.mxu0 %v3077
        %3356 = vmatprep.subr.mxu0 %v3085
        %3357 = vmatpush1.msra.mxu0 %v3083
        %3358 = vmatprep.subr.mxu0 %v3156
        %3359 = vmatpush1.msra.mxu0 %v3154
        %3360 = vmatprep.subr.mxu0 %v3162
        %3361 = vmatpush1.msra.mxu0 %v3160
        %3362 = vmatprep.subr.mxu0 %v3233
        %3363 = vmatpush1.msra.mxu0 %v3231
        %3364 = vmatprep.subr.mxu0 %v3239
        %3365 = vmatpush1.msra.mxu0 %v3237
        %3366 = vmatprep.subr.mxu0 %v3310
        %3367 = vmatpush1.msra.mxu0 %v3308
        %3368 = vmatprep.subr.mxu0 %v3316
        %3369 = vmatpush1.msra.mxu0 %v3314
        %3370 = vmatprep.subr.mxu0 0.0
        %3371 = vmatpush1.msra.mxu0 0.0
        %3372 = vmatprep.subr.mxu0 0.0
        %3373 = vmatpush1.msra.mxu0 0.0
        %3374 = vmatprep.subr.mxu0 0.0
        %3375 = vmatpush1.msra.mxu0 0.0
        %3376 = vmatprep.subr.mxu0 0.0
        %3377 = vmatpush1.msra.mxu0 0.0
        %3378 = vmatprep.subr.mxu0 0.0
        %3379 = vmatpush1.msra.mxu0 0.0
        %3380 = vmatprep.subr.mxu0 0.0
        %3381 = vmatpush1.msra.mxu0 0.0
        %3382 = vmatprep.subr.mxu0 0.0
        %3383 = vmatpush1.msra.mxu0 0.0
        %3384 = vmatprep.subr.mxu0 0.0
        %3385 = vmatpush1.msra.mxu0 0.0
        %3386 = vmatprep.subr.mxu0 0.0
        %3387 = vmatpush1.msra.mxu0 0.0
        %3388 = vmatprep.subr.mxu0 0.0
        %3389 = vmatpush1.msra.mxu0 0.0
        %3390 = vmatprep.subr.mxu0 0.0
        %3391 = vmatpush1.msra.mxu0 0.0
        %3392 = vmatprep.subr.mxu0 0.0
        %3393 = vmatpush1.msra.mxu0 0.0
        %3394 = vmatprep.subr.mxu0 0.0
        %3395 = vmatpush1.msra.mxu0 0.0
        %3396 = vmatprep.subr.mxu0 0.0
        %3397 = vmatpush1.msra.mxu0 0.0
        %3398 = vmatprep.mubr.f32.mxu0 %v3329
        %3399 = vmatmul.mubr.f32.gmra.mrb[0].mxu0 %v2618
        %v3400 = vpop.f32.mrb[0].mxu0
        %v3401 = vadd.f32 %v3321, %v3400
        %v3402 = vpop.f32.mrb[0].mxu0
        %v3403 = vadd.f32 %v3321, %v3402
        %3404 = vmatprep.mubr.f32.mxu0 %v3332
        %3405 = vmatmul.mubr.f32.gmra.mrb[0].mxu0 %v2620
        %v3406 = vpop.f32.mrb[0].mxu0
        %v3407 = vadd.f32 %v3326, %v3406
        %v3408 = vpop.f32.mrb[0].mxu0
        %v3409 = vadd.f32 %v3326, %v3408
        %3410 = vdwg.mxu0
        %v3411 = vmax.f32 %v3401, 0.0
        %v3412 = vmax.f32 %v3403, 0.0
        %v3413 = vmax.f32 %v3407, 0.0
        %v3414 = vmax.f32 %v3409, 0.0
        %s3415 = scalar_lea.vmem [#allocation7], 96
        %v3416 = vld [vmem:[%s3415] sm:$0xff]
        %v3417 = vld [vmem:[%s3415 + $0x8] sm:$0xff]
        %v3418 = vld [vmem:[%s3415 + $0x10] sm:$0xff]
        %v3419 = vld [vmem:[%s3415 + $0x18] sm:$0xff]
        %s3420 = scalar_lea.vmem %s3, 48
        %v3421 = vld [vmem:[%s3420] sm:$0xff]
        %v3422 = vld [vmem:[%s3420 + $0x8] sm:$0xff]
        %3423 = vmatprep.subr.mxu0 %v445
        %3424 = vmatpush1.msra.mxu0 %v444
        %3425 = vmatprep.subr.mxu0 %v447
        %3426 = vmatpush1.msra.mxu0 %v446
        %3427 = vmatprep.subr.mxu0 %v449
        %3428 = vmatpush1.msra.mxu0 %v448
        %3429 = vmatprep.subr.mxu0 %v451
        %3430 = vmatpush1.msra.mxu0 %v450
        %3431 = vmatprep.subr.mxu0 %v453
        %3432 = vmatpush1.msra.mxu0 %v452
        %3433 = vmatprep.subr.mxu0 %v455
        %3434 = vmatpush1.msra.mxu0 %v454
        %3435 = vmatprep.subr.mxu0 %v457
        %3436 = vmatpush1.msra.mxu0 %v456
        %3437 = vmatprep.subr.mxu0 %v459
        %3438 = vmatpush1.msra.mxu0 %v458
        %3439 = vmatprep.subr.mxu0 %v461
        %3440 = vmatpush1.msra.mxu0 %v460
        %3441 = vmatprep.subr.mxu0 %v463
        %3442 = vmatpush1.msra.mxu0 %v462
        %3443 = vmatprep.subr.mxu0 %v465
        %3444 = vmatpush1.msra.mxu0 %v464
        %3445 = vmatprep.subr.mxu0 %v467
        %3446 = vmatpush1.msra.mxu0 %v466
        %3447 = vmatprep.subr.mxu0 %v469
        %3448 = vmatpush1.msra.mxu0 %v468
        %3449 = vmatprep.subr.mxu0 %v471
        %3450 = vmatpush1.msra.mxu0 %v470
        %3451 = vmatprep.subr.mxu0 %v473
        %3452 = vmatpush1.msra.mxu0 %v472
        %3453 = vmatprep.subr.mxu0 %v475
        %3454 = vmatpush1.msra.mxu0 %v474
        %3455 = vmatprep.subr.mxu0 %v477
        %3456 = vmatpush1.msra.mxu0 %v476
        %3457 = vmatprep.subr.mxu0 %v479
        %3458 = vmatpush1.msra.mxu0 %v478
        %3459 = vmatprep.subr.mxu0 %v481
        %3460 = vmatpush1.msra.mxu0 %v480
        %3461 = vmatprep.subr.mxu0 %v483
        %3462 = vmatpush1.msra.mxu0 %v482
        %3463 = vmatprep.subr.mxu0 %v485
        %3464 = vmatpush1.msra.mxu0 %v484
        %3465 = vmatprep.subr.mxu0 %v487
        %3466 = vmatpush1.msra.mxu0 %v486
        %3467 = vmatprep.subr.mxu0 %v489
        %3468 = vmatpush1.msra.mxu0 %v488
        %3469 = vmatprep.subr.mxu0 %v491
        %3470 = vmatpush1.msra.mxu0 %v490
        %3471 = vmatprep.subr.mxu0 %v493
        %3472 = vmatpush1.msra.mxu0 %v492
        %3473 = vmatprep.subr.mxu0 %v495
        %3474 = vmatpush1.msra.mxu0 %v494
        %3475 = vmatprep.subr.mxu0 %v497
        %3476 = vmatpush1.msra.mxu0 %v496
        %3477 = vmatprep.subr.mxu0 %v499
        %3478 = vmatpush1.msra.mxu0 %v498
        %3479 = vmatprep.subr.mxu0 %v501
        %3480 = vmatpush1.msra.mxu0 %v500
        %3481 = vmatprep.subr.mxu0 %v503
        %3482 = vmatpush1.msra.mxu0 %v502
        %3483 = vmatprep.subr.mxu0 %v505
        %3484 = vmatpush1.msra.mxu0 %v504
        %3485 = vmatprep.subr.mxu0 %v507
        %3486 = vmatpush1.msra.mxu0 %v506
        %3487 = vmatprep.mubr.f32.mxu0 %v3412
        %3488 = vmatmul.mubr.f32.gmra.mrb[0].mxu0 %v3411
        %v3489 = vpop.f32.mrb[0].mxu0
        %v3490 = vadd.f32 0.0, %v3489
        %v3491 = vpop.f32.mrb[0].mxu0
        %v3492 = vadd.f32 0.0, %v3491
        %3493 = vmatprep.mubr.f32.mxu0 %v3414
        %3494 = vmatmul.mubr.f32.gmra.mrb[0].mxu0 %v3413
        %v3495 = vpop.f32.mrb[0].mxu0
        %v3496 = vadd.f32 0.0, %v3495
        %v3497 = vpop.f32.mrb[0].mxu0
        %v3498 = vadd.f32 0.0, %v3497
        %3499 = vdwg.mxu0
        %3500 = vmatprep.subr.mxu0 %v587
        %3501 = vmatpush1.msra.mxu0 %v586
        %3502 = vmatprep.subr.mxu0 %v589
        %3503 = vmatpush1.msra.mxu0 %v588
        %3504 = vmatprep.subr.mxu0 %v591
        %3505 = vmatpush1.msra.mxu0 %v590
        %3506 = vmatprep.subr.mxu0 %v593
        %3507 = vmatpush1.msra.mxu0 %v592
        %3508 = vmatprep.subr.mxu0 %v595
        %3509 = vmatpush1.msra.mxu0 %v594
        %3510 = vmatprep.subr.mxu0 %v597
        %3511 = vmatpush1.msra.mxu0 %v596
        %3512 = vmatprep.subr.mxu0 %v599
        %3513 = vmatpush1.msra.mxu0 %v598
        %3514 = vmatprep.subr.mxu0 %v601
        %3515 = vmatpush1.msra.mxu0 %v600
        %3516 = vmatprep.subr.mxu0 %v603
        %3517 = vmatpush1.msra.mxu0 %v602
        %3518 = vmatprep.subr.mxu0 %v605
        %3519 = vmatpush1.msra.mxu0 %v604
        %3520 = vmatprep.subr.mxu0 %v607
        %3521 = vmatpush1.msra.mxu0 %v606
        %3522 = vmatprep.subr.mxu0 %v609
        %3523 = vmatpush1.msra.mxu0 %v608
        %3524 = vmatprep.subr.mxu0 %v611
        %3525 = vmatpush1.msra.mxu0 %v610
        %3526 = vmatprep.subr.mxu0 %v613
        %3527 = vmatpush1.msra.mxu0 %v612
        %3528 = vmatprep.subr.mxu0 %v615
        %3529 = vmatpush1.msra.mxu0 %v614
        %3530 = vmatprep.subr.mxu0 %v617
        %3531 = vmatpush1.msra.mxu0 %v616
        %3532 = vmatprep.subr.mxu0 %v619
        %3533 = vmatpush1.msra.mxu0 %v618
        %3534 = vmatprep.subr.mxu0 %v621
        %3535 = vmatpush1.msra.mxu0 %v620
        %3536 = vmatprep.subr.mxu0 %v623
        %3537 = vmatpush1.msra.mxu0 %v622
        %3538 = vmatprep.subr.mxu0 %v625
        %3539 = vmatpush1.msra.mxu0 %v624
        %3540 = vmatprep.subr.mxu0 %v627
        %3541 = vmatpush1.msra.mxu0 %v626
        %3542 = vmatprep.subr.mxu0 %v629
        %3543 = vmatpush1.msra.mxu0 %v628
        %3544 = vmatprep.subr.mxu0 %v631
        %3545 = vmatpush1.msra.mxu0 %v630
        %3546 = vmatprep.subr.mxu0 %v633
        %3547 = vmatpush1.msra.mxu0 %v632
        %3548 = vmatprep.subr.mxu0 %v635
        %3549 = vmatpush1.msra.mxu0 %v634
        %3550 = vmatprep.subr.mxu0 %v637
        %3551 = vmatpush1.msra.mxu0 %v636
        %3552 = vmatprep.subr.mxu0 %v639
        %3553 = vmatpush1.msra.mxu0 %v638
        %3554 = vmatprep.subr.mxu0 %v641
        %3555 = vmatpush1.msra.mxu0 %v640
        %3556 = vmatprep.subr.mxu0 %v643
        %3557 = vmatpush1.msra.mxu0 %v642
        %3558 = vmatprep.subr.mxu0 %v645
        %3559 = vmatpush1.msra.mxu0 %v644
        %3560 = vmatprep.subr.mxu0 %v647
        %3561 = vmatpush1.msra.mxu0 %v646
        %3562 = vmatprep.subr.mxu0 %v649
        %3563 = vmatpush1.msra.mxu0 %v648
        %3564 = vmatprep.mubr.f32.mxu0 %v3412
        %3565 = vmatmul.mubr.f32.gmra.mrb[0].mxu0 %v3411
        %v3566 = vpop.f32.mrb[0].mxu0
        %v3567 = vadd.f32 0.0, %v3566
        %v3568 = vpop.f32.mrb[0].mxu0
        %v3569 = vadd.f32 0.0, %v3568
        %3570 = vmatprep.mubr.f32.mxu0 %v3414
        %3571 = vmatmul.mubr.f32.gmra.mrb[0].mxu0 %v3413
        %v3572 = vpop.f32.mrb[0].mxu0
        %v3573 = vadd.f32 0.0, %v3572
        %v3574 = vpop.f32.mrb[0].mxu0
        %v3575 = vadd.f32 0.0, %v3574
        %3576 = vdwg.mxu0
        %3577 = vmatprep.subr.mxu0 %v729
        %3578 = vmatpush1.msra.mxu0 %v728
        %3579 = vmatprep.subr.mxu0 %v731
        %3580 = vmatpush1.msra.mxu0 %v730
        %3581 = vmatprep.subr.mxu0 %v733
        %3582 = vmatpush1.msra.mxu0 %v732
        %3583 = vmatprep.subr.mxu0 %v735
        %3584 = vmatpush1.msra.mxu0 %v734
        %3585 = vmatprep.subr.mxu0 %v737
        %3586 = vmatpush1.msra.mxu0 %v736
        %3587 = vmatprep.subr.mxu0 %v739
        %3588 = vmatpush1.msra.mxu0 %v738
        %3589 = vmatprep.subr.mxu0 %v741
        %3590 = vmatpush1.msra.mxu0 %v740
        %3591 = vmatprep.subr.mxu0 %v743
        %3592 = vmatpush1.msra.mxu0 %v742
        %3593 = vmatprep.subr.mxu0 %v745
        %3594 = vmatpush1.msra.mxu0 %v744
        %3595 = vmatprep.subr.mxu0 %v747
        %3596 = vmatpush1.msra.mxu0 %v746
        %3597 = vmatprep.subr.mxu0 %v749
        %3598 = vmatpush1.msra.mxu0 %v748
        %3599 = vmatprep.subr.mxu0 %v751
        %3600 = vmatpush1.msra.mxu0 %v750
        %3601 = vmatprep.subr.mxu0 %v753
        %3602 = vmatpush1.msra.mxu0 %v752
        %3603 = vmatprep.subr.mxu0 %v755
        %3604 = vmatpush1.msra.mxu0 %v754
        %3605 = vmatprep.subr.mxu0 %v757
        %3606 = vmatpush1.msra.mxu0 %v756
        %3607 = vmatprep.subr.mxu0 %v759
        %3608 = vmatpush1.msra.mxu0 %v758
        %3609 = vmatprep.subr.mxu0 %v761
        %3610 = vmatpush1.msra.mxu0 %v760
        %3611 = vmatprep.subr.mxu0 %v763
        %3612 = vmatpush1.msra.mxu0 %v762
        %3613 = vmatprep.subr.mxu0 %v765
        %3614 = vmatpush1.msra.mxu0 %v764
        %3615 = vmatprep.subr.mxu0 %v767
        %3616 = vmatpush1.msra.mxu0 %v766
        %3617 = vmatprep.subr.mxu0 %v769
        %3618 = vmatpush1.msra.mxu0 %v768
        %3619 = vmatprep.subr.mxu0 %v771
        %3620 = vmatpush1.msra.mxu0 %v770
        %3621 = vmatprep.subr.mxu0 %v773
        %3622 = vmatpush1.msra.mxu0 %v772
        %3623 = vmatprep.subr.mxu0 %v775
        %3624 = vmatpush1.msra.mxu0 %v774
        %3625 = vmatprep.subr.mxu0 %v777
        %3626 = vmatpush1.msra.mxu0 %v776
        %3627 = vmatprep.subr.mxu0 %v779
        %3628 = vmatpush1.msra.mxu0 %v778
        %3629 = vmatprep.subr.mxu0 %v781
        %3630 = vmatpush1.msra.mxu0 %v780
        %3631 = vmatprep.subr.mxu0 %v783
        %3632 = vmatpush1.msra.mxu0 %v782
        %3633 = vmatprep.subr.mxu0 %v785
        %3634 = vmatpush1.msra.mxu0 %v784
        %3635 = vmatprep.subr.mxu0 %v787
        %3636 = vmatpush1.msra.mxu0 %v786
        %3637 = vmatprep.subr.mxu0 %v789
        %3638 = vmatpush1.msra.mxu0 %v788
        %3639 = vmatprep.subr.mxu0 %v791
        %3640 = vmatpush1.msra.mxu0 %v790
        %3641 = vmatprep.mubr.f32.mxu0 %v3412
        %3642 = vmatmul.mubr.f32.gmra.mrb[0].mxu0 %v3411
        %v3643 = vpop.f32.mrb[0].mxu0
        %v3644 = vadd.f32 0.0, %v3643
        %v3645 = vpop.f32.mrb[0].mxu0
        %v3646 = vadd.f32 0.0, %v3645
        %3647 = vmatprep.mubr.f32.mxu0 %v3414
        %3648 = vmatmul.mubr.f32.gmra.mrb[0].mxu0 %v3413
        %v3649 = vpop.f32.mrb[0].mxu0
        %v3650 = vadd.f32 0.0, %v3649
        %v3651 = vpop.f32.mrb[0].mxu0
        %v3652 = vadd.f32 0.0, %v3651
        %3653 = vdwg.mxu0
        %3654 = vmatprep.subr.mxu0 %v871
        %3655 = vmatpush1.msra.mxu0 %v870
        %3656 = vmatprep.subr.mxu0 %v873
        %3657 = vmatpush1.msra.mxu0 %v872
        %3658 = vmatprep.subr.mxu0 %v875
        %3659 = vmatpush1.msra.mxu0 %v874
        %3660 = vmatprep.subr.mxu0 %v877
        %3661 = vmatpush1.msra.mxu0 %v876
        %3662 = vmatprep.subr.mxu0 %v879
        %3663 = vmatpush1.msra.mxu0 %v878
        %3664 = vmatprep.subr.mxu0 %v881
        %3665 = vmatpush1.msra.mxu0 %v880
        %3666 = vmatprep.subr.mxu0 %v883
        %3667 = vmatpush1.msra.mxu0 %v882
        %3668 = vmatprep.subr.mxu0 %v885
        %3669 = vmatpush1.msra.mxu0 %v884
        %3670 = vmatprep.subr.mxu0 %v887
        %3671 = vmatpush1.msra.mxu0 %v886
        %3672 = vmatprep.subr.mxu0 %v889
        %3673 = vmatpush1.msra.mxu0 %v888
        %3674 = vmatprep.subr.mxu0 %v891
        %3675 = vmatpush1.msra.mxu0 %v890
        %3676 = vmatprep.subr.mxu0 %v893
        %3677 = vmatpush1.msra.mxu0 %v892
        %3678 = vmatprep.subr.mxu0 %v895
        %3679 = vmatpush1.msra.mxu0 %v894
        %3680 = vmatprep.subr.mxu0 %v897
        %3681 = vmatpush1.msra.mxu0 %v896
        %3682 = vmatprep.subr.mxu0 %v899
        %3683 = vmatpush1.msra.mxu0 %v898
        %3684 = vmatprep.subr.mxu0 %v901
        %3685 = vmatpush1.msra.mxu0 %v900
        %3686 = vmatprep.subr.mxu0 %v903
        %3687 = vmatpush1.msra.mxu0 %v902
        %3688 = vmatprep.subr.mxu0 %v905
        %3689 = vmatpush1.msra.mxu0 %v904
        %3690 = vmatprep.subr.mxu0 %v907
        %3691 = vmatpush1.msra.mxu0 %v906
        %3692 = vmatprep.subr.mxu0 %v909
        %3693 = vmatpush1.msra.mxu0 %v908
        %3694 = vmatprep.subr.mxu0 %v911
        %3695 = vmatpush1.msra.mxu0 %v910
        %3696 = vmatprep.subr.mxu0 %v913
        %3697 = vmatpush1.msra.mxu0 %v912
        %3698 = vmatprep.subr.mxu0 %v915
        %3699 = vmatpush1.msra.mxu0 %v914
        %3700 = vmatprep.subr.mxu0 %v917
        %3701 = vmatpush1.msra.mxu0 %v916
        %3702 = vmatprep.subr.mxu0 %v919
        %3703 = vmatpush1.msra.mxu0 %v918
        %3704 = vmatprep.subr.mxu0 %v921
        %3705 = vmatpush1.msra.mxu0 %v920
        %3706 = vmatprep.subr.mxu0 %v923
        %3707 = vmatpush1.msra.mxu0 %v922
        %3708 = vmatprep.subr.mxu0 %v925
        %3709 = vmatpush1.msra.mxu0 %v924
        %3710 = vmatprep.subr.mxu0 %v927
        %3711 = vmatpush1.msra.mxu0 %v926
        %3712 = vmatprep.subr.mxu0 %v929
        %3713 = vmatpush1.msra.mxu0 %v928
        %3714 = vmatprep.subr.mxu0 %v931
        %3715 = vmatpush1.msra.mxu0 %v930
        %3716 = vmatprep.subr.mxu0 %v933
        %3717 = vmatpush1.msra.mxu0 %v932
        %3718 = vmatprep.mubr.f32.mxu0 %v3412
        %3719 = vmatmul.mubr.f32.gmra.mrb[0].mxu0 %v3411
        %v3720 = vpop.f32.mrb[0].mxu0
        %v3721 = vadd.f32 0.0, %v3720
        %v3722 = vpop.f32.mrb[0].mxu0
        %v3723 = vadd.f32 0.0, %v3722
        %3724 = vmatprep.mubr.f32.mxu0 %v3414
        %3725 = vmatmul.mubr.f32.gmra.mrb[0].mxu0 %v3413
        %v3726 = vpop.f32.mrb[0].mxu0
        %v3727 = vadd.f32 0.0, %v3726
        %v3728 = vpop.f32.mrb[0].mxu0
        %v3729 = vadd.f32 0.0, %v3728
        %3730 = vdwg.mxu0
        %3731 = vmatprep.subr.mxu0 %v1013
        %3732 = vmatpush1.msra.mxu0 %v1012
        %3733 = vmatprep.subr.mxu0 %v1015
        %3734 = vmatpush1.msra.mxu0 %v1014
        %3735 = vmatprep.subr.mxu0 %v1017
        %3736 = vmatpush1.msra.mxu0 %v1016
        %3737 = vmatprep.subr.mxu0 %v1019
        %3738 = vmatpush1.msra.mxu0 %v1018
        %3739 = vmatprep.subr.mxu0 %v1021
        %3740 = vmatpush1.msra.mxu0 %v1020
        %3741 = vmatprep.subr.mxu0 %v1023
        %3742 = vmatpush1.msra.mxu0 %v1022
        %3743 = vmatprep.subr.mxu0 %v1025
        %3744 = vmatpush1.msra.mxu0 %v1024
        %3745 = vmatprep.subr.mxu0 %v1027
        %3746 = vmatpush1.msra.mxu0 %v1026
        %3747 = vmatprep.subr.mxu0 %v1029
        %3748 = vmatpush1.msra.mxu0 %v1028
        %3749 = vmatprep.subr.mxu0 %v1031
        %3750 = vmatpush1.msra.mxu0 %v1030
        %3751 = vmatprep.subr.mxu0 %v1033
        %3752 = vmatpush1.msra.mxu0 %v1032
        %3753 = vmatprep.subr.mxu0 %v1035
        %3754 = vmatpush1.msra.mxu0 %v1034
        %3755 = vmatprep.subr.mxu0 %v1037
        %3756 = vmatpush1.msra.mxu0 %v1036
        %3757 = vmatprep.subr.mxu0 %v1039
        %3758 = vmatpush1.msra.mxu0 %v1038
        %3759 = vmatprep.subr.mxu0 %v1041
        %3760 = vmatpush1.msra.mxu0 %v1040
        %3761 = vmatprep.subr.mxu0 %v1043
        %3762 = vmatpush1.msra.mxu0 %v1042
        %3763 = vmatprep.subr.mxu0 %v1045
        %3764 = vmatpush1.msra.mxu0 %v1044
        %3765 = vmatprep.subr.mxu0 %v1047
        %3766 = vmatpush1.msra.mxu0 %v1046
        %3767 = vmatprep.subr.mxu0 %v1049
        %3768 = vmatpush1.msra.mxu0 %v1048
        %3769 = vmatprep.subr.mxu0 %v1051
        %3770 = vmatpush1.msra.mxu0 %v1050
        %3771 = vmatprep.subr.mxu0 %v1053
        %3772 = vmatpush1.msra.mxu0 %v1052
        %3773 = vmatprep.subr.mxu0 %v1055
        %3774 = vmatpush1.msra.mxu0 %v1054
        %3775 = vmatprep.subr.mxu0 %v1057
        %3776 = vmatpush1.msra.mxu0 %v1056
        %3777 = vmatprep.subr.mxu0 %v1059
        %3778 = vmatpush1.msra.mxu0 %v1058
        %3779 = vmatprep.subr.mxu0 %v1061
        %3780 = vmatpush1.msra.mxu0 %v1060
        %3781 = vmatprep.subr.mxu0 %v1063
        %3782 = vmatpush1.msra.mxu0 %v1062
        %3783 = vmatprep.subr.mxu0 %v1065
        %3784 = vmatpush1.msra.mxu0 %v1064
        %3785 = vmatprep.subr.mxu0 %v1067
        %3786 = vmatpush1.msra.mxu0 %v1066
        %3787 = vmatprep.subr.mxu0 %v1069
        %3788 = vmatpush1.msra.mxu0 %v1068
        %3789 = vmatprep.subr.mxu0 %v1071
        %3790 = vmatpush1.msra.mxu0 %v1070
        %3791 = vmatprep.subr.mxu0 %v1073
        %3792 = vmatpush1.msra.mxu0 %v1072
        %3793 = vmatprep.subr.mxu0 %v1075
        %3794 = vmatpush1.msra.mxu0 %v1074
        %3795 = vmatprep.mubr.f32.mxu0 %v3412
        %3796 = vmatmul.mubr.f32.gmra.mrb[0].mxu0 %v3411
        %v3797 = vpop.f32.mrb[0].mxu0
        %v3798 = vadd.f32 0.0, %v3797
        %v3799 = vpop.f32.mrb[0].mxu0
        %v3800 = vadd.f32 0.0, %v3799
        %3801 = vmatprep.mubr.f32.mxu0 %v3414
        %3802 = vmatmul.mubr.f32.gmra.mrb[0].mxu0 %v3413
        %v3803 = vpop.f32.mrb[0].mxu0
        %v3804 = vadd.f32 0.0, %v3803
        %v3805 = vpop.f32.mrb[0].mxu0
        %v3806 = vadd.f32 0.0, %v3805
        %3807 = vdwg.mxu0
        %3808 = vmatprep.subr.mxu0 %v1155
        %3809 = vmatpush1.msra.mxu0 %v1154
        %3810 = vmatprep.subr.mxu0 %v1157
        %3811 = vmatpush1.msra.mxu0 %v1156
        %3812 = vmatprep.subr.mxu0 %v1159
        %3813 = vmatpush1.msra.mxu0 %v1158
        %3814 = vmatprep.subr.mxu0 %v1161
        %3815 = vmatpush1.msra.mxu0 %v1160
        %3816 = vmatprep.subr.mxu0 %v1163
        %3817 = vmatpush1.msra.mxu0 %v1162
        %3818 = vmatprep.subr.mxu0 %v1165
        %3819 = vmatpush1.msra.mxu0 %v1164
        %3820 = vmatprep.subr.mxu0 %v1167
        %3821 = vmatpush1.msra.mxu0 %v1166
        %3822 = vmatprep.subr.mxu0 %v1169
        %3823 = vmatpush1.msra.mxu0 %v1168
        %3824 = vmatprep.subr.mxu0 %v1171
        %3825 = vmatpush1.msra.mxu0 %v1170
        %3826 = vmatprep.subr.mxu0 %v1173
        %3827 = vmatpush1.msra.mxu0 %v1172
        %3828 = vmatprep.subr.mxu0 %v1175
        %3829 = vmatpush1.msra.mxu0 %v1174
        %3830 = vmatprep.subr.mxu0 %v1177
        %3831 = vmatpush1.msra.mxu0 %v1176
        %3832 = vmatprep.subr.mxu0 %v1179
        %3833 = vmatpush1.msra.mxu0 %v1178
        %3834 = vmatprep.subr.mxu0 %v1181
        %3835 = vmatpush1.msra.mxu0 %v1180
        %3836 = vmatprep.subr.mxu0 %v1183
        %3837 = vmatpush1.msra.mxu0 %v1182
        %3838 = vmatprep.subr.mxu0 %v1185
        %3839 = vmatpush1.msra.mxu0 %v1184
        %3840 = vmatprep.subr.mxu0 %v1187
        %3841 = vmatpush1.msra.mxu0 %v1186
        %3842 = vmatprep.subr.mxu0 %v1189
        %3843 = vmatpush1.msra.mxu0 %v1188
        %3844 = vmatprep.subr.mxu0 %v1191
        %3845 = vmatpush1.msra.mxu0 %v1190
        %3846 = vmatprep.subr.mxu0 %v1193
        %3847 = vmatpush1.msra.mxu0 %v1192
        %3848 = vmatprep.subr.mxu0 %v1195
        %3849 = vmatpush1.msra.mxu0 %v1194
        %3850 = vmatprep.subr.mxu0 %v1197
        %3851 = vmatpush1.msra.mxu0 %v1196
        %3852 = vmatprep.subr.mxu0 %v1199
        %3853 = vmatpush1.msra.mxu0 %v1198
        %3854 = vmatprep.subr.mxu0 %v1201
        %3855 = vmatpush1.msra.mxu0 %v1200
        %3856 = vmatprep.subr.mxu0 %v1203
        %3857 = vmatpush1.msra.mxu0 %v1202
        %3858 = vmatprep.subr.mxu0 %v1205
        %3859 = vmatpush1.msra.mxu0 %v1204
        %3860 = vmatprep.subr.mxu0 %v1207
        %3861 = vmatpush1.msra.mxu0 %v1206
        %3862 = vmatprep.subr.mxu0 %v1209
        %3863 = vmatpush1.msra.mxu0 %v1208
        %3864 = vmatprep.subr.mxu0 %v1211
        %3865 = vmatpush1.msra.mxu0 %v1210
        %3866 = vmatprep.subr.mxu0 %v1213
        %3867 = vmatpush1.msra.mxu0 %v1212
        %3868 = vmatprep.subr.mxu0 %v1215
        %3869 = vmatpush1.msra.mxu0 %v1214
        %3870 = vmatprep.subr.mxu0 %v1217
        %3871 = vmatpush1.msra.mxu0 %v1216
        %3872 = vmatprep.mubr.f32.mxu0 %v3412
        %3873 = vmatmul.mubr.f32.gmra.mrb[0].mxu0 %v3411
        %v3874 = vpop.f32.mrb[0].mxu0
        %v3875 = vadd.f32 0.0, %v3874
        %v3876 = vpop.f32.mrb[0].mxu0
        %v3877 = vadd.f32 0.0, %v3876
        %3878 = vmatprep.mubr.f32.mxu0 %v3414
        %3879 = vmatmul.mubr.f32.gmra.mrb[0].mxu0 %v3413
        %v3880 = vpop.f32.mrb[0].mxu0
        %v3881 = vadd.f32 0.0, %v3880
        %v3882 = vpop.f32.mrb[0].mxu0
        %v3883 = vadd.f32 0.0, %v3882
        %3884 = vdwg.mxu0
        %3885 = vmatprep.subr.mxu0 %v1297
        %3886 = vmatpush1.msra.mxu0 %v1296
        %3887 = vmatprep.subr.mxu0 %v1299
        %3888 = vmatpush1.msra.mxu0 %v1298
        %3889 = vmatprep.subr.mxu0 %v1301
        %3890 = vmatpush1.msra.mxu0 %v1300
        %3891 = vmatprep.subr.mxu0 %v1303
        %3892 = vmatpush1.msra.mxu0 %v1302
        %3893 = vmatprep.subr.mxu0 %v1305
        %3894 = vmatpush1.msra.mxu0 %v1304
        %3895 = vmatprep.subr.mxu0 %v1307
        %3896 = vmatpush1.msra.mxu0 %v1306
        %3897 = vmatprep.subr.mxu0 %v1309
        %3898 = vmatpush1.msra.mxu0 %v1308
        %3899 = vmatprep.subr.mxu0 %v1311
        %3900 = vmatpush1.msra.mxu0 %v1310
        %3901 = vmatprep.subr.mxu0 %v1313
        %3902 = vmatpush1.msra.mxu0 %v1312
        %3903 = vmatprep.subr.mxu0 %v1315
        %3904 = vmatpush1.msra.mxu0 %v1314
        %3905 = vmatprep.subr.mxu0 %v1317
        %3906 = vmatpush1.msra.mxu0 %v1316
        %3907 = vmatprep.subr.mxu0 %v1319
        %3908 = vmatpush1.msra.mxu0 %v1318
        %3909 = vmatprep.subr.mxu0 %v1321
        %3910 = vmatpush1.msra.mxu0 %v1320
        %3911 = vmatprep.subr.mxu0 %v1323
        %3912 = vmatpush1.msra.mxu0 %v1322
        %3913 = vmatprep.subr.mxu0 %v1325
        %3914 = vmatpush1.msra.mxu0 %v1324
        %3915 = vmatprep.subr.mxu0 %v1327
        %3916 = vmatpush1.msra.mxu0 %v1326
        %3917 = vmatprep.subr.mxu0 %v1329
        %3918 = vmatpush1.msra.mxu0 %v1328
        %3919 = vmatprep.subr.mxu0 %v1331
        %3920 = vmatpush1.msra.mxu0 %v1330
        %3921 = vmatprep.subr.mxu0 %v1333
        %3922 = vmatpush1.msra.mxu0 %v1332
        %3923 = vmatprep.subr.mxu0 %v1335
        %3924 = vmatpush1.msra.mxu0 %v1334
        %3925 = vmatprep.subr.mxu0 %v1337
        %3926 = vmatpush1.msra.mxu0 %v1336
        %3927 = vmatprep.subr.mxu0 %v1339
        %3928 = vmatpush1.msra.mxu0 %v1338
        %3929 = vmatprep.subr.mxu0 %v1341
        %3930 = vmatpush1.msra.mxu0 %v1340
        %3931 = vmatprep.subr.mxu0 %v1343
        %3932 = vmatpush1.msra.mxu0 %v1342
        %3933 = vmatprep.subr.mxu0 %v1345
        %3934 = vmatpush1.msra.mxu0 %v1344
        %3935 = vmatprep.subr.mxu0 %v1347
        %3936 = vmatpush1.msra.mxu0 %v1346
        %3937 = vmatprep.subr.mxu0 %v1349
        %3938 = vmatpush1.msra.mxu0 %v1348
        %3939 = vmatprep.subr.mxu0 %v1351
        %3940 = vmatpush1.msra.mxu0 %v1350
        %3941 = vmatprep.subr.mxu0 %v1353
        %3942 = vmatpush1.msra.mxu0 %v1352
        %3943 = vmatprep.subr.mxu0 %v1355
        %3944 = vmatpush1.msra.mxu0 %v1354
        %3945 = vmatprep.subr.mxu0 %v1357
        %3946 = vmatpush1.msra.mxu0 %v1356
        %3947 = vmatprep.subr.mxu0 %v1359
        %3948 = vmatpush1.msra.mxu0 %v1358
        %3949 = vmatprep.mubr.f32.mxu0 %v3412
        %3950 = vmatmul.mubr.f32.gmra.mrb[0].mxu0 %v3411
        %v3951 = vpop.f32.mrb[0].mxu0
        %v3952 = vadd.f32 0.0, %v3951
        %v3953 = vpop.f32.mrb[0].mxu0
        %v3954 = vadd.f32 0.0, %v3953
        %3955 = vmatprep.mubr.f32.mxu0 %v3414
        %3956 = vmatmul.mubr.f32.gmra.mrb[0].mxu0 %v3413
        %v3957 = vpop.f32.mrb[0].mxu0
        %v3958 = vadd.f32 0.0, %v3957
        %v3959 = vpop.f32.mrb[0].mxu0
        %v3960 = vadd.f32 0.0, %v3959
        %3961 = vdwg.mxu0
        %3962 = vmatprep.subr.mxu0 %v1439
        %3963 = vmatpush1.msra.mxu0 %v1438
        %3964 = vmatprep.subr.mxu0 %v1441
        %3965 = vmatpush1.msra.mxu0 %v1440
        %3966 = vmatprep.subr.mxu0 %v1443
        %3967 = vmatpush1.msra.mxu0 %v1442
        %3968 = vmatprep.subr.mxu0 %v1445
        %3969 = vmatpush1.msra.mxu0 %v1444
        %3970 = vmatprep.subr.mxu0 %v1447
        %3971 = vmatpush1.msra.mxu0 %v1446
        %3972 = vmatprep.subr.mxu0 %v1449
        %3973 = vmatpush1.msra.mxu0 %v1448
        %3974 = vmatprep.subr.mxu0 %v1451
        %3975 = vmatpush1.msra.mxu0 %v1450
        %3976 = vmatprep.subr.mxu0 %v1453
        %3977 = vmatpush1.msra.mxu0 %v1452
        %3978 = vmatprep.subr.mxu0 %v1455
        %3979 = vmatpush1.msra.mxu0 %v1454
        %3980 = vmatprep.subr.mxu0 %v1457
        %3981 = vmatpush1.msra.mxu0 %v1456
        %3982 = vmatprep.subr.mxu0 %v1459
        %3983 = vmatpush1.msra.mxu0 %v1458
        %3984 = vmatprep.subr.mxu0 %v1461
        %3985 = vmatpush1.msra.mxu0 %v1460
        %3986 = vmatprep.subr.mxu0 %v1463
        %3987 = vmatpush1.msra.mxu0 %v1462
        %3988 = vmatprep.subr.mxu0 %v1465
        %3989 = vmatpush1.msra.mxu0 %v1464
        %3990 = vmatprep.subr.mxu0 %v1467
        %3991 = vmatpush1.msra.mxu0 %v1466
        %3992 = vmatprep.subr.mxu0 %v1469
        %3993 = vmatpush1.msra.mxu0 %v1468
        %3994 = vmatprep.subr.mxu0 %v1471
        %3995 = vmatpush1.msra.mxu0 %v1470
        %3996 = vmatprep.subr.mxu0 %v1473
        %3997 = vmatpush1.msra.mxu0 %v1472
        %3998 = vmatprep.subr.mxu0 %v1475
        %3999 = vmatpush1.msra.mxu0 %v1474
        %4000 = vmatprep.subr.mxu0 %v1477
        %4001 = vmatpush1.msra.mxu0 %v1476
        %4002 = vmatprep.subr.mxu0 %v1479
        %4003 = vmatpush1.msra.mxu0 %v1478
        %4004 = vmatprep.subr.mxu0 %v1481
        %4005 = vmatpush1.msra.mxu0 %v1480
        %4006 = vmatprep.subr.mxu0 %v1483
        %4007 = vmatpush1.msra.mxu0 %v1482
        %4008 = vmatprep.subr.mxu0 %v1485
        %4009 = vmatpush1.msra.mxu0 %v1484
        %4010 = vmatprep.subr.mxu0 %v1487
        %4011 = vmatpush1.msra.mxu0 %v1486
        %4012 = vmatprep.subr.mxu0 %v1489
        %4013 = vmatpush1.msra.mxu0 %v1488
        %4014 = vmatprep.subr.mxu0 %v1491
        %4015 = vmatpush1.msra.mxu0 %v1490
        %4016 = vmatprep.subr.mxu0 %v1493
        %4017 = vmatpush1.msra.mxu0 %v1492
        %4018 = vmatprep.subr.mxu0 %v1495
        %4019 = vmatpush1.msra.mxu0 %v1494
        %4020 = vmatprep.subr.mxu0 %v1497
        %4021 = vmatpush1.msra.mxu0 %v1496
        %4022 = vmatprep.subr.mxu0 %v1499
        %4023 = vmatpush1.msra.mxu0 %v1498
        %4024 = vmatprep.subr.mxu0 %v1501
        %4025 = vmatpush1.msra.mxu0 %v1500
        %4026 = vmatprep.mubr.f32.mxu0 %v3412
        %4027 = vmatmul.mubr.f32.gmra.mrb[0].mxu0 %v3411
        %v4028 = vpop.f32.mrb[0].mxu0
        %v4029 = vadd.f32 0.0, %v4028
        %v4030 = vpop.f32.mrb[0].mxu0
        %v4031 = vadd.f32 0.0, %v4030
        %4032 = vmatprep.mubr.f32.mxu0 %v3414
        %4033 = vmatmul.mubr.f32.gmra.mrb[0].mxu0 %v3413
        %v4034 = vpop.f32.mrb[0].mxu0
        %v4035 = vadd.f32 0.0, %v4034
        %v4036 = vpop.f32.mrb[0].mxu0
        %v4037 = vadd.f32 0.0, %v4036
        %4038 = vdwg.mxu0
        %4039 = vmatprep.subr.mxu0 %v1581
        %4040 = vmatpush1.msra.mxu0 %v1580
        %4041 = vmatprep.subr.mxu0 %v1583
        %4042 = vmatpush1.msra.mxu0 %v1582
        %4043 = vmatprep.subr.mxu0 %v1585
        %4044 = vmatpush1.msra.mxu0 %v1584
        %4045 = vmatprep.subr.mxu0 %v1587
        %4046 = vmatpush1.msra.mxu0 %v1586
        %4047 = vmatprep.subr.mxu0 %v1589
        %4048 = vmatpush1.msra.mxu0 %v1588
        %4049 = vmatprep.subr.mxu0 %v1591
        %4050 = vmatpush1.msra.mxu0 %v1590
        %4051 = vmatprep.subr.mxu0 %v1593
        %4052 = vmatpush1.msra.mxu0 %v1592
        %4053 = vmatprep.subr.mxu0 %v1595
        %4054 = vmatpush1.msra.mxu0 %v1594
        %4055 = vmatprep.subr.mxu0 %v1597
        %4056 = vmatpush1.msra.mxu0 %v1596
        %4057 = vmatprep.subr.mxu0 %v1599
        %4058 = vmatpush1.msra.mxu0 %v1598
        %4059 = vmatprep.subr.mxu0 %v1601
        %4060 = vmatpush1.msra.mxu0 %v1600
        %4061 = vmatprep.subr.mxu0 %v1603
        %4062 = vmatpush1.msra.mxu0 %v1602
        %4063 = vmatprep.subr.mxu0 %v1605
        %4064 = vmatpush1.msra.mxu0 %v1604
        %4065 = vmatprep.subr.mxu0 %v1607
        %4066 = vmatpush1.msra.mxu0 %v1606
        %4067 = vmatprep.subr.mxu0 %v1609
        %4068 = vmatpush1.msra.mxu0 %v1608
        %4069 = vmatprep.subr.mxu0 %v1611
        %4070 = vmatpush1.msra.mxu0 %v1610
        %4071 = vmatprep.subr.mxu0 %v1613
        %4072 = vmatpush1.msra.mxu0 %v1612
        %4073 = vmatprep.subr.mxu0 %v1615
        %4074 = vmatpush1.msra.mxu0 %v1614
        %4075 = vmatprep.subr.mxu0 %v1617
        %4076 = vmatpush1.msra.mxu0 %v1616
        %4077 = vmatprep.subr.mxu0 %v1619
        %4078 = vmatpush1.msra.mxu0 %v1618
        %4079 = vmatprep.subr.mxu0 %v1621
        %4080 = vmatpush1.msra.mxu0 %v1620
        %4081 = vmatprep.subr.mxu0 %v1623
        %4082 = vmatpush1.msra.mxu0 %v1622
        %4083 = vmatprep.subr.mxu0 %v1625
        %4084 = vmatpush1.msra.mxu0 %v1624
        %4085 = vmatprep.subr.mxu0 %v1627
        %4086 = vmatpush1.msra.mxu0 %v1626
        %4087 = vmatprep.subr.mxu0 %v1629
        %4088 = vmatpush1.msra.mxu0 %v1628
        %4089 = vmatprep.subr.mxu0 %v1631
        %4090 = vmatpush1.msra.mxu0 %v1630
        %4091 = vmatprep.subr.mxu0 %v1633
        %4092 = vmatpush1.msra.mxu0 %v1632
        %4093 = vmatprep.subr.mxu0 %v1635
        %4094 = vmatpush1.msra.mxu0 %v1634
        %4095 = vmatprep.subr.mxu0 %v1637
        %4096 = vmatpush1.msra.mxu0 %v1636
        %4097 = vmatprep.subr.mxu0 %v1639
        %4098 = vmatpush1.msra.mxu0 %v1638
        %4099 = vmatprep.subr.mxu0 %v1641
        %4100 = vmatpush1.msra.mxu0 %v1640
        %4101 = vmatprep.subr.mxu0 %v1643
        %4102 = vmatpush1.msra.mxu0 %v1642
        %4103 = vmatprep.mubr.f32.mxu0 %v3412
        %4104 = vmatmul.mubr.f32.gmra.mrb[0].mxu0 %v3411
        %v4105 = vpop.f32.mrb[0].mxu0
        %v4106 = vadd.f32 0.0, %v4105
        %v4107 = vpop.f32.mrb[0].mxu0
        %v4108 = vadd.f32 0.0, %v4107
        %4109 = vmatprep.mubr.f32.mxu0 %v3414
        %4110 = vmatmul.mubr.f32.gmra.mrb[0].mxu0 %v3413
        %v4111 = vpop.f32.mrb[0].mxu0
        %v4112 = vadd.f32 0.0, %v4111
        %v4113 = vpop.f32.mrb[0].mxu0
        %v4114 = vadd.f32 0.0, %v4113
        %4115 = vdwg.mxu0
        %4117 = vset.pattern.permute.xlu0 0
        %4118 = vperm.xlu0 %4117, %v3421
        %v4119 = vpop.permute.xlu0 %4118
        %4122 = vset.pattern.permute.xlu0 0
        %4123 = vperm.xlu0 %4122, %v3422
        %v4124 = vpop.permute.xlu0 %4123
        %v4127 = vsel %vm1731, %v3417, 0
        %v4130 = vsel %vm1731, %v3419, 0
        %4132 = vmatprep.subr.mxu0 %v3492
        %4133 = vmatpush1.msra.mxu0 %v3490
        %4134 = vmatprep.subr.mxu0 %v3498
        %4135 = vmatpush1.msra.mxu0 %v3496
        %4136 = vmatprep.subr.mxu0 %v3569
        %4137 = vmatpush1.msra.mxu0 %v3567
        %4138 = vmatprep.subr.mxu0 %v3575
        %4139 = vmatpush1.msra.mxu0 %v3573
        %4140 = vmatprep.subr.mxu0 %v3646
        %4141 = vmatpush1.msra.mxu0 %v3644
        %4142 = vmatprep.subr.mxu0 %v3652
        %4143 = vmatpush1.msra.mxu0 %v3650
        %4144 = vmatprep.subr.mxu0 %v3723
        %4145 = vmatpush1.msra.mxu0 %v3721
        %4146 = vmatprep.subr.mxu0 %v3729
        %4147 = vmatpush1.msra.mxu0 %v3727
        %4148 = vmatprep.subr.mxu0 %v3800
        %4149 = vmatpush1.msra.mxu0 %v3798
        %4150 = vmatprep.subr.mxu0 %v3806
        %4151 = vmatpush1.msra.mxu0 %v3804
        %4152 = vmatprep.subr.mxu0 %v3877
        %4153 = vmatpush1.msra.mxu0 %v3875
        %4154 = vmatprep.subr.mxu0 %v3883
        %4155 = vmatpush1.msra.mxu0 %v3881
        %4156 = vmatprep.subr.mxu0 %v3954
        %4157 = vmatpush1.msra.mxu0 %v3952
        %4158 = vmatprep.subr.mxu0 %v3960
        %4159 = vmatpush1.msra.mxu0 %v3958
        %4160 = vmatprep.subr.mxu0 %v4031
        %4161 = vmatpush1.msra.mxu0 %v4029
        %4162 = vmatprep.subr.mxu0 %v4037
        %4163 = vmatpush1.msra.mxu0 %v4035
        %4164 = vmatprep.subr.mxu0 %v4108
        %4165 = vmatpush1.msra.mxu0 %v4106
        %4166 = vmatprep.subr.mxu0 %v4114
        %4167 = vmatpush1.msra.mxu0 %v4112
        %4168 = vmatprep.subr.mxu0 0.0
        %4169 = vmatpush1.msra.mxu0 0.0
        %4170 = vmatprep.subr.mxu0 0.0
        %4171 = vmatpush1.msra.mxu0 0.0
        %4172 = vmatprep.subr.mxu0 0.0
        %4173 = vmatpush1.msra.mxu0 0.0
        %4174 = vmatprep.subr.mxu0 0.0
        %4175 = vmatpush1.msra.mxu0 0.0
        %4176 = vmatprep.subr.mxu0 0.0
        %4177 = vmatpush1.msra.mxu0 0.0
        %4178 = vmatprep.subr.mxu0 0.0
        %4179 = vmatpush1.msra.mxu0 0.0
        %4180 = vmatprep.subr.mxu0 0.0
        %4181 = vmatpush1.msra.mxu0 0.0
        %4182 = vmatprep.subr.mxu0 0.0
        %4183 = vmatpush1.msra.mxu0 0.0
        %4184 = vmatprep.subr.mxu0 0.0
        %4185 = vmatpush1.msra.mxu0 0.0
        %4186 = vmatprep.subr.mxu0 0.0
        %4187 = vmatpush1.msra.mxu0 0.0
        %4188 = vmatprep.subr.mxu0 0.0
        %4189 = vmatpush1.msra.mxu0 0.0
        %4190 = vmatprep.subr.mxu0 0.0
        %4191 = vmatpush1.msra.mxu0 0.0
        %4192 = vmatprep.subr.mxu0 0.0
        %4193 = vmatpush1.msra.mxu0 0.0
        %4194 = vmatprep.subr.mxu0 0.0
        %4195 = vmatpush1.msra.mxu0 0.0
        %4196 = vmatprep.mubr.f32.mxu0 %v4127
        %4197 = vmatmul.mubr.f32.gmra.mrb[0].mxu0 %v3416
        %v4198 = vpop.f32.mrb[0].mxu0
        %v4199 = vadd.f32 %v4119, %v4198
        %v4200 = vpop.f32.mrb[0].mxu0
        %v4201 = vadd.f32 %v4119, %v4200
        %4202 = vmatprep.mubr.f32.mxu0 %v4130
        %4203 = vmatmul.mubr.f32.gmra.mrb[0].mxu0 %v3418
        %v4204 = vpop.f32.mrb[0].mxu0
        %v4205 = vadd.f32 %v4124, %v4204
        %v4206 = vpop.f32.mrb[0].mxu0
        %v4207 = vadd.f32 %v4124, %v4206
        %4208 = vdwg.mxu0
        %v4209 = vadd.f32 %v4199, %v2613
        %v4210 = vadd.f32 %v4201, %v2614
        %v4211 = vadd.f32 %v4205, %v2615
        %v4212 = vadd.f32 %v4207, %v2616
        %v4213 = vadd.f32 %v4209, %v4210
        %4214 = vadd.xlane.f32.xlu0 %v4213
        %v4215 = vpop.xlane.xlu0 %4214
        %v4216 = vadd.f32 %v4211, %v4212
        %4217 = vadd.xlane.f32.xlu0 %v4216
        %v4218 = vpop.xlane.xlu0 %4217
        %v4219 = vmul.f32 %v4215, 0.00390625
        %v4220 = vmul.f32 %v4218, 0.00390625
        %v4221 = vsub.f32 %v4209, %v4219
        %v4222 = vsub.f32 %v4210, %v4219
        %v4223 = vsub.f32 %v4211, %v4220
        %v4224 = vsub.f32 %v4212, %v4220
        %4225 = vmatprep.subr.mxu0 %v4222
        %4226 = vmatpush1.xpose.msra.mxu0 %v4221
        %4227 = vmatprep.subr.mxu0 %v4224
        %4228 = vmatpush1.xpose.msra.mxu0 %v4223
        %4229 = vmatprep.subr.mxu0 0.0
        %4230 = vmatpush1.xpose.msra.mxu0 0.0
        %4231 = vmatprep.subr.mxu0 0.0
        %4232 = vmatpush1.xpose.msra.mxu0 0.0
        %4233 = vmatprep.subr.mxu0 0.0
        %4234 = vmatpush1.xpose.msra.mxu0 0.0
        %4235 = vmatprep.subr.mxu0 0.0
        %4236 = vmatpush1.xpose.msra.mxu0 0.0
        %4237 = vmatprep.subr.mxu0 0.0
        %4238 = vmatpush1.xpose.msra.mxu0 0.0
        %4239 = vmatprep.subr.mxu0 0.0
        %4240 = vmatpush1.xpose.msra.mxu0 0.0
        %4241 = vmatprep.subr.mxu0 0.0
        %4242 = vmatpush1.xpose.msra.mxu0 0.0
        %4243 = vmatprep.subr.mxu0 0.0
        %4244 = vmatpush1.xpose.msra.mxu0 0.0
        %4245 = vmatprep.subr.mxu0 0.0
        %4246 = vmatpush1.xpose.msra.mxu0 0.0
        %4247 = vmatprep.subr.mxu0 0.0
        %4248 = vmatpush1.xpose.msra.mxu0 0.0
        %4249 = vmatprep.subr.mxu0 0.0
        %4250 = vmatpush1.xpose.msra.mxu0 0.0
        %4251 = vmatprep.subr.mxu0 0.0
        %4252 = vmatpush1.xpose.msra.mxu0 0.0
        %4253 = vmatprep.subr.mxu0 0.0
        %4254 = vmatpush1.xpose.msra.mxu0 0.0
        %4255 = vmatprep.subr.mxu0 0.0
        %4256 = vmatpush1.xpose.msra.mxu0 0.0
        %4257 = vmatprep.subr.mxu0 0.0
        %4258 = vmatpush1.xpose.msra.mxu0 0.0
        %4259 = vmatprep.subr.mxu0 0.0
        %4260 = vmatpush1.xpose.msra.mxu0 0.0
        %4261 = vmatprep.subr.mxu0 0.0
        %4262 = vmatpush1.xpose.msra.mxu0 0.0
        %4263 = vmatprep.subr.mxu0 0.0
        %4264 = vmatpush1.xpose.msra.mxu0 0.0
        %4265 = vmatprep.subr.mxu0 0.0
        %4266 = vmatpush1.xpose.msra.mxu0 0.0
        %4267 = vmatprep.subr.mxu0 0.0
        %4268 = vmatpush1.xpose.msra.mxu0 0.0
        %4269 = vmatprep.subr.mxu0 0.0
        %4270 = vmatpush1.xpose.msra.mxu0 0.0
        %4271 = vmatprep.subr.mxu0 0.0
        %4272 = vmatpush1.xpose.msra.mxu0 0.0
        %4273 = vmatprep.subr.mxu0 0.0
        %4274 = vmatpush1.xpose.msra.mxu0 0.0
        %4275 = vmatprep.subr.mxu0 0.0
        %4276 = vmatpush1.xpose.msra.mxu0 0.0
        %4277 = vmatprep.subr.mxu0 0.0
        %4278 = vmatpush1.xpose.msra.mxu0 0.0
        %4279 = vmatprep.subr.mxu0 0.0
        %4280 = vmatpush1.xpose.msra.mxu0 0.0
        %4281 = vmatprep.subr.mxu0 0.0
        %4282 = vmatpush1.xpose.msra.mxu0 0.0
        %4283 = vmatprep.subr.mxu0 0.0
        %4284 = vmatpush1.xpose.msra.mxu0 0.0
        %4285 = vmatprep.subr.mxu0 0.0
        %4286 = vmatpush1.xpose.msra.mxu0 0.0
        %4287 = vmatprep.subr.mxu0 0.0
        %4288 = vmatpush1.xpose.msra.mxu0 0.0
        %4289 = vmatprep.mubr.f32.mxu0 %v4222
        %4290 = vmatmul.mubr.f32.gmra.mrb[0].mxu0 %v4221
        %v4291 = vpop.f32.mrb[0].mxu0
        %v4292 = vadd.f32 0.0, %v4291
        %v4293 = vpop.f32.mrb[0].mxu0
        %4294 = vmatprep.mubr.f32.mxu0 %v4224
        %4295 = vmatmul.mubr.f32.gmra.mrb[0].mxu0 %v4223
        %v4296 = vpop.f32.mrb[0].mxu0
        %v4297 = vadd.f32 0.0, %v4296
        %v4298 = vpop.f32.mrb[0].mxu0
        %4299 = vdwg.mxu0
        %v4300 = vmul.f32 %v4292, 0.00390625
        %v4301 = vmul.f32 %v4297, 0.00390625
        %v4302 = vlaneseq
        %v4303 = vshrl.u32 %v4302, 7
        %v4304 = vadd.s32 %v4303, 8
        %v4305 = vlaneseq
        %v4306 = vand.u32 %v4305, 127
        %vm4307 = vcmp.eq.s32.totalorder %v4303, %v4306
        %vm4308 = vcmp.eq.s32.totalorder %v4304, %v4306
        %v4309 = vsel %vm4307, 1, 0
        %v4310 = vsel %vm4308, 1, 0
        %v4311 = vcvt.s32.f32 %v4309
        %v4312 = vcvt.s32.f32 %v4310
        %v4313 = vmul.f32 %v4311, 3.0
        %v4314 = vmul.f32 %v4312, 3.0
        %v4315 = vmul.f32 %v4300, %v4311
        %v4316 = vmul.f32 %v4301, %v4312
        %v4317 = vsel %vm1731, %v4315, 0.0
        %v4318 = vsel %vm1731, %v4316, 0.0
        %v4319 = vadd.f32 %v4317, %v4318
        %4320 = vadd.xlane.f32.xlu0 %v4319
        %v4321 = vpop.xlane.xlu0 %4320
        %v4322 = vrot.slane %v4321, 4
        %v4323 = vadd.f32 %v4321, %v4322
        %v4324 = vrot.slane %v4323, 2
        %v4325 = vadd.f32 %v4323, %v4324
        %v4326 = vrot.slane %v4325, 1
        %v4327 = vadd.f32 %v4325, %v4326
        %s4328 = vtos %v4327
        %v4329 = vstv %s4328
        %v4330 = vrcp.pop %v4329
        %v4331 = vmul.f32 %v4300, %v4330
        %v4332 = vmul.f32 %v4301, %v4330
        %v4333 = vsub.f32 %v4313, %v4331
        %v4334 = vsub.f32 %v4314, %v4332
        %v4335 = vmul.f32 %v4333, 0.5
        %v4336 = vmul.f32 %v4334, 0.5
        %v4338 = vsel %vm1731, %v4331, 0
        %v4341 = vsel %vm1731, %v4332, 0
        %4343 = vmatprep.subr.mxu0 0.0
        %4344 = vmatpush1.msra.mxu0 %v4335
        %4345 = vmatprep.subr.mxu0 0.0
        %4346 = vmatpush1.msra.mxu0 %v4336
        %4347 = vmatprep.subr.mxu0 0.0
        %4348 = vmatpush1.msra.mxu0 0.0
        %4349 = vmatprep.subr.mxu0 0.0
        %4350 = vmatpush1.msra.mxu0 0.0
        %4351 = vmatprep.subr.mxu0 0.0
        %4352 = vmatpush1.msra.mxu0 0.0
        %4353 = vmatprep.subr.mxu0 0.0
        %4354 = vmatpush1.msra.mxu0 0.0
        %4355 = vmatprep.subr.mxu0 0.0
        %4356 = vmatpush1.msra.mxu0 0.0
        %4357 = vmatprep.subr.mxu0 0.0
        %4358 = vmatpush1.msra.mxu0 0.0
        %4359 = vmatprep.subr.mxu0 0.0
        %4360 = vmatpush1.msra.mxu0 0.0
        %4361 = vmatprep.subr.mxu0 0.0
        %4362 = vmatpush1.msra.mxu0 0.0
        %4363 = vmatprep.subr.mxu0 0.0
        %4364 = vmatpush1.msra.mxu0 0.0
        %4365 = vmatprep.subr.mxu0 0.0
        %4366 = vmatpush1.msra.mxu0 0.0
        %4367 = vmatprep.subr.mxu0 0.0
        %4368 = vmatpush1.msra.mxu0 0.0
        %4369 = vmatprep.subr.mxu0 0.0
        %4370 = vmatpush1.msra.mxu0 0.0
        %4371 = vmatprep.subr.mxu0 0.0
        %4372 = vmatpush1.msra.mxu0 0.0
        %4373 = vmatprep.subr.mxu0 0.0
        %4374 = vmatpush1.msra.mxu0 0.0
        %4375 = vmatprep.subr.mxu0 0.0
        %4376 = vmatpush1.msra.mxu0 0.0
        %4377 = vmatprep.subr.mxu0 0.0
        %4378 = vmatpush1.msra.mxu0 0.0
        %4379 = vmatprep.subr.mxu0 0.0
        %4380 = vmatpush1.msra.mxu0 0.0
        %4381 = vmatprep.subr.mxu0 0.0
        %4382 = vmatpush1.msra.mxu0 0.0
        %4383 = vmatprep.subr.mxu0 0.0
        %4384 = vmatpush1.msra.mxu0 0.0
        %4385 = vmatprep.subr.mxu0 0.0
        %4386 = vmatpush1.msra.mxu0 0.0
        %4387 = vmatprep.subr.mxu0 0.0
        %4388 = vmatpush1.msra.mxu0 0.0
        %4389 = vmatprep.subr.mxu0 0.0
        %4390 = vmatpush1.msra.mxu0 0.0
        %4391 = vmatprep.subr.mxu0 0.0
        %4392 = vmatpush1.msra.mxu0 0.0
        %4393 = vmatprep.subr.mxu0 0.0
        %4394 = vmatpush1.msra.mxu0 0.0
        %4395 = vmatprep.subr.mxu0 0.0
        %4396 = vmatpush1.msra.mxu0 0.0
        %4397 = vmatprep.subr.mxu0 0.0
        %4398 = vmatpush1.msra.mxu0 0.0
        %4399 = vmatprep.subr.mxu0 0.0
        %4400 = vmatpush1.msra.mxu0 0.0
        %4401 = vmatprep.subr.mxu0 0.0
        %4402 = vmatpush1.msra.mxu0 0.0
        %4403 = vmatprep.subr.mxu0 0.0
        %4404 = vmatpush1.msra.mxu0 0.0
        %4405 = vmatprep.subr.mxu0 0.0
        %4406 = vmatpush1.msra.mxu0 0.0
        %4407 = vmatprep.mubr.f32.mxu0 0.0
        %4408 = vmatmul.mubr.f32.gmra.mrb[0].mxu0 %v4338
        %v4409 = vpop.f32.mrb[0].mxu0
        %v4410 = vadd.f32 0.0, %v4409
        %v4411 = vpop.f32.mrb[0].mxu0
        %4412 = vmatprep.mubr.f32.mxu0 0.0
        %4413 = vmatmul.mubr.f32.gmra.mrb[0].mxu0 %v4341
        %v4414 = vpop.f32.mrb[0].mxu0
        %v4415 = vadd.f32 0.0, %v4414
        %v4416 = vpop.f32.mrb[0].mxu0
        %4417 = vdwg.mxu0
        %v4419 = vsel %vm1731, %v4335, 0
        %v4422 = vsel %vm1731, %v4336, 0
        %4424 = vmatprep.subr.mxu0 0.0
        %4425 = vmatpush1.msra.mxu0 %v4410
        %4426 = vmatprep.subr.mxu0 0.0
        %4427 = vmatpush1.msra.mxu0 %v4415
        %4428 = vmatprep.subr.mxu0 0.0
        %4429 = vmatpush1.msra.mxu0 0.0
        %4430 = vmatprep.subr.mxu0 0.0
        %4431 = vmatpush1.msra.mxu0 0.0
        %4432 = vmatprep.subr.mxu0 0.0
        %4433 = vmatpush1.msra.mxu0 0.0
        %4434 = vmatprep.subr.mxu0 0.0
        %4435 = vmatpush1.msra.mxu0 0.0
        %4436 = vmatprep.subr.mxu0 0.0
        %4437 = vmatpush1.msra.mxu0 0.0
        %4438 = vmatprep.subr.mxu0 0.0
        %4439 = vmatpush1.msra.mxu0 0.0
        %4440 = vmatprep.subr.mxu0 0.0
        %4441 = vmatpush1.msra.mxu0 0.0
        %4442 = vmatprep.subr.mxu0 0.0
        %4443 = vmatpush1.msra.mxu0 0.0
        %4444 = vmatprep.subr.mxu0 0.0
        %4445 = vmatpush1.msra.mxu0 0.0
        %4446 = vmatprep.subr.mxu0 0.0
        %4447 = vmatpush1.msra.mxu0 0.0
        %4448 = vmatprep.subr.mxu0 0.0
        %4449 = vmatpush1.msra.mxu0 0.0
        %4450 = vmatprep.subr.mxu0 0.0
        %4451 = vmatpush1.msra.mxu0 0.0
        %4452 = vmatprep.subr.mxu0 0.0
        %4453 = vmatpush1.msra.mxu0 0.0
        %4454 = vmatprep.subr.mxu0 0.0
        %4455 = vmatpush1.msra.mxu0 0.0
        %4456 = vmatprep.subr.mxu0 0.0
        %4457 = vmatpush1.msra.mxu0 0.0
        %4458 = vmatprep.subr.mxu0 0.0
        %4459 = vmatpush1.msra.mxu0 0.0
        %4460 = vmatprep.subr.mxu0 0.0
        %4461 = vmatpush1.msra.mxu0 0.0
        %4462 = vmatprep.subr.mxu0 0.0
        %4463 = vmatpush1.msra.mxu0 0.0
        %4464 = vmatprep.subr.mxu0 0.0
        %4465 = vmatpush1.msra.mxu0 0.0
        %4466 = vmatprep.subr.mxu0 0.0
        %4467 = vmatpush1.msra.mxu0 0.0
        %4468 = vmatprep.subr.mxu0 0.0
        %4469 = vmatpush1.msra.mxu0 0.0
        %4470 = vmatprep.subr.mxu0 0.0
        %4471 = vmatpush1.msra.mxu0 0.0
        %4472 = vmatprep.subr.mxu0 0.0
        %4473 = vmatpush1.msra.mxu0 0.0
        %4474 = vmatprep.subr.mxu0 0.0
        %4475 = vmatpush1.msra.mxu0 0.0
        %4476 = vmatprep.subr.mxu0 0.0
        %4477 = vmatpush1.msra.mxu0 0.0
        %4478 = vmatprep.subr.mxu0 0.0
        %4479 = vmatpush1.msra.mxu0 0.0
        %4480 = vmatprep.subr.mxu0 0.0
        %4481 = vmatpush1.msra.mxu0 0.0
        %4482 = vmatprep.subr.mxu0 0.0
        %4483 = vmatpush1.msra.mxu0 0.0
        %4484 = vmatprep.subr.mxu0 0.0
        %4485 = vmatpush1.msra.mxu0 0.0
        %4486 = vmatprep.subr.mxu0 0.0
        %4487 = vmatpush1.msra.mxu0 0.0
        %4488 = vmatprep.mubr.f32.mxu0 0.0
        %4489 = vmatmul.mubr.f32.gmra.mrb[0].mxu0 %v4419
        %v4490 = vpop.f32.mrb[0].mxu0
        %v4491 = vadd.f32 0.0, %v4490
        %v4492 = vpop.f32.mrb[0].mxu0
        %4493 = vmatprep.mubr.f32.mxu0 0.0
        %4494 = vmatmul.mubr.f32.gmra.mrb[0].mxu0 %v4422
        %v4495 = vpop.f32.mrb[0].mxu0
        %v4496 = vadd.f32 0.0, %v4495
        %v4497 = vpop.f32.mrb[0].mxu0
        %4498 = vdwg.mxu0
        %v4499 = vsub.f32 %v4313, %v4491
        %v4500 = vsub.f32 %v4314, %v4496
        %v4501 = vmul.f32 %v4499, 0.5
        %v4502 = vmul.f32 %v4500, 0.5
        %v4504 = vsel %vm1731, %v4410, 0
        %v4507 = vsel %vm1731, %v4415, 0
        %4509 = vmatprep.subr.mxu0 0.0
        %4510 = vmatpush1.msra.mxu0 %v4501
        %4511 = vmatprep.subr.mxu0 0.0
        %4512 = vmatpush1.msra.mxu0 %v4502
        %4513 = vmatprep.subr.mxu0 0.0
        %4514 = vmatpush1.msra.mxu0 0.0
        %4515 = vmatprep.subr.mxu0 0.0
        %4516 = vmatpush1.msra.mxu0 0.0
        %4517 = vmatprep.subr.mxu0 0.0
        %4518 = vmatpush1.msra.mxu0 0.0
        %4519 = vmatprep.subr.mxu0 0.0
        %4520 = vmatpush1.msra.mxu0 0.0
        %4521 = vmatprep.subr.mxu0 0.0
        %4522 = vmatpush1.msra.mxu0 0.0
        %4523 = vmatprep.subr.mxu0 0.0
        %4524 = vmatpush1.msra.mxu0 0.0
        %4525 = vmatprep.subr.mxu0 0.0
        %4526 = vmatpush1.msra.mxu0 0.0
        %4527 = vmatprep.subr.mxu0 0.0
        %4528 = vmatpush1.msra.mxu0 0.0
        %4529 = vmatprep.subr.mxu0 0.0
        %4530 = vmatpush1.msra.mxu0 0.0
        %4531 = vmatprep.subr.mxu0 0.0
        %4532 = vmatpush1.msra.mxu0 0.0
        %4533 = vmatprep.subr.mxu0 0.0
        %4534 = vmatpush1.msra.mxu0 0.0
        %4535 = vmatprep.subr.mxu0 0.0
        %4536 = vmatpush1.msra.mxu0 0.0
        %4537 = vmatprep.subr.mxu0 0.0
        %4538 = vmatpush1.msra.mxu0 0.0
        %4539 = vmatprep.subr.mxu0 0.0
        %4540 = vmatpush1.msra.mxu0 0.0
        %4541 = vmatprep.subr.mxu0 0.0
        %4542 = vmatpush1.msra.mxu0 0.0
        %4543 = vmatprep.subr.mxu0 0.0
        %4544 = vmatpush1.msra.mxu0 0.0
        %4545 = vmatprep.subr.mxu0 0.0
        %4546 = vmatpush1.msra.mxu0 0.0
        %4547 = vmatprep.subr.mxu0 0.0
        %4548 = vmatpush1.msra.mxu0 0.0
        %4549 = vmatprep.subr.mxu0 0.0
        %4550 = vmatpush1.msra.mxu0 0.0
        %4551 = vmatprep.subr.mxu0 0.0
        %4552 = vmatpush1.msra.mxu0 0.0
        %4553 = vmatprep.subr.mxu0 0.0
        %4554 = vmatpush1.msra.mxu0 0.0
        %4555 = vmatprep.subr.mxu0 0.0
        %4556 = vmatpush1.msra.mxu0 0.0
        %4557 = vmatprep.subr.mxu0 0.0
        %4558 = vmatpush1.msra.mxu0 0.0
        %4559 = vmatprep.subr.mxu0 0.0
        %4560 = vmatpush1.msra.mxu0 0.0
        %4561 = vmatprep.subr.mxu0 0.0
        %4562 = vmatpush1.msra.mxu0 0.0
        %4563 = vmatprep.subr.mxu0 0.0
        %4564 = vmatpush1.msra.mxu0 0.0
        %4565 = vmatprep.subr.mxu0 0.0
        %4566 = vmatpush1.msra.mxu0 0.0
        %4567 = vmatprep.subr.mxu0 0.0
        %4568 = vmatpush1.msra.mxu0 0.0
        %4569 = vmatprep.subr.mxu0 0.0
        %4570 = vmatpush1.msra.mxu0 0.0
        %4571 = vmatprep.subr.mxu0 0.0
        %4572 = vmatpush1.msra.mxu0 0.0
        %4573 = vmatprep.mubr.f32.mxu0 0.0
        %4574 = vmatmul.mubr.f32.gmra.mrb[0].mxu0 %v4504
        %v4575 = vpop.f32.mrb[0].mxu0
        %v4576 = vadd.f32 0.0, %v4575
        %v4577 = vpop.f32.mrb[0].mxu0
        %4578 = vmatprep.mubr.f32.mxu0 0.0
        %4579 = vmatmul.mubr.f32.gmra.mrb[0].mxu0 %v4507
        %v4580 = vpop.f32.mrb[0].mxu0
        %v4581 = vadd.f32 0.0, %v4580
        %v4582 = vpop.f32.mrb[0].mxu0
        %4583 = vdwg.mxu0
        %v4585 = vsel %vm1731, %v4501, 0
        %v4588 = vsel %vm1731, %v4502, 0
        %4590 = vmatprep.subr.mxu0 0.0
        %4591 = vmatpush1.msra.mxu0 %v4335
        %4592 = vmatprep.subr.mxu0 0.0
        %4593 = vmatpush1.msra.mxu0 %v4336
        %4594 = vmatprep.subr.mxu0 0.0
        %4595 = vmatpush1.msra.mxu0 0.0
        %4596 = vmatprep.subr.mxu0 0.0
        %4597 = vmatpush1.msra.mxu0 0.0
        %4598 = vmatprep.subr.mxu0 0.0
        %4599 = vmatpush1.msra.mxu0 0.0
        %4600 = vmatprep.subr.mxu0 0.0
        %4601 = vmatpush1.msra.mxu0 0.0
        %4602 = vmatprep.subr.mxu0 0.0
        %4603 = vmatpush1.msra.mxu0 0.0
        %4604 = vmatprep.subr.mxu0 0.0
        %4605 = vmatpush1.msra.mxu0 0.0
        %4606 = vmatprep.subr.mxu0 0.0
        %4607 = vmatpush1.msra.mxu0 0.0
        %4608 = vmatprep.subr.mxu0 0.0
        %4609 = vmatpush1.msra.mxu0 0.0
        %4610 = vmatprep.subr.mxu0 0.0
        %4611 = vmatpush1.msra.mxu0 0.0
        %4612 = vmatprep.subr.mxu0 0.0
        %4613 = vmatpush1.msra.mxu0 0.0
        %4614 = vmatprep.subr.mxu0 0.0
        %4615 = vmatpush1.msra.mxu0 0.0
        %4616 = vmatprep.subr.mxu0 0.0
        %4617 = vmatpush1.msra.mxu0 0.0
        %4618 = vmatprep.subr.mxu0 0.0
        %4619 = vmatpush1.msra.mxu0 0.0
        %4620 = vmatprep.subr.mxu0 0.0
        %4621 = vmatpush1.msra.mxu0 0.0
        %4622 = vmatprep.subr.mxu0 0.0
        %4623 = vmatpush1.msra.mxu0 0.0
        %4624 = vmatprep.subr.mxu0 0.0
        %4625 = vmatpush1.msra.mxu0 0.0
        %4626 = vmatprep.subr.mxu0 0.0
        %4627 = vmatpush1.msra.mxu0 0.0
        %4628 = vmatprep.subr.mxu0 0.0
        %4629 = vmatpush1.msra.mxu0 0.0
        %4630 = vmatprep.subr.mxu0 0.0
        %4631 = vmatpush1.msra.mxu0 0.0
        %4632 = vmatprep.subr.mxu0 0.0
        %4633 = vmatpush1.msra.mxu0 0.0
        %4634 = vmatprep.subr.mxu0 0.0
        %4635 = vmatpush1.msra.mxu0 0.0
        %4636 = vmatprep.subr.mxu0 0.0
        %4637 = vmatpush1.msra.mxu0 0.0
        %4638 = vmatprep.subr.mxu0 0.0
        %4639 = vmatpush1.msra.mxu0 0.0
        %4640 = vmatprep.subr.mxu0 0.0
        %4641 = vmatpush1.msra.mxu0 0.0
        %4642 = vmatprep.subr.mxu0 0.0
        %4643 = vmatpush1.msra.mxu0 0.0
        %4644 = vmatprep.subr.mxu0 0.0
        %4645 = vmatpush1.msra.mxu0 0.0
        %4646 = vmatprep.subr.mxu0 0.0
        %4647 = vmatpush1.msra.mxu0 0.0
        %4648 = vmatprep.subr.mxu0 0.0
        %4649 = vmatpush1.msra.mxu0 0.0
        %4650 = vmatprep.subr.mxu0 0.0
        %4651 = vmatpush1.msra.mxu0 0.0
        %4652 = vmatprep.subr.mxu0 0.0
        %4653 = vmatpush1.msra.mxu0 0.0
        %4654 = vmatprep.mubr.f32.mxu0 0.0
        %4655 = vmatmul.mubr.f32.gmra.mrb[0].mxu0 %v4585
        %v4656 = vpop.f32.mrb[0].mxu0
        %v4657 = vadd.f32 0.0, %v4656
        %v4658 = vpop.f32.mrb[0].mxu0
        %4659 = vmatprep.mubr.f32.mxu0 0.0
        %4660 = vmatmul.mubr.f32.gmra.mrb[0].mxu0 %v4588
        %v4661 = vpop.f32.mrb[0].mxu0
        %v4662 = vadd.f32 0.0, %v4661
        %v4663 = vpop.f32.mrb[0].mxu0
        %4664 = vdwg.mxu0
        %v4666 = vsel %vm1731, %v4657, 0
        %v4669 = vsel %vm1731, %v4662, 0
        %4671 = vmatprep.subr.mxu0 0.0
        %4672 = vmatpush1.msra.mxu0 %v4576
        %4673 = vmatprep.subr.mxu0 0.0
        %4674 = vmatpush1.msra.mxu0 %v4581
        %4675 = vmatprep.subr.mxu0 0.0
        %4676 = vmatpush1.msra.mxu0 0.0
        %4677 = vmatprep.subr.mxu0 0.0
        %4678 = vmatpush1.msra.mxu0 0.0
        %4679 = vmatprep.subr.mxu0 0.0
        %4680 = vmatpush1.msra.mxu0 0.0
        %4681 = vmatprep.subr.mxu0 0.0
        %4682 = vmatpush1.msra.mxu0 0.0
        %4683 = vmatprep.subr.mxu0 0.0
        %4684 = vmatpush1.msra.mxu0 0.0
        %4685 = vmatprep.subr.mxu0 0.0
        %4686 = vmatpush1.msra.mxu0 0.0
        %4687 = vmatprep.subr.mxu0 0.0
        %4688 = vmatpush1.msra.mxu0 0.0
        %4689 = vmatprep.subr.mxu0 0.0
        %4690 = vmatpush1.msra.mxu0 0.0
        %4691 = vmatprep.subr.mxu0 0.0
        %4692 = vmatpush1.msra.mxu0 0.0
        %4693 = vmatprep.subr.mxu0 0.0
        %4694 = vmatpush1.msra.mxu0 0.0
        %4695 = vmatprep.subr.mxu0 0.0
        %4696 = vmatpush1.msra.mxu0 0.0
        %4697 = vmatprep.subr.mxu0 0.0
        %4698 = vmatpush1.msra.mxu0 0.0
        %4699 = vmatprep.subr.mxu0 0.0
        %4700 = vmatpush1.msra.mxu0 0.0
        %4701 = vmatprep.subr.mxu0 0.0
        %4702 = vmatpush1.msra.mxu0 0.0
        %4703 = vmatprep.subr.mxu0 0.0
        %4704 = vmatpush1.msra.mxu0 0.0
        %4705 = vmatprep.subr.mxu0 0.0
        %4706 = vmatpush1.msra.mxu0 0.0
        %4707 = vmatprep.subr.mxu0 0.0
        %4708 = vmatpush1.msra.mxu0 0.0
        %4709 = vmatprep.subr.mxu0 0.0
        %4710 = vmatpush1.msra.mxu0 0.0
        %4711 = vmatprep.subr.mxu0 0.0
        %4712 = vmatpush1.msra.mxu0 0.0
        %4713 = vmatprep.subr.mxu0 0.0
        %4714 = vmatpush1.msra.mxu0 0.0
        %4715 = vmatprep.subr.mxu0 0.0
        %4716 = vmatpush1.msra.mxu0 0.0
        %4717 = vmatprep.subr.mxu0 0.0
        %4718 = vmatpush1.msra.mxu0 0.0
        %4719 = vmatprep.subr.mxu0 0.0
        %4720 = vmatpush1.msra.mxu0 0.0
        %4721 = vmatprep.subr.mxu0 0.0
        %4722 = vmatpush1.msra.mxu0 0.0
        %4723 = vmatprep.subr.mxu0 0.0
        %4724 = vmatpush1.msra.mxu0 0.0
        %4725 = vmatprep.subr.mxu0 0.0
        %4726 = vmatpush1.msra.mxu0 0.0
        %4727 = vmatprep.subr.mxu0 0.0
        %4728 = vmatpush1.msra.mxu0 0.0
        %4729 = vmatprep.subr.mxu0 0.0
        %4730 = vmatpush1.msra.mxu0 0.0
        %4731 = vmatprep.subr.mxu0 0.0
        %4732 = vmatpush1.msra.mxu0 0.0
        %4733 = vmatprep.subr.mxu0 0.0
        %4734 = vmatpush1.msra.mxu0 0.0
        %4735 = vmatprep.mubr.f32.mxu0 0.0
        %4736 = vmatmul.mubr.f32.gmra.mrb[0].mxu0 %v4666
        %v4737 = vpop.f32.mrb[0].mxu0
        %v4738 = vadd.f32 0.0, %v4737
        %v4739 = vpop.f32.mrb[0].mxu0
        %4740 = vmatprep.mubr.f32.mxu0 0.0
        %4741 = vmatmul.mubr.f32.gmra.mrb[0].mxu0 %v4669
        %v4742 = vpop.f32.mrb[0].mxu0
        %v4743 = vadd.f32 0.0, %v4742
        %v4744 = vpop.f32.mrb[0].mxu0
        %4745 = vdwg.mxu0
        %v4746 = vsub.f32 %v4313, %v4738
        %v4747 = vsub.f32 %v4314, %v4743
        %v4748 = vmul.f32 %v4746, 0.5
        %v4749 = vmul.f32 %v4747, 0.5
        %v4751 = vsel %vm1731, %v4576, 0
        %v4754 = vsel %vm1731, %v4581, 0
        %4756 = vmatprep.subr.mxu0 0.0
        %4757 = vmatpush1.msra.mxu0 %v4748
        %4758 = vmatprep.subr.mxu0 0.0
        %4759 = vmatpush1.msra.mxu0 %v4749
        %4760 = vmatprep.subr.mxu0 0.0
        %4761 = vmatpush1.msra.mxu0 0.0
        %4762 = vmatprep.subr.mxu0 0.0
        %4763 = vmatpush1.msra.mxu0 0.0
        %4764 = vmatprep.subr.mxu0 0.0
        %4765 = vmatpush1.msra.mxu0 0.0
        %4766 = vmatprep.subr.mxu0 0.0
        %4767 = vmatpush1.msra.mxu0 0.0
        %4768 = vmatprep.subr.mxu0 0.0
        %4769 = vmatpush1.msra.mxu0 0.0
        %4770 = vmatprep.subr.mxu0 0.0
        %4771 = vmatpush1.msra.mxu0 0.0
        %4772 = vmatprep.subr.mxu0 0.0
        %4773 = vmatpush1.msra.mxu0 0.0
        %4774 = vmatprep.subr.mxu0 0.0
        %4775 = vmatpush1.msra.mxu0 0.0
        %4776 = vmatprep.subr.mxu0 0.0
        %4777 = vmatpush1.msra.mxu0 0.0
        %4778 = vmatprep.subr.mxu0 0.0
        %4779 = vmatpush1.msra.mxu0 0.0
        %4780 = vmatprep.subr.mxu0 0.0
        %4781 = vmatpush1.msra.mxu0 0.0
        %4782 = vmatprep.subr.mxu0 0.0
        %4783 = vmatpush1.msra.mxu0 0.0
        %4784 = vmatprep.subr.mxu0 0.0
        %4785 = vmatpush1.msra.mxu0 0.0
        %4786 = vmatprep.subr.mxu0 0.0
        %4787 = vmatpush1.msra.mxu0 0.0
        %4788 = vmatprep.subr.mxu0 0.0
        %4789 = vmatpush1.msra.mxu0 0.0
        %4790 = vmatprep.subr.mxu0 0.0
        %4791 = vmatpush1.msra.mxu0 0.0
        %4792 = vmatprep.subr.mxu0 0.0
        %4793 = vmatpush1.msra.mxu0 0.0
        %4794 = vmatprep.subr.mxu0 0.0
        %4795 = vmatpush1.msra.mxu0 0.0
        %4796 = vmatprep.subr.mxu0 0.0
        %4797 = vmatpush1.msra.mxu0 0.0
        %4798 = vmatprep.subr.mxu0 0.0
        %4799 = vmatpush1.msra.mxu0 0.0
        %4800 = vmatprep.subr.mxu0 0.0
        %4801 = vmatpush1.msra.mxu0 0.0
        %4802 = vmatprep.subr.mxu0 0.0
        %4803 = vmatpush1.msra.mxu0 0.0
        %4804 = vmatprep.subr.mxu0 0.0
        %4805 = vmatpush1.msra.mxu0 0.0
        %4806 = vmatprep.subr.mxu0 0.0
        %4807 = vmatpush1.msra.mxu0 0.0
        %4808 = vmatprep.subr.mxu0 0.0
        %4809 = vmatpush1.msra.mxu0 0.0
        %4810 = vmatprep.subr.mxu0 0.0
        %4811 = vmatpush1.msra.mxu0 0.0
        %4812 = vmatprep.subr.mxu0 0.0
        %4813 = vmatpush1.msra.mxu0 0.0
        %4814 = vmatprep.subr.mxu0 0.0
        %4815 = vmatpush1.msra.mxu0 0.0
        %4816 = vmatprep.subr.mxu0 0.0
        %4817 = vmatpush1.msra.mxu0 0.0
        %4818 = vmatprep.subr.mxu0 0.0
        %4819 = vmatpush1.msra.mxu0 0.0
        %4820 = vmatprep.mubr.f32.mxu0 0.0
        %4821 = vmatmul.mubr.f32.gmra.mrb[0].mxu0 %v4751
        %v4822 = vpop.f32.mrb[0].mxu0
        %v4823 = vadd.f32 0.0, %v4822
        %v4824 = vpop.f32.mrb[0].mxu0
        %4825 = vmatprep.mubr.f32.mxu0 0.0
        %4826 = vmatmul.mubr.f32.gmra.mrb[0].mxu0 %v4754
        %v4827 = vpop.f32.mrb[0].mxu0
        %v4828 = vadd.f32 0.0, %v4827
        %v4829 = vpop.f32.mrb[0].mxu0
        %4830 = vdwg.mxu0
        %v4832 = vsel %vm1731, %v4748, 0
        %v4835 = vsel %vm1731, %v4749, 0
        %4837 = vmatprep.subr.mxu0 0.0
        %4838 = vmatpush1.msra.mxu0 %v4657
        %4839 = vmatprep.subr.mxu0 0.0
        %4840 = vmatpush1.msra.mxu0 %v4662
        %4841 = vmatprep.subr.mxu0 0.0
        %4842 = vmatpush1.msra.mxu0 0.0
        %4843 = vmatprep.subr.mxu0 0.0
        %4844 = vmatpush1.msra.mxu0 0.0
        %4845 = vmatprep.subr.mxu0 0.0
        %4846 = vmatpush1.msra.mxu0 0.0
        %4847 = vmatprep.subr.mxu0 0.0
        %4848 = vmatpush1.msra.mxu0 0.0
        %4849 = vmatprep.subr.mxu0 0.0
        %4850 = vmatpush1.msra.mxu0 0.0
        %4851 = vmatprep.subr.mxu0 0.0
        %4852 = vmatpush1.msra.mxu0 0.0
        %4853 = vmatprep.subr.mxu0 0.0
        %4854 = vmatpush1.msra.mxu0 0.0
        %4855 = vmatprep.subr.mxu0 0.0
        %4856 = vmatpush1.msra.mxu0 0.0
        %4857 = vmatprep.subr.mxu0 0.0
        %4858 = vmatpush1.msra.mxu0 0.0
        %4859 = vmatprep.subr.mxu0 0.0
        %4860 = vmatpush1.msra.mxu0 0.0
        %4861 = vmatprep.subr.mxu0 0.0
        %4862 = vmatpush1.msra.mxu0 0.0
        %4863 = vmatprep.subr.mxu0 0.0
        %4864 = vmatpush1.msra.mxu0 0.0
        %4865 = vmatprep.subr.mxu0 0.0
        %4866 = vmatpush1.msra.mxu0 0.0
        %4867 = vmatprep.subr.mxu0 0.0
        %4868 = vmatpush1.msra.mxu0 0.0
        %4869 = vmatprep.subr.mxu0 0.0
        %4870 = vmatpush1.msra.mxu0 0.0
        %4871 = vmatprep.subr.mxu0 0.0
        %4872 = vmatpush1.msra.mxu0 0.0
        %4873 = vmatprep.subr.mxu0 0.0
        %4874 = vmatpush1.msra.mxu0 0.0
        %4875 = vmatprep.subr.mxu0 0.0
        %4876 = vmatpush1.msra.mxu0 0.0
        %4877 = vmatprep.subr.mxu0 0.0
        %4878 = vmatpush1.msra.mxu0 0.0
        %4879 = vmatprep.subr.mxu0 0.0
        %4880 = vmatpush1.msra.mxu0 0.0
        %4881 = vmatprep.subr.mxu0 0.0
        %4882 = vmatpush1.msra.mxu0 0.0
        %4883 = vmatprep.subr.mxu0 0.0
        %4884 = vmatpush1.msra.mxu0 0.0
        %4885 = vmatprep.subr.mxu0 0.0
        %4886 = vmatpush1.msra.mxu0 0.0
        %4887 = vmatprep.subr.mxu0 0.0
        %4888 = vmatpush1.msra.mxu0 0.0
        %4889 = vmatprep.subr.mxu0 0.0
        %4890 = vmatpush1.msra.mxu0 0.0
        %4891 = vmatprep.subr.mxu0 0.0
        %4892 = vmatpush1.msra.mxu0 0.0
        %4893 = vmatprep.subr.mxu0 0.0
        %4894 = vmatpush1.msra.mxu0 0.0
        %4895 = vmatprep.subr.mxu0 0.0
        %4896 = vmatpush1.msra.mxu0 0.0
        %4897 = vmatprep.subr.mxu0 0.0
        %4898 = vmatpush1.msra.mxu0 0.0
        %4899 = vmatprep.subr.mxu0 0.0
        %4900 = vmatpush1.msra.mxu0 0.0
        %4901 = vmatprep.mubr.f32.mxu0 0.0
        %4902 = vmatmul.mubr.f32.gmra.mrb[0].mxu0 %v4832
        %v4903 = vpop.f32.mrb[0].mxu0
        %v4904 = vadd.f32 0.0, %v4903
        %v4905 = vpop.f32.mrb[0].mxu0
        %4906 = vmatprep.mubr.f32.mxu0 0.0
        %4907 = vmatmul.mubr.f32.gmra.mrb[0].mxu0 %v4835
        %v4908 = vpop.f32.mrb[0].mxu0
        %v4909 = vadd.f32 0.0, %v4908
        %v4910 = vpop.f32.mrb[0].mxu0
        %4911 = vdwg.mxu0
        %v4913 = vsel %vm1731, %v4904, 0
        %v4916 = vsel %vm1731, %v4909, 0
        %4918 = vmatprep.subr.mxu0 0.0
        %4919 = vmatpush1.msra.mxu0 %v4823
        %4920 = vmatprep.subr.mxu0 0.0
        %4921 = vmatpush1.msra.mxu0 %v4828
        %4922 = vmatprep.subr.mxu0 0.0
        %4923 = vmatpush1.msra.mxu0 0.0
        %4924 = vmatprep.subr.mxu0 0.0
        %4925 = vmatpush1.msra.mxu0 0.0
        %4926 = vmatprep.subr.mxu0 0.0
        %4927 = vmatpush1.msra.mxu0 0.0
        %4928 = vmatprep.subr.mxu0 0.0
        %4929 = vmatpush1.msra.mxu0 0.0
        %4930 = vmatprep.subr.mxu0 0.0
        %4931 = vmatpush1.msra.mxu0 0.0
        %4932 = vmatprep.subr.mxu0 0.0
        %4933 = vmatpush1.msra.mxu0 0.0
        %4934 = vmatprep.subr.mxu0 0.0
        %4935 = vmatpush1.msra.mxu0 0.0
        %4936 = vmatprep.subr.mxu0 0.0
        %4937 = vmatpush1.msra.mxu0 0.0
        %4938 = vmatprep.subr.mxu0 0.0
        %4939 = vmatpush1.msra.mxu0 0.0
        %4940 = vmatprep.subr.mxu0 0.0
        %4941 = vmatpush1.msra.mxu0 0.0
        %4942 = vmatprep.subr.mxu0 0.0
        %4943 = vmatpush1.msra.mxu0 0.0
        %4944 = vmatprep.subr.mxu0 0.0
        %4945 = vmatpush1.msra.mxu0 0.0
        %4946 = vmatprep.subr.mxu0 0.0
        %4947 = vmatpush1.msra.mxu0 0.0
        %4948 = vmatprep.subr.mxu0 0.0
        %4949 = vmatpush1.msra.mxu0 0.0
        %4950 = vmatprep.subr.mxu0 0.0
        %4951 = vmatpush1.msra.mxu0 0.0
        %4952 = vmatprep.subr.mxu0 0.0
        %4953 = vmatpush1.msra.mxu0 0.0
        %4954 = vmatprep.subr.mxu0 0.0
        %4955 = vmatpush1.msra.mxu0 0.0
        %4956 = vmatprep.subr.mxu0 0.0
        %4957 = vmatpush1.msra.mxu0 0.0
        %4958 = vmatprep.subr.mxu0 0.0
        %4959 = vmatpush1.msra.mxu0 0.0
        %4960 = vmatprep.subr.mxu0 0.0
        %4961 = vmatpush1.msra.mxu0 0.0
        %4962 = vmatprep.subr.mxu0 0.0
        %4963 = vmatpush1.msra.mxu0 0.0
        %4964 = vmatprep.subr.mxu0 0.0
        %4965 = vmatpush1.msra.mxu0 0.0
        %4966 = vmatprep.subr.mxu0 0.0
        %4967 = vmatpush1.msra.mxu0 0.0
        %4968 = vmatprep.subr.mxu0 0.0
        %4969 = vmatpush1.msra.mxu0 0.0
        %4970 = vmatprep.subr.mxu0 0.0
        %4971 = vmatpush1.msra.mxu0 0.0
        %4972 = vmatprep.subr.mxu0 0.0
        %4973 = vmatpush1.msra.mxu0 0.0
        %4974 = vmatprep.subr.mxu0 0.0
        %4975 = vmatpush1.msra.mxu0 0.0
        %4976 = vmatprep.subr.mxu0 0.0
        %4977 = vmatpush1.msra.mxu0 0.0
        %4978 = vmatprep.subr.mxu0 0.0
        %4979 = vmatpush1.msra.mxu0 0.0
        %4980 = vmatprep.subr.mxu0 0.0
        %4981 = vmatpush1.msra.mxu0 0.0
        %4982 = vmatprep.mubr.f32.mxu0 0.0
        %4983 = vmatmul.mubr.f32.gmra.mrb[0].mxu0 %v4913
        %v4984 = vpop.f32.mrb[0].mxu0
        %v4985 = vadd.f32 0.0, %v4984
        %v4986 = vpop.f32.mrb[0].mxu0
        %4987 = vmatprep.mubr.f32.mxu0 0.0
        %4988 = vmatmul.mubr.f32.gmra.mrb[0].mxu0 %v4916
        %v4989 = vpop.f32.mrb[0].mxu0
        %v4990 = vadd.f32 0.0, %v4989
        %v4991 = vpop.f32.mrb[0].mxu0
        %4992 = vdwg.mxu0
        %v4993 = vsub.f32 %v4313, %v4985
        %v4994 = vsub.f32 %v4314, %v4990
        %v4995 = vmul.f32 %v4993, 0.5
        %v4996 = vmul.f32 %v4994, 0.5
        %v4998 = vsel %vm1731, %v4823, 0
        %v5001 = vsel %vm1731, %v4828, 0
        %5003 = vmatprep.subr.mxu0 0.0
        %5004 = vmatpush1.msra.mxu0 %v4995
        %5005 = vmatprep.subr.mxu0 0.0
        %5006 = vmatpush1.msra.mxu0 %v4996
        %5007 = vmatprep.subr.mxu0 0.0
        %5008 = vmatpush1.msra.mxu0 0.0
        %5009 = vmatprep.subr.mxu0 0.0
        %5010 = vmatpush1.msra.mxu0 0.0
        %5011 = vmatprep.subr.mxu0 0.0
        %5012 = vmatpush1.msra.mxu0 0.0
        %5013 = vmatprep.subr.mxu0 0.0
        %5014 = vmatpush1.msra.mxu0 0.0
        %5015 = vmatprep.subr.mxu0 0.0
        %5016 = vmatpush1.msra.mxu0 0.0
        %5017 = vmatprep.subr.mxu0 0.0
        %5018 = vmatpush1.msra.mxu0 0.0
        %5019 = vmatprep.subr.mxu0 0.0
        %5020 = vmatpush1.msra.mxu0 0.0
        %5021 = vmatprep.subr.mxu0 0.0
        %5022 = vmatpush1.msra.mxu0 0.0
        %5023 = vmatprep.subr.mxu0 0.0
        %5024 = vmatpush1.msra.mxu0 0.0
        %5025 = vmatprep.subr.mxu0 0.0
        %5026 = vmatpush1.msra.mxu0 0.0
        %5027 = vmatprep.subr.mxu0 0.0
        %5028 = vmatpush1.msra.mxu0 0.0
        %5029 = vmatprep.subr.mxu0 0.0
        %5030 = vmatpush1.msra.mxu0 0.0
        %5031 = vmatprep.subr.mxu0 0.0
        %5032 = vmatpush1.msra.mxu0 0.0
        %5033 = vmatprep.subr.mxu0 0.0
        %5034 = vmatpush1.msra.mxu0 0.0
        %5035 = vmatprep.subr.mxu0 0.0
        %5036 = vmatpush1.msra.mxu0 0.0
        %5037 = vmatprep.subr.mxu0 0.0
        %5038 = vmatpush1.msra.mxu0 0.0
        %5039 = vmatprep.subr.mxu0 0.0
        %5040 = vmatpush1.msra.mxu0 0.0
        %5041 = vmatprep.subr.mxu0 0.0
        %5042 = vmatpush1.msra.mxu0 0.0
        %5043 = vmatprep.subr.mxu0 0.0
        %5044 = vmatpush1.msra.mxu0 0.0
        %5045 = vmatprep.subr.mxu0 0.0
        %5046 = vmatpush1.msra.mxu0 0.0
        %5047 = vmatprep.subr.mxu0 0.0
        %5048 = vmatpush1.msra.mxu0 0.0
        %5049 = vmatprep.subr.mxu0 0.0
        %5050 = vmatpush1.msra.mxu0 0.0
        %5051 = vmatprep.subr.mxu0 0.0
        %5052 = vmatpush1.msra.mxu0 0.0
        %5053 = vmatprep.subr.mxu0 0.0
        %5054 = vmatpush1.msra.mxu0 0.0
        %5055 = vmatprep.subr.mxu0 0.0
        %5056 = vmatpush1.msra.mxu0 0.0
        %5057 = vmatprep.subr.mxu0 0.0
        %5058 = vmatpush1.msra.mxu0 0.0
        %5059 = vmatprep.subr.mxu0 0.0
        %5060 = vmatpush1.msra.mxu0 0.0
        %5061 = vmatprep.subr.mxu0 0.0
        %5062 = vmatpush1.msra.mxu0 0.0
        %5063 = vmatprep.subr.mxu0 0.0
        %5064 = vmatpush1.msra.mxu0 0.0
        %5065 = vmatprep.subr.mxu0 0.0
        %5066 = vmatpush1.msra.mxu0 0.0
        %5067 = vmatprep.mubr.f32.mxu0 0.0
        %5068 = vmatmul.mubr.f32.gmra.mrb[0].mxu0 %v4998
        %v5069 = vpop.f32.mrb[0].mxu0
        %v5070 = vadd.f32 0.0, %v5069
        %v5071 = vpop.f32.mrb[0].mxu0
        %5072 = vmatprep.mubr.f32.mxu0 0.0
        %5073 = vmatmul.mubr.f32.gmra.mrb[0].mxu0 %v5001
        %v5074 = vpop.f32.mrb[0].mxu0
        %v5075 = vadd.f32 0.0, %v5074
        %v5076 = vpop.f32.mrb[0].mxu0
        %5077 = vdwg.mxu0
        %v5079 = vsel %vm1731, %v4995, 0
        %v5082 = vsel %vm1731, %v4996, 0
        %5084 = vmatprep.subr.mxu0 0.0
        %5085 = vmatpush1.msra.mxu0 %v4904
        %5086 = vmatprep.subr.mxu0 0.0
        %5087 = vmatpush1.msra.mxu0 %v4909
        %5088 = vmatprep.subr.mxu0 0.0
        %5089 = vmatpush1.msra.mxu0 0.0
        %5090 = vmatprep.subr.mxu0 0.0
        %5091 = vmatpush1.msra.mxu0 0.0
        %5092 = vmatprep.subr.mxu0 0.0
        %5093 = vmatpush1.msra.mxu0 0.0
        %5094 = vmatprep.subr.mxu0 0.0
        %5095 = vmatpush1.msra.mxu0 0.0
        %5096 = vmatprep.subr.mxu0 0.0
        %5097 = vmatpush1.msra.mxu0 0.0
        %5098 = vmatprep.subr.mxu0 0.0
        %5099 = vmatpush1.msra.mxu0 0.0
        %5100 = vmatprep.subr.mxu0 0.0
        %5101 = vmatpush1.msra.mxu0 0.0
        %5102 = vmatprep.subr.mxu0 0.0
        %5103 = vmatpush1.msra.mxu0 0.0
        %5104 = vmatprep.subr.mxu0 0.0
        %5105 = vmatpush1.msra.mxu0 0.0
        %5106 = vmatprep.subr.mxu0 0.0
        %5107 = vmatpush1.msra.mxu0 0.0
        %5108 = vmatprep.subr.mxu0 0.0
        %5109 = vmatpush1.msra.mxu0 0.0
        %5110 = vmatprep.subr.mxu0 0.0
        %5111 = vmatpush1.msra.mxu0 0.0
        %5112 = vmatprep.subr.mxu0 0.0
        %5113 = vmatpush1.msra.mxu0 0.0
        %5114 = vmatprep.subr.mxu0 0.0
        %5115 = vmatpush1.msra.mxu0 0.0
        %5116 = vmatprep.subr.mxu0 0.0
        %5117 = vmatpush1.msra.mxu0 0.0
        %5118 = vmatprep.subr.mxu0 0.0
        %5119 = vmatpush1.msra.mxu0 0.0
        %5120 = vmatprep.subr.mxu0 0.0
        %5121 = vmatpush1.msra.mxu0 0.0
        %5122 = vmatprep.subr.mxu0 0.0
        %5123 = vmatpush1.msra.mxu0 0.0
        %5124 = vmatprep.subr.mxu0 0.0
        %5125 = vmatpush1.msra.mxu0 0.0
        %5126 = vmatprep.subr.mxu0 0.0
        %5127 = vmatpush1.msra.mxu0 0.0
        %5128 = vmatprep.subr.mxu0 0.0
        %5129 = vmatpush1.msra.mxu0 0.0
        %5130 = vmatprep.subr.mxu0 0.0
        %5131 = vmatpush1.msra.mxu0 0.0
        %5132 = vmatprep.subr.mxu0 0.0
        %5133 = vmatpush1.msra.mxu0 0.0
        %5134 = vmatprep.subr.mxu0 0.0
        %5135 = vmatpush1.msra.mxu0 0.0
        %5136 = vmatprep.subr.mxu0 0.0
        %5137 = vmatpush1.msra.mxu0 0.0
        %5138 = vmatprep.subr.mxu0 0.0
        %5139 = vmatpush1.msra.mxu0 0.0
        %5140 = vmatprep.subr.mxu0 0.0
        %5141 = vmatpush1.msra.mxu0 0.0
        %5142 = vmatprep.subr.mxu0 0.0
        %5143 = vmatpush1.msra.mxu0 0.0
        %5144 = vmatprep.subr.mxu0 0.0
        %5145 = vmatpush1.msra.mxu0 0.0
        %5146 = vmatprep.subr.mxu0 0.0
        %5147 = vmatpush1.msra.mxu0 0.0
        %5148 = vmatprep.mubr.f32.mxu0 0.0
        %5149 = vmatmul.mubr.f32.gmra.mrb[0].mxu0 %v5079
        %v5150 = vpop.f32.mrb[0].mxu0
        %v5151 = vadd.f32 0.0, %v5150
        %v5152 = vpop.f32.mrb[0].mxu0
        %5153 = vmatprep.mubr.f32.mxu0 0.0
        %5154 = vmatmul.mubr.f32.gmra.mrb[0].mxu0 %v5082
        %v5155 = vpop.f32.mrb[0].mxu0
        %v5156 = vadd.f32 0.0, %v5155
        %v5157 = vpop.f32.mrb[0].mxu0
        %5158 = vdwg.mxu0
        %v5160 = vsel %vm1731, %v5151, 0
        %v5163 = vsel %vm1731, %v5156, 0
        %5165 = vmatprep.subr.mxu0 0.0
        %5166 = vmatpush1.msra.mxu0 %v5070
        %5167 = vmatprep.subr.mxu0 0.0
        %5168 = vmatpush1.msra.mxu0 %v5075
        %5169 = vmatprep.subr.mxu0 0.0
        %5170 = vmatpush1.msra.mxu0 0.0
        %5171 = vmatprep.subr.mxu0 0.0
        %5172 = vmatpush1.msra.mxu0 0.0
        %5173 = vmatprep.subr.mxu0 0.0
        %5174 = vmatpush1.msra.mxu0 0.0
        %5175 = vmatprep.subr.mxu0 0.0
        %5176 = vmatpush1.msra.mxu0 0.0
        %5177 = vmatprep.subr.mxu0 0.0
        %5178 = vmatpush1.msra.mxu0 0.0
        %5179 = vmatprep.subr.mxu0 0.0
        %5180 = vmatpush1.msra.mxu0 0.0
        %5181 = vmatprep.subr.mxu0 0.0
        %5182 = vmatpush1.msra.mxu0 0.0
        %5183 = vmatprep.subr.mxu0 0.0
        %5184 = vmatpush1.msra.mxu0 0.0
        %5185 = vmatprep.subr.mxu0 0.0
        %5186 = vmatpush1.msra.mxu0 0.0
        %5187 = vmatprep.subr.mxu0 0.0
        %5188 = vmatpush1.msra.mxu0 0.0
        %5189 = vmatprep.subr.mxu0 0.0
        %5190 = vmatpush1.msra.mxu0 0.0
        %5191 = vmatprep.subr.mxu0 0.0
        %5192 = vmatpush1.msra.mxu0 0.0
        %5193 = vmatprep.subr.mxu0 0.0
        %5194 = vmatpush1.msra.mxu0 0.0
        %5195 = vmatprep.subr.mxu0 0.0
        %5196 = vmatpush1.msra.mxu0 0.0
        %5197 = vmatprep.subr.mxu0 0.0
        %5198 = vmatpush1.msra.mxu0 0.0
        %5199 = vmatprep.subr.mxu0 0.0
        %5200 = vmatpush1.msra.mxu0 0.0
        %5201 = vmatprep.subr.mxu0 0.0
        %5202 = vmatpush1.msra.mxu0 0.0
        %5203 = vmatprep.subr.mxu0 0.0
        %5204 = vmatpush1.msra.mxu0 0.0
        %5205 = vmatprep.subr.mxu0 0.0
        %5206 = vmatpush1.msra.mxu0 0.0
        %5207 = vmatprep.subr.mxu0 0.0
        %5208 = vmatpush1.msra.mxu0 0.0
        %5209 = vmatprep.subr.mxu0 0.0
        %5210 = vmatpush1.msra.mxu0 0.0
        %5211 = vmatprep.subr.mxu0 0.0
        %5212 = vmatpush1.msra.mxu0 0.0
        %5213 = vmatprep.subr.mxu0 0.0
        %5214 = vmatpush1.msra.mxu0 0.0
        %5215 = vmatprep.subr.mxu0 0.0
        %5216 = vmatpush1.msra.mxu0 0.0
        %5217 = vmatprep.subr.mxu0 0.0
        %5218 = vmatpush1.msra.mxu0 0.0
        %5219 = vmatprep.subr.mxu0 0.0
        %5220 = vmatpush1.msra.mxu0 0.0
        %5221 = vmatprep.subr.mxu0 0.0
        %5222 = vmatpush1.msra.mxu0 0.0
        %5223 = vmatprep.subr.mxu0 0.0
        %5224 = vmatpush1.msra.mxu0 0.0
        %5225 = vmatprep.subr.mxu0 0.0
        %5226 = vmatpush1.msra.mxu0 0.0
        %5227 = vmatprep.subr.mxu0 0.0
        %5228 = vmatpush1.msra.mxu0 0.0
        %5229 = vmatprep.mubr.f32.mxu0 0.0
        %5230 = vmatmul.mubr.f32.gmra.mrb[0].mxu0 %v5160
        %v5231 = vpop.f32.mrb[0].mxu0
        %v5232 = vadd.f32 0.0, %v5231
        %v5233 = vpop.f32.mrb[0].mxu0
        %5234 = vmatprep.mubr.f32.mxu0 0.0
        %5235 = vmatmul.mubr.f32.gmra.mrb[0].mxu0 %v5163
        %v5236 = vpop.f32.mrb[0].mxu0
        %v5237 = vadd.f32 0.0, %v5236
        %v5238 = vpop.f32.mrb[0].mxu0
        %5239 = vdwg.mxu0
        %v5240 = vsub.f32 %v4313, %v5232
        %v5241 = vsub.f32 %v4314, %v5237
        %v5243 = vsel %vm1731, %v5070, 0
        %v5246 = vsel %vm1731, %v5075, 0
        %5248 = vmatprep.subr.mxu0 0.0
        %5249 = vmatpush1.msra.mxu0 %v5240
        %5250 = vmatprep.subr.mxu0 0.0
        %5251 = vmatpush1.msra.mxu0 %v5241
        %5252 = vmatprep.subr.mxu0 0.0
        %5253 = vmatpush1.msra.mxu0 0.0
        %5254 = vmatprep.subr.mxu0 0.0
        %5255 = vmatpush1.msra.mxu0 0.0
        %5256 = vmatprep.subr.mxu0 0.0
        %5257 = vmatpush1.msra.mxu0 0.0
        %5258 = vmatprep.subr.mxu0 0.0
        %5259 = vmatpush1.msra.mxu0 0.0
        %5260 = vmatprep.subr.mxu0 0.0
        %5261 = vmatpush1.msra.mxu0 0.0
        %5262 = vmatprep.subr.mxu0 0.0
        %5263 = vmatpush1.msra.mxu0 0.0
        %5264 = vmatprep.subr.mxu0 0.0
        %5265 = vmatpush1.msra.mxu0 0.0
        %5266 = vmatprep.subr.mxu0 0.0
        %5267 = vmatpush1.msra.mxu0 0.0
        %5268 = vmatprep.subr.mxu0 0.0
        %5269 = vmatpush1.msra.mxu0 0.0
        %5270 = vmatprep.subr.mxu0 0.0
        %5271 = vmatpush1.msra.mxu0 0.0
        %5272 = vmatprep.subr.mxu0 0.0
        %5273 = vmatpush1.msra.mxu0 0.0
        %5274 = vmatprep.subr.mxu0 0.0
        %5275 = vmatpush1.msra.mxu0 0.0
        %5276 = vmatprep.subr.mxu0 0.0
        %5277 = vmatpush1.msra.mxu0 0.0
        %5278 = vmatprep.subr.mxu0 0.0
        %5279 = vmatpush1.msra.mxu0 0.0
        %5280 = vmatprep.subr.mxu0 0.0
        %5281 = vmatpush1.msra.mxu0 0.0
        %5282 = vmatprep.subr.mxu0 0.0
        %5283 = vmatpush1.msra.mxu0 0.0
        %5284 = vmatprep.subr.mxu0 0.0
        %5285 = vmatpush1.msra.mxu0 0.0
        %5286 = vmatprep.subr.mxu0 0.0
        %5287 = vmatpush1.msra.mxu0 0.0
        %5288 = vmatprep.subr.mxu0 0.0
        %5289 = vmatpush1.msra.mxu0 0.0
        %5290 = vmatprep.subr.mxu0 0.0
        %5291 = vmatpush1.msra.mxu0 0.0
        %5292 = vmatprep.subr.mxu0 0.0
        %5293 = vmatpush1.msra.mxu0 0.0
        %5294 = vmatprep.subr.mxu0 0.0
        %5295 = vmatpush1.msra.mxu0 0.0
        %5296 = vmatprep.subr.mxu0 0.0
        %5297 = vmatpush1.msra.mxu0 0.0
        %5298 = vmatprep.subr.mxu0 0.0
        %5299 = vmatpush1.msra.mxu0 0.0
        %5300 = vmatprep.subr.mxu0 0.0
        %5301 = vmatpush1.msra.mxu0 0.0
        %5302 = vmatprep.subr.mxu0 0.0
        %5303 = vmatpush1.msra.mxu0 0.0
        %5304 = vmatprep.subr.mxu0 0.0
        %5305 = vmatpush1.msra.mxu0 0.0
        %5306 = vmatprep.subr.mxu0 0.0
        %5307 = vmatpush1.msra.mxu0 0.0
        %5308 = vmatprep.subr.mxu0 0.0
        %5309 = vmatpush1.msra.mxu0 0.0
        %5310 = vmatprep.subr.mxu0 0.0
        %5311 = vmatpush1.msra.mxu0 0.0
        %5312 = vmatprep.mubr.f32.mxu0 0.0
        %5313 = vmatmul.mubr.f32.gmra.mrb[0].mxu0 %v5243
        %v5314 = vpop.f32.mrb[0].mxu0
        %v5315 = vadd.f32 0.0, %v5314
        %v5316 = vpop.f32.mrb[0].mxu0
        %5317 = vmatprep.mubr.f32.mxu0 0.0
        %5318 = vmatmul.mubr.f32.gmra.mrb[0].mxu0 %v5246
        %v5319 = vpop.f32.mrb[0].mxu0
        %v5320 = vadd.f32 0.0, %v5319
        %v5321 = vpop.f32.mrb[0].mxu0
        %5322 = vdwg.mxu0
        %v5323 = vmul.f32 %v5315, 0.5
        %v5324 = vmul.f32 %v5320, 0.5
        %v5325 = vstv %s4328
        %v5326 = vrsqrt.pop %v5325
        %v5327 = vmul.f32 %v5325, %v5326
        %vm5328 = vcmp.eq.f32.partialorder %v5325, inf
        %v5329 = vsel %vm5328, %v5325, %v5327
        %vm5330 = vcmp.eq.f32.partialorder %v5325, 0.0
        %v5331 = vand.u32 %v5325, 2147483648
        %v5332 = vsel %vm5330, %v5331, %v5329
        %s5333 = vtos %v5332
        %v5334 = vstv %s5333
        %v5335 = vmul.f32 %v5323, %v5334
        %v5336 = vmul.f32 %v5324, %v5334
        %5337 = vxpose.xlu0.b32.start [1/16] %v5335, 128
        %5338 = vxpose.xlu0.b32.cont [2/16] %v5336, 128
        %5339 = vxpose.xlu0.b32.cont [3/16] 0.0, 128
        %5340 = vxpose.xlu0.b32.cont [4/16] 0.0, 128
        %5341 = vxpose.xlu0.b32.cont [5/16] 0.0, 128
        %5342 = vxpose.xlu0.b32.cont [6/16] 0.0, 128
        %5343 = vxpose.xlu0.b32.cont [7/16] 0.0, 128
        %5344 = vxpose.xlu0.b32.cont [8/16] 0.0, 128
        %5345 = vxpose.xlu0.b32.cont [9/16] 0.0, 128
        %5346 = vxpose.xlu0.b32.cont [10/16] 0.0, 128
        %5347 = vxpose.xlu0.b32.cont [11/16] 0.0, 128
        %5348 = vxpose.xlu0.b32.cont [12/16] 0.0, 128
        %5349 = vxpose.xlu0.b32.cont [13/16] 0.0, 128
        %5350 = vxpose.xlu0.b32.cont [14/16] 0.0, 128
        %5351 = vxpose.xlu0.b32.cont [15/16] 0.0, 128
        %5352 = vxpose.xlu0.b32.end [16/16] 0.0, 128
        %v5353 = vpop.trf.xlu0
        %v5354 = vpop.trf.xlu0
        %v5355 = vpop.trf.xlu0
        %v5356 = vpop.trf.xlu0
        %v5357 = vpop.trf.xlu0
        %v5358 = vpop.trf.xlu0
        %v5359 = vpop.trf.xlu0
        %v5360 = vpop.trf.xlu0
        %v5361 = vpop.trf.xlu0
        %v5362 = vpop.trf.xlu0
        %v5363 = vpop.trf.xlu0
        %v5364 = vpop.trf.xlu0
        %v5365 = vpop.trf.xlu0
        %v5366 = vpop.trf.xlu0
        %v5367 = vpop.trf.xlu0
        %v5368 = vpop.trf.xlu0
        %v5370 = vsel %vm1731, %v5353, 0
        %v5373 = vsel %vm1731, %v5354, 0
        %5375 = vmatprep.subr.mxu0 0.0
        %5376 = vmatpush1.msra.mxu0 1.0
        %5377 = vmatprep.subr.mxu0 0.0
        %5378 = vmatpush1.msra.mxu0 1.0
        %5379 = vmatprep.subr.mxu0 0.0
        %5380 = vmatpush1.msra.mxu0 0.0
        %5381 = vmatprep.subr.mxu0 0.0
        %5382 = vmatpush1.msra.mxu0 0.0
        %5383 = vmatprep.subr.mxu0 0.0
        %5384 = vmatpush1.msra.mxu0 0.0
        %5385 = vmatprep.subr.mxu0 0.0
        %5386 = vmatpush1.msra.mxu0 0.0
        %5387 = vmatprep.subr.mxu0 0.0
        %5388 = vmatpush1.msra.mxu0 0.0
        %5389 = vmatprep.subr.mxu0 0.0
        %5390 = vmatpush1.msra.mxu0 0.0
        %5391 = vmatprep.subr.mxu0 0.0
        %5392 = vmatpush1.msra.mxu0 0.0
        %5393 = vmatprep.subr.mxu0 0.0
        %5394 = vmatpush1.msra.mxu0 0.0
        %5395 = vmatprep.subr.mxu0 0.0
        %5396 = vmatpush1.msra.mxu0 0.0
        %5397 = vmatprep.subr.mxu0 0.0
        %5398 = vmatpush1.msra.mxu0 0.0
        %5399 = vmatprep.subr.mxu0 0.0
        %5400 = vmatpush1.msra.mxu0 0.0
        %5401 = vmatprep.subr.mxu0 0.0
        %5402 = vmatpush1.msra.mxu0 0.0
        %5403 = vmatprep.subr.mxu0 0.0
        %5404 = vmatpush1.msra.mxu0 0.0
        %5405 = vmatprep.subr.mxu0 0.0
        %5406 = vmatpush1.msra.mxu0 0.0
        %5407 = vmatprep.subr.mxu0 0.0
        %5408 = vmatpush1.msra.mxu0 0.0
        %5409 = vmatprep.subr.mxu0 0.0
        %5410 = vmatpush1.msra.mxu0 0.0
        %5411 = vmatprep.subr.mxu0 0.0
        %5412 = vmatpush1.msra.mxu0 0.0
        %5413 = vmatprep.subr.mxu0 0.0
        %5414 = vmatpush1.msra.mxu0 0.0
        %5415 = vmatprep.subr.mxu0 0.0
        %5416 = vmatpush1.msra.mxu0 0.0
        %5417 = vmatprep.subr.mxu0 0.0
        %5418 = vmatpush1.msra.mxu0 0.0
        %5419 = vmatprep.subr.mxu0 0.0
        %5420 = vmatpush1.msra.mxu0 0.0
        %5421 = vmatprep.subr.mxu0 0.0
        %5422 = vmatpush1.msra.mxu0 0.0
        %5423 = vmatprep.subr.mxu0 0.0
        %5424 = vmatpush1.msra.mxu0 0.0
        %5425 = vmatprep.subr.mxu0 0.0
        %5426 = vmatpush1.msra.mxu0 0.0
        %5427 = vmatprep.subr.mxu0 0.0
        %5428 = vmatpush1.msra.mxu0 0.0
        %5429 = vmatprep.subr.mxu0 0.0
        %5430 = vmatpush1.msra.mxu0 0.0
        %5431 = vmatprep.subr.mxu0 0.0
        %5432 = vmatpush1.msra.mxu0 0.0
        %5433 = vmatprep.subr.mxu0 0.0
        %5434 = vmatpush1.msra.mxu0 0.0
        %5435 = vmatprep.subr.mxu0 0.0
        %5436 = vmatpush1.msra.mxu0 0.0
        %5437 = vmatprep.subr.mxu0 0.0
        %5438 = vmatpush1.msra.mxu0 0.0
        %5439 = vmatprep.mubr.f32.mxu0 0.0
        %5440 = vmatmul.mubr.f32.gmra.mrb[0].mxu0 %v5370
        %v5441 = vpop.f32.mrb[0].mxu0
        %v5442 = vadd.f32 0.0, %v5441
        %v5443 = vpop.f32.mrb[0].mxu0
        %5444 = vmatprep.mubr.f32.mxu0 0.0
        %5445 = vmatmul.mubr.f32.gmra.mrb[0].mxu0 %v5373
        %v5446 = vpop.f32.mrb[0].mxu0
        %v5447 = vadd.f32 0.0, %v5446
        %v5448 = vpop.f32.mrb[0].mxu0
        %5449 = vdwg.mxu0
        %v5450 = vmul.f32 %v5442, 0.0625
        %v5451 = vmul.f32 %v5447, 0.0625
        %v5452 = vld [vmem:[#allocation8] sm:$0xf]
        %v5453 = vld [vmem:[%s5] sm:$0xf]
        %v5455 = vsel %vm1731, %v5452, 0
        %5457 = vmatprep.subr.mxu0 0.0
        %5458 = vmatpush1.msra.mxu0 %v5450
        %5459 = vmatprep.subr.mxu0 0.0
        %5460 = vmatpush1.msra.mxu0 %v5451
        %5461 = vmatprep.subr.mxu0 0.0
        %5462 = vmatpush1.msra.mxu0 0.0
        %5463 = vmatprep.subr.mxu0 0.0
        %5464 = vmatpush1.msra.mxu0 0.0
        %5465 = vmatprep.subr.mxu0 0.0
        %5466 = vmatpush1.msra.mxu0 0.0
        %5467 = vmatprep.subr.mxu0 0.0
        %5468 = vmatpush1.msra.mxu0 0.0
        %5469 = vmatprep.subr.mxu0 0.0
        %5470 = vmatpush1.msra.mxu0 0.0
        %5471 = vmatprep.subr.mxu0 0.0
        %5472 = vmatpush1.msra.mxu0 0.0
        %5473 = vmatprep.subr.mxu0 0.0
        %5474 = vmatpush1.msra.mxu0 0.0
        %5475 = vmatprep.subr.mxu0 0.0
        %5476 = vmatpush1.msra.mxu0 0.0
        %5477 = vmatprep.subr.mxu0 0.0
        %5478 = vmatpush1.msra.mxu0 0.0
        %5479 = vmatprep.subr.mxu0 0.0
        %5480 = vmatpush1.msra.mxu0 0.0
        %5481 = vmatprep.subr.mxu0 0.0
        %5482 = vmatpush1.msra.mxu0 0.0
        %5483 = vmatprep.subr.mxu0 0.0
        %5484 = vmatpush1.msra.mxu0 0.0
        %5485 = vmatprep.subr.mxu0 0.0
        %5486 = vmatpush1.msra.mxu0 0.0
        %5487 = vmatprep.subr.mxu0 0.0
        %5488 = vmatpush1.msra.mxu0 0.0
        %5489 = vmatprep.subr.mxu0 0.0
        %5490 = vmatpush1.msra.mxu0 0.0
        %5491 = vmatprep.subr.mxu0 0.0
        %5492 = vmatpush1.msra.mxu0 0.0
        %5493 = vmatprep.subr.mxu0 0.0
        %5494 = vmatpush1.msra.mxu0 0.0
        %5495 = vmatprep.subr.mxu0 0.0
        %5496 = vmatpush1.msra.mxu0 0.0
        %5497 = vmatprep.subr.mxu0 0.0
        %5498 = vmatpush1.msra.mxu0 0.0
        %5499 = vmatprep.subr.mxu0 0.0
        %5500 = vmatpush1.msra.mxu0 0.0
        %5501 = vmatprep.subr.mxu0 0.0
        %5502 = vmatpush1.msra.mxu0 0.0
        %5503 = vmatprep.subr.mxu0 0.0
        %5504 = vmatpush1.msra.mxu0 0.0
        %5505 = vmatprep.subr.mxu0 0.0
        %5506 = vmatpush1.msra.mxu0 0.0
        %5507 = vmatprep.subr.mxu0 0.0
        %5508 = vmatpush1.msra.mxu0 0.0
        %5509 = vmatprep.subr.mxu0 0.0
        %5510 = vmatpush1.msra.mxu0 0.0
        %5511 = vmatprep.subr.mxu0 0.0
        %5512 = vmatpush1.msra.mxu0 0.0
        %5513 = vmatprep.subr.mxu0 0.0
        %5514 = vmatpush1.msra.mxu0 0.0
        %5515 = vmatprep.subr.mxu0 0.0
        %5516 = vmatpush1.msra.mxu0 0.0
        %5517 = vmatprep.subr.mxu0 0.0
        %5518 = vmatpush1.msra.mxu0 0.0
        %5519 = vmatprep.subr.mxu0 0.0
        %5520 = vmatpush1.msra.mxu0 0.0
        %5521 = vmatprep.mubr.f32.mxu0 0.0
        %5522 = vmatmul.mubr.f32.gmra.mrb[0].mxu0 %v5455
        %v5523 = vpop.f32.mrb[0].mxu0
        %v5524 = vadd.f32 %v5453, %v5523
        %v5525 = vpop.f32.mrb[0].mxu0
        %5526 = vdwg.mxu0
        %v5527 = vmax.f32 %v5524, 0.0
        %v5528 = vld [vmem:[%s6] sm:$0xff]
        %v5529 = vld [vmem:[%s6 + $0x8] sm:$0xff]
        %v5530 = vld [vmem:[%s7] sm:$0xff]
        %v5531 = vld [vmem:[%s7 + $0x8] sm:$0xff]
        %vm5532 = vcmask 31744
        %v5534 = vsel %vm5532, %v5528, 0
        %v5537 = vsel %vm5532, %v5529, 0
        %vm5539 = vcmask 1043456
        %v5541 = vsel %vm5539, %v5527, 0
        %5543 = vmatprep.subr.mxu0 0.0
        %5544 = vmatpush1.msra.mxu0 %v5541
        %5545 = vmatprep.subr.mxu0 0.0
        %5546 = vmatpush1.msra.mxu0 0.0
        %5547 = vmatprep.subr.mxu0 0.0
        %5548 = vmatpush1.msra.mxu0 0.0
        %5549 = vmatprep.subr.mxu0 0.0
        %5550 = vmatpush1.msra.mxu0 0.0
        %5551 = vmatprep.subr.mxu0 0.0
        %5552 = vmatpush1.msra.mxu0 0.0
        %5553 = vmatprep.subr.mxu0 0.0
        %5554 = vmatpush1.msra.mxu0 0.0
        %5555 = vmatprep.subr.mxu0 0.0
        %5556 = vmatpush1.msra.mxu0 0.0
        %5557 = vmatprep.subr.mxu0 0.0
        %5558 = vmatpush1.msra.mxu0 0.0
        %5559 = vmatprep.subr.mxu0 0.0
        %5560 = vmatpush1.msra.mxu0 0.0
        %5561 = vmatprep.subr.mxu0 0.0
        %5562 = vmatpush1.msra.mxu0 0.0
        %5563 = vmatprep.subr.mxu0 0.0
        %5564 = vmatpush1.msra.mxu0 0.0
        %5565 = vmatprep.subr.mxu0 0.0
        %5566 = vmatpush1.msra.mxu0 0.0
        %5567 = vmatprep.subr.mxu0 0.0
        %5568 = vmatpush1.msra.mxu0 0.0
        %5569 = vmatprep.subr.mxu0 0.0
        %5570 = vmatpush1.msra.mxu0 0.0
        %5571 = vmatprep.subr.mxu0 0.0
        %5572 = vmatpush1.msra.mxu0 0.0
        %5573 = vmatprep.subr.mxu0 0.0
        %5574 = vmatpush1.msra.mxu0 0.0
        %5575 = vmatprep.subr.mxu0 0.0
        %5576 = vmatpush1.msra.mxu0 0.0
        %5577 = vmatprep.subr.mxu0 0.0
        %5578 = vmatpush1.msra.mxu0 0.0
        %5579 = vmatprep.subr.mxu0 0.0
        %5580 = vmatpush1.msra.mxu0 0.0
        %5581 = vmatprep.subr.mxu0 0.0
        %5582 = vmatpush1.msra.mxu0 0.0
        %5583 = vmatprep.subr.mxu0 0.0
        %5584 = vmatpush1.msra.mxu0 0.0
        %5585 = vmatprep.subr.mxu0 0.0
        %5586 = vmatpush1.msra.mxu0 0.0
        %5587 = vmatprep.subr.mxu0 0.0
        %5588 = vmatpush1.msra.mxu0 0.0
        %5589 = vmatprep.subr.mxu0 0.0
        %5590 = vmatpush1.msra.mxu0 0.0
        %5591 = vmatprep.subr.mxu0 0.0
        %5592 = vmatpush1.msra.mxu0 0.0
        %5593 = vmatprep.subr.mxu0 0.0
        %5594 = vmatpush1.msra.mxu0 0.0
        %5595 = vmatprep.subr.mxu0 0.0
        %5596 = vmatpush1.msra.mxu0 0.0
        %5597 = vmatprep.subr.mxu0 0.0
        %5598 = vmatpush1.msra.mxu0 0.0
        %5599 = vmatprep.subr.mxu0 0.0
        %5600 = vmatpush1.msra.mxu0 0.0
        %5601 = vmatprep.subr.mxu0 0.0
        %5602 = vmatpush1.msra.mxu0 0.0
        %5603 = vmatprep.subr.mxu0 0.0
        %5604 = vmatpush1.msra.mxu0 0.0
        %5605 = vmatprep.subr.mxu0 0.0
        %5606 = vmatpush1.msra.mxu0 0.0
        %5607 = vmatprep.mubr.f32.mxu0 0.0
        %5608 = vmatmul.mubr.f32.gmra.mrb[0].mxu0 %v5534
        %v5609 = vpop.f32.mrb[0].mxu0
        %v5610 = vadd.f32 %v5530, %v5609
        %v5611 = vpop.f32.mrb[0].mxu0
        %5612 = vmatprep.mubr.f32.mxu0 0.0
        %5613 = vmatmul.mubr.f32.gmra.mrb[0].mxu0 %v5537
        %v5614 = vpop.f32.mrb[0].mxu0
        %v5615 = vadd.f32 %v5531, %v5614
        %v5616 = vpop.f32.mrb[0].mxu0
        %5617 = vdwg.mxu0
        %v5618 = vxor.u32 %v5610, 2147483648
        %v5619 = vxor.u32 %v5615, 2147483648
        %v5620 = vmul.f32 %v5618, 1.442695
        %v5621 = vpow.pop %v5620
        %v5622 = vmul.f32 %v5619, 1.442695
        %v5623 = vpow.pop %v5622
        %v5624 = vadd.f32 %v5621, 1.0
        %v5625 = vadd.f32 %v5623, 1.0
        %v5626 = vrcp.pop %v5624
        %v5627 = vmul.f32 1.0, %v5626
        %v5628 = vrcp.pop %v5625
        %v5629 = vmul.f32 1.0, %v5628
        %5631 = vset.pattern.permute.xlu0 0
        %5632 = vperm.xlu0 %5631, %v5627
        %v5633 = vpop.permute.xlu0 %5632
        %5636 = vset.pattern.permute.xlu0 0
        %5637 = vperm.xlu0 %5636, %v5629
        %v5638 = vpop.permute.xlu0 %5637
        %v5640 = vmul.f32 %v4209, %v5633
        %v5641 = vmul.f32 %v4210, %v5633
        %v5642 = vmul.f32 %v4211, %v5638
        %v5643 = vmul.f32 %v4212, %v5638
        %v5644 = vld [vmem:[#allocation10] sm:$0xff]
        %v5645 = vld [vmem:[#allocation10 + $0x8] sm:$0xff]
        %v5646 = vld [vmem:[#allocation10 + $0x10] sm:$0xff]
        %v5647 = vld [vmem:[#allocation10 + $0x18] sm:$0xff]
        %v5648 = vld [vmem:[%s9] sm:$0xff]
        %v5649 = vld [vmem:[%s9 + $0x8] sm:$0xff]
        %5650 = vmatprep.subr.mxu0 %v445
        %5651 = vmatpush1.msra.mxu0 %v444
        %5652 = vmatprep.subr.mxu0 %v447
        %5653 = vmatpush1.msra.mxu0 %v446
        %5654 = vmatprep.subr.mxu0 %v449
        %5655 = vmatpush1.msra.mxu0 %v448
        %5656 = vmatprep.subr.mxu0 %v451
        %5657 = vmatpush1.msra.mxu0 %v450
        %5658 = vmatprep.subr.mxu0 %v453
        %5659 = vmatpush1.msra.mxu0 %v452
        %5660 = vmatprep.subr.mxu0 %v455
        %5661 = vmatpush1.msra.mxu0 %v454
        %5662 = vmatprep.subr.mxu0 %v457
        %5663 = vmatpush1.msra.mxu0 %v456
        %5664 = vmatprep.subr.mxu0 %v459
        %5665 = vmatpush1.msra.mxu0 %v458
        %5666 = vmatprep.subr.mxu0 %v461
        %5667 = vmatpush1.msra.mxu0 %v460
        %5668 = vmatprep.subr.mxu0 %v463
        %5669 = vmatpush1.msra.mxu0 %v462
        %5670 = vmatprep.subr.mxu0 %v465
        %5671 = vmatpush1.msra.mxu0 %v464
        %5672 = vmatprep.subr.mxu0 %v467
        %5673 = vmatpush1.msra.mxu0 %v466
        %5674 = vmatprep.subr.mxu0 %v469
        %5675 = vmatpush1.msra.mxu0 %v468
        %5676 = vmatprep.subr.mxu0 %v471
        %5677 = vmatpush1.msra.mxu0 %v470
        %5678 = vmatprep.subr.mxu0 %v473
        %5679 = vmatpush1.msra.mxu0 %v472
        %5680 = vmatprep.subr.mxu0 %v475
        %5681 = vmatpush1.msra.mxu0 %v474
        %5682 = vmatprep.subr.mxu0 %v477
        %5683 = vmatpush1.msra.mxu0 %v476
        %5684 = vmatprep.subr.mxu0 %v479
        %5685 = vmatpush1.msra.mxu0 %v478
        %5686 = vmatprep.subr.mxu0 %v481
        %5687 = vmatpush1.msra.mxu0 %v480
        %5688 = vmatprep.subr.mxu0 %v483
        %5689 = vmatpush1.msra.mxu0 %v482
        %5690 = vmatprep.subr.mxu0 %v485
        %5691 = vmatpush1.msra.mxu0 %v484
        %5692 = vmatprep.subr.mxu0 %v487
        %5693 = vmatpush1.msra.mxu0 %v486
        %5694 = vmatprep.subr.mxu0 %v489
        %5695 = vmatpush1.msra.mxu0 %v488
        %5696 = vmatprep.subr.mxu0 %v491
        %5697 = vmatpush1.msra.mxu0 %v490
        %5698 = vmatprep.subr.mxu0 %v493
        %5699 = vmatpush1.msra.mxu0 %v492
        %5700 = vmatprep.subr.mxu0 %v495
        %5701 = vmatpush1.msra.mxu0 %v494
        %5702 = vmatprep.subr.mxu0 %v497
        %5703 = vmatpush1.msra.mxu0 %v496
        %5704 = vmatprep.subr.mxu0 %v499
        %5705 = vmatpush1.msra.mxu0 %v498
        %5706 = vmatprep.subr.mxu0 %v501
        %5707 = vmatpush1.msra.mxu0 %v500
        %5708 = vmatprep.subr.mxu0 %v503
        %5709 = vmatpush1.msra.mxu0 %v502
        %5710 = vmatprep.subr.mxu0 %v505
        %5711 = vmatpush1.msra.mxu0 %v504
        %5712 = vmatprep.subr.mxu0 %v507
        %5713 = vmatpush1.msra.mxu0 %v506
        %5714 = vmatprep.mubr.f32.mxu0 %v5641
        %5715 = vmatmul.mubr.f32.gmra.mrb[0].mxu0 %v5640
        %v5716 = vpop.f32.mrb[0].mxu0
        %v5717 = vadd.f32 0.0, %v5716
        %v5718 = vpop.f32.mrb[0].mxu0
        %v5719 = vadd.f32 0.0, %v5718
        %5720 = vmatprep.mubr.f32.mxu0 %v5643
        %5721 = vmatmul.mubr.f32.gmra.mrb[0].mxu0 %v5642
        %v5722 = vpop.f32.mrb[0].mxu0
        %v5723 = vadd.f32 0.0, %v5722
        %v5724 = vpop.f32.mrb[0].mxu0
        %v5725 = vadd.f32 0.0, %v5724
        %5726 = vdwg.mxu0
        %5727 = vmatprep.subr.mxu0 %v587
        %5728 = vmatpush1.msra.mxu0 %v586
        %5729 = vmatprep.subr.mxu0 %v589
        %5730 = vmatpush1.msra.mxu0 %v588
        %5731 = vmatprep.subr.mxu0 %v591
        %5732 = vmatpush1.msra.mxu0 %v590
        %5733 = vmatprep.subr.mxu0 %v593
        %5734 = vmatpush1.msra.mxu0 %v592
        %5735 = vmatprep.subr.mxu0 %v595
        %5736 = vmatpush1.msra.mxu0 %v594
        %5737 = vmatprep.subr.mxu0 %v597
        %5738 = vmatpush1.msra.mxu0 %v596
        %5739 = vmatprep.subr.mxu0 %v599
        %5740 = vmatpush1.msra.mxu0 %v598
        %5741 = vmatprep.subr.mxu0 %v601
        %5742 = vmatpush1.msra.mxu0 %v600
        %5743 = vmatprep.subr.mxu0 %v603
        %5744 = vmatpush1.msra.mxu0 %v602
        %5745 = vmatprep.subr.mxu0 %v605
        %5746 = vmatpush1.msra.mxu0 %v604
        %5747 = vmatprep.subr.mxu0 %v607
        %5748 = vmatpush1.msra.mxu0 %v606
        %5749 = vmatprep.subr.mxu0 %v609
        %5750 = vmatpush1.msra.mxu0 %v608
        %5751 = vmatprep.subr.mxu0 %v611
        %5752 = vmatpush1.msra.mxu0 %v610
        %5753 = vmatprep.subr.mxu0 %v613
        %5754 = vmatpush1.msra.mxu0 %v612
        %5755 = vmatprep.subr.mxu0 %v615
        %5756 = vmatpush1.msra.mxu0 %v614
        %5757 = vmatprep.subr.mxu0 %v617
        %5758 = vmatpush1.msra.mxu0 %v616
        %5759 = vmatprep.subr.mxu0 %v619
        %5760 = vmatpush1.msra.mxu0 %v618
        %5761 = vmatprep.subr.mxu0 %v621
        %5762 = vmatpush1.msra.mxu0 %v620
        %5763 = vmatprep.subr.mxu0 %v623
        %5764 = vmatpush1.msra.mxu0 %v622
        %5765 = vmatprep.subr.mxu0 %v625
        %5766 = vmatpush1.msra.mxu0 %v624
        %5767 = vmatprep.subr.mxu0 %v627
        %5768 = vmatpush1.msra.mxu0 %v626
        %5769 = vmatprep.subr.mxu0 %v629
        %5770 = vmatpush1.msra.mxu0 %v628
        %5771 = vmatprep.subr.mxu0 %v631
        %5772 = vmatpush1.msra.mxu0 %v630
        %5773 = vmatprep.subr.mxu0 %v633
        %5774 = vmatpush1.msra.mxu0 %v632
        %5775 = vmatprep.subr.mxu0 %v635
        %5776 = vmatpush1.msra.mxu0 %v634
        %5777 = vmatprep.subr.mxu0 %v637
        %5778 = vmatpush1.msra.mxu0 %v636
        %5779 = vmatprep.subr.mxu0 %v639
        %5780 = vmatpush1.msra.mxu0 %v638
        %5781 = vmatprep.subr.mxu0 %v641
        %5782 = vmatpush1.msra.mxu0 %v640
        %5783 = vmatprep.subr.mxu0 %v643
        %5784 = vmatpush1.msra.mxu0 %v642
        %5785 = vmatprep.subr.mxu0 %v645
        %5786 = vmatpush1.msra.mxu0 %v644
        %5787 = vmatprep.subr.mxu0 %v647
        %5788 = vmatpush1.msra.mxu0 %v646
        %5789 = vmatprep.subr.mxu0 %v649
        %5790 = vmatpush1.msra.mxu0 %v648
        %5791 = vmatprep.mubr.f32.mxu0 %v5641
        %5792 = vmatmul.mubr.f32.gmra.mrb[0].mxu0 %v5640
        %v5793 = vpop.f32.mrb[0].mxu0
        %v5794 = vadd.f32 0.0, %v5793
        %v5795 = vpop.f32.mrb[0].mxu0
        %v5796 = vadd.f32 0.0, %v5795
        %5797 = vmatprep.mubr.f32.mxu0 %v5643
        %5798 = vmatmul.mubr.f32.gmra.mrb[0].mxu0 %v5642
        %v5799 = vpop.f32.mrb[0].mxu0
        %v5800 = vadd.f32 0.0, %v5799
        %v5801 = vpop.f32.mrb[0].mxu0
        %v5802 = vadd.f32 0.0, %v5801
        %5803 = vdwg.mxu0
        %5804 = vmatprep.subr.mxu0 %v729
        %5805 = vmatpush1.msra.mxu0 %v728
        %5806 = vmatprep.subr.mxu0 %v731
        %5807 = vmatpush1.msra.mxu0 %v730
        %5808 = vmatprep.subr.mxu0 %v733
        %5809 = vmatpush1.msra.mxu0 %v732
        %5810 = vmatprep.subr.mxu0 %v735
        %5811 = vmatpush1.msra.mxu0 %v734
        %5812 = vmatprep.subr.mxu0 %v737
        %5813 = vmatpush1.msra.mxu0 %v736
        %5814 = vmatprep.subr.mxu0 %v739
        %5815 = vmatpush1.msra.mxu0 %v738
        %5816 = vmatprep.subr.mxu0 %v741
        %5817 = vmatpush1.msra.mxu0 %v740
        %5818 = vmatprep.subr.mxu0 %v743
        %5819 = vmatpush1.msra.mxu0 %v742
        %5820 = vmatprep.subr.mxu0 %v745
        %5821 = vmatpush1.msra.mxu0 %v744
        %5822 = vmatprep.subr.mxu0 %v747
        %5823 = vmatpush1.msra.mxu0 %v746
        %5824 = vmatprep.subr.mxu0 %v749
        %5825 = vmatpush1.msra.mxu0 %v748
        %5826 = vmatprep.subr.mxu0 %v751
        %5827 = vmatpush1.msra.mxu0 %v750
        %5828 = vmatprep.subr.mxu0 %v753
        %5829 = vmatpush1.msra.mxu0 %v752
        %5830 = vmatprep.subr.mxu0 %v755
        %5831 = vmatpush1.msra.mxu0 %v754
        %5832 = vmatprep.subr.mxu0 %v757
        %5833 = vmatpush1.msra.mxu0 %v756
        %5834 = vmatprep.subr.mxu0 %v759
        %5835 = vmatpush1.msra.mxu0 %v758
        %5836 = vmatprep.subr.mxu0 %v761
        %5837 = vmatpush1.msra.mxu0 %v760
        %5838 = vmatprep.subr.mxu0 %v763
        %5839 = vmatpush1.msra.mxu0 %v762
        %5840 = vmatprep.subr.mxu0 %v765
        %5841 = vmatpush1.msra.mxu0 %v764
        %5842 = vmatprep.subr.mxu0 %v767
        %5843 = vmatpush1.msra.mxu0 %v766
        %5844 = vmatprep.subr.mxu0 %v769
        %5845 = vmatpush1.msra.mxu0 %v768
        %5846 = vmatprep.subr.mxu0 %v771
        %5847 = vmatpush1.msra.mxu0 %v770
        %5848 = vmatprep.subr.mxu0 %v773
        %5849 = vmatpush1.msra.mxu0 %v772
        %5850 = vmatprep.subr.mxu0 %v775
        %5851 = vmatpush1.msra.mxu0 %v774
        %5852 = vmatprep.subr.mxu0 %v777
        %5853 = vmatpush1.msra.mxu0 %v776
        %5854 = vmatprep.subr.mxu0 %v779
        %5855 = vmatpush1.msra.mxu0 %v778
        %5856 = vmatprep.subr.mxu0 %v781
        %5857 = vmatpush1.msra.mxu0 %v780
        %5858 = vmatprep.subr.mxu0 %v783
        %5859 = vmatpush1.msra.mxu0 %v782
        %5860 = vmatprep.subr.mxu0 %v785
        %5861 = vmatpush1.msra.mxu0 %v784
        %5862 = vmatprep.subr.mxu0 %v787
        %5863 = vmatpush1.msra.mxu0 %v786
        %5864 = vmatprep.subr.mxu0 %v789
        %5865 = vmatpush1.msra.mxu0 %v788
        %5866 = vmatprep.subr.mxu0 %v791
        %5867 = vmatpush1.msra.mxu0 %v790
        %5868 = vmatprep.mubr.f32.mxu0 %v5641
        %5869 = vmatmul.mubr.f32.gmra.mrb[0].mxu0 %v5640
        %v5870 = vpop.f32.mrb[0].mxu0
        %v5871 = vadd.f32 0.0, %v5870
        %v5872 = vpop.f32.mrb[0].mxu0
        %v5873 = vadd.f32 0.0, %v5872
        %5874 = vmatprep.mubr.f32.mxu0 %v5643
        %5875 = vmatmul.mubr.f32.gmra.mrb[0].mxu0 %v5642
        %v5876 = vpop.f32.mrb[0].mxu0
        %v5877 = vadd.f32 0.0, %v5876
        %v5878 = vpop.f32.mrb[0].mxu0
        %v5879 = vadd.f32 0.0, %v5878
        %5880 = vdwg.mxu0
        %5881 = vmatprep.subr.mxu0 %v871
        %5882 = vmatpush1.msra.mxu0 %v870
        %5883 = vmatprep.subr.mxu0 %v873
        %5884 = vmatpush1.msra.mxu0 %v872
        %5885 = vmatprep.subr.mxu0 %v875
        %5886 = vmatpush1.msra.mxu0 %v874
        %5887 = vmatprep.subr.mxu0 %v877
        %5888 = vmatpush1.msra.mxu0 %v876
        %5889 = vmatprep.subr.mxu0 %v879
        %5890 = vmatpush1.msra.mxu0 %v878
        %5891 = vmatprep.subr.mxu0 %v881
        %5892 = vmatpush1.msra.mxu0 %v880
        %5893 = vmatprep.subr.mxu0 %v883
        %5894 = vmatpush1.msra.mxu0 %v882
        %5895 = vmatprep.subr.mxu0 %v885
        %5896 = vmatpush1.msra.mxu0 %v884
        %5897 = vmatprep.subr.mxu0 %v887
        %5898 = vmatpush1.msra.mxu0 %v886
        %5899 = vmatprep.subr.mxu0 %v889
        %5900 = vmatpush1.msra.mxu0 %v888
        %5901 = vmatprep.subr.mxu0 %v891
        %5902 = vmatpush1.msra.mxu0 %v890
        %5903 = vmatprep.subr.mxu0 %v893
        %5904 = vmatpush1.msra.mxu0 %v892
        %5905 = vmatprep.subr.mxu0 %v895
        %5906 = vmatpush1.msra.mxu0 %v894
        %5907 = vmatprep.subr.mxu0 %v897
        %5908 = vmatpush1.msra.mxu0 %v896
        %5909 = vmatprep.subr.mxu0 %v899
        %5910 = vmatpush1.msra.mxu0 %v898
        %5911 = vmatprep.subr.mxu0 %v901
        %5912 = vmatpush1.msra.mxu0 %v900
        %5913 = vmatprep.subr.mxu0 %v903
        %5914 = vmatpush1.msra.mxu0 %v902
        %5915 = vmatprep.subr.mxu0 %v905
        %5916 = vmatpush1.msra.mxu0 %v904
        %5917 = vmatprep.subr.mxu0 %v907
        %5918 = vmatpush1.msra.mxu0 %v906
        %5919 = vmatprep.subr.mxu0 %v909
        %5920 = vmatpush1.msra.mxu0 %v908
        %5921 = vmatprep.subr.mxu0 %v911
        %5922 = vmatpush1.msra.mxu0 %v910
        %5923 = vmatprep.subr.mxu0 %v913
        %5924 = vmatpush1.msra.mxu0 %v912
        %5925 = vmatprep.subr.mxu0 %v915
        %5926 = vmatpush1.msra.mxu0 %v914
        %5927 = vmatprep.subr.mxu0 %v917
        %5928 = vmatpush1.msra.mxu0 %v916
        %5929 = vmatprep.subr.mxu0 %v919
        %5930 = vmatpush1.msra.mxu0 %v918
        %5931 = vmatprep.subr.mxu0 %v921
        %5932 = vmatpush1.msra.mxu0 %v920
        %5933 = vmatprep.subr.mxu0 %v923
        %5934 = vmatpush1.msra.mxu0 %v922
        %5935 = vmatprep.subr.mxu0 %v925
        %5936 = vmatpush1.msra.mxu0 %v924
        %5937 = vmatprep.subr.mxu0 %v927
        %5938 = vmatpush1.msra.mxu0 %v926
        %5939 = vmatprep.subr.mxu0 %v929
        %5940 = vmatpush1.msra.mxu0 %v928
        %5941 = vmatprep.subr.mxu0 %v931
        %5942 = vmatpush1.msra.mxu0 %v930
        %5943 = vmatprep.subr.mxu0 %v933
        %5944 = vmatpush1.msra.mxu0 %v932
        %5945 = vmatprep.mubr.f32.mxu0 %v5641
        %5946 = vmatmul.mubr.f32.gmra.mrb[0].mxu0 %v5640
        %v5947 = vpop.f32.mrb[0].mxu0
        %v5948 = vadd.f32 0.0, %v5947
        %v5949 = vpop.f32.mrb[0].mxu0
        %v5950 = vadd.f32 0.0, %v5949
        %5951 = vmatprep.mubr.f32.mxu0 %v5643
        %5952 = vmatmul.mubr.f32.gmra.mrb[0].mxu0 %v5642
        %v5953 = vpop.f32.mrb[0].mxu0
        %v5954 = vadd.f32 0.0, %v5953
        %v5955 = vpop.f32.mrb[0].mxu0
        %v5956 = vadd.f32 0.0, %v5955
        %5957 = vdwg.mxu0
        %5958 = vmatprep.subr.mxu0 %v1013
        %5959 = vmatpush1.msra.mxu0 %v1012
        %5960 = vmatprep.subr.mxu0 %v1015
        %5961 = vmatpush1.msra.mxu0 %v1014
        %5962 = vmatprep.subr.mxu0 %v1017
        %5963 = vmatpush1.msra.mxu0 %v1016
        %5964 = vmatprep.subr.mxu0 %v1019
        %5965 = vmatpush1.msra.mxu0 %v1018
        %5966 = vmatprep.subr.mxu0 %v1021
        %5967 = vmatpush1.msra.mxu0 %v1020
        %5968 = vmatprep.subr.mxu0 %v1023
        %5969 = vmatpush1.msra.mxu0 %v1022
        %5970 = vmatprep.subr.mxu0 %v1025
        %5971 = vmatpush1.msra.mxu0 %v1024
        %5972 = vmatprep.subr.mxu0 %v1027
        %5973 = vmatpush1.msra.mxu0 %v1026
        %5974 = vmatprep.subr.mxu0 %v1029
        %5975 = vmatpush1.msra.mxu0 %v1028
        %5976 = vmatprep.subr.mxu0 %v1031
        %5977 = vmatpush1.msra.mxu0 %v1030
        %5978 = vmatprep.subr.mxu0 %v1033
        %5979 = vmatpush1.msra.mxu0 %v1032
        %5980 = vmatprep.subr.mxu0 %v1035
        %5981 = vmatpush1.msra.mxu0 %v1034
        %5982 = vmatprep.subr.mxu0 %v1037
        %5983 = vmatpush1.msra.mxu0 %v1036
        %5984 = vmatprep.subr.mxu0 %v1039
        %5985 = vmatpush1.msra.mxu0 %v1038
        %5986 = vmatprep.subr.mxu0 %v1041
        %5987 = vmatpush1.msra.mxu0 %v1040
        %5988 = vmatprep.subr.mxu0 %v1043
        %5989 = vmatpush1.msra.mxu0 %v1042
        %5990 = vmatprep.subr.mxu0 %v1045
        %5991 = vmatpush1.msra.mxu0 %v1044
        %5992 = vmatprep.subr.mxu0 %v1047
        %5993 = vmatpush1.msra.mxu0 %v1046
        %5994 = vmatprep.subr.mxu0 %v1049
        %5995 = vmatpush1.msra.mxu0 %v1048
        %5996 = vmatprep.subr.mxu0 %v1051
        %5997 = vmatpush1.msra.mxu0 %v1050
        %5998 = vmatprep.subr.mxu0 %v1053
        %5999 = vmatpush1.msra.mxu0 %v1052
        %6000 = vmatprep.subr.mxu0 %v1055
        %6001 = vmatpush1.msra.mxu0 %v1054
        %6002 = vmatprep.subr.mxu0 %v1057
        %6003 = vmatpush1.msra.mxu0 %v1056
        %6004 = vmatprep.subr.mxu0 %v1059
        %6005 = vmatpush1.msra.mxu0 %v1058
        %6006 = vmatprep.subr.mxu0 %v1061
        %6007 = vmatpush1.msra.mxu0 %v1060
        %6008 = vmatprep.subr.mxu0 %v1063
        %6009 = vmatpush1.msra.mxu0 %v1062
        %6010 = vmatprep.subr.mxu0 %v1065
        %6011 = vmatpush1.msra.mxu0 %v1064
        %6012 = vmatprep.subr.mxu0 %v1067
        %6013 = vmatpush1.msra.mxu0 %v1066
        %6014 = vmatprep.subr.mxu0 %v1069
        %6015 = vmatpush1.msra.mxu0 %v1068
        %6016 = vmatprep.subr.mxu0 %v1071
        %6017 = vmatpush1.msra.mxu0 %v1070
        %6018 = vmatprep.subr.mxu0 %v1073
        %6019 = vmatpush1.msra.mxu0 %v1072
        %6020 = vmatprep.subr.mxu0 %v1075
        %6021 = vmatpush1.msra.mxu0 %v1074
        %6022 = vmatprep.mubr.f32.mxu0 %v5641
        %6023 = vmatmul.mubr.f32.gmra.mrb[0].mxu0 %v5640
        %v6024 = vpop.f32.mrb[0].mxu0
        %v6025 = vadd.f32 0.0, %v6024
        %v6026 = vpop.f32.mrb[0].mxu0
        %v6027 = vadd.f32 0.0, %v6026
        %6028 = vmatprep.mubr.f32.mxu0 %v5643
        %6029 = vmatmul.mubr.f32.gmra.mrb[0].mxu0 %v5642
        %v6030 = vpop.f32.mrb[0].mxu0
        %v6031 = vadd.f32 0.0, %v6030
        %v6032 = vpop.f32.mrb[0].mxu0
        %v6033 = vadd.f32 0.0, %v6032
        %6034 = vdwg.mxu0
        %6035 = vmatprep.subr.mxu0 %v1155
        %6036 = vmatpush1.msra.mxu0 %v1154
        %6037 = vmatprep.subr.mxu0 %v1157
        %6038 = vmatpush1.msra.mxu0 %v1156
        %6039 = vmatprep.subr.mxu0 %v1159
        %6040 = vmatpush1.msra.mxu0 %v1158
        %6041 = vmatprep.subr.mxu0 %v1161
        %6042 = vmatpush1.msra.mxu0 %v1160
        %6043 = vmatprep.subr.mxu0 %v1163
        %6044 = vmatpush1.msra.mxu0 %v1162
        %6045 = vmatprep.subr.mxu0 %v1165
        %6046 = vmatpush1.msra.mxu0 %v1164
        %6047 = vmatprep.subr.mxu0 %v1167
        %6048 = vmatpush1.msra.mxu0 %v1166
        %6049 = vmatprep.subr.mxu0 %v1169
        %6050 = vmatpush1.msra.mxu0 %v1168
        %6051 = vmatprep.subr.mxu0 %v1171
        %6052 = vmatpush1.msra.mxu0 %v1170
        %6053 = vmatprep.subr.mxu0 %v1173
        %6054 = vmatpush1.msra.mxu0 %v1172
        %6055 = vmatprep.subr.mxu0 %v1175
        %6056 = vmatpush1.msra.mxu0 %v1174
        %6057 = vmatprep.subr.mxu0 %v1177
        %6058 = vmatpush1.msra.mxu0 %v1176
        %6059 = vmatprep.subr.mxu0 %v1179
        %6060 = vmatpush1.msra.mxu0 %v1178
        %6061 = vmatprep.subr.mxu0 %v1181
        %6062 = vmatpush1.msra.mxu0 %v1180
        %6063 = vmatprep.subr.mxu0 %v1183
        %6064 = vmatpush1.msra.mxu0 %v1182
        %6065 = vmatprep.subr.mxu0 %v1185
        %6066 = vmatpush1.msra.mxu0 %v1184
        %6067 = vmatprep.subr.mxu0 %v1187
        %6068 = vmatpush1.msra.mxu0 %v1186
        %6069 = vmatprep.subr.mxu0 %v1189
        %6070 = vmatpush1.msra.mxu0 %v1188
        %6071 = vmatprep.subr.mxu0 %v1191
        %6072 = vmatpush1.msra.mxu0 %v1190
        %6073 = vmatprep.subr.mxu0 %v1193
        %6074 = vmatpush1.msra.mxu0 %v1192
        %6075 = vmatprep.subr.mxu0 %v1195
        %6076 = vmatpush1.msra.mxu0 %v1194
        %6077 = vmatprep.subr.mxu0 %v1197
        %6078 = vmatpush1.msra.mxu0 %v1196
        %6079 = vmatprep.subr.mxu0 %v1199
        %6080 = vmatpush1.msra.mxu0 %v1198
        %6081 = vmatprep.subr.mxu0 %v1201
        %6082 = vmatpush1.msra.mxu0 %v1200
        %6083 = vmatprep.subr.mxu0 %v1203
        %6084 = vmatpush1.msra.mxu0 %v1202
        %6085 = vmatprep.subr.mxu0 %v1205
        %6086 = vmatpush1.msra.mxu0 %v1204
        %6087 = vmatprep.subr.mxu0 %v1207
        %6088 = vmatpush1.msra.mxu0 %v1206
        %6089 = vmatprep.subr.mxu0 %v1209
        %6090 = vmatpush1.msra.mxu0 %v1208
        %6091 = vmatprep.subr.mxu0 %v1211
        %6092 = vmatpush1.msra.mxu0 %v1210
        %6093 = vmatprep.subr.mxu0 %v1213
        %6094 = vmatpush1.msra.mxu0 %v1212
        %6095 = vmatprep.subr.mxu0 %v1215
        %6096 = vmatpush1.msra.mxu0 %v1214
        %6097 = vmatprep.subr.mxu0 %v1217
        %6098 = vmatpush1.msra.mxu0 %v1216
        %6099 = vmatprep.mubr.f32.mxu0 %v5641
        %6100 = vmatmul.mubr.f32.gmra.mrb[0].mxu0 %v5640
        %v6101 = vpop.f32.mrb[0].mxu0
        %v6102 = vadd.f32 0.0, %v6101
        %v6103 = vpop.f32.mrb[0].mxu0
        %v6104 = vadd.f32 0.0, %v6103
        %6105 = vmatprep.mubr.f32.mxu0 %v5643
        %6106 = vmatmul.mubr.f32.gmra.mrb[0].mxu0 %v5642
        %v6107 = vpop.f32.mrb[0].mxu0
        %v6108 = vadd.f32 0.0, %v6107
        %v6109 = vpop.f32.mrb[0].mxu0
        %v6110 = vadd.f32 0.0, %v6109
        %6111 = vdwg.mxu0
        %6112 = vmatprep.subr.mxu0 %v1297
        %6113 = vmatpush1.msra.mxu0 %v1296
        %6114 = vmatprep.subr.mxu0 %v1299
        %6115 = vmatpush1.msra.mxu0 %v1298
        %6116 = vmatprep.subr.mxu0 %v1301
        %6117 = vmatpush1.msra.mxu0 %v1300
        %6118 = vmatprep.subr.mxu0 %v1303
        %6119 = vmatpush1.msra.mxu0 %v1302
        %6120 = vmatprep.subr.mxu0 %v1305
        %6121 = vmatpush1.msra.mxu0 %v1304
        %6122 = vmatprep.subr.mxu0 %v1307
        %6123 = vmatpush1.msra.mxu0 %v1306
        %6124 = vmatprep.subr.mxu0 %v1309
        %6125 = vmatpush1.msra.mxu0 %v1308
        %6126 = vmatprep.subr.mxu0 %v1311
        %6127 = vmatpush1.msra.mxu0 %v1310
        %6128 = vmatprep.subr.mxu0 %v1313
        %6129 = vmatpush1.msra.mxu0 %v1312
        %6130 = vmatprep.subr.mxu0 %v1315
        %6131 = vmatpush1.msra.mxu0 %v1314
        %6132 = vmatprep.subr.mxu0 %v1317
        %6133 = vmatpush1.msra.mxu0 %v1316
        %6134 = vmatprep.subr.mxu0 %v1319
        %6135 = vmatpush1.msra.mxu0 %v1318
        %6136 = vmatprep.subr.mxu0 %v1321
        %6137 = vmatpush1.msra.mxu0 %v1320
        %6138 = vmatprep.subr.mxu0 %v1323
        %6139 = vmatpush1.msra.mxu0 %v1322
        %6140 = vmatprep.subr.mxu0 %v1325
        %6141 = vmatpush1.msra.mxu0 %v1324
        %6142 = vmatprep.subr.mxu0 %v1327
        %6143 = vmatpush1.msra.mxu0 %v1326
        %6144 = vmatprep.subr.mxu0 %v1329
        %6145 = vmatpush1.msra.mxu0 %v1328
        %6146 = vmatprep.subr.mxu0 %v1331
        %6147 = vmatpush1.msra.mxu0 %v1330
        %6148 = vmatprep.subr.mxu0 %v1333
        %6149 = vmatpush1.msra.mxu0 %v1332
        %6150 = vmatprep.subr.mxu0 %v1335
        %6151 = vmatpush1.msra.mxu0 %v1334
        %6152 = vmatprep.subr.mxu0 %v1337
        %6153 = vmatpush1.msra.mxu0 %v1336
        %6154 = vmatprep.subr.mxu0 %v1339
        %6155 = vmatpush1.msra.mxu0 %v1338
        %6156 = vmatprep.subr.mxu0 %v1341
        %6157 = vmatpush1.msra.mxu0 %v1340
        %6158 = vmatprep.subr.mxu0 %v1343
        %6159 = vmatpush1.msra.mxu0 %v1342
        %6160 = vmatprep.subr.mxu0 %v1345
        %6161 = vmatpush1.msra.mxu0 %v1344
        %6162 = vmatprep.subr.mxu0 %v1347
        %6163 = vmatpush1.msra.mxu0 %v1346
        %6164 = vmatprep.subr.mxu0 %v1349
        %6165 = vmatpush1.msra.mxu0 %v1348
        %6166 = vmatprep.subr.mxu0 %v1351
        %6167 = vmatpush1.msra.mxu0 %v1350
        %6168 = vmatprep.subr.mxu0 %v1353
        %6169 = vmatpush1.msra.mxu0 %v1352
        %6170 = vmatprep.subr.mxu0 %v1355
        %6171 = vmatpush1.msra.mxu0 %v1354
        %6172 = vmatprep.subr.mxu0 %v1357
        %6173 = vmatpush1.msra.mxu0 %v1356
        %6174 = vmatprep.subr.mxu0 %v1359
        %6175 = vmatpush1.msra.mxu0 %v1358
        %6176 = vmatprep.mubr.f32.mxu0 %v5641
        %6177 = vmatmul.mubr.f32.gmra.mrb[0].mxu0 %v5640
        %v6178 = vpop.f32.mrb[0].mxu0
        %v6179 = vadd.f32 0.0, %v6178
        %v6180 = vpop.f32.mrb[0].mxu0
        %v6181 = vadd.f32 0.0, %v6180
        %6182 = vmatprep.mubr.f32.mxu0 %v5643
        %6183 = vmatmul.mubr.f32.gmra.mrb[0].mxu0 %v5642
        %v6184 = vpop.f32.mrb[0].mxu0
        %v6185 = vadd.f32 0.0, %v6184
        %v6186 = vpop.f32.mrb[0].mxu0
        %v6187 = vadd.f32 0.0, %v6186
        %6188 = vdwg.mxu0
        %6189 = vmatprep.subr.mxu0 %v1439
        %6190 = vmatpush1.msra.mxu0 %v1438
        %6191 = vmatprep.subr.mxu0 %v1441
        %6192 = vmatpush1.msra.mxu0 %v1440
        %6193 = vmatprep.subr.mxu0 %v1443
        %6194 = vmatpush1.msra.mxu0 %v1442
        %6195 = vmatprep.subr.mxu0 %v1445
        %6196 = vmatpush1.msra.mxu0 %v1444
        %6197 = vmatprep.subr.mxu0 %v1447
        %6198 = vmatpush1.msra.mxu0 %v1446
        %6199 = vmatprep.subr.mxu0 %v1449
        %6200 = vmatpush1.msra.mxu0 %v1448
        %6201 = vmatprep.subr.mxu0 %v1451
        %6202 = vmatpush1.msra.mxu0 %v1450
        %6203 = vmatprep.subr.mxu0 %v1453
        %6204 = vmatpush1.msra.mxu0 %v1452
        %6205 = vmatprep.subr.mxu0 %v1455
        %6206 = vmatpush1.msra.mxu0 %v1454
        %6207 = vmatprep.subr.mxu0 %v1457
        %6208 = vmatpush1.msra.mxu0 %v1456
        %6209 = vmatprep.subr.mxu0 %v1459
        %6210 = vmatpush1.msra.mxu0 %v1458
        %6211 = vmatprep.subr.mxu0 %v1461
        %6212 = vmatpush1.msra.mxu0 %v1460
        %6213 = vmatprep.subr.mxu0 %v1463
        %6214 = vmatpush1.msra.mxu0 %v1462
        %6215 = vmatprep.subr.mxu0 %v1465
        %6216 = vmatpush1.msra.mxu0 %v1464
        %6217 = vmatprep.subr.mxu0 %v1467
        %6218 = vmatpush1.msra.mxu0 %v1466
        %6219 = vmatprep.subr.mxu0 %v1469
        %6220 = vmatpush1.msra.mxu0 %v1468
        %6221 = vmatprep.subr.mxu0 %v1471
        %6222 = vmatpush1.msra.mxu0 %v1470
        %6223 = vmatprep.subr.mxu0 %v1473
        %6224 = vmatpush1.msra.mxu0 %v1472
        %6225 = vmatprep.subr.mxu0 %v1475
        %6226 = vmatpush1.msra.mxu0 %v1474
        %6227 = vmatprep.subr.mxu0 %v1477
        %6228 = vmatpush1.msra.mxu0 %v1476
        %6229 = vmatprep.subr.mxu0 %v1479
        %6230 = vmatpush1.msra.mxu0 %v1478
        %6231 = vmatprep.subr.mxu0 %v1481
        %6232 = vmatpush1.msra.mxu0 %v1480
        %6233 = vmatprep.subr.mxu0 %v1483
        %6234 = vmatpush1.msra.mxu0 %v1482
        %6235 = vmatprep.subr.mxu0 %v1485
        %6236 = vmatpush1.msra.mxu0 %v1484
        %6237 = vmatprep.subr.mxu0 %v1487
        %6238 = vmatpush1.msra.mxu0 %v1486
        %6239 = vmatprep.subr.mxu0 %v1489
        %6240 = vmatpush1.msra.mxu0 %v1488
        %6241 = vmatprep.subr.mxu0 %v1491
        %6242 = vmatpush1.msra.mxu0 %v1490
        %6243 = vmatprep.subr.mxu0 %v1493
        %6244 = vmatpush1.msra.mxu0 %v1492
        %6245 = vmatprep.subr.mxu0 %v1495
        %6246 = vmatpush1.msra.mxu0 %v1494
        %6247 = vmatprep.subr.mxu0 %v1497
        %6248 = vmatpush1.msra.mxu0 %v1496
        %6249 = vmatprep.subr.mxu0 %v1499
        %6250 = vmatpush1.msra.mxu0 %v1498
        %6251 = vmatprep.subr.mxu0 %v1501
        %6252 = vmatpush1.msra.mxu0 %v1500
        %6253 = vmatprep.mubr.f32.mxu0 %v5641
        %6254 = vmatmul.mubr.f32.gmra.mrb[0].mxu0 %v5640
        %v6255 = vpop.f32.mrb[0].mxu0
        %v6256 = vadd.f32 0.0, %v6255
        %v6257 = vpop.f32.mrb[0].mxu0
        %v6258 = vadd.f32 0.0, %v6257
        %6259 = vmatprep.mubr.f32.mxu0 %v5643
        %6260 = vmatmul.mubr.f32.gmra.mrb[0].mxu0 %v5642
        %v6261 = vpop.f32.mrb[0].mxu0
        %v6262 = vadd.f32 0.0, %v6261
        %v6263 = vpop.f32.mrb[0].mxu0
        %v6264 = vadd.f32 0.0, %v6263
        %6265 = vdwg.mxu0
        %6266 = vmatprep.subr.mxu0 %v1581
        %6267 = vmatpush1.msra.mxu0 %v1580
        %6268 = vmatprep.subr.mxu0 %v1583
        %6269 = vmatpush1.msra.mxu0 %v1582
        %6270 = vmatprep.subr.mxu0 %v1585
        %6271 = vmatpush1.msra.mxu0 %v1584
        %6272 = vmatprep.subr.mxu0 %v1587
        %6273 = vmatpush1.msra.mxu0 %v1586
        %6274 = vmatprep.subr.mxu0 %v1589
        %6275 = vmatpush1.msra.mxu0 %v1588
        %6276 = vmatprep.subr.mxu0 %v1591
        %6277 = vmatpush1.msra.mxu0 %v1590
        %6278 = vmatprep.subr.mxu0 %v1593
        %6279 = vmatpush1.msra.mxu0 %v1592
        %6280 = vmatprep.subr.mxu0 %v1595
        %6281 = vmatpush1.msra.mxu0 %v1594
        %6282 = vmatprep.subr.mxu0 %v1597
        %6283 = vmatpush1.msra.mxu0 %v1596
        %6284 = vmatprep.subr.mxu0 %v1599
        %6285 = vmatpush1.msra.mxu0 %v1598
        %6286 = vmatprep.subr.mxu0 %v1601
        %6287 = vmatpush1.msra.mxu0 %v1600
        %6288 = vmatprep.subr.mxu0 %v1603
        %6289 = vmatpush1.msra.mxu0 %v1602
        %6290 = vmatprep.subr.mxu0 %v1605
        %6291 = vmatpush1.msra.mxu0 %v1604
        %6292 = vmatprep.subr.mxu0 %v1607
        %6293 = vmatpush1.msra.mxu0 %v1606
        %6294 = vmatprep.subr.mxu0 %v1609
        %6295 = vmatpush1.msra.mxu0 %v1608
        %6296 = vmatprep.subr.mxu0 %v1611
        %6297 = vmatpush1.msra.mxu0 %v1610
        %6298 = vmatprep.subr.mxu0 %v1613
        %6299 = vmatpush1.msra.mxu0 %v1612
        %6300 = vmatprep.subr.mxu0 %v1615
        %6301 = vmatpush1.msra.mxu0 %v1614
        %6302 = vmatprep.subr.mxu0 %v1617
        %6303 = vmatpush1.msra.mxu0 %v1616
        %6304 = vmatprep.subr.mxu0 %v1619
        %6305 = vmatpush1.msra.mxu0 %v1618
        %6306 = vmatprep.subr.mxu0 %v1621
        %6307 = vmatpush1.msra.mxu0 %v1620
        %6308 = vmatprep.subr.mxu0 %v1623
        %6309 = vmatpush1.msra.mxu0 %v1622
        %6310 = vmatprep.subr.mxu0 %v1625
        %6311 = vmatpush1.msra.mxu0 %v1624
        %6312 = vmatprep.subr.mxu0 %v1627
        %6313 = vmatpush1.msra.mxu0 %v1626
        %6314 = vmatprep.subr.mxu0 %v1629
        %6315 = vmatpush1.msra.mxu0 %v1628
        %6316 = vmatprep.subr.mxu0 %v1631
        %6317 = vmatpush1.msra.mxu0 %v1630
        %6318 = vmatprep.subr.mxu0 %v1633
        %6319 = vmatpush1.msra.mxu0 %v1632
        %6320 = vmatprep.subr.mxu0 %v1635
        %6321 = vmatpush1.msra.mxu0 %v1634
        %6322 = vmatprep.subr.mxu0 %v1637
        %6323 = vmatpush1.msra.mxu0 %v1636
        %6324 = vmatprep.subr.mxu0 %v1639
        %6325 = vmatpush1.msra.mxu0 %v1638
        %6326 = vmatprep.subr.mxu0 %v1641
        %6327 = vmatpush1.msra.mxu0 %v1640
        %6328 = vmatprep.subr.mxu0 %v1643
        %6329 = vmatpush1.msra.mxu0 %v1642
        %6330 = vmatprep.mubr.f32.mxu0 %v5641
        %6331 = vmatmul.mubr.f32.gmra.mrb[0].mxu0 %v5640
        %v6332 = vpop.f32.mrb[0].mxu0
        %v6333 = vadd.f32 0.0, %v6332
        %v6334 = vpop.f32.mrb[0].mxu0
        %v6335 = vadd.f32 0.0, %v6334
        %6336 = vmatprep.mubr.f32.mxu0 %v5643
        %6337 = vmatmul.mubr.f32.gmra.mrb[0].mxu0 %v5642
        %v6338 = vpop.f32.mrb[0].mxu0
        %v6339 = vadd.f32 0.0, %v6338
        %v6340 = vpop.f32.mrb[0].mxu0
        %v6341 = vadd.f32 0.0, %v6340
        %6342 = vdwg.mxu0
        %6344 = vset.pattern.permute.xlu0 0
        %6345 = vperm.xlu0 %6344, %v5648
        %v6346 = vpop.permute.xlu0 %6345
        %6349 = vset.pattern.permute.xlu0 0
        %6350 = vperm.xlu0 %6349, %v5649
        %v6351 = vpop.permute.xlu0 %6350
        %v6354 = vsel %vm1731, %v5645, 0
        %v6357 = vsel %vm1731, %v5647, 0
        %6359 = vmatprep.subr.mxu0 %v5719
        %6360 = vmatpush1.msra.mxu0 %v5717
        %6361 = vmatprep.subr.mxu0 %v5725
        %6362 = vmatpush1.msra.mxu0 %v5723
        %6363 = vmatprep.subr.mxu0 %v5796
        %6364 = vmatpush1.msra.mxu0 %v5794
        %6365 = vmatprep.subr.mxu0 %v5802
        %6366 = vmatpush1.msra.mxu0 %v5800
        %6367 = vmatprep.subr.mxu0 %v5873
        %6368 = vmatpush1.msra.mxu0 %v5871
        %6369 = vmatprep.subr.mxu0 %v5879
        %6370 = vmatpush1.msra.mxu0 %v5877
        %6371 = vmatprep.subr.mxu0 %v5950
        %6372 = vmatpush1.msra.mxu0 %v5948
        %6373 = vmatprep.subr.mxu0 %v5956
        %6374 = vmatpush1.msra.mxu0 %v5954
        %6375 = vmatprep.subr.mxu0 %v6027
        %6376 = vmatpush1.msra.mxu0 %v6025
        %6377 = vmatprep.subr.mxu0 %v6033
        %6378 = vmatpush1.msra.mxu0 %v6031
        %6379 = vmatprep.subr.mxu0 %v6104
        %6380 = vmatpush1.msra.mxu0 %v6102
        %6381 = vmatprep.subr.mxu0 %v6110
        %6382 = vmatpush1.msra.mxu0 %v6108
        %6383 = vmatprep.subr.mxu0 %v6181
        %6384 = vmatpush1.msra.mxu0 %v6179
        %6385 = vmatprep.subr.mxu0 %v6187
        %6386 = vmatpush1.msra.mxu0 %v6185
        %6387 = vmatprep.subr.mxu0 %v6258
        %6388 = vmatpush1.msra.mxu0 %v6256
        %6389 = vmatprep.subr.mxu0 %v6264
        %6390 = vmatpush1.msra.mxu0 %v6262
        %6391 = vmatprep.subr.mxu0 %v6335
        %6392 = vmatpush1.msra.mxu0 %v6333
        %6393 = vmatprep.subr.mxu0 %v6341
        %6394 = vmatpush1.msra.mxu0 %v6339
        %6395 = vmatprep.subr.mxu0 0.0
        %6396 = vmatpush1.msra.mxu0 0.0
        %6397 = vmatprep.subr.mxu0 0.0
        %6398 = vmatpush1.msra.mxu0 0.0
        %6399 = vmatprep.subr.mxu0 0.0
        %6400 = vmatpush1.msra.mxu0 0.0
        %6401 = vmatprep.subr.mxu0 0.0
        %6402 = vmatpush1.msra.mxu0 0.0
        %6403 = vmatprep.subr.mxu0 0.0
        %6404 = vmatpush1.msra.mxu0 0.0
        %6405 = vmatprep.subr.mxu0 0.0
        %6406 = vmatpush1.msra.mxu0 0.0
        %6407 = vmatprep.subr.mxu0 0.0
        %6408 = vmatpush1.msra.mxu0 0.0
        %6409 = vmatprep.subr.mxu0 0.0
        %6410 = vmatpush1.msra.mxu0 0.0
        %6411 = vmatprep.subr.mxu0 0.0
        %6412 = vmatpush1.msra.mxu0 0.0
        %6413 = vmatprep.subr.mxu0 0.0
        %6414 = vmatpush1.msra.mxu0 0.0
        %6415 = vmatprep.subr.mxu0 0.0
        %6416 = vmatpush1.msra.mxu0 0.0
        %6417 = vmatprep.subr.mxu0 0.0
        %6418 = vmatpush1.msra.mxu0 0.0
        %6419 = vmatprep.subr.mxu0 0.0
        %6420 = vmatpush1.msra.mxu0 0.0
        %6421 = vmatprep.subr.mxu0 0.0
        %6422 = vmatpush1.msra.mxu0 0.0
        %6423 = vmatprep.mubr.f32.mxu0 %v6354
        %6424 = vmatmul.mubr.f32.gmra.mrb[0].mxu0 %v5644
        %v6425 = vpop.f32.mrb[0].mxu0
        %v6426 = vadd.f32 %v6346, %v6425
        %v6427 = vpop.f32.mrb[0].mxu0
        %v6428 = vadd.f32 %v6346, %v6427
        %6429 = vmatprep.mubr.f32.mxu0 %v6357
        %6430 = vmatmul.mubr.f32.gmra.mrb[0].mxu0 %v5646
        %v6431 = vpop.f32.mrb[0].mxu0
        %v6432 = vadd.f32 %v6351, %v6431
        %v6433 = vpop.f32.mrb[0].mxu0
        %v6434 = vadd.f32 %v6351, %v6433
        %6435 = vdwg.mxu0
        %v6436 = vadd.f32 %v6426, %v434
        %v6437 = vadd.f32 %v6428, %v435
        %v6438 = vadd.f32 %v6432, %v436
        %v6439 = vadd.f32 %v6434, %v437
        %6440 = vst [vmem:[%s433] sm:$0xff] %v6436
        %6441 = vst [vmem:[%s433 + $0x8] sm:$0xff] %v6437
        %6442 = vst [vmem:[%s433 + $0x10] sm:$0xff] %v6438
        %6443 = vst [vmem:[%s433 + $0x18] sm:$0xff] %v6439
        %s6444 = sand.u32 %s252, 1
        %s6445 = scalar_lea.sflag [#allocation4], %s6444
        %s6446 = sand.u32 %s252, 1
        %s6447 = smul.addr %s6446, 32
        %s6448 = scalar_lea.vmem [#allocation11], %s6447
        // Predicated region
        $region81: #{tpu_custom_call.1} parent=59 // pred_check
          %p6449 = pneg %p262
        $region82: #{tpu_custom_call.1} parent=59 // pred_check_branch
          %6451 = sbr.rel (%p6449) target = $region84
        $region83: #{tpu_custom_call.1} parent=59 // pred_region
          %s6453 = ssub.s32 512, 512
          %6454 = vsyncadd %s6445, %s6453
          %s6455 = smul.addr %s29, 4
          %s6456 = smul.addr %s6455, 128
          %s6457 = scalar_lea.hbm %s10, %s6456
          %s6458 = sshll.u32 %s6448, 4
          %s6459 = int_to_ptr.vmem [resolvable:$true] %s6458
          %6464 = dma.vmem_to_hbm [thread:$0]  %s6459, 512, %s6457, %s6445, 256, 256, 16
        $region84: #{tpu_custom_call.1} parent=59 // pred_fallthru
          _
      $region60: #{tpu_custom_call.1} parent=5 // pred_fallthru
        _
      %p6465 = scmp.le.s32.totalorder 2, %s24
      // Predicated region
      $region85: #{tpu_custom_call.1} parent=5 // pred_check
        %p6466 = pneg %p6465
      $region86: #{tpu_custom_call.1} parent=5 // pred_check_branch
        %6468 = sbr.rel (%p6466) target = $region88
      $region87: #{tpu_custom_call.1} parent=5 // pred_region
        %s6469 = ssub.s32 %s24, 2
        // Predicated region
        $region89: #{tpu_custom_call.1} parent=87 // pred_check
          %p6470 = pneg %p268
        $region90: #{tpu_custom_call.1} parent=87 // pred_check_branch
          %6472 = sbr.rel (%p6470) target = $region92
        $region91: #{tpu_custom_call.1} parent=87 // pred_region
          %s6473 = sand.u32 %s253, 1
          %s6474 = scalar_lea.sflag [#allocation4], %s6473
          %s6475 = sand.u32 %s253, 1
          %s6476 = smul.addr %s6475, 32
          %s6477 = scalar_lea.vmem [#allocation11], %s6476
          %6478 = dma.done %s6474, 512
        $region92: #{tpu_custom_call.1} parent=87 // pred_fallthru
          _
      $region88: #{tpu_custom_call.1} parent=5 // pred_fallthru
        _
    $region6: #{tpu_custom_call.1} parent=1 // loop_footer
      %s28 = sadd.s32 1, %s24
    $region7: #{tpu_custom_call.1} parent=1 // loop_footer_branch
      %23 = sbr.rel target = $region3
    $region8: #{tpu_custom_call.1} parent=1 // loop_exit
      _
    %6479 = vsyncpa [#allocation3], 1
    %s6480 = scalar_lea.sflag [#allocation3], 1
    %6481 = vsyncpa %s6480, 1
    %6482 = vsyncpa [#allocation6], 1
    %6483 = vsyncpa [#allocation9], 1
    %6484 = vsyncpa [#allocation4], 1
    %s6485 = scalar_lea.sflag [#allocation4], 1
    %6486 = vsyncpa %s6485, 1

</llo_original>
